<compile_context>
chip_gen: v7x
topology: tpu7x:2x2x1
jax: 0.10.0
libtpu: 0.0.40
codegen_flags: <defaults>
</compile_context>

<pallas_src>
import numpy as np
import jax
import jax.numpy as jnp
from jax import lax
from jax.experimental import pallas as pl
from jax.experimental.pallas import tpu as pltpu

# ---- static layout constants ---------------------------------------------- #
KSIZE = 5                  # conv kernel size
NTAP = KSIZE * KSIZE       # 25 taps
C0, C1 = 16, 32            # conv0 / conv1 output channels
H1 = 14                    # spatial size after layer-1 pooling
PADW = H1 + 4              # 18: zero-padded spatial width (pad=2 each side)
PADSPAT = PADW * PADW      # 324 flattened padded positions per image
IMGW = 384                 # per-image lane stride (324 rounded up to 3*128)
SLACK = 128                # trailing lanes so static lane shifts stay in-bounds
NSH = 9                    # conv0 folds onto 3x3 shifts of the parity planes
NPLANE = 8                 # 4 parity planes padded to 8 rows (aligned stores)
DEFAULT_BB = 2             # images per grid step (keeps conv1 acc in vregs)


# --------------------------------------------------------------------------- #
# Static tables (numpy -> baked constants under jit)
# --------------------------------------------------------------------------- #
def _conv0_tap_tables():
    """Map conv0's 5x5 taps onto the (shift, parity-plane) columns of the folded
    conv0 weight matrix, one row-block of 16 per 2x2-pool group g=(r,s)."""
    idx = np.zeros((4, NSH * NPLANE), np.int32)
    val = np.zeros((4, NSH * NPLANE), np.float32)
    for r in range(2):
        for s in range(2):
            g = 2 * r + s
            for qr in range(3):
                for qc in range(3):
                    for a in range(2):
                        for c in range(2):
                            dy, dx = 2 * qr + a - r, 2 * qc + c - s
                            if 0 <= dy < KSIZE and 0 <= dx < KSIZE:
                                col = (qr * 3 + qc) * NPLANE + a * 2 + c
                                idx[g, col] = dy * KSIZE + dx
                                val[g, col] = 1.0
    return idx, val


_TAP_IDX, _TAP_VAL = _conv0_tap_tables()


def _build_mask(BB):
    """(1, BB*IMGW) f32: 1.0 on the valid interior (u,v in 2..15) of each padded
    18x18 map, 0.0 on the pad ring and the per-image filler lanes."""
    m = np.zeros((PADW, PADW), np.float32)
    m[2:2 + H1, 2:2 + H1] = 1.0
    m = np.concatenate([m.reshape(-1), np.zeros(IMGW - PADSPAT, np.float32)])
    return jnp.asarray(np.tile(m, BB)[None, :])


# --------------------------------------------------------------------------- #
# Fused Pallas kernel: conv0 + ReLU + pool  ->  conv1 + ReLU + pool
# --------------------------------------------------------------------------- #
def fused_conv_stack(xe, mask, w0eff, b0, w1k, b1, BB):
    """xe   : (NB, 8, HCW) f32   parity planes of the padded input (rows 4..7 = 0);
                                 row a*2+c, lane bb*384 + (m+2)*18 + (n+2) holds
                                 xpad[b, 2m+a, 2n+c].
       mask : (1, TOTW)    f32
       w0eff: (64, 72)     f32   folded conv0 weights, rows = group*16 + co
       b0   : (16, 1)      f32
       w1k  : (25, 32, 16) bf16  conv1 weights per tap [t, co, ci]
       b1   : (32, 1)      f32
       out  : (NB, 32, POOLW) f32; pooled conv1 value for (bb, co, pi, pj) at
              lane bb*384 + 36*pi + 2*pj of block nb (other lanes: don't-care)."""
    NB = xe.shape[0]
    HCW = xe.shape[2]
    TOTW = BB * IMGW
    POOLW = TOTW - SLACK
    assert HCW == TOTW + SLACK

    def kernel(xe_ref, m_ref, w0_ref, b0_ref, w1_ref, b1_ref, o_ref,
               a0_ref, h0_ref):
        # ---- conv0 im2col: 9 lane-shifted copies of the 8-row plane slab ----- #
        # (8-row aligned f32 stores; only ~54 store vregs total)
        for qr in range(3):
            for qc in range(3):
                s9 = qr * 3 + qc
                sh = qr * PADW + qc
                a0_ref[s9 * NPLANE:(s9 + 1) * NPLANE, :] = xe_ref[:, sh:sh + TOTW]

        # ---- conv0 (+2x2 maxpool): 4 per-group dots with a running max ------- #
        pooled0 = jnp.dot(w0_ref[0:C0, :], a0_ref[...],
                          preferred_element_type=jnp.float32)        # (16, TOTW)
        for g in range(1, 4):
            zg = jnp.dot(w0_ref[g * C0:(g + 1) * C0, :], a0_ref[...],
                         preferred_element_type=jnp.float32)
            pooled0 = jnp.maximum(pooled0, zg)

        # bias + ReLU once AFTER the pool max (monotone); mask zeroes the conv1
        # padding ring / filler lanes so layer-2 sees a true zero-padded map.
        h0 = jnp.maximum(pooled0 + b0_ref[...], 0.0) * m_ref[...]     # f32
        h0_ref[:, :TOTW] = h0.astype(jnp.bfloat16)
        h0_ref[:, TOTW:] = jnp.zeros((C0, SLACK), jnp.bfloat16)       # defined slack

        # ---- conv1: 25 accumulating K=16 dots from lane-shifted h0 slices ---- #
        acc = jnp.zeros((C1, TOTW), jnp.float32)
        for t in range(NTAP):
            off = (t // KSIZE) * PADW + (t % KSIZE)
            acc = acc + jnp.dot(w1_ref[t, :, :], h0_ref[:, off:off + TOTW],
                                preferred_element_type=jnp.float32)

        # ---- 2x2 maxpool over lane windows {l, l+1, l+18, l+19}, bias+ReLU --- #
        m2 = jnp.maximum(
            jnp.maximum(acc[:, 0:POOLW], acc[:, 1:1 + POOLW]),
            jnp.maximum(acc[:, PADW:PADW + POOLW],
                        acc[:, PADW + 1:PADW + 1 + POOLW]))
        o_ref[...] = jnp.maximum(m2 + b1_ref[...], 0.0)               # (32, POOLW)

    return pl.pallas_call(
        kernel,
        out_shape=jax.ShapeDtypeStruct((NB, C1, POOLW), jnp.float32),
        grid=(NB,),
        in_specs=[
            pl.BlockSpec((None, NPLANE, HCW), lambda i: (i, 0, 0)),   # per-block input
            pl.BlockSpec((1, TOTW), lambda i: (0, 0)),                # mask (resident)
            pl.BlockSpec((4 * C0, NSH * NPLANE), lambda i: (0, 0)),   # conv0 weights
            pl.BlockSpec((C0, 1), lambda i: (0, 0)),
            pl.BlockSpec((NTAP, C1, C0), lambda i: (0, 0, 0)),        # conv1 weights
            pl.BlockSpec((C1, 1), lambda i: (0, 0)),
        ],
        out_specs=pl.BlockSpec((None, C1, POOLW), lambda i: (i, 0, 0)),
        scratch_shapes=[
            pltpu.VMEM((NSH * NPLANE, TOTW), jnp.float32),    # conv0 im2col (72 rows)
            pltpu.VMEM((C0, TOTW + SLACK), jnp.bfloat16),     # pooled conv0 activations
        ],
        compiler_params=pltpu.CompilerParams(dimension_semantics=("parallel",)),
    )(xe, mask, w0eff, b0, w1k, b1)


# --------------------------------------------------------------------------- #
# JAX glue (wrapper-side): tiny input repack, weight folding, feature gather
# --------------------------------------------------------------------------- #
def build_xe(x2, BB):
    """x2: (Bp, 28, 28) f32, Bp % BB == 0 -> (NB, 8, BB*IMGW + SLACK) f32."""
    Bp = x2.shape[0]
    NB = Bp // BB
    xp = jnp.pad(x2, ((0, 0), (2, 2), (2, 2)))                     # (Bp, 32, 32)
    e = xp.reshape(Bp, 16, 2, 16, 2)                               # [b, m, a, n, c]
    e = jnp.transpose(e, (0, 2, 4, 1, 3))                          # [b, a, c, m, n]
    e = jnp.pad(e, ((0, 0), (0, 0), (0, 0), (2, 0), (2, 0)))       # embed at (m+2, n+2)
    e = e.reshape(Bp, 4, PADSPAT)
    e = jnp.pad(e, ((0, 0), (0, 0), (0, IMGW - PADSPAT)))          # (Bp, 4, 384)
    e = e.reshape(NB, BB, 4, IMGW)
    e = jnp.transpose(e, (0, 2, 1, 3)).reshape(NB, 4, BB * IMGW)
    e = jnp.pad(e, ((0, 0), (0, NPLANE - 4), (0, SLACK)))          # (NB, 8, HCW)
    return e


def transform_params(params):
    w0flat = params["conv0_w"].reshape(C0, NTAP)                   # [co, dy*5+dx]
    w0g = w0flat[:, _TAP_IDX] * _TAP_VAL                           # (16, 4, 72)
    w0eff = jnp.transpose(w0g, (1, 0, 2)).reshape(4 * C0, NSH * NPLANE)
    b0 = params["conv0_b"].reshape(C0, 1)
    w1k = jnp.transpose(params["conv1_w"].reshape(C1, C0, NTAP),
                        (2, 0, 1)).astype(jnp.bfloat16)            # (25, 32, 16)
    b1 = params["conv1_b"].reshape(C1, 1)
    return w0eff, b0, w1k, b1


def extract_features(pooled, Bp, BB):
    """pooled: (NB, 32, BB*IMGW - SLACK) -> channel-major (Bp, 32*7*7) = y.view(B,-1)."""
    NB = Bp // BB
    full = jnp.pad(pooled, ((0, 0), (0, 0), (0, SLACK)))           # (NB, 32, BB*384)
    full = full.reshape(NB, C1, BB, IMGW)[..., :7 * 2 * PADW]      # (NB, 32, BB, 252)
    g7 = full.reshape(NB, C1, BB, 7, 2 * PADW)[..., 0:2 * 7:2]     # (NB, 32, BB, 7, 7)
    return jnp.transpose(g7, (0, 2, 1, 3, 4)).reshape(Bp, C1 * 7 * 7)


# --------------------------------------------------------------------------- #
# Model: cnn.forward
# --------------------------------------------------------------------------- #
def cnn_forward(x, params, block_batch=DEFAULT_BB):
    """x: (B, 1, 28, 28) f32 -> (logits (B, 10), features (B, 1568))."""
    B = x.shape[0]
    BB = min(block_batch, B)
    Bp = ((B + BB - 1) // BB) * BB
    x2 = x[:, 0]
    if Bp != B:
        x2 = jnp.pad(x2, ((0, Bp - B), (0, 0), (0, 0)))
    w0eff, b0, w1k, b1 = transform_params(params)
    xe = build_xe(x2, BB)
    mask = _build_mask(BB)
    pooled = fused_conv_stack(xe, mask, w0eff, b0, w1k, b1, BB)
    feat = extract_features(pooled, Bp, BB)[:B]
    out = feat @ params["fc_w"].T + params["fc_b"]    # tiny classifier -> XLA
    return out, feat


def init_params(key):
    ks = jax.random.split(key, 6)

    def u(k, shape, fan_in):
        bound = 1.0 / np.sqrt(fan_in)
        return jax.random.uniform(k, shape, jnp.float32, -bound, bound)

    return dict(
        conv0_w=u(ks[0], (C0, 1, KSIZE, KSIZE), NTAP),
        conv0_b=u(ks[1], (C0,), NTAP),
        conv1_w=u(ks[2], (C1, C0, KSIZE, KSIZE), NTAP * C0),
        conv1_b=u(ks[3], (C1,), NTAP * C0),
        fc_w=u(ks[4], (10, C1 * 7 * 7), C1 * 7 * 7),
        fc_b=u(ks[5], (10,), C1 * 7 * 7),
    )


# Pure-JAX reference (lax.conv) used only to sanity-check the fused kernel.
def cnn_reference(x, params):
    def conv_relu(h, w, b):
        y = lax.conv_general_dilated(h, w, (1, 1), ((2, 2), (2, 2)),
                                     dimension_numbers=("NCHW", "OIHW", "NCHW"))
        return jax.nn.relu(y + b.reshape(1, -1, 1, 1))

    def pool(h):
        return lax.reduce_window(h, -jnp.inf, lax.max,
                                 (1, 1, 2, 2), (1, 1, 2, 2), "VALID")

    h = pool(conv_relu(x, params["conv0_w"], params["conv0_b"]))
    h = pool(conv_relu(h, params["conv1_w"], params["conv1_b"]))
    feat = h.reshape(x.shape[0], -1)
    return feat @ params["fc_w"].T + params["fc_b"], feat


if __name__ == "__main__":
    key = jax.random.PRNGKey(0)
    pkey, xkey, xkey2 = jax.random.split(key, 3)
    params = init_params(pkey)

    # MNIST-shaped NCHW input, batch=2
    x = jax.random.normal(xkey, (2, 1, 28, 28), jnp.float32)
    out, feat = jax.jit(cnn_forward)(x, params)
    jax.block_until_ready((out, feat))
    assert out.shape == (2, 10) and out.dtype == jnp.float32
    assert feat.shape == (2, C1 * 7 * 7) and feat.dtype == jnp.float32

    out_ref, feat_ref = cnn_reference(x, params)
    assert float(jnp.max(jnp.abs(feat - feat_ref))) < 5e-2
    assert float(jnp.max(jnp.abs(out - out_ref))) < 5e-2

    # Also exercise the batch-blocked "parallel" grid path (B=4 -> 2 blocks of 2)
    x4 = jax.random.normal(xkey2, (4, 1, 28, 28), jnp.float32)
    out4, feat4 = jax.jit(cnn_forward)(x4, params)
    jax.block_until_ready((out4, feat4))
    out4_ref, feat4_ref = cnn_reference(x4, params)
    assert float(jnp.max(jnp.abs(feat4 - feat4_ref))) < 5e-2
    assert float(jnp.max(jnp.abs(out4 - out4_ref))) < 5e-2

    print("KERNEL_OK")
</pallas_src>

<mosaic_0001>
module attributes {stable_mosaic.version = 11 : i64} {
  func.func @kernel(%arg0: i32, %arg1: memref<1x8x896xf32, #tpu.memory_space<vmem>>, %arg2: memref<1x768xf32, #tpu.memory_space<vmem>>, %arg3: memref<64x72xf32, #tpu.memory_space<vmem>>, %arg4: memref<16x1xf32, #tpu.memory_space<vmem>>, %arg5: memref<25x32x16xbf16, #tpu.memory_space<vmem>>, %arg6: memref<32x1xf32, #tpu.memory_space<vmem>>, %arg7: memref<1x32x640xf32, #tpu.memory_space<vmem>>, %arg8: memref<72x768xf32, #tpu.memory_space<vmem>>, %arg9: memref<16x896xbf16, #tpu.memory_space<vmem>>) attributes {dimension_semantics = [#tpu.dimension_semantics<parallel>], iteration_bounds = array<i64: 1>, scalar_prefetch = 0 : i64, scratch_operands = 2 : i64, tpu.core_type = #tpu.core_type<tc>, window_params = [{transform_indices = @transform_0, window_bounds = array<i64: 1, 8, 896>}, {pipeline_mode = #tpu.pipeline_mode<synchronous>, transform_indices = @transform_1, window_bounds = array<i64: 1, 768>}, {pipeline_mode = #tpu.pipeline_mode<synchronous>, transform_indices = @transform_2, window_bounds = array<i64: 64, 72>}, {pipeline_mode = #tpu.pipeline_mode<synchronous>, transform_indices = @transform_3, window_bounds = array<i64: 16, 1>}, {pipeline_mode = #tpu.pipeline_mode<synchronous>, transform_indices = @transform_4, window_bounds = array<i64: 25, 32, 16>}, {pipeline_mode = #tpu.pipeline_mode<synchronous>, transform_indices = @transform_5, window_bounds = array<i64: 32, 1>}, {transform_indices = @transform_6, window_bounds = array<i64: 1, 32, 640>}]} {
    %c0 = arith.constant 0 : index
    %c0_0 = arith.constant 0 : index
    %c0_1 = arith.constant 0 : index
    %0 = vector.load %arg1[%c0, %c0_0, %c0_1] : memref<1x8x896xf32, #tpu.memory_space<vmem>>, vector<1x8x768xf32>
    %1 = vector.shape_cast %0 : vector<1x8x768xf32> to vector<8x768xf32>
    %c0_2 = arith.constant 0 : index
    %c0_3 = arith.constant 0 : index
    %2 = vector.load %arg8[%c0_2, %c0_3] : memref<72x768xf32, #tpu.memory_space<vmem>>, vector<8x768xf32>
    tpu.vector_store %arg8[%c0_2, %c0_3], %1 {strides = array<i32>} : memref<72x768xf32, #tpu.memory_space<vmem>>, vector<8x768xf32>,
    %c0_4 = arith.constant 0 : index
    %c0_5 = arith.constant 0 : index
    %c1 = arith.constant 1 : index
    %3 = vector.load %arg1[%c0_4, %c0_5, %c1] : memref<1x8x896xf32, #tpu.memory_space<vmem>>, vector<1x8x768xf32>
    %4 = vector.shape_cast %3 : vector<1x8x768xf32> to vector<8x768xf32>
    %c8 = arith.constant 8 : index
    %c0_6 = arith.constant 0 : index
    %5 = vector.load %arg8[%c8, %c0_6] : memref<72x768xf32, #tpu.memory_space<vmem>>, vector<8x768xf32>
    tpu.vector_store %arg8[%c8, %c0_6], %4 {strides = array<i32>} : memref<72x768xf32, #tpu.memory_space<vmem>>, vector<8x768xf32>,
    %c0_7 = arith.constant 0 : index
    %c0_8 = arith.constant 0 : index
    %c2 = arith.constant 2 : index
    %6 = vector.load %arg1[%c0_7, %c0_8, %c2] : memref<1x8x896xf32, #tpu.memory_space<vmem>>, vector<1x8x768xf32>
    %7 = vector.shape_cast %6 : vector<1x8x768xf32> to vector<8x768xf32>
    %c16 = arith.constant 16 : index
    %c0_9 = arith.constant 0 : index
    %8 = vector.load %arg8[%c16, %c0_9] : memref<72x768xf32, #tpu.memory_space<vmem>>, vector<8x768xf32>
    tpu.vector_store %arg8[%c16, %c0_9], %7 {strides = array<i32>} : memref<72x768xf32, #tpu.memory_space<vmem>>, vector<8x768xf32>,
    %c0_10 = arith.constant 0 : index
    %c0_11 = arith.constant 0 : index
    %c18 = arith.constant 18 : index
    %9 = vector.load %arg1[%c0_10, %c0_11, %c18] : memref<1x8x896xf32, #tpu.memory_space<vmem>>, vector<1x8x768xf32>
    %10 = vector.shape_cast %9 : vector<1x8x768xf32> to vector<8x768xf32>
    %c24 = arith.constant 24 : index
    %c0_12 = arith.constant 0 : index
    %11 = vector.load %arg8[%c24, %c0_12] : memref<72x768xf32, #tpu.memory_space<vmem>>, vector<8x768xf32>
    tpu.vector_store %arg8[%c24, %c0_12], %10 {strides = array<i32>} : memref<72x768xf32, #tpu.memory_space<vmem>>, vector<8x768xf32>,
    %c0_13 = arith.constant 0 : index
    %c0_14 = arith.constant 0 : index
    %c19 = arith.constant 19 : index
    %12 = vector.load %arg1[%c0_13, %c0_14, %c19] : memref<1x8x896xf32, #tpu.memory_space<vmem>>, vector<1x8x768xf32>
    %13 = vector.shape_cast %12 : vector<1x8x768xf32> to vector<8x768xf32>
    %c32 = arith.constant 32 : index
    %c0_15 = arith.constant 0 : index
    %14 = vector.load %arg8[%c32, %c0_15] : memref<72x768xf32, #tpu.memory_space<vmem>>, vector<8x768xf32>
    tpu.vector_store %arg8[%c32, %c0_15], %13 {strides = array<i32>} : memref<72x768xf32, #tpu.memory_space<vmem>>, vector<8x768xf32>,
    %c0_16 = arith.constant 0 : index
    %c0_17 = arith.constant 0 : index
    %c20 = arith.constant 20 : index
    %15 = vector.load %arg1[%c0_16, %c0_17, %c20] : memref<1x8x896xf32, #tpu.memory_space<vmem>>, vector<1x8x768xf32>
    %16 = vector.shape_cast %15 : vector<1x8x768xf32> to vector<8x768xf32>
    %c40 = arith.constant 40 : index
    %c0_18 = arith.constant 0 : index
    %17 = vector.load %arg8[%c40, %c0_18] : memref<72x768xf32, #tpu.memory_space<vmem>>, vector<8x768xf32>
    tpu.vector_store %arg8[%c40, %c0_18], %16 {strides = array<i32>} : memref<72x768xf32, #tpu.memory_space<vmem>>, vector<8x768xf32>,
    %c0_19 = arith.constant 0 : index
    %c0_20 = arith.constant 0 : index
    %c36 = arith.constant 36 : index
    %18 = vector.load %arg1[%c0_19, %c0_20, %c36] : memref<1x8x896xf32, #tpu.memory_space<vmem>>, vector<1x8x768xf32>
    %19 = vector.shape_cast %18 : vector<1x8x768xf32> to vector<8x768xf32>
    %c48 = arith.constant 48 : index
    %c0_21 = arith.constant 0 : index
    %20 = vector.load %arg8[%c48, %c0_21] : memref<72x768xf32, #tpu.memory_space<vmem>>, vector<8x768xf32>
    tpu.vector_store %arg8[%c48, %c0_21], %19 {strides = array<i32>} : memref<72x768xf32, #tpu.memory_space<vmem>>, vector<8x768xf32>,
    %c0_22 = arith.constant 0 : index
    %c0_23 = arith.constant 0 : index
    %c37 = arith.constant 37 : index
    %21 = vector.load %arg1[%c0_22, %c0_23, %c37] : memref<1x8x896xf32, #tpu.memory_space<vmem>>, vector<1x8x768xf32>
    %22 = vector.shape_cast %21 : vector<1x8x768xf32> to vector<8x768xf32>
    %c56 = arith.constant 56 : index
    %c0_24 = arith.constant 0 : index
    %23 = vector.load %arg8[%c56, %c0_24] : memref<72x768xf32, #tpu.memory_space<vmem>>, vector<8x768xf32>
    tpu.vector_store %arg8[%c56, %c0_24], %22 {strides = array<i32>} : memref<72x768xf32, #tpu.memory_space<vmem>>, vector<8x768xf32>,
    %c0_25 = arith.constant 0 : index
    %c0_26 = arith.constant 0 : index
    %c38 = arith.constant 38 : index
    %24 = vector.load %arg1[%c0_25, %c0_26, %c38] : memref<1x8x896xf32, #tpu.memory_space<vmem>>, vector<1x8x768xf32>
    %25 = vector.shape_cast %24 : vector<1x8x768xf32> to vector<8x768xf32>
    %c64 = arith.constant 64 : index
    %c0_27 = arith.constant 0 : index
    %26 = vector.load %arg8[%c64, %c0_27] : memref<72x768xf32, #tpu.memory_space<vmem>>, vector<8x768xf32>
    tpu.vector_store %arg8[%c64, %c0_27], %25 {strides = array<i32>} : memref<72x768xf32, #tpu.memory_space<vmem>>, vector<8x768xf32>,
    %c0_28 = arith.constant 0 : index
    %c0_29 = arith.constant 0 : index
    %27 = vector.load %arg3[%c0_28, %c0_29] : memref<64x72xf32, #tpu.memory_space<vmem>>, vector<16x72xf32>
    %c0_30 = arith.constant 0 : index
    %c0_31 = arith.constant 0 : index
    %28 = vector.load %arg8[%c0_30, %c0_31] : memref<72x768xf32, #tpu.memory_space<vmem>>, vector<72x768xf32>
    %cst = arith.constant dense<0.000000e+00> : vector<16x768xf32>
    %29 = tpu.matmul %27, %28, %cst {dimension_numbers = #tpu.dot_dimension_numbers<[1], [0], [0], [1], [0, 0, 1, 1], [], []>} : vector<16x72xf32>, vector<72x768xf32>, vector<16x768xf32> -> vector<16x768xf32>
    %c16_32 = arith.constant 16 : index
    %c0_33 = arith.constant 0 : index
    %30 = vector.load %arg3[%c16_32, %c0_33] : memref<64x72xf32, #tpu.memory_space<vmem>>, vector<16x72xf32>
    %c0_34 = arith.constant 0 : index
    %c0_35 = arith.constant 0 : index
    %31 = vector.load %arg8[%c0_34, %c0_35] : memref<72x768xf32, #tpu.memory_space<vmem>>, vector<72x768xf32>
    %cst_36 = arith.constant dense<0.000000e+00> : vector<16x768xf32>
    %32 = tpu.matmul %30, %31, %cst_36 {dimension_numbers = #tpu.dot_dimension_numbers<[1], [0], [0], [1], [0, 0, 1, 1], [], []>} : vector<16x72xf32>, vector<72x768xf32>, vector<16x768xf32> -> vector<16x768xf32>
    %33 = arith.maximumf %29, %32 : vector<16x768xf32>
    %c32_37 = arith.constant 32 : index
    %c0_38 = arith.constant 0 : index
    %34 = vector.load %arg3[%c32_37, %c0_38] : memref<64x72xf32, #tpu.memory_space<vmem>>, vector<16x72xf32>
    %c0_39 = arith.constant 0 : index
    %c0_40 = arith.constant 0 : index
    %35 = vector.load %arg8[%c0_39, %c0_40] : memref<72x768xf32, #tpu.memory_space<vmem>>, vector<72x768xf32>
    %cst_41 = arith.constant dense<0.000000e+00> : vector<16x768xf32>
    %36 = tpu.matmul %34, %35, %cst_41 {dimension_numbers = #tpu.dot_dimension_numbers<[1], [0], [0], [1], [0, 0, 1, 1], [], []>} : vector<16x72xf32>, vector<72x768xf32>, vector<16x768xf32> -> vector<16x768xf32>
    %37 = arith.maximumf %33, %36 : vector<16x768xf32>
    %c48_42 = arith.constant 48 : index
    %c0_43 = arith.constant 0 : index
    %38 = vector.load %arg3[%c48_42, %c0_43] : memref<64x72xf32, #tpu.memory_space<vmem>>, vector<16x72xf32>
    %c0_44 = arith.constant 0 : index
    %c0_45 = arith.constant 0 : index
    %39 = vector.load %arg8[%c0_44, %c0_45] : memref<72x768xf32, #tpu.memory_space<vmem>>, vector<72x768xf32>
    %cst_46 = arith.constant dense<0.000000e+00> : vector<16x768xf32>
    %40 = tpu.matmul %38, %39, %cst_46 {dimension_numbers = #tpu.dot_dimension_numbers<[1], [0], [0], [1], [0, 0, 1, 1], [], []>} : vector<16x72xf32>, vector<72x768xf32>, vector<16x768xf32> -> vector<16x768xf32>
    %41 = arith.maximumf %37, %40 : vector<16x768xf32>
    %c0_47 = arith.constant 0 : index
    %c0_48 = arith.constant 0 : index
    %42 = vector.load %arg4[%c0_47, %c0_48] : memref<16x1xf32, #tpu.memory_space<vmem>>, vector<16x1xf32>
    %43 = vector.broadcast %42 : vector<16x1xf32> to vector<16x768xf32>
    %44 = arith.addf %41, %43 : vector<16x768xf32>
    %cst_49 = arith.constant 0.000000e+00 : f32
    %45 = vector.broadcast %cst_49 : f32 to vector<16x768xf32>
    %46 = arith.maximumf %44, %45 : vector<16x768xf32>
    %c0_50 = arith.constant 0 : index
    %c0_51 = arith.constant 0 : index
    %47 = vector.load %arg2[%c0_50, %c0_51] : memref<1x768xf32, #tpu.memory_space<vmem>>, vector<1x768xf32>
    %48 = vector.broadcast %47 : vector<1x768xf32> to vector<16x768xf32>
    %49 = arith.mulf %46, %48 : vector<16x768xf32>
    %50 = arith.truncf %49 : vector<16x768xf32> to vector<16x768xbf16>
    %c0_52 = arith.constant 0 : index
    %c0_53 = arith.constant 0 : index
    %51 = vector.load %arg9[%c0_52, %c0_53] : memref<16x896xbf16, #tpu.memory_space<vmem>>, vector<16x768xbf16>
    tpu.vector_store %arg9[%c0_52, %c0_53], %50 {strides = array<i32>} : memref<16x896xbf16, #tpu.memory_space<vmem>>, vector<16x768xbf16>,
    %cst_54 = arith.constant 0.000000e+00 : bf16
    %52 = vector.broadcast %cst_54 : bf16 to vector<16x128xbf16>
    %c0_55 = arith.constant 0 : index
    %c768 = arith.constant 768 : index
    %53 = vector.load %arg9[%c0_55, %c768] : memref<16x896xbf16, #tpu.memory_space<vmem>>, vector<16x128xbf16>
    tpu.vector_store %arg9[%c0_55, %c768], %52 {strides = array<i32>} : memref<16x896xbf16, #tpu.memory_space<vmem>>, vector<16x128xbf16>,
    %cst_56 = arith.constant 0.000000e+00 : f32
    %54 = vector.broadcast %cst_56 : f32 to vector<32x768xf32>
    %c0_57 = arith.constant 0 : index
    %c0_58 = arith.constant 0 : index
    %c0_59 = arith.constant 0 : index
    %55 = vector.load %arg5[%c0_57, %c0_58, %c0_59] : memref<25x32x16xbf16, #tpu.memory_space<vmem>>, vector<1x32x16xbf16>
    %56 = vector.shape_cast %55 : vector<1x32x16xbf16> to vector<32x16xbf16>
    %c0_60 = arith.constant 0 : index
    %c0_61 = arith.constant 0 : index
    %57 = vector.load %arg9[%c0_60, %c0_61] : memref<16x896xbf16, #tpu.memory_space<vmem>>, vector<16x768xbf16>
    %cst_62 = arith.constant dense<0.000000e+00> : vector<32x768xf32>
    %58 = tpu.matmul %56, %57, %cst_62 {dimension_numbers = #tpu.dot_dimension_numbers<[1], [0], [0], [1], [0, 0, 1, 1], [], []>} : vector<32x16xbf16>, vector<16x768xbf16>, vector<32x768xf32> -> vector<32x768xf32>
    %59 = arith.addf %54, %58 : vector<32x768xf32>
    %c1_63 = arith.constant 1 : index
    %c0_64 = arith.constant 0 : index
    %c0_65 = arith.constant 0 : index
    %60 = vector.load %arg5[%c1_63, %c0_64, %c0_65] : memref<25x32x16xbf16, #tpu.memory_space<vmem>>, vector<1x32x16xbf16>
    %61 = vector.shape_cast %60 : vector<1x32x16xbf16> to vector<32x16xbf16>
    %c0_66 = arith.constant 0 : index
    %c1_67 = arith.constant 1 : index
    %62 = vector.load %arg9[%c0_66, %c1_67] : memref<16x896xbf16, #tpu.memory_space<vmem>>, vector<16x768xbf16>
    %cst_68 = arith.constant dense<0.000000e+00> : vector<32x768xf32>
    %63 = tpu.matmul %61, %62, %cst_68 {dimension_numbers = #tpu.dot_dimension_numbers<[1], [0], [0], [1], [0, 0, 1, 1], [], []>} : vector<32x16xbf16>, vector<16x768xbf16>, vector<32x768xf32> -> vector<32x768xf32>
    %64 = arith.addf %59, %63 : vector<32x768xf32>
    %c2_69 = arith.constant 2 : index
    %c0_70 = arith.constant 0 : index
    %c0_71 = arith.constant 0 : index
    %65 = vector.load %arg5[%c2_69, %c0_70, %c0_71] : memref<25x32x16xbf16, #tpu.memory_space<vmem>>, vector<1x32x16xbf16>
    %66 = vector.shape_cast %65 : vector<1x32x16xbf16> to vector<32x16xbf16>
    %c0_72 = arith.constant 0 : index
    %c2_73 = arith.constant 2 : index
    %67 = vector.load %arg9[%c0_72, %c2_73] : memref<16x896xbf16, #tpu.memory_space<vmem>>, vector<16x768xbf16>
    %cst_74 = arith.constant dense<0.000000e+00> : vector<32x768xf32>
    %68 = tpu.matmul %66, %67, %cst_74 {dimension_numbers = #tpu.dot_dimension_numbers<[1], [0], [0], [1], [0, 0, 1, 1], [], []>} : vector<32x16xbf16>, vector<16x768xbf16>, vector<32x768xf32> -> vector<32x768xf32>
    %69 = arith.addf %64, %68 : vector<32x768xf32>
    %c3 = arith.constant 3 : index
    %c0_75 = arith.constant 0 : index
    %c0_76 = arith.constant 0 : index
    %70 = vector.load %arg5[%c3, %c0_75, %c0_76] : memref<25x32x16xbf16, #tpu.memory_space<vmem>>, vector<1x32x16xbf16>
    %71 = vector.shape_cast %70 : vector<1x32x16xbf16> to vector<32x16xbf16>
    %c0_77 = arith.constant 0 : index
    %c3_78 = arith.constant 3 : index
    %72 = vector.load %arg9[%c0_77, %c3_78] : memref<16x896xbf16, #tpu.memory_space<vmem>>, vector<16x768xbf16>
    %cst_79 = arith.constant dense<0.000000e+00> : vector<32x768xf32>
    %73 = tpu.matmul %71, %72, %cst_79 {dimension_numbers = #tpu.dot_dimension_numbers<[1], [0], [0], [1], [0, 0, 1, 1], [], []>} : vector<32x16xbf16>, vector<16x768xbf16>, vector<32x768xf32> -> vector<32x768xf32>
    %74 = arith.addf %69, %73 : vector<32x768xf32>
    %c4 = arith.constant 4 : index
    %c0_80 = arith.constant 0 : index
    %c0_81 = arith.constant 0 : index
    %75 = vector.load %arg5[%c4, %c0_80, %c0_81] : memref<25x32x16xbf16, #tpu.memory_space<vmem>>, vector<1x32x16xbf16>
    %76 = vector.shape_cast %75 : vector<1x32x16xbf16> to vector<32x16xbf16>
    %c0_82 = arith.constant 0 : index
    %c4_83 = arith.constant 4 : index
    %77 = vector.load %arg9[%c0_82, %c4_83] : memref<16x896xbf16, #tpu.memory_space<vmem>>, vector<16x768xbf16>
    %cst_84 = arith.constant dense<0.000000e+00> : vector<32x768xf32>
    %78 = tpu.matmul %76, %77, %cst_84 {dimension_numbers = #tpu.dot_dimension_numbers<[1], [0], [0], [1], [0, 0, 1, 1], [], []>} : vector<32x16xbf16>, vector<16x768xbf16>, vector<32x768xf32> -> vector<32x768xf32>
    %79 = arith.addf %74, %78 : vector<32x768xf32>
    %c5 = arith.constant 5 : index
    %c0_85 = arith.constant 0 : index
    %c0_86 = arith.constant 0 : index
    %80 = vector.load %arg5[%c5, %c0_85, %c0_86] : memref<25x32x16xbf16, #tpu.memory_space<vmem>>, vector<1x32x16xbf16>
    %81 = vector.shape_cast %80 : vector<1x32x16xbf16> to vector<32x16xbf16>
    %c0_87 = arith.constant 0 : index
    %c18_88 = arith.constant 18 : index
    %82 = vector.load %arg9[%c0_87, %c18_88] : memref<16x896xbf16, #tpu.memory_space<vmem>>, vector<16x768xbf16>
    %cst_89 = arith.constant dense<0.000000e+00> : vector<32x768xf32>
    %83 = tpu.matmul %81, %82, %cst_89 {dimension_numbers = #tpu.dot_dimension_numbers<[1], [0], [0], [1], [0, 0, 1, 1], [], []>} : vector<32x16xbf16>, vector<16x768xbf16>, vector<32x768xf32> -> vector<32x768xf32>
    %84 = arith.addf %79, %83 : vector<32x768xf32>
    %c6 = arith.constant 6 : index
    %c0_90 = arith.constant 0 : index
    %c0_91 = arith.constant 0 : index
    %85 = vector.load %arg5[%c6, %c0_90, %c0_91] : memref<25x32x16xbf16, #tpu.memory_space<vmem>>, vector<1x32x16xbf16>
    %86 = vector.shape_cast %85 : vector<1x32x16xbf16> to vector<32x16xbf16>
    %c0_92 = arith.constant 0 : index
    %c19_93 = arith.constant 19 : index
    %87 = vector.load %arg9[%c0_92, %c19_93] : memref<16x896xbf16, #tpu.memory_space<vmem>>, vector<16x768xbf16>
    %cst_94 = arith.constant dense<0.000000e+00> : vector<32x768xf32>
    %88 = tpu.matmul %86, %87, %cst_94 {dimension_numbers = #tpu.dot_dimension_numbers<[1], [0], [0], [1], [0, 0, 1, 1], [], []>} : vector<32x16xbf16>, vector<16x768xbf16>, vector<32x768xf32> -> vector<32x768xf32>
    %89 = arith.addf %84, %88 : vector<32x768xf32>
    %c7 = arith.constant 7 : index
    %c0_95 = arith.constant 0 : index
    %c0_96 = arith.constant 0 : index
    %90 = vector.load %arg5[%c7, %c0_95, %c0_96] : memref<25x32x16xbf16, #tpu.memory_space<vmem>>, vector<1x32x16xbf16>
    %91 = vector.shape_cast %90 : vector<1x32x16xbf16> to vector<32x16xbf16>
    %c0_97 = arith.constant 0 : index
    %c20_98 = arith.constant 20 : index
    %92 = vector.load %arg9[%c0_97, %c20_98] : memref<16x896xbf16, #tpu.memory_space<vmem>>, vector<16x768xbf16>
    %cst_99 = arith.constant dense<0.000000e+00> : vector<32x768xf32>
    %93 = tpu.matmul %91, %92, %cst_99 {dimension_numbers = #tpu.dot_dimension_numbers<[1], [0], [0], [1], [0, 0, 1, 1], [], []>} : vector<32x16xbf16>, vector<16x768xbf16>, vector<32x768xf32> -> vector<32x768xf32>
    %94 = arith.addf %89, %93 : vector<32x768xf32>
    %c8_100 = arith.constant 8 : index
    %c0_101 = arith.constant 0 : index
    %c0_102 = arith.constant 0 : index
    %95 = vector.load %arg5[%c8_100, %c0_101, %c0_102] : memref<25x32x16xbf16, #tpu.memory_space<vmem>>, vector<1x32x16xbf16>
    %96 = vector.shape_cast %95 : vector<1x32x16xbf16> to vector<32x16xbf16>
    %c0_103 = arith.constant 0 : index
    %c21 = arith.constant 21 : index
    %97 = vector.load %arg9[%c0_103, %c21] : memref<16x896xbf16, #tpu.memory_space<vmem>>, vector<16x768xbf16>
    %cst_104 = arith.constant dense<0.000000e+00> : vector<32x768xf32>
    %98 = tpu.matmul %96, %97, %cst_104 {dimension_numbers = #tpu.dot_dimension_numbers<[1], [0], [0], [1], [0, 0, 1, 1], [], []>} : vector<32x16xbf16>, vector<16x768xbf16>, vector<32x768xf32> -> vector<32x768xf32>
    %99 = arith.addf %94, %98 : vector<32x768xf32>
    %c9 = arith.constant 9 : index
    %c0_105 = arith.constant 0 : index
    %c0_106 = arith.constant 0 : index
    %100 = vector.load %arg5[%c9, %c0_105, %c0_106] : memref<25x32x16xbf16, #tpu.memory_space<vmem>>, vector<1x32x16xbf16>
    %101 = vector.shape_cast %100 : vector<1x32x16xbf16> to vector<32x16xbf16>
    %c0_107 = arith.constant 0 : index
    %c22 = arith.constant 22 : index
    %102 = vector.load %arg9[%c0_107, %c22] : memref<16x896xbf16, #tpu.memory_space<vmem>>, vector<16x768xbf16>
    %cst_108 = arith.constant dense<0.000000e+00> : vector<32x768xf32>
    %103 = tpu.matmul %101, %102, %cst_108 {dimension_numbers = #tpu.dot_dimension_numbers<[1], [0], [0], [1], [0, 0, 1, 1], [], []>} : vector<32x16xbf16>, vector<16x768xbf16>, vector<32x768xf32> -> vector<32x768xf32>
    %104 = arith.addf %99, %103 : vector<32x768xf32>
    %c10 = arith.constant 10 : index
    %c0_109 = arith.constant 0 : index
    %c0_110 = arith.constant 0 : index
    %105 = vector.load %arg5[%c10, %c0_109, %c0_110] : memref<25x32x16xbf16, #tpu.memory_space<vmem>>, vector<1x32x16xbf16>
    %106 = vector.shape_cast %105 : vector<1x32x16xbf16> to vector<32x16xbf16>
    %c0_111 = arith.constant 0 : index
    %c36_112 = arith.constant 36 : index
    %107 = vector.load %arg9[%c0_111, %c36_112] : memref<16x896xbf16, #tpu.memory_space<vmem>>, vector<16x768xbf16>
    %cst_113 = arith.constant dense<0.000000e+00> : vector<32x768xf32>
    %108 = tpu.matmul %106, %107, %cst_113 {dimension_numbers = #tpu.dot_dimension_numbers<[1], [0], [0], [1], [0, 0, 1, 1], [], []>} : vector<32x16xbf16>, vector<16x768xbf16>, vector<32x768xf32> -> vector<32x768xf32>
    %109 = arith.addf %104, %108 : vector<32x768xf32>
    %c11 = arith.constant 11 : index
    %c0_114 = arith.constant 0 : index
    %c0_115 = arith.constant 0 : index
    %110 = vector.load %arg5[%c11, %c0_114, %c0_115] : memref<25x32x16xbf16, #tpu.memory_space<vmem>>, vector<1x32x16xbf16>
    %111 = vector.shape_cast %110 : vector<1x32x16xbf16> to vector<32x16xbf16>
    %c0_116 = arith.constant 0 : index
    %c37_117 = arith.constant 37 : index
    %112 = vector.load %arg9[%c0_116, %c37_117] : memref<16x896xbf16, #tpu.memory_space<vmem>>, vector<16x768xbf16>
    %cst_118 = arith.constant dense<0.000000e+00> : vector<32x768xf32>
    %113 = tpu.matmul %111, %112, %cst_118 {dimension_numbers = #tpu.dot_dimension_numbers<[1], [0], [0], [1], [0, 0, 1, 1], [], []>} : vector<32x16xbf16>, vector<16x768xbf16>, vector<32x768xf32> -> vector<32x768xf32>
    %114 = arith.addf %109, %113 : vector<32x768xf32>
    %c12 = arith.constant 12 : index
    %c0_119 = arith.constant 0 : index
    %c0_120 = arith.constant 0 : index
    %115 = vector.load %arg5[%c12, %c0_119, %c0_120] : memref<25x32x16xbf16, #tpu.memory_space<vmem>>, vector<1x32x16xbf16>
    %116 = vector.shape_cast %115 : vector<1x32x16xbf16> to vector<32x16xbf16>
    %c0_121 = arith.constant 0 : index
    %c38_122 = arith.constant 38 : index
    %117 = vector.load %arg9[%c0_121, %c38_122] : memref<16x896xbf16, #tpu.memory_space<vmem>>, vector<16x768xbf16>
    %cst_123 = arith.constant dense<0.000000e+00> : vector<32x768xf32>
    %118 = tpu.matmul %116, %117, %cst_123 {dimension_numbers = #tpu.dot_dimension_numbers<[1], [0], [0], [1], [0, 0, 1, 1], [], []>} : vector<32x16xbf16>, vector<16x768xbf16>, vector<32x768xf32> -> vector<32x768xf32>
    %119 = arith.addf %114, %118 : vector<32x768xf32>
    %c13 = arith.constant 13 : index
    %c0_124 = arith.constant 0 : index
    %c0_125 = arith.constant 0 : index
    %120 = vector.load %arg5[%c13, %c0_124, %c0_125] : memref<25x32x16xbf16, #tpu.memory_space<vmem>>, vector<1x32x16xbf16>
    %121 = vector.shape_cast %120 : vector<1x32x16xbf16> to vector<32x16xbf16>
    %c0_126 = arith.constant 0 : index
    %c39 = arith.constant 39 : index
    %122 = vector.load %arg9[%c0_126, %c39] : memref<16x896xbf16, #tpu.memory_space<vmem>>, vector<16x768xbf16>
    %cst_127 = arith.constant dense<0.000000e+00> : vector<32x768xf32>
    %123 = tpu.matmul %121, %122, %cst_127 {dimension_numbers = #tpu.dot_dimension_numbers<[1], [0], [0], [1], [0, 0, 1, 1], [], []>} : vector<32x16xbf16>, vector<16x768xbf16>, vector<32x768xf32> -> vector<32x768xf32>
    %124 = arith.addf %119, %123 : vector<32x768xf32>
    %c14 = arith.constant 14 : index
    %c0_128 = arith.constant 0 : index
    %c0_129 = arith.constant 0 : index
    %125 = vector.load %arg5[%c14, %c0_128, %c0_129] : memref<25x32x16xbf16, #tpu.memory_space<vmem>>, vector<1x32x16xbf16>
    %126 = vector.shape_cast %125 : vector<1x32x16xbf16> to vector<32x16xbf16>
    %c0_130 = arith.constant 0 : index
    %c40_131 = arith.constant 40 : index
    %127 = vector.load %arg9[%c0_130, %c40_131] : memref<16x896xbf16, #tpu.memory_space<vmem>>, vector<16x768xbf16>
    %cst_132 = arith.constant dense<0.000000e+00> : vector<32x768xf32>
    %128 = tpu.matmul %126, %127, %cst_132 {dimension_numbers = #tpu.dot_dimension_numbers<[1], [0], [0], [1], [0, 0, 1, 1], [], []>} : vector<32x16xbf16>, vector<16x768xbf16>, vector<32x768xf32> -> vector<32x768xf32>
    %129 = arith.addf %124, %128 : vector<32x768xf32>
    %c15 = arith.constant 15 : index
    %c0_133 = arith.constant 0 : index
    %c0_134 = arith.constant 0 : index
    %130 = vector.load %arg5[%c15, %c0_133, %c0_134] : memref<25x32x16xbf16, #tpu.memory_space<vmem>>, vector<1x32x16xbf16>
    %131 = vector.shape_cast %130 : vector<1x32x16xbf16> to vector<32x16xbf16>
    %c0_135 = arith.constant 0 : index
    %c54 = arith.constant 54 : index
    %132 = vector.load %arg9[%c0_135, %c54] : memref<16x896xbf16, #tpu.memory_space<vmem>>, vector<16x768xbf16>
    %cst_136 = arith.constant dense<0.000000e+00> : vector<32x768xf32>
    %133 = tpu.matmul %131, %132, %cst_136 {dimension_numbers = #tpu.dot_dimension_numbers<[1], [0], [0], [1], [0, 0, 1, 1], [], []>} : vector<32x16xbf16>, vector<16x768xbf16>, vector<32x768xf32> -> vector<32x768xf32>
    %134 = arith.addf %129, %133 : vector<32x768xf32>
    %c16_137 = arith.constant 16 : index
    %c0_138 = arith.constant 0 : index
    %c0_139 = arith.constant 0 : index
    %135 = vector.load %arg5[%c16_137, %c0_138, %c0_139] : memref<25x32x16xbf16, #tpu.memory_space<vmem>>, vector<1x32x16xbf16>
    %136 = vector.shape_cast %135 : vector<1x32x16xbf16> to vector<32x16xbf16>
    %c0_140 = arith.constant 0 : index
    %c55 = arith.constant 55 : index
    %137 = vector.load %arg9[%c0_140, %c55] : memref<16x896xbf16, #tpu.memory_space<vmem>>, vector<16x768xbf16>
    %cst_141 = arith.constant dense<0.000000e+00> : vector<32x768xf32>
    %138 = tpu.matmul %136, %137, %cst_141 {dimension_numbers = #tpu.dot_dimension_numbers<[1], [0], [0], [1], [0, 0, 1, 1], [], []>} : vector<32x16xbf16>, vector<16x768xbf16>, vector<32x768xf32> -> vector<32x768xf32>
    %139 = arith.addf %134, %138 : vector<32x768xf32>
    %c17 = arith.constant 17 : index
    %c0_142 = arith.constant 0 : index
    %c0_143 = arith.constant 0 : index
    %140 = vector.load %arg5[%c17, %c0_142, %c0_143] : memref<25x32x16xbf16, #tpu.memory_space<vmem>>, vector<1x32x16xbf16>
    %141 = vector.shape_cast %140 : vector<1x32x16xbf16> to vector<32x16xbf16>
    %c0_144 = arith.constant 0 : index
    %c56_145 = arith.constant 56 : index
    %142 = vector.load %arg9[%c0_144, %c56_145] : memref<16x896xbf16, #tpu.memory_space<vmem>>, vector<16x768xbf16>
    %cst_146 = arith.constant dense<0.000000e+00> : vector<32x768xf32>
    %143 = tpu.matmul %141, %142, %cst_146 {dimension_numbers = #tpu.dot_dimension_numbers<[1], [0], [0], [1], [0, 0, 1, 1], [], []>} : vector<32x16xbf16>, vector<16x768xbf16>, vector<32x768xf32> -> vector<32x768xf32>
    %144 = arith.addf %139, %143 : vector<32x768xf32>
    %c18_147 = arith.constant 18 : index
    %c0_148 = arith.constant 0 : index
    %c0_149 = arith.constant 0 : index
    %145 = vector.load %arg5[%c18_147, %c0_148, %c0_149] : memref<25x32x16xbf16, #tpu.memory_space<vmem>>, vector<1x32x16xbf16>
    %146 = vector.shape_cast %145 : vector<1x32x16xbf16> to vector<32x16xbf16>
    %c0_150 = arith.constant 0 : index
    %c57 = arith.constant 57 : index
    %147 = vector.load %arg9[%c0_150, %c57] : memref<16x896xbf16, #tpu.memory_space<vmem>>, vector<16x768xbf16>
    %cst_151 = arith.constant dense<0.000000e+00> : vector<32x768xf32>
    %148 = tpu.matmul %146, %147, %cst_151 {dimension_numbers = #tpu.dot_dimension_numbers<[1], [0], [0], [1], [0, 0, 1, 1], [], []>} : vector<32x16xbf16>, vector<16x768xbf16>, vector<32x768xf32> -> vector<32x768xf32>
    %149 = arith.addf %144, %148 : vector<32x768xf32>
    %c19_152 = arith.constant 19 : index
    %c0_153 = arith.constant 0 : index
    %c0_154 = arith.constant 0 : index
    %150 = vector.load %arg5[%c19_152, %c0_153, %c0_154] : memref<25x32x16xbf16, #tpu.memory_space<vmem>>, vector<1x32x16xbf16>
    %151 = vector.shape_cast %150 : vector<1x32x16xbf16> to vector<32x16xbf16>
    %c0_155 = arith.constant 0 : index
    %c58 = arith.constant 58 : index
    %152 = vector.load %arg9[%c0_155, %c58] : memref<16x896xbf16, #tpu.memory_space<vmem>>, vector<16x768xbf16>
    %cst_156 = arith.constant dense<0.000000e+00> : vector<32x768xf32>
    %153 = tpu.matmul %151, %152, %cst_156 {dimension_numbers = #tpu.dot_dimension_numbers<[1], [0], [0], [1], [0, 0, 1, 1], [], []>} : vector<32x16xbf16>, vector<16x768xbf16>, vector<32x768xf32> -> vector<32x768xf32>
    %154 = arith.addf %149, %153 : vector<32x768xf32>
    %c20_157 = arith.constant 20 : index
    %c0_158 = arith.constant 0 : index
    %c0_159 = arith.constant 0 : index
    %155 = vector.load %arg5[%c20_157, %c0_158, %c0_159] : memref<25x32x16xbf16, #tpu.memory_space<vmem>>, vector<1x32x16xbf16>
    %156 = vector.shape_cast %155 : vector<1x32x16xbf16> to vector<32x16xbf16>
    %c0_160 = arith.constant 0 : index
    %c72 = arith.constant 72 : index
    %157 = vector.load %arg9[%c0_160, %c72] : memref<16x896xbf16, #tpu.memory_space<vmem>>, vector<16x768xbf16>
    %cst_161 = arith.constant dense<0.000000e+00> : vector<32x768xf32>
    %158 = tpu.matmul %156, %157, %cst_161 {dimension_numbers = #tpu.dot_dimension_numbers<[1], [0], [0], [1], [0, 0, 1, 1], [], []>} : vector<32x16xbf16>, vector<16x768xbf16>, vector<32x768xf32> -> vector<32x768xf32>
    %159 = arith.addf %154, %158 : vector<32x768xf32>
    %c21_162 = arith.constant 21 : index
    %c0_163 = arith.constant 0 : index
    %c0_164 = arith.constant 0 : index
    %160 = vector.load %arg5[%c21_162, %c0_163, %c0_164] : memref<25x32x16xbf16, #tpu.memory_space<vmem>>, vector<1x32x16xbf16>
    %161 = vector.shape_cast %160 : vector<1x32x16xbf16> to vector<32x16xbf16>
    %c0_165 = arith.constant 0 : index
    %c73 = arith.constant 73 : index
    %162 = vector.load %arg9[%c0_165, %c73] : memref<16x896xbf16, #tpu.memory_space<vmem>>, vector<16x768xbf16>
    %cst_166 = arith.constant dense<0.000000e+00> : vector<32x768xf32>
    %163 = tpu.matmul %161, %162, %cst_166 {dimension_numbers = #tpu.dot_dimension_numbers<[1], [0], [0], [1], [0, 0, 1, 1], [], []>} : vector<32x16xbf16>, vector<16x768xbf16>, vector<32x768xf32> -> vector<32x768xf32>
    %164 = arith.addf %159, %163 : vector<32x768xf32>
    %c22_167 = arith.constant 22 : index
    %c0_168 = arith.constant 0 : index
    %c0_169 = arith.constant 0 : index
    %165 = vector.load %arg5[%c22_167, %c0_168, %c0_169] : memref<25x32x16xbf16, #tpu.memory_space<vmem>>, vector<1x32x16xbf16>
    %166 = vector.shape_cast %165 : vector<1x32x16xbf16> to vector<32x16xbf16>
    %c0_170 = arith.constant 0 : index
    %c74 = arith.constant 74 : index
    %167 = vector.load %arg9[%c0_170, %c74] : memref<16x896xbf16, #tpu.memory_space<vmem>>, vector<16x768xbf16>
    %cst_171 = arith.constant dense<0.000000e+00> : vector<32x768xf32>
    %168 = tpu.matmul %166, %167, %cst_171 {dimension_numbers = #tpu.dot_dimension_numbers<[1], [0], [0], [1], [0, 0, 1, 1], [], []>} : vector<32x16xbf16>, vector<16x768xbf16>, vector<32x768xf32> -> vector<32x768xf32>
    %169 = arith.addf %164, %168 : vector<32x768xf32>
    %c23 = arith.constant 23 : index
    %c0_172 = arith.constant 0 : index
    %c0_173 = arith.constant 0 : index
    %170 = vector.load %arg5[%c23, %c0_172, %c0_173] : memref<25x32x16xbf16, #tpu.memory_space<vmem>>, vector<1x32x16xbf16>
    %171 = vector.shape_cast %170 : vector<1x32x16xbf16> to vector<32x16xbf16>
    %c0_174 = arith.constant 0 : index
    %c75 = arith.constant 75 : index
    %172 = vector.load %arg9[%c0_174, %c75] : memref<16x896xbf16, #tpu.memory_space<vmem>>, vector<16x768xbf16>
    %cst_175 = arith.constant dense<0.000000e+00> : vector<32x768xf32>
    %173 = tpu.matmul %171, %172, %cst_175 {dimension_numbers = #tpu.dot_dimension_numbers<[1], [0], [0], [1], [0, 0, 1, 1], [], []>} : vector<32x16xbf16>, vector<16x768xbf16>, vector<32x768xf32> -> vector<32x768xf32>
    %174 = arith.addf %169, %173 : vector<32x768xf32>
    %c24_176 = arith.constant 24 : index
    %c0_177 = arith.constant 0 : index
    %c0_178 = arith.constant 0 : index
    %175 = vector.load %arg5[%c24_176, %c0_177, %c0_178] : memref<25x32x16xbf16, #tpu.memory_space<vmem>>, vector<1x32x16xbf16>
    %176 = vector.shape_cast %175 : vector<1x32x16xbf16> to vector<32x16xbf16>
    %c0_179 = arith.constant 0 : index
    %c76 = arith.constant 76 : index
    %177 = vector.load %arg9[%c0_179, %c76] : memref<16x896xbf16, #tpu.memory_space<vmem>>, vector<16x768xbf16>
    %cst_180 = arith.constant dense<0.000000e+00> : vector<32x768xf32>
    %178 = tpu.matmul %176, %177, %cst_180 {dimension_numbers = #tpu.dot_dimension_numbers<[1], [0], [0], [1], [0, 0, 1, 1], [], []>} : vector<32x16xbf16>, vector<16x768xbf16>, vector<32x768xf32> -> vector<32x768xf32>
    %179 = arith.addf %174, %178 : vector<32x768xf32>
    %180 = vector.extract_strided_slice %179 {offsets = [0, 0], sizes = [32, 640], strides = [1, 1]} : vector<32x768xf32> to vector<32x640xf32>
    %181 = vector.extract_strided_slice %179 {offsets = [0, 1], sizes = [32, 640], strides = [1, 1]} : vector<32x768xf32> to vector<32x640xf32>
    %182 = arith.maximumf %180, %181 : vector<32x640xf32>
    %183 = vector.extract_strided_slice %179 {offsets = [0, 18], sizes = [32, 640], strides = [1, 1]} : vector<32x768xf32> to vector<32x640xf32>
    %184 = vector.extract_strided_slice %179 {offsets = [0, 19], sizes = [32, 640], strides = [1, 1]} : vector<32x768xf32> to vector<32x640xf32>
    %185 = arith.maximumf %183, %184 : vector<32x640xf32>
    %186 = arith.maximumf %182, %185 : vector<32x640xf32>
    %c0_181 = arith.constant 0 : index
    %c0_182 = arith.constant 0 : index
    %187 = vector.load %arg6[%c0_181, %c0_182] : memref<32x1xf32, #tpu.memory_space<vmem>>, vector<32x1xf32>
    %188 = vector.broadcast %187 : vector<32x1xf32> to vector<32x640xf32>
    %189 = arith.addf %186, %188 : vector<32x640xf32>
    %cst_183 = arith.constant 0.000000e+00 : f32
    %190 = vector.broadcast %cst_183 : f32 to vector<32x640xf32>
    %191 = arith.maximumf %189, %190 : vector<32x640xf32>
    %c0_184 = arith.constant 0 : index
    %c0_185 = arith.constant 0 : index
    %c0_186 = arith.constant 0 : index
    %192 = vector.load %arg7[%c0_184, %c0_185, %c0_186] : memref<1x32x640xf32, #tpu.memory_space<vmem>>, vector<1x32x640xf32>
    %193 = vector.shape_cast %192 : vector<1x32x640xf32> to vector<32x640xf32>
    %194 = vector.shape_cast %191 : vector<32x640xf32> to vector<1x32x640xf32>
    tpu.vector_store %arg7[%c0_184, %c0_185, %c0_186], %194 {strides = array<i32>} : memref<1x32x640xf32, #tpu.memory_space<vmem>>, vector<1x32x640xf32>,
    return
  }
  func.func @transform_0(%arg0: i32) -> (i32, i32, i32) {
    %c0_i32 = arith.constant 0 : i32
    %c0_i32_0 = arith.constant 0 : i32
    %c0_i32_1 = arith.constant 0 : i32
    return %arg0, %c0_i32, %c0_i32_0 : i32, i32, i32
  }
  func.func @transform_1(%arg0: i32) -> (i32, i32) {
    %c0_i32 = arith.constant 0 : i32
    %c0_i32_0 = arith.constant 0 : i32
    %c0_i32_1 = arith.constant 0 : i32
    return %c0_i32, %c0_i32_0 : i32, i32
  }
  func.func @transform_2(%arg0: i32) -> (i32, i32) {
    %c0_i32 = arith.constant 0 : i32
    %c0_i32_0 = arith.constant 0 : i32
    %c0_i32_1 = arith.constant 0 : i32
    return %c0_i32, %c0_i32_0 : i32, i32
  }
  func.func @transform_3(%arg0: i32) -> (i32, i32) {
    %c0_i32 = arith.constant 0 : i32
    %c0_i32_0 = arith.constant 0 : i32
    %c0_i32_1 = arith.constant 0 : i32
    return %c0_i32, %c0_i32_0 : i32, i32
  }
  func.func @transform_4(%arg0: i32) -> (i32, i32, i32) {
    %c0_i32 = arith.constant 0 : i32
    %c0_i32_0 = arith.constant 0 : i32
    %c0_i32_1 = arith.constant 0 : i32
    %c0_i32_2 = arith.constant 0 : i32
    return %c0_i32, %c0_i32_0, %c0_i32_1 : i32, i32, i32
  }
  func.func @transform_5(%arg0: i32) -> (i32, i32) {
    %c0_i32 = arith.constant 0 : i32
    %c0_i32_0 = arith.constant 0 : i32
    %c0_i32_1 = arith.constant 0 : i32
    return %c0_i32, %c0_i32_0 : i32, i32
  }
  func.func @transform_6(%arg0: i32) -> (i32, i32, i32) {
    %c0_i32 = arith.constant 0 : i32
    %c0_i32_0 = arith.constant 0 : i32
    %c0_i32_1 = arith.constant 0 : i32
    return %arg0, %c0_i32, %c0_i32_0 : i32, i32, i32
  }
}

</mosaic_0001>

<llo_original>
// kernel: cnn_forward.1
$region0: #{cnn_forward.1}
  #allocation0 [shape = 'u32[]', space=smem, size = 0x4, offset = 0x4, fixed_abs, tag = 'smem constant byte address 0x4 - core index']
  #allocation1 [shape = 'u32[144,128]{1,0:T(1,128)}', space=vmem, size = 0x12000, scoped, tag = 'internal scratch']
  #allocation2 [shape = 'f32[72,768]{1,0:T(8,128)}', space=vmem, size = 0x36000, scoped, tag = 'scratch operand']
  #allocation3 [shape = 'bf16[16,896]{1,0:T(16,128)(2,1)}', space=vmem, size = 0x7000, scoped, tag = 'scratch operand']
  %s0 = inlined_call_operand.vmem [shape: f32[1,8,896], index: 0, kind: input, shape index: {}]
  %s1 = inlined_call_operand.vmem [shape: f32[1,768], index: 1, kind: input, shape index: {}]
  %s2 = inlined_call_operand.vmem [shape: f32[64,72], index: 2, kind: input, shape index: {}]
  %s3 = inlined_call_operand.vmem [shape: f32[16,1], index: 3, kind: input, shape index: {}]
  %s4 = inlined_call_operand.vmem [shape: bf16[25,32,16], index: 4, kind: input, shape index: {}]
  %s5 = inlined_call_operand.vmem [shape: f32[32,1], index: 5, kind: input, shape index: {}]
  %s6 = inlined_call_operand.vmem [shape: f32[1,32,640], index: 6, kind: output, shape index: {}]
  %s7 = sld [smem:[#allocation0]]
  $region34: #{cnn_forward.1} parent=0
    _
  %s9 = ssub.s32 1, %s7
  %s10 = scalar_select 0, %s9, %s7
  // Predicated region
  $region2: #{cnn_forward.1} parent=0 // pred_check
    _
  $region3: #{cnn_forward.1} parent=0 // pred_check_branch
    %12 = sbr.rel (0) target = $region5
  $region4: #{cnn_forward.1} parent=0 // pred_region
    _
  $region5: #{cnn_forward.1} parent=0 // pred_fallthru
    _
  // Predicated region
  $region6: #{cnn_forward.1} parent=0 // pred_check
    _
  $region7: #{cnn_forward.1} parent=0 // pred_check_branch
    %14 = sbr.rel (0) target = $region9
  $region8: #{cnn_forward.1} parent=0 // pred_region
    _
  $region9: #{cnn_forward.1} parent=0 // pred_fallthru
    _
  // Predicated region
  $region10: #{cnn_forward.1} parent=0 // pred_check
    _
  $region11: #{cnn_forward.1} parent=0 // pred_check_branch
    %16 = sbr.rel (0) target = $region13
  $region12: #{cnn_forward.1} parent=0 // pred_region
    _
  $region13: #{cnn_forward.1} parent=0 // pred_fallthru
    _
  // Predicated region
  $region14: #{cnn_forward.1} parent=0 // pred_check
    _
  $region15: #{cnn_forward.1} parent=0 // pred_check_branch
    %18 = sbr.rel (0) target = $region17
  $region16: #{cnn_forward.1} parent=0 // pred_region
    _
  $region17: #{cnn_forward.1} parent=0 // pred_fallthru
    _
  // Predicated region
  $region18: #{cnn_forward.1} parent=0 // pred_check
    _
  $region19: #{cnn_forward.1} parent=0 // pred_check_branch
    %20 = sbr.rel (0) target = $region21
  $region20: #{cnn_forward.1} parent=0 // pred_region
    _
  $region21: #{cnn_forward.1} parent=0 // pred_fallthru
    _
  // Predicated region
  $region22: #{cnn_forward.1} parent=0 // pred_check
    _
  $region23: #{cnn_forward.1} parent=0 // pred_check_branch
    %22 = sbr.rel (0) target = $region25
  $region24: #{cnn_forward.1} parent=0 // pred_region
    _
  $region25: #{cnn_forward.1} parent=0 // pred_fallthru
    _
  %v24 = vld [vmem:[%s0] sm:$0xff]
  %v25 = vld [vmem:[%s0 + $0x8] sm:$0xff]
  %v26 = vld [vmem:[%s0 + $0x10] sm:$0xff]
  %v27 = vld [vmem:[%s0 + $0x18] sm:$0xff]
  %v28 = vld [vmem:[%s0 + $0x20] sm:$0xff]
  %v29 = vld [vmem:[%s0 + $0x28] sm:$0xff]
  %30 = vst [vmem:[#allocation2] sm:$0xff] %v24
  %31 = vst [vmem:[#allocation2 + $0x8] sm:$0xff] %v25
  %32 = vst [vmem:[#allocation2 + $0x10] sm:$0xff] %v26
  %33 = vst [vmem:[#allocation2 + $0x18] sm:$0xff] %v27
  %34 = vst [vmem:[#allocation2 + $0x20] sm:$0xff] %v28
  %35 = vst [vmem:[#allocation2 + $0x28] sm:$0xff] %v29
  %v36 = vld [vmem:[%s0] sm:$0xff]
  %v37 = vld [vmem:[%s0 + $0x8] sm:$0xff]
  %v38 = vld [vmem:[%s0 + $0x10] sm:$0xff]
  %v39 = vld [vmem:[%s0 + $0x18] sm:$0xff]
  %v40 = vld [vmem:[%s0 + $0x20] sm:$0xff]
  %v41 = vld [vmem:[%s0 + $0x28] sm:$0xff]
  %v42 = vld [vmem:[%s0 + $0x30] sm:$0xff]
  %50 = vrot.lane.b32.xlu0 %v36, 127
  %v51 = vpop.permute.xlu0 %50
  %52 = vrot.lane.b32.xlu0 %v37, 127
  %v53 = vpop.permute.xlu0 %52
  %54 = vrot.lane.b32.xlu0 %v38, 127
  %v55 = vpop.permute.xlu0 %54
  %56 = vrot.lane.b32.xlu0 %v39, 127
  %v57 = vpop.permute.xlu0 %56
  %58 = vrot.lane.b32.xlu0 %v40, 127
  %v59 = vpop.permute.xlu0 %58
  %60 = vrot.lane.b32.xlu0 %v41, 127
  %v61 = vpop.permute.xlu0 %60
  %62 = vrot.lane.b32.xlu0 %v42, 127
  %v63 = vpop.permute.xlu0 %62
  %vm64 = vcmask 1039360
  %v65 = vsel %vm64, %v51, %v53
  %v66 = vsel %vm64, %v53, %v55
  %v67 = vsel %vm64, %v55, %v57
  %v68 = vsel %vm64, %v57, %v59
  %v69 = vsel %vm64, %v59, %v61
  %v70 = vsel %vm64, %v61, %v63
  %77 = vst [vmem:[#allocation2 + $0x30] sm:$0xff] %v65
  %78 = vst [vmem:[#allocation2 + $0x38] sm:$0xff] %v66
  %79 = vst [vmem:[#allocation2 + $0x40] sm:$0xff] %v67
  %80 = vst [vmem:[#allocation2 + $0x48] sm:$0xff] %v68
  %81 = vst [vmem:[#allocation2 + $0x50] sm:$0xff] %v69
  %82 = vst [vmem:[#allocation2 + $0x58] sm:$0xff] %v70
  %v83 = vld [vmem:[%s0] sm:$0xff]
  %v84 = vld [vmem:[%s0 + $0x8] sm:$0xff]
  %v85 = vld [vmem:[%s0 + $0x10] sm:$0xff]
  %v86 = vld [vmem:[%s0 + $0x18] sm:$0xff]
  %v87 = vld [vmem:[%s0 + $0x20] sm:$0xff]
  %v88 = vld [vmem:[%s0 + $0x28] sm:$0xff]
  %v89 = vld [vmem:[%s0 + $0x30] sm:$0xff]
  %97 = vrot.lane.b32.xlu0 %v83, 126
  %v98 = vpop.permute.xlu0 %97
  %99 = vrot.lane.b32.xlu0 %v84, 126
  %v100 = vpop.permute.xlu0 %99
  %101 = vrot.lane.b32.xlu0 %v85, 126
  %v102 = vpop.permute.xlu0 %101
  %103 = vrot.lane.b32.xlu0 %v86, 126
  %v104 = vpop.permute.xlu0 %103
  %105 = vrot.lane.b32.xlu0 %v87, 126
  %v106 = vpop.permute.xlu0 %105
  %107 = vrot.lane.b32.xlu0 %v88, 126
  %v108 = vpop.permute.xlu0 %107
  %109 = vrot.lane.b32.xlu0 %v89, 126
  %v110 = vpop.permute.xlu0 %109
  %vm111 = vcmask 1031168
  %v112 = vsel %vm111, %v98, %v100
  %v113 = vsel %vm111, %v100, %v102
  %v114 = vsel %vm111, %v102, %v104
  %v115 = vsel %vm111, %v104, %v106
  %v116 = vsel %vm111, %v106, %v108
  %v117 = vsel %vm111, %v108, %v110
  %124 = vst [vmem:[#allocation2 + $0x60] sm:$0xff] %v112
  %125 = vst [vmem:[#allocation2 + $0x68] sm:$0xff] %v113
  %126 = vst [vmem:[#allocation2 + $0x70] sm:$0xff] %v114
  %127 = vst [vmem:[#allocation2 + $0x78] sm:$0xff] %v115
  %128 = vst [vmem:[#allocation2 + $0x80] sm:$0xff] %v116
  %129 = vst [vmem:[#allocation2 + $0x88] sm:$0xff] %v117
  %v130 = vld [vmem:[%s0] sm:$0xff]
  %v131 = vld [vmem:[%s0 + $0x8] sm:$0xff]
  %v132 = vld [vmem:[%s0 + $0x10] sm:$0xff]
  %v133 = vld [vmem:[%s0 + $0x18] sm:$0xff]
  %v134 = vld [vmem:[%s0 + $0x20] sm:$0xff]
  %v135 = vld [vmem:[%s0 + $0x28] sm:$0xff]
  %v136 = vld [vmem:[%s0 + $0x30] sm:$0xff]
  %144 = vrot.lane.b32.xlu0 %v130, 110
  %v145 = vpop.permute.xlu0 %144
  %146 = vrot.lane.b32.xlu0 %v131, 110
  %v147 = vpop.permute.xlu0 %146
  %148 = vrot.lane.b32.xlu0 %v132, 110
  %v149 = vpop.permute.xlu0 %148
  %150 = vrot.lane.b32.xlu0 %v133, 110
  %v151 = vpop.permute.xlu0 %150
  %152 = vrot.lane.b32.xlu0 %v134, 110
  %v153 = vpop.permute.xlu0 %152
  %154 = vrot.lane.b32.xlu0 %v135, 110
  %v155 = vpop.permute.xlu0 %154
  %156 = vrot.lane.b32.xlu0 %v136, 110
  %v157 = vpop.permute.xlu0 %156
  %vm158 = vcmask 900096
  %v159 = vsel %vm158, %v145, %v147
  %v160 = vsel %vm158, %v147, %v149
  %v161 = vsel %vm158, %v149, %v151
  %v162 = vsel %vm158, %v151, %v153
  %v163 = vsel %vm158, %v153, %v155
  %v164 = vsel %vm158, %v155, %v157
  %171 = vst [vmem:[#allocation2 + $0x90] sm:$0xff] %v159
  %172 = vst [vmem:[#allocation2 + $0x98] sm:$0xff] %v160
  %173 = vst [vmem:[#allocation2 + $0xa0] sm:$0xff] %v161
  %174 = vst [vmem:[#allocation2 + $0xa8] sm:$0xff] %v162
  %175 = vst [vmem:[#allocation2 + $0xb0] sm:$0xff] %v163
  %176 = vst [vmem:[#allocation2 + $0xb8] sm:$0xff] %v164
  %v177 = vld [vmem:[%s0] sm:$0xff]
  %v178 = vld [vmem:[%s0 + $0x8] sm:$0xff]
  %v179 = vld [vmem:[%s0 + $0x10] sm:$0xff]
  %v180 = vld [vmem:[%s0 + $0x18] sm:$0xff]
  %v181 = vld [vmem:[%s0 + $0x20] sm:$0xff]
  %v182 = vld [vmem:[%s0 + $0x28] sm:$0xff]
  %v183 = vld [vmem:[%s0 + $0x30] sm:$0xff]
  %191 = vrot.lane.b32.xlu0 %v177, 109
  %v192 = vpop.permute.xlu0 %191
  %193 = vrot.lane.b32.xlu0 %v178, 109
  %v194 = vpop.permute.xlu0 %193
  %195 = vrot.lane.b32.xlu0 %v179, 109
  %v196 = vpop.permute.xlu0 %195
  %197 = vrot.lane.b32.xlu0 %v180, 109
  %v198 = vpop.permute.xlu0 %197
  %199 = vrot.lane.b32.xlu0 %v181, 109
  %v200 = vpop.permute.xlu0 %199
  %201 = vrot.lane.b32.xlu0 %v182, 109
  %v202 = vpop.permute.xlu0 %201
  %203 = vrot.lane.b32.xlu0 %v183, 109
  %v204 = vpop.permute.xlu0 %203
  %vm205 = vcmask 891904
  %v206 = vsel %vm205, %v192, %v194
  %v207 = vsel %vm205, %v194, %v196
  %v208 = vsel %vm205, %v196, %v198
  %v209 = vsel %vm205, %v198, %v200
  %v210 = vsel %vm205, %v200, %v202
  %v211 = vsel %vm205, %v202, %v204
  %218 = vst [vmem:[#allocation2 + $0xc0] sm:$0xff] %v206
  %219 = vst [vmem:[#allocation2 + $0xc8] sm:$0xff] %v207
  %220 = vst [vmem:[#allocation2 + $0xd0] sm:$0xff] %v208
  %221 = vst [vmem:[#allocation2 + $0xd8] sm:$0xff] %v209
  %222 = vst [vmem:[#allocation2 + $0xe0] sm:$0xff] %v210
  %223 = vst [vmem:[#allocation2 + $0xe8] sm:$0xff] %v211
  %v224 = vld [vmem:[%s0] sm:$0xff]
  %v225 = vld [vmem:[%s0 + $0x8] sm:$0xff]
  %v226 = vld [vmem:[%s0 + $0x10] sm:$0xff]
  %v227 = vld [vmem:[%s0 + $0x18] sm:$0xff]
  %v228 = vld [vmem:[%s0 + $0x20] sm:$0xff]
  %v229 = vld [vmem:[%s0 + $0x28] sm:$0xff]
  %v230 = vld [vmem:[%s0 + $0x30] sm:$0xff]
  %238 = vrot.lane.b32.xlu0 %v224, 108
  %v239 = vpop.permute.xlu0 %238
  %240 = vrot.lane.b32.xlu0 %v225, 108
  %v241 = vpop.permute.xlu0 %240
  %242 = vrot.lane.b32.xlu0 %v226, 108
  %v243 = vpop.permute.xlu0 %242
  %244 = vrot.lane.b32.xlu0 %v227, 108
  %v245 = vpop.permute.xlu0 %244
  %246 = vrot.lane.b32.xlu0 %v228, 108
  %v247 = vpop.permute.xlu0 %246
  %248 = vrot.lane.b32.xlu0 %v229, 108
  %v249 = vpop.permute.xlu0 %248
  %250 = vrot.lane.b32.xlu0 %v230, 108
  %v251 = vpop.permute.xlu0 %250
  %vm252 = vcmask 883712
  %v253 = vsel %vm252, %v239, %v241
  %v254 = vsel %vm252, %v241, %v243
  %v255 = vsel %vm252, %v243, %v245
  %v256 = vsel %vm252, %v245, %v247
  %v257 = vsel %vm252, %v247, %v249
  %v258 = vsel %vm252, %v249, %v251
  %265 = vst [vmem:[#allocation2 + $0xf0] sm:$0xff] %v253
  %266 = vst [vmem:[#allocation2 + $0xf8] sm:$0xff] %v254
  %267 = vst [vmem:[#allocation2 + $0x100] sm:$0xff] %v255
  %268 = vst [vmem:[#allocation2 + $0x108] sm:$0xff] %v256
  %269 = vst [vmem:[#allocation2 + $0x110] sm:$0xff] %v257
  %270 = vst [vmem:[#allocation2 + $0x118] sm:$0xff] %v258
  %v271 = vld [vmem:[%s0] sm:$0xff]
  %v272 = vld [vmem:[%s0 + $0x8] sm:$0xff]
  %v273 = vld [vmem:[%s0 + $0x10] sm:$0xff]
  %v274 = vld [vmem:[%s0 + $0x18] sm:$0xff]
  %v275 = vld [vmem:[%s0 + $0x20] sm:$0xff]
  %v276 = vld [vmem:[%s0 + $0x28] sm:$0xff]
  %v277 = vld [vmem:[%s0 + $0x30] sm:$0xff]
  %285 = vrot.lane.b32.xlu0 %v271, 92
  %v286 = vpop.permute.xlu0 %285
  %287 = vrot.lane.b32.xlu0 %v272, 92
  %v288 = vpop.permute.xlu0 %287
  %289 = vrot.lane.b32.xlu0 %v273, 92
  %v290 = vpop.permute.xlu0 %289
  %291 = vrot.lane.b32.xlu0 %v274, 92
  %v292 = vpop.permute.xlu0 %291
  %293 = vrot.lane.b32.xlu0 %v275, 92
  %v294 = vpop.permute.xlu0 %293
  %295 = vrot.lane.b32.xlu0 %v276, 92
  %v296 = vpop.permute.xlu0 %295
  %297 = vrot.lane.b32.xlu0 %v277, 92
  %v298 = vpop.permute.xlu0 %297
  %vm299 = vcmask 752640
  %v300 = vsel %vm299, %v286, %v288
  %v301 = vsel %vm299, %v288, %v290
  %v302 = vsel %vm299, %v290, %v292
  %v303 = vsel %vm299, %v292, %v294
  %v304 = vsel %vm299, %v294, %v296
  %v305 = vsel %vm299, %v296, %v298
  %312 = vst [vmem:[#allocation2 + $0x120] sm:$0xff] %v300
  %313 = vst [vmem:[#allocation2 + $0x128] sm:$0xff] %v301
  %314 = vst [vmem:[#allocation2 + $0x130] sm:$0xff] %v302
  %315 = vst [vmem:[#allocation2 + $0x138] sm:$0xff] %v303
  %316 = vst [vmem:[#allocation2 + $0x140] sm:$0xff] %v304
  %317 = vst [vmem:[#allocation2 + $0x148] sm:$0xff] %v305
  %v318 = vld [vmem:[%s0] sm:$0xff]
  %v319 = vld [vmem:[%s0 + $0x8] sm:$0xff]
  %v320 = vld [vmem:[%s0 + $0x10] sm:$0xff]
  %v321 = vld [vmem:[%s0 + $0x18] sm:$0xff]
  %v322 = vld [vmem:[%s0 + $0x20] sm:$0xff]
  %v323 = vld [vmem:[%s0 + $0x28] sm:$0xff]
  %v324 = vld [vmem:[%s0 + $0x30] sm:$0xff]
  %332 = vrot.lane.b32.xlu0 %v318, 91
  %v333 = vpop.permute.xlu0 %332
  %334 = vrot.lane.b32.xlu0 %v319, 91
  %v335 = vpop.permute.xlu0 %334
  %336 = vrot.lane.b32.xlu0 %v320, 91
  %v337 = vpop.permute.xlu0 %336
  %338 = vrot.lane.b32.xlu0 %v321, 91
  %v339 = vpop.permute.xlu0 %338
  %340 = vrot.lane.b32.xlu0 %v322, 91
  %v341 = vpop.permute.xlu0 %340
  %342 = vrot.lane.b32.xlu0 %v323, 91
  %v343 = vpop.permute.xlu0 %342
  %344 = vrot.lane.b32.xlu0 %v324, 91
  %v345 = vpop.permute.xlu0 %344
  %vm346 = vcmask 744448
  %v347 = vsel %vm346, %v333, %v335
  %v348 = vsel %vm346, %v335, %v337
  %v349 = vsel %vm346, %v337, %v339
  %v350 = vsel %vm346, %v339, %v341
  %v351 = vsel %vm346, %v341, %v343
  %v352 = vsel %vm346, %v343, %v345
  %359 = vst [vmem:[#allocation2 + $0x150] sm:$0xff] %v347
  %360 = vst [vmem:[#allocation2 + $0x158] sm:$0xff] %v348
  %361 = vst [vmem:[#allocation2 + $0x160] sm:$0xff] %v349
  %362 = vst [vmem:[#allocation2 + $0x168] sm:$0xff] %v350
  %363 = vst [vmem:[#allocation2 + $0x170] sm:$0xff] %v351
  %364 = vst [vmem:[#allocation2 + $0x178] sm:$0xff] %v352
  %v365 = vld [vmem:[%s0] sm:$0xff]
  %v366 = vld [vmem:[%s0 + $0x8] sm:$0xff]
  %v367 = vld [vmem:[%s0 + $0x10] sm:$0xff]
  %v368 = vld [vmem:[%s0 + $0x18] sm:$0xff]
  %v369 = vld [vmem:[%s0 + $0x20] sm:$0xff]
  %v370 = vld [vmem:[%s0 + $0x28] sm:$0xff]
  %v371 = vld [vmem:[%s0 + $0x30] sm:$0xff]
  %379 = vrot.lane.b32.xlu0 %v365, 90
  %v380 = vpop.permute.xlu0 %379
  %381 = vrot.lane.b32.xlu0 %v366, 90
  %v382 = vpop.permute.xlu0 %381
  %383 = vrot.lane.b32.xlu0 %v367, 90
  %v384 = vpop.permute.xlu0 %383
  %385 = vrot.lane.b32.xlu0 %v368, 90
  %v386 = vpop.permute.xlu0 %385
  %387 = vrot.lane.b32.xlu0 %v369, 90
  %v388 = vpop.permute.xlu0 %387
  %389 = vrot.lane.b32.xlu0 %v370, 90
  %v390 = vpop.permute.xlu0 %389
  %391 = vrot.lane.b32.xlu0 %v371, 90
  %v392 = vpop.permute.xlu0 %391
  %vm393 = vcmask 736256
  %v394 = vsel %vm393, %v380, %v382
  %v395 = vsel %vm393, %v382, %v384
  %v396 = vsel %vm393, %v384, %v386
  %v397 = vsel %vm393, %v386, %v388
  %v398 = vsel %vm393, %v388, %v390
  %v399 = vsel %vm393, %v390, %v392
  %406 = vst [vmem:[#allocation2 + $0x180] sm:$0xff] %v394
  %407 = vst [vmem:[#allocation2 + $0x188] sm:$0xff] %v395
  %408 = vst [vmem:[#allocation2 + $0x190] sm:$0xff] %v396
  %409 = vst [vmem:[#allocation2 + $0x198] sm:$0xff] %v397
  %410 = vst [vmem:[#allocation2 + $0x1a0] sm:$0xff] %v398
  %411 = vst [vmem:[#allocation2 + $0x1a8] sm:$0xff] %v399
  %v412 = vld [vmem:[%s2] sm:$0xff]
  %v413 = vld [vmem:[%s2 + $0x8] sm:$0xff]
  %v414 = vld [vmem:[#allocation2] sm:$0xff]
  %v415 = vld [vmem:[#allocation2 + $0x8] sm:$0xff]
  %v416 = vld [vmem:[#allocation2 + $0x10] sm:$0xff]
  %v417 = vld [vmem:[#allocation2 + $0x18] sm:$0xff]
  %v418 = vld [vmem:[#allocation2 + $0x20] sm:$0xff]
  %v419 = vld [vmem:[#allocation2 + $0x28] sm:$0xff]
  %v420 = vld [vmem:[#allocation2 + $0x30] sm:$0xff]
  %v421 = vld [vmem:[#allocation2 + $0x38] sm:$0xff]
  %v422 = vld [vmem:[#allocation2 + $0x40] sm:$0xff]
  %v423 = vld [vmem:[#allocation2 + $0x48] sm:$0xff]
  %v424 = vld [vmem:[#allocation2 + $0x50] sm:$0xff]
  %v425 = vld [vmem:[#allocation2 + $0x58] sm:$0xff]
  %v426 = vld [vmem:[#allocation2 + $0x60] sm:$0xff]
  %v427 = vld [vmem:[#allocation2 + $0x68] sm:$0xff]
  %v428 = vld [vmem:[#allocation2 + $0x70] sm:$0xff]
  %v429 = vld [vmem:[#allocation2 + $0x78] sm:$0xff]
  %v430 = vld [vmem:[#allocation2 + $0x80] sm:$0xff]
  %v431 = vld [vmem:[#allocation2 + $0x88] sm:$0xff]
  %v432 = vld [vmem:[#allocation2 + $0x90] sm:$0xff]
  %v433 = vld [vmem:[#allocation2 + $0x98] sm:$0xff]
  %v434 = vld [vmem:[#allocation2 + $0xa0] sm:$0xff]
  %v435 = vld [vmem:[#allocation2 + $0xa8] sm:$0xff]
  %v436 = vld [vmem:[#allocation2 + $0xb0] sm:$0xff]
  %v437 = vld [vmem:[#allocation2 + $0xb8] sm:$0xff]
  %v438 = vld [vmem:[#allocation2 + $0xc0] sm:$0xff]
  %v439 = vld [vmem:[#allocation2 + $0xc8] sm:$0xff]
  %v440 = vld [vmem:[#allocation2 + $0xd0] sm:$0xff]
  %v441 = vld [vmem:[#allocation2 + $0xd8] sm:$0xff]
  %v442 = vld [vmem:[#allocation2 + $0xe0] sm:$0xff]
  %v443 = vld [vmem:[#allocation2 + $0xe8] sm:$0xff]
  %v444 = vld [vmem:[#allocation2 + $0xf0] sm:$0xff]
  %v445 = vld [vmem:[#allocation2 + $0xf8] sm:$0xff]
  %v446 = vld [vmem:[#allocation2 + $0x100] sm:$0xff]
  %v447 = vld [vmem:[#allocation2 + $0x108] sm:$0xff]
  %v448 = vld [vmem:[#allocation2 + $0x110] sm:$0xff]
  %v449 = vld [vmem:[#allocation2 + $0x118] sm:$0xff]
  %v450 = vld [vmem:[#allocation2 + $0x120] sm:$0xff]
  %v451 = vld [vmem:[#allocation2 + $0x128] sm:$0xff]
  %v452 = vld [vmem:[#allocation2 + $0x130] sm:$0xff]
  %v453 = vld [vmem:[#allocation2 + $0x138] sm:$0xff]
  %v454 = vld [vmem:[#allocation2 + $0x140] sm:$0xff]
  %v455 = vld [vmem:[#allocation2 + $0x148] sm:$0xff]
  %v456 = vld [vmem:[#allocation2 + $0x150] sm:$0xff]
  %v457 = vld [vmem:[#allocation2 + $0x158] sm:$0xff]
  %v458 = vld [vmem:[#allocation2 + $0x160] sm:$0xff]
  %v459 = vld [vmem:[#allocation2 + $0x168] sm:$0xff]
  %v460 = vld [vmem:[#allocation2 + $0x170] sm:$0xff]
  %v461 = vld [vmem:[#allocation2 + $0x178] sm:$0xff]
  %v462 = vld [vmem:[#allocation2 + $0x180] sm:$0xff]
  %v463 = vld [vmem:[#allocation2 + $0x188] sm:$0xff]
  %v464 = vld [vmem:[#allocation2 + $0x190] sm:$0xff]
  %v465 = vld [vmem:[#allocation2 + $0x198] sm:$0xff]
  %v466 = vld [vmem:[#allocation2 + $0x1a0] sm:$0xff]
  %v467 = vld [vmem:[#allocation2 + $0x1a8] sm:$0xff]
  %vm468 = vcmask 588800
  %v470 = vsel %vm468, %v412, 0
  %v473 = vsel %vm468, %v413, 0
  %475 = vmatprep.subr.mxu0 %v415
  %476 = vmatpush1.msra.mxu0 %v414
  %477 = vmatprep.subr.mxu0 %v421
  %478 = vmatpush1.msra.mxu0 %v420
  %479 = vmatprep.subr.mxu0 %v427
  %480 = vmatpush1.msra.mxu0 %v426
  %481 = vmatprep.subr.mxu0 %v433
  %482 = vmatpush1.msra.mxu0 %v432
  %483 = vmatprep.subr.mxu0 %v439
  %484 = vmatpush1.msra.mxu0 %v438
  %485 = vmatprep.subr.mxu0 %v445
  %486 = vmatpush1.msra.mxu0 %v444
  %487 = vmatprep.subr.mxu0 %v451
  %488 = vmatpush1.msra.mxu0 %v450
  %489 = vmatprep.subr.mxu0 %v457
  %490 = vmatpush1.msra.mxu0 %v456
  %491 = vmatprep.subr.mxu0 %v463
  %492 = vmatpush1.msra.mxu0 %v462
  %493 = vmatprep.subr.mxu0 0.0
  %494 = vmatpush1.msra.mxu0 0.0
  %495 = vmatprep.subr.mxu0 0.0
  %496 = vmatpush1.msra.mxu0 0.0
  %497 = vmatprep.subr.mxu0 0.0
  %498 = vmatpush1.msra.mxu0 0.0
  %499 = vmatprep.subr.mxu0 0.0
  %500 = vmatpush1.msra.mxu0 0.0
  %501 = vmatprep.subr.mxu0 0.0
  %502 = vmatpush1.msra.mxu0 0.0
  %503 = vmatprep.subr.mxu0 0.0
  %504 = vmatpush1.msra.mxu0 0.0
  %505 = vmatprep.subr.mxu0 0.0
  %506 = vmatpush1.msra.mxu0 0.0
  %507 = vmatprep.subr.mxu0 0.0
  %508 = vmatpush1.msra.mxu0 0.0
  %509 = vmatprep.subr.mxu0 0.0
  %510 = vmatpush1.msra.mxu0 0.0
  %511 = vmatprep.subr.mxu0 0.0
  %512 = vmatpush1.msra.mxu0 0.0
  %513 = vmatprep.subr.mxu0 0.0
  %514 = vmatpush1.msra.mxu0 0.0
  %515 = vmatprep.subr.mxu0 0.0
  %516 = vmatpush1.msra.mxu0 0.0
  %517 = vmatprep.subr.mxu0 0.0
  %518 = vmatpush1.msra.mxu0 0.0
  %519 = vmatprep.subr.mxu0 0.0
  %520 = vmatpush1.msra.mxu0 0.0
  %521 = vmatprep.subr.mxu0 0.0
  %522 = vmatpush1.msra.mxu0 0.0
  %523 = vmatprep.subr.mxu0 0.0
  %524 = vmatpush1.msra.mxu0 0.0
  %525 = vmatprep.subr.mxu0 0.0
  %526 = vmatpush1.msra.mxu0 0.0
  %527 = vmatprep.subr.mxu0 0.0
  %528 = vmatpush1.msra.mxu0 0.0
  %529 = vmatprep.subr.mxu0 0.0
  %530 = vmatpush1.msra.mxu0 0.0
  %531 = vmatprep.subr.mxu0 0.0
  %532 = vmatpush1.msra.mxu0 0.0
  %533 = vmatprep.subr.mxu0 0.0
  %534 = vmatpush1.msra.mxu0 0.0
  %535 = vmatprep.subr.mxu0 0.0
  %536 = vmatpush1.msra.mxu0 0.0
  %537 = vmatprep.subr.mxu0 0.0
  %538 = vmatpush1.msra.mxu0 0.0
  %539 = vmatprep.mubr.f32.mxu0 0.0
  %540 = vmatmul.mubr.f32.gmra.mrb[0].mxu0 %v470
  %v541 = vpop.f32.mrb[0].mxu0
  %v542 = vadd.f32 0.0, %v541
  %v543 = vpop.f32.mrb[0].mxu0
  %v544 = vadd.f32 0.0, %v543
  %545 = vmatprep.mubr.f32.mxu0 0.0
  %546 = vmatmul.mubr.f32.gmra.mrb[0].mxu0 %v473
  %v547 = vpop.f32.mrb[0].mxu0
  %v548 = vadd.f32 0.0, %v547
  %v549 = vpop.f32.mrb[0].mxu0
  %v550 = vadd.f32 0.0, %v549
  %551 = vdwg.mxu0
  %552 = vmatprep.subr.mxu0 %v417
  %553 = vmatpush1.msra.mxu0 %v416
  %554 = vmatprep.subr.mxu0 %v423
  %555 = vmatpush1.msra.mxu0 %v422
  %556 = vmatprep.subr.mxu0 %v429
  %557 = vmatpush1.msra.mxu0 %v428
  %558 = vmatprep.subr.mxu0 %v435
  %559 = vmatpush1.msra.mxu0 %v434
  %560 = vmatprep.subr.mxu0 %v441
  %561 = vmatpush1.msra.mxu0 %v440
  %562 = vmatprep.subr.mxu0 %v447
  %563 = vmatpush1.msra.mxu0 %v446
  %564 = vmatprep.subr.mxu0 %v453
  %565 = vmatpush1.msra.mxu0 %v452
  %566 = vmatprep.subr.mxu0 %v459
  %567 = vmatpush1.msra.mxu0 %v458
  %568 = vmatprep.subr.mxu0 %v465
  %569 = vmatpush1.msra.mxu0 %v464
  %570 = vmatprep.subr.mxu0 0.0
  %571 = vmatpush1.msra.mxu0 0.0
  %572 = vmatprep.subr.mxu0 0.0
  %573 = vmatpush1.msra.mxu0 0.0
  %574 = vmatprep.subr.mxu0 0.0
  %575 = vmatpush1.msra.mxu0 0.0
  %576 = vmatprep.subr.mxu0 0.0
  %577 = vmatpush1.msra.mxu0 0.0
  %578 = vmatprep.subr.mxu0 0.0
  %579 = vmatpush1.msra.mxu0 0.0
  %580 = vmatprep.subr.mxu0 0.0
  %581 = vmatpush1.msra.mxu0 0.0
  %582 = vmatprep.subr.mxu0 0.0
  %583 = vmatpush1.msra.mxu0 0.0
  %584 = vmatprep.subr.mxu0 0.0
  %585 = vmatpush1.msra.mxu0 0.0
  %586 = vmatprep.subr.mxu0 0.0
  %587 = vmatpush1.msra.mxu0 0.0
  %588 = vmatprep.subr.mxu0 0.0
  %589 = vmatpush1.msra.mxu0 0.0
  %590 = vmatprep.subr.mxu0 0.0
  %591 = vmatpush1.msra.mxu0 0.0
  %592 = vmatprep.subr.mxu0 0.0
  %593 = vmatpush1.msra.mxu0 0.0
  %594 = vmatprep.subr.mxu0 0.0
  %595 = vmatpush1.msra.mxu0 0.0
  %596 = vmatprep.subr.mxu0 0.0
  %597 = vmatpush1.msra.mxu0 0.0
  %598 = vmatprep.subr.mxu0 0.0
  %599 = vmatpush1.msra.mxu0 0.0
  %600 = vmatprep.subr.mxu0 0.0
  %601 = vmatpush1.msra.mxu0 0.0
  %602 = vmatprep.subr.mxu0 0.0
  %603 = vmatpush1.msra.mxu0 0.0
  %604 = vmatprep.subr.mxu0 0.0
  %605 = vmatpush1.msra.mxu0 0.0
  %606 = vmatprep.subr.mxu0 0.0
  %607 = vmatpush1.msra.mxu0 0.0
  %608 = vmatprep.subr.mxu0 0.0
  %609 = vmatpush1.msra.mxu0 0.0
  %610 = vmatprep.subr.mxu0 0.0
  %611 = vmatpush1.msra.mxu0 0.0
  %612 = vmatprep.subr.mxu0 0.0
  %613 = vmatpush1.msra.mxu0 0.0
  %614 = vmatprep.subr.mxu0 0.0
  %615 = vmatpush1.msra.mxu0 0.0
  %616 = vmatprep.mubr.f32.mxu0 0.0
  %617 = vmatmul.mubr.f32.gmra.mrb[0].mxu0 %v470
  %v618 = vpop.f32.mrb[0].mxu0
  %v619 = vadd.f32 0.0, %v618
  %v620 = vpop.f32.mrb[0].mxu0
  %v621 = vadd.f32 0.0, %v620
  %622 = vmatprep.mubr.f32.mxu0 0.0
  %623 = vmatmul.mubr.f32.gmra.mrb[0].mxu0 %v473
  %v624 = vpop.f32.mrb[0].mxu0
  %v625 = vadd.f32 0.0, %v624
  %v626 = vpop.f32.mrb[0].mxu0
  %v627 = vadd.f32 0.0, %v626
  %628 = vdwg.mxu0
  %629 = vmatprep.subr.mxu0 %v419
  %630 = vmatpush1.msra.mxu0 %v418
  %631 = vmatprep.subr.mxu0 %v425
  %632 = vmatpush1.msra.mxu0 %v424
  %633 = vmatprep.subr.mxu0 %v431
  %634 = vmatpush1.msra.mxu0 %v430
  %635 = vmatprep.subr.mxu0 %v437
  %636 = vmatpush1.msra.mxu0 %v436
  %637 = vmatprep.subr.mxu0 %v443
  %638 = vmatpush1.msra.mxu0 %v442
  %639 = vmatprep.subr.mxu0 %v449
  %640 = vmatpush1.msra.mxu0 %v448
  %641 = vmatprep.subr.mxu0 %v455
  %642 = vmatpush1.msra.mxu0 %v454
  %643 = vmatprep.subr.mxu0 %v461
  %644 = vmatpush1.msra.mxu0 %v460
  %645 = vmatprep.subr.mxu0 %v467
  %646 = vmatpush1.msra.mxu0 %v466
  %647 = vmatprep.subr.mxu0 0.0
  %648 = vmatpush1.msra.mxu0 0.0
  %649 = vmatprep.subr.mxu0 0.0
  %650 = vmatpush1.msra.mxu0 0.0
  %651 = vmatprep.subr.mxu0 0.0
  %652 = vmatpush1.msra.mxu0 0.0
  %653 = vmatprep.subr.mxu0 0.0
  %654 = vmatpush1.msra.mxu0 0.0
  %655 = vmatprep.subr.mxu0 0.0
  %656 = vmatpush1.msra.mxu0 0.0
  %657 = vmatprep.subr.mxu0 0.0
  %658 = vmatpush1.msra.mxu0 0.0
  %659 = vmatprep.subr.mxu0 0.0
  %660 = vmatpush1.msra.mxu0 0.0
  %661 = vmatprep.subr.mxu0 0.0
  %662 = vmatpush1.msra.mxu0 0.0
  %663 = vmatprep.subr.mxu0 0.0
  %664 = vmatpush1.msra.mxu0 0.0
  %665 = vmatprep.subr.mxu0 0.0
  %666 = vmatpush1.msra.mxu0 0.0
  %667 = vmatprep.subr.mxu0 0.0
  %668 = vmatpush1.msra.mxu0 0.0
  %669 = vmatprep.subr.mxu0 0.0
  %670 = vmatpush1.msra.mxu0 0.0
  %671 = vmatprep.subr.mxu0 0.0
  %672 = vmatpush1.msra.mxu0 0.0
  %673 = vmatprep.subr.mxu0 0.0
  %674 = vmatpush1.msra.mxu0 0.0
  %675 = vmatprep.subr.mxu0 0.0
  %676 = vmatpush1.msra.mxu0 0.0
  %677 = vmatprep.subr.mxu0 0.0
  %678 = vmatpush1.msra.mxu0 0.0
  %679 = vmatprep.subr.mxu0 0.0
  %680 = vmatpush1.msra.mxu0 0.0
  %681 = vmatprep.subr.mxu0 0.0
  %682 = vmatpush1.msra.mxu0 0.0
  %683 = vmatprep.subr.mxu0 0.0
  %684 = vmatpush1.msra.mxu0 0.0
  %685 = vmatprep.subr.mxu0 0.0
  %686 = vmatpush1.msra.mxu0 0.0
  %687 = vmatprep.subr.mxu0 0.0
  %688 = vmatpush1.msra.mxu0 0.0
  %689 = vmatprep.subr.mxu0 0.0
  %690 = vmatpush1.msra.mxu0 0.0
  %691 = vmatprep.subr.mxu0 0.0
  %692 = vmatpush1.msra.mxu0 0.0
  %693 = vmatprep.mubr.f32.mxu0 0.0
  %694 = vmatmul.mubr.f32.gmra.mrb[0].mxu0 %v470
  %v695 = vpop.f32.mrb[0].mxu0
  %v696 = vadd.f32 0.0, %v695
  %v697 = vpop.f32.mrb[0].mxu0
  %v698 = vadd.f32 0.0, %v697
  %699 = vmatprep.mubr.f32.mxu0 0.0
  %700 = vmatmul.mubr.f32.gmra.mrb[0].mxu0 %v473
  %v701 = vpop.f32.mrb[0].mxu0
  %v702 = vadd.f32 0.0, %v701
  %v703 = vpop.f32.mrb[0].mxu0
  %v704 = vadd.f32 0.0, %v703
  %705 = vdwg.mxu0
  %v706 = vld [vmem:[%s2 + $0x10] sm:$0xff]
  %v707 = vld [vmem:[%s2 + $0x18] sm:$0xff]
  %v709 = vsel %vm468, %v706, 0
  %v712 = vsel %vm468, %v707, 0
  %714 = vmatprep.subr.mxu0 %v415
  %715 = vmatpush1.msra.mxu0 %v414
  %716 = vmatprep.subr.mxu0 %v421
  %717 = vmatpush1.msra.mxu0 %v420
  %718 = vmatprep.subr.mxu0 %v427
  %719 = vmatpush1.msra.mxu0 %v426
  %720 = vmatprep.subr.mxu0 %v433
  %721 = vmatpush1.msra.mxu0 %v432
  %722 = vmatprep.subr.mxu0 %v439
  %723 = vmatpush1.msra.mxu0 %v438
  %724 = vmatprep.subr.mxu0 %v445
  %725 = vmatpush1.msra.mxu0 %v444
  %726 = vmatprep.subr.mxu0 %v451
  %727 = vmatpush1.msra.mxu0 %v450
  %728 = vmatprep.subr.mxu0 %v457
  %729 = vmatpush1.msra.mxu0 %v456
  %730 = vmatprep.subr.mxu0 %v463
  %731 = vmatpush1.msra.mxu0 %v462
  %732 = vmatprep.subr.mxu0 0.0
  %733 = vmatpush1.msra.mxu0 0.0
  %734 = vmatprep.subr.mxu0 0.0
  %735 = vmatpush1.msra.mxu0 0.0
  %736 = vmatprep.subr.mxu0 0.0
  %737 = vmatpush1.msra.mxu0 0.0
  %738 = vmatprep.subr.mxu0 0.0
  %739 = vmatpush1.msra.mxu0 0.0
  %740 = vmatprep.subr.mxu0 0.0
  %741 = vmatpush1.msra.mxu0 0.0
  %742 = vmatprep.subr.mxu0 0.0
  %743 = vmatpush1.msra.mxu0 0.0
  %744 = vmatprep.subr.mxu0 0.0
  %745 = vmatpush1.msra.mxu0 0.0
  %746 = vmatprep.subr.mxu0 0.0
  %747 = vmatpush1.msra.mxu0 0.0
  %748 = vmatprep.subr.mxu0 0.0
  %749 = vmatpush1.msra.mxu0 0.0
  %750 = vmatprep.subr.mxu0 0.0
  %751 = vmatpush1.msra.mxu0 0.0
  %752 = vmatprep.subr.mxu0 0.0
  %753 = vmatpush1.msra.mxu0 0.0
  %754 = vmatprep.subr.mxu0 0.0
  %755 = vmatpush1.msra.mxu0 0.0
  %756 = vmatprep.subr.mxu0 0.0
  %757 = vmatpush1.msra.mxu0 0.0
  %758 = vmatprep.subr.mxu0 0.0
  %759 = vmatpush1.msra.mxu0 0.0
  %760 = vmatprep.subr.mxu0 0.0
  %761 = vmatpush1.msra.mxu0 0.0
  %762 = vmatprep.subr.mxu0 0.0
  %763 = vmatpush1.msra.mxu0 0.0
  %764 = vmatprep.subr.mxu0 0.0
  %765 = vmatpush1.msra.mxu0 0.0
  %766 = vmatprep.subr.mxu0 0.0
  %767 = vmatpush1.msra.mxu0 0.0
  %768 = vmatprep.subr.mxu0 0.0
  %769 = vmatpush1.msra.mxu0 0.0
  %770 = vmatprep.subr.mxu0 0.0
  %771 = vmatpush1.msra.mxu0 0.0
  %772 = vmatprep.subr.mxu0 0.0
  %773 = vmatpush1.msra.mxu0 0.0
  %774 = vmatprep.subr.mxu0 0.0
  %775 = vmatpush1.msra.mxu0 0.0
  %776 = vmatprep.subr.mxu0 0.0
  %777 = vmatpush1.msra.mxu0 0.0
  %778 = vmatprep.mubr.f32.mxu0 0.0
  %779 = vmatmul.mubr.f32.gmra.mrb[0].mxu0 %v709
  %v780 = vpop.f32.mrb[0].mxu0
  %v781 = vadd.f32 0.0, %v780
  %v782 = vpop.f32.mrb[0].mxu0
  %v783 = vadd.f32 0.0, %v782
  %784 = vmatprep.mubr.f32.mxu0 0.0
  %785 = vmatmul.mubr.f32.gmra.mrb[0].mxu0 %v712
  %v786 = vpop.f32.mrb[0].mxu0
  %v787 = vadd.f32 0.0, %v786
  %v788 = vpop.f32.mrb[0].mxu0
  %v789 = vadd.f32 0.0, %v788
  %790 = vdwg.mxu0
  %791 = vmatprep.subr.mxu0 %v417
  %792 = vmatpush1.msra.mxu0 %v416
  %793 = vmatprep.subr.mxu0 %v423
  %794 = vmatpush1.msra.mxu0 %v422
  %795 = vmatprep.subr.mxu0 %v429
  %796 = vmatpush1.msra.mxu0 %v428
  %797 = vmatprep.subr.mxu0 %v435
  %798 = vmatpush1.msra.mxu0 %v434
  %799 = vmatprep.subr.mxu0 %v441
  %800 = vmatpush1.msra.mxu0 %v440
  %801 = vmatprep.subr.mxu0 %v447
  %802 = vmatpush1.msra.mxu0 %v446
  %803 = vmatprep.subr.mxu0 %v453
  %804 = vmatpush1.msra.mxu0 %v452
  %805 = vmatprep.subr.mxu0 %v459
  %806 = vmatpush1.msra.mxu0 %v458
  %807 = vmatprep.subr.mxu0 %v465
  %808 = vmatpush1.msra.mxu0 %v464
  %809 = vmatprep.subr.mxu0 0.0
  %810 = vmatpush1.msra.mxu0 0.0
  %811 = vmatprep.subr.mxu0 0.0
  %812 = vmatpush1.msra.mxu0 0.0
  %813 = vmatprep.subr.mxu0 0.0
  %814 = vmatpush1.msra.mxu0 0.0
  %815 = vmatprep.subr.mxu0 0.0
  %816 = vmatpush1.msra.mxu0 0.0
  %817 = vmatprep.subr.mxu0 0.0
  %818 = vmatpush1.msra.mxu0 0.0
  %819 = vmatprep.subr.mxu0 0.0
  %820 = vmatpush1.msra.mxu0 0.0
  %821 = vmatprep.subr.mxu0 0.0
  %822 = vmatpush1.msra.mxu0 0.0
  %823 = vmatprep.subr.mxu0 0.0
  %824 = vmatpush1.msra.mxu0 0.0
  %825 = vmatprep.subr.mxu0 0.0
  %826 = vmatpush1.msra.mxu0 0.0
  %827 = vmatprep.subr.mxu0 0.0
  %828 = vmatpush1.msra.mxu0 0.0
  %829 = vmatprep.subr.mxu0 0.0
  %830 = vmatpush1.msra.mxu0 0.0
  %831 = vmatprep.subr.mxu0 0.0
  %832 = vmatpush1.msra.mxu0 0.0
  %833 = vmatprep.subr.mxu0 0.0
  %834 = vmatpush1.msra.mxu0 0.0
  %835 = vmatprep.subr.mxu0 0.0
  %836 = vmatpush1.msra.mxu0 0.0
  %837 = vmatprep.subr.mxu0 0.0
  %838 = vmatpush1.msra.mxu0 0.0
  %839 = vmatprep.subr.mxu0 0.0
  %840 = vmatpush1.msra.mxu0 0.0
  %841 = vmatprep.subr.mxu0 0.0
  %842 = vmatpush1.msra.mxu0 0.0
  %843 = vmatprep.subr.mxu0 0.0
  %844 = vmatpush1.msra.mxu0 0.0
  %845 = vmatprep.subr.mxu0 0.0
  %846 = vmatpush1.msra.mxu0 0.0
  %847 = vmatprep.subr.mxu0 0.0
  %848 = vmatpush1.msra.mxu0 0.0
  %849 = vmatprep.subr.mxu0 0.0
  %850 = vmatpush1.msra.mxu0 0.0
  %851 = vmatprep.subr.mxu0 0.0
  %852 = vmatpush1.msra.mxu0 0.0
  %853 = vmatprep.subr.mxu0 0.0
  %854 = vmatpush1.msra.mxu0 0.0
  %855 = vmatprep.mubr.f32.mxu0 0.0
  %856 = vmatmul.mubr.f32.gmra.mrb[0].mxu0 %v709
  %v857 = vpop.f32.mrb[0].mxu0
  %v858 = vadd.f32 0.0, %v857
  %v859 = vpop.f32.mrb[0].mxu0
  %v860 = vadd.f32 0.0, %v859
  %861 = vmatprep.mubr.f32.mxu0 0.0
  %862 = vmatmul.mubr.f32.gmra.mrb[0].mxu0 %v712
  %v863 = vpop.f32.mrb[0].mxu0
  %v864 = vadd.f32 0.0, %v863
  %v865 = vpop.f32.mrb[0].mxu0
  %v866 = vadd.f32 0.0, %v865
  %867 = vdwg.mxu0
  %868 = vmatprep.subr.mxu0 %v419
  %869 = vmatpush1.msra.mxu0 %v418
  %870 = vmatprep.subr.mxu0 %v425
  %871 = vmatpush1.msra.mxu0 %v424
  %872 = vmatprep.subr.mxu0 %v431
  %873 = vmatpush1.msra.mxu0 %v430
  %874 = vmatprep.subr.mxu0 %v437
  %875 = vmatpush1.msra.mxu0 %v436
  %876 = vmatprep.subr.mxu0 %v443
  %877 = vmatpush1.msra.mxu0 %v442
  %878 = vmatprep.subr.mxu0 %v449
  %879 = vmatpush1.msra.mxu0 %v448
  %880 = vmatprep.subr.mxu0 %v455
  %881 = vmatpush1.msra.mxu0 %v454
  %882 = vmatprep.subr.mxu0 %v461
  %883 = vmatpush1.msra.mxu0 %v460
  %884 = vmatprep.subr.mxu0 %v467
  %885 = vmatpush1.msra.mxu0 %v466
  %886 = vmatprep.subr.mxu0 0.0
  %887 = vmatpush1.msra.mxu0 0.0
  %888 = vmatprep.subr.mxu0 0.0
  %889 = vmatpush1.msra.mxu0 0.0
  %890 = vmatprep.subr.mxu0 0.0
  %891 = vmatpush1.msra.mxu0 0.0
  %892 = vmatprep.subr.mxu0 0.0
  %893 = vmatpush1.msra.mxu0 0.0
  %894 = vmatprep.subr.mxu0 0.0
  %895 = vmatpush1.msra.mxu0 0.0
  %896 = vmatprep.subr.mxu0 0.0
  %897 = vmatpush1.msra.mxu0 0.0
  %898 = vmatprep.subr.mxu0 0.0
  %899 = vmatpush1.msra.mxu0 0.0
  %900 = vmatprep.subr.mxu0 0.0
  %901 = vmatpush1.msra.mxu0 0.0
  %902 = vmatprep.subr.mxu0 0.0
  %903 = vmatpush1.msra.mxu0 0.0
  %904 = vmatprep.subr.mxu0 0.0
  %905 = vmatpush1.msra.mxu0 0.0
  %906 = vmatprep.subr.mxu0 0.0
  %907 = vmatpush1.msra.mxu0 0.0
  %908 = vmatprep.subr.mxu0 0.0
  %909 = vmatpush1.msra.mxu0 0.0
  %910 = vmatprep.subr.mxu0 0.0
  %911 = vmatpush1.msra.mxu0 0.0
  %912 = vmatprep.subr.mxu0 0.0
  %913 = vmatpush1.msra.mxu0 0.0
  %914 = vmatprep.subr.mxu0 0.0
  %915 = vmatpush1.msra.mxu0 0.0
  %916 = vmatprep.subr.mxu0 0.0
  %917 = vmatpush1.msra.mxu0 0.0
  %918 = vmatprep.subr.mxu0 0.0
  %919 = vmatpush1.msra.mxu0 0.0
  %920 = vmatprep.subr.mxu0 0.0
  %921 = vmatpush1.msra.mxu0 0.0
  %922 = vmatprep.subr.mxu0 0.0
  %923 = vmatpush1.msra.mxu0 0.0
  %924 = vmatprep.subr.mxu0 0.0
  %925 = vmatpush1.msra.mxu0 0.0
  %926 = vmatprep.subr.mxu0 0.0
  %927 = vmatpush1.msra.mxu0 0.0
  %928 = vmatprep.subr.mxu0 0.0
  %929 = vmatpush1.msra.mxu0 0.0
  %930 = vmatprep.subr.mxu0 0.0
  %931 = vmatpush1.msra.mxu0 0.0
  %932 = vmatprep.mubr.f32.mxu0 0.0
  %933 = vmatmul.mubr.f32.gmra.mrb[0].mxu0 %v709
  %v934 = vpop.f32.mrb[0].mxu0
  %v935 = vadd.f32 0.0, %v934
  %v936 = vpop.f32.mrb[0].mxu0
  %v937 = vadd.f32 0.0, %v936
  %938 = vmatprep.mubr.f32.mxu0 0.0
  %939 = vmatmul.mubr.f32.gmra.mrb[0].mxu0 %v712
  %v940 = vpop.f32.mrb[0].mxu0
  %v941 = vadd.f32 0.0, %v940
  %v942 = vpop.f32.mrb[0].mxu0
  %v943 = vadd.f32 0.0, %v942
  %944 = vdwg.mxu0
  %v945 = vmax.f32 %v542, %v781
  %v946 = vmax.f32 %v544, %v783
  %v947 = vmax.f32 %v619, %v858
  %v948 = vmax.f32 %v621, %v860
  %v949 = vmax.f32 %v696, %v935
  %v950 = vmax.f32 %v698, %v937
  %v951 = vmax.f32 %v548, %v787
  %v952 = vmax.f32 %v550, %v789
  %v953 = vmax.f32 %v625, %v864
  %v954 = vmax.f32 %v627, %v866
  %v955 = vmax.f32 %v702, %v941
  %v956 = vmax.f32 %v704, %v943
  %v957 = vld [vmem:[%s2 + $0x20] sm:$0xff]
  %v958 = vld [vmem:[%s2 + $0x28] sm:$0xff]
  %v960 = vsel %vm468, %v957, 0
  %v963 = vsel %vm468, %v958, 0
  %965 = vmatprep.subr.mxu0 %v415
  %966 = vmatpush1.msra.mxu0 %v414
  %967 = vmatprep.subr.mxu0 %v421
  %968 = vmatpush1.msra.mxu0 %v420
  %969 = vmatprep.subr.mxu0 %v427
  %970 = vmatpush1.msra.mxu0 %v426
  %971 = vmatprep.subr.mxu0 %v433
  %972 = vmatpush1.msra.mxu0 %v432
  %973 = vmatprep.subr.mxu0 %v439
  %974 = vmatpush1.msra.mxu0 %v438
  %975 = vmatprep.subr.mxu0 %v445
  %976 = vmatpush1.msra.mxu0 %v444
  %977 = vmatprep.subr.mxu0 %v451
  %978 = vmatpush1.msra.mxu0 %v450
  %979 = vmatprep.subr.mxu0 %v457
  %980 = vmatpush1.msra.mxu0 %v456
  %981 = vmatprep.subr.mxu0 %v463
  %982 = vmatpush1.msra.mxu0 %v462
  %983 = vmatprep.subr.mxu0 0.0
  %984 = vmatpush1.msra.mxu0 0.0
  %985 = vmatprep.subr.mxu0 0.0
  %986 = vmatpush1.msra.mxu0 0.0
  %987 = vmatprep.subr.mxu0 0.0
  %988 = vmatpush1.msra.mxu0 0.0
  %989 = vmatprep.subr.mxu0 0.0
  %990 = vmatpush1.msra.mxu0 0.0
  %991 = vmatprep.subr.mxu0 0.0
  %992 = vmatpush1.msra.mxu0 0.0
  %993 = vmatprep.subr.mxu0 0.0
  %994 = vmatpush1.msra.mxu0 0.0
  %995 = vmatprep.subr.mxu0 0.0
  %996 = vmatpush1.msra.mxu0 0.0
  %997 = vmatprep.subr.mxu0 0.0
  %998 = vmatpush1.msra.mxu0 0.0
  %999 = vmatprep.subr.mxu0 0.0
  %1000 = vmatpush1.msra.mxu0 0.0
  %1001 = vmatprep.subr.mxu0 0.0
  %1002 = vmatpush1.msra.mxu0 0.0
  %1003 = vmatprep.subr.mxu0 0.0
  %1004 = vmatpush1.msra.mxu0 0.0
  %1005 = vmatprep.subr.mxu0 0.0
  %1006 = vmatpush1.msra.mxu0 0.0
  %1007 = vmatprep.subr.mxu0 0.0
  %1008 = vmatpush1.msra.mxu0 0.0
  %1009 = vmatprep.subr.mxu0 0.0
  %1010 = vmatpush1.msra.mxu0 0.0
  %1011 = vmatprep.subr.mxu0 0.0
  %1012 = vmatpush1.msra.mxu0 0.0
  %1013 = vmatprep.subr.mxu0 0.0
  %1014 = vmatpush1.msra.mxu0 0.0
  %1015 = vmatprep.subr.mxu0 0.0
  %1016 = vmatpush1.msra.mxu0 0.0
  %1017 = vmatprep.subr.mxu0 0.0
  %1018 = vmatpush1.msra.mxu0 0.0
  %1019 = vmatprep.subr.mxu0 0.0
  %1020 = vmatpush1.msra.mxu0 0.0
  %1021 = vmatprep.subr.mxu0 0.0
  %1022 = vmatpush1.msra.mxu0 0.0
  %1023 = vmatprep.subr.mxu0 0.0
  %1024 = vmatpush1.msra.mxu0 0.0
  %1025 = vmatprep.subr.mxu0 0.0
  %1026 = vmatpush1.msra.mxu0 0.0
  %1027 = vmatprep.subr.mxu0 0.0
  %1028 = vmatpush1.msra.mxu0 0.0
  %1029 = vmatprep.mubr.f32.mxu0 0.0
  %1030 = vmatmul.mubr.f32.gmra.mrb[0].mxu0 %v960
  %v1031 = vpop.f32.mrb[0].mxu0
  %v1032 = vadd.f32 0.0, %v1031
  %v1033 = vpop.f32.mrb[0].mxu0
  %v1034 = vadd.f32 0.0, %v1033
  %1035 = vmatprep.mubr.f32.mxu0 0.0
  %1036 = vmatmul.mubr.f32.gmra.mrb[0].mxu0 %v963
  %v1037 = vpop.f32.mrb[0].mxu0
  %v1038 = vadd.f32 0.0, %v1037
  %v1039 = vpop.f32.mrb[0].mxu0
  %v1040 = vadd.f32 0.0, %v1039
  %1041 = vdwg.mxu0
  %1042 = vmatprep.subr.mxu0 %v417
  %1043 = vmatpush1.msra.mxu0 %v416
  %1044 = vmatprep.subr.mxu0 %v423
  %1045 = vmatpush1.msra.mxu0 %v422
  %1046 = vmatprep.subr.mxu0 %v429
  %1047 = vmatpush1.msra.mxu0 %v428
  %1048 = vmatprep.subr.mxu0 %v435
  %1049 = vmatpush1.msra.mxu0 %v434
  %1050 = vmatprep.subr.mxu0 %v441
  %1051 = vmatpush1.msra.mxu0 %v440
  %1052 = vmatprep.subr.mxu0 %v447
  %1053 = vmatpush1.msra.mxu0 %v446
  %1054 = vmatprep.subr.mxu0 %v453
  %1055 = vmatpush1.msra.mxu0 %v452
  %1056 = vmatprep.subr.mxu0 %v459
  %1057 = vmatpush1.msra.mxu0 %v458
  %1058 = vmatprep.subr.mxu0 %v465
  %1059 = vmatpush1.msra.mxu0 %v464
  %1060 = vmatprep.subr.mxu0 0.0
  %1061 = vmatpush1.msra.mxu0 0.0
  %1062 = vmatprep.subr.mxu0 0.0
  %1063 = vmatpush1.msra.mxu0 0.0
  %1064 = vmatprep.subr.mxu0 0.0
  %1065 = vmatpush1.msra.mxu0 0.0
  %1066 = vmatprep.subr.mxu0 0.0
  %1067 = vmatpush1.msra.mxu0 0.0
  %1068 = vmatprep.subr.mxu0 0.0
  %1069 = vmatpush1.msra.mxu0 0.0
  %1070 = vmatprep.subr.mxu0 0.0
  %1071 = vmatpush1.msra.mxu0 0.0
  %1072 = vmatprep.subr.mxu0 0.0
  %1073 = vmatpush1.msra.mxu0 0.0
  %1074 = vmatprep.subr.mxu0 0.0
  %1075 = vmatpush1.msra.mxu0 0.0
  %1076 = vmatprep.subr.mxu0 0.0
  %1077 = vmatpush1.msra.mxu0 0.0
  %1078 = vmatprep.subr.mxu0 0.0
  %1079 = vmatpush1.msra.mxu0 0.0
  %1080 = vmatprep.subr.mxu0 0.0
  %1081 = vmatpush1.msra.mxu0 0.0
  %1082 = vmatprep.subr.mxu0 0.0
  %1083 = vmatpush1.msra.mxu0 0.0
  %1084 = vmatprep.subr.mxu0 0.0
  %1085 = vmatpush1.msra.mxu0 0.0
  %1086 = vmatprep.subr.mxu0 0.0
  %1087 = vmatpush1.msra.mxu0 0.0
  %1088 = vmatprep.subr.mxu0 0.0
  %1089 = vmatpush1.msra.mxu0 0.0
  %1090 = vmatprep.subr.mxu0 0.0
  %1091 = vmatpush1.msra.mxu0 0.0
  %1092 = vmatprep.subr.mxu0 0.0
  %1093 = vmatpush1.msra.mxu0 0.0
  %1094 = vmatprep.subr.mxu0 0.0
  %1095 = vmatpush1.msra.mxu0 0.0
  %1096 = vmatprep.subr.mxu0 0.0
  %1097 = vmatpush1.msra.mxu0 0.0
  %1098 = vmatprep.subr.mxu0 0.0
  %1099 = vmatpush1.msra.mxu0 0.0
  %1100 = vmatprep.subr.mxu0 0.0
  %1101 = vmatpush1.msra.mxu0 0.0
  %1102 = vmatprep.subr.mxu0 0.0
  %1103 = vmatpush1.msra.mxu0 0.0
  %1104 = vmatprep.subr.mxu0 0.0
  %1105 = vmatpush1.msra.mxu0 0.0
  %1106 = vmatprep.mubr.f32.mxu0 0.0
  %1107 = vmatmul.mubr.f32.gmra.mrb[0].mxu0 %v960
  %v1108 = vpop.f32.mrb[0].mxu0
  %v1109 = vadd.f32 0.0, %v1108
  %v1110 = vpop.f32.mrb[0].mxu0
  %v1111 = vadd.f32 0.0, %v1110
  %1112 = vmatprep.mubr.f32.mxu0 0.0
  %1113 = vmatmul.mubr.f32.gmra.mrb[0].mxu0 %v963
  %v1114 = vpop.f32.mrb[0].mxu0
  %v1115 = vadd.f32 0.0, %v1114
  %v1116 = vpop.f32.mrb[0].mxu0
  %v1117 = vadd.f32 0.0, %v1116
  %1118 = vdwg.mxu0
  %1119 = vmatprep.subr.mxu0 %v419
  %1120 = vmatpush1.msra.mxu0 %v418
  %1121 = vmatprep.subr.mxu0 %v425
  %1122 = vmatpush1.msra.mxu0 %v424
  %1123 = vmatprep.subr.mxu0 %v431
  %1124 = vmatpush1.msra.mxu0 %v430
  %1125 = vmatprep.subr.mxu0 %v437
  %1126 = vmatpush1.msra.mxu0 %v436
  %1127 = vmatprep.subr.mxu0 %v443
  %1128 = vmatpush1.msra.mxu0 %v442
  %1129 = vmatprep.subr.mxu0 %v449
  %1130 = vmatpush1.msra.mxu0 %v448
  %1131 = vmatprep.subr.mxu0 %v455
  %1132 = vmatpush1.msra.mxu0 %v454
  %1133 = vmatprep.subr.mxu0 %v461
  %1134 = vmatpush1.msra.mxu0 %v460
  %1135 = vmatprep.subr.mxu0 %v467
  %1136 = vmatpush1.msra.mxu0 %v466
  %1137 = vmatprep.subr.mxu0 0.0
  %1138 = vmatpush1.msra.mxu0 0.0
  %1139 = vmatprep.subr.mxu0 0.0
  %1140 = vmatpush1.msra.mxu0 0.0
  %1141 = vmatprep.subr.mxu0 0.0
  %1142 = vmatpush1.msra.mxu0 0.0
  %1143 = vmatprep.subr.mxu0 0.0
  %1144 = vmatpush1.msra.mxu0 0.0
  %1145 = vmatprep.subr.mxu0 0.0
  %1146 = vmatpush1.msra.mxu0 0.0
  %1147 = vmatprep.subr.mxu0 0.0
  %1148 = vmatpush1.msra.mxu0 0.0
  %1149 = vmatprep.subr.mxu0 0.0
  %1150 = vmatpush1.msra.mxu0 0.0
  %1151 = vmatprep.subr.mxu0 0.0
  %1152 = vmatpush1.msra.mxu0 0.0
  %1153 = vmatprep.subr.mxu0 0.0
  %1154 = vmatpush1.msra.mxu0 0.0
  %1155 = vmatprep.subr.mxu0 0.0
  %1156 = vmatpush1.msra.mxu0 0.0
  %1157 = vmatprep.subr.mxu0 0.0
  %1158 = vmatpush1.msra.mxu0 0.0
  %1159 = vmatprep.subr.mxu0 0.0
  %1160 = vmatpush1.msra.mxu0 0.0
  %1161 = vmatprep.subr.mxu0 0.0
  %1162 = vmatpush1.msra.mxu0 0.0
  %1163 = vmatprep.subr.mxu0 0.0
  %1164 = vmatpush1.msra.mxu0 0.0
  %1165 = vmatprep.subr.mxu0 0.0
  %1166 = vmatpush1.msra.mxu0 0.0
  %1167 = vmatprep.subr.mxu0 0.0
  %1168 = vmatpush1.msra.mxu0 0.0
  %1169 = vmatprep.subr.mxu0 0.0
  %1170 = vmatpush1.msra.mxu0 0.0
  %1171 = vmatprep.subr.mxu0 0.0
  %1172 = vmatpush1.msra.mxu0 0.0
  %1173 = vmatprep.subr.mxu0 0.0
  %1174 = vmatpush1.msra.mxu0 0.0
  %1175 = vmatprep.subr.mxu0 0.0
  %1176 = vmatpush1.msra.mxu0 0.0
  %1177 = vmatprep.subr.mxu0 0.0
  %1178 = vmatpush1.msra.mxu0 0.0
  %1179 = vmatprep.subr.mxu0 0.0
  %1180 = vmatpush1.msra.mxu0 0.0
  %1181 = vmatprep.subr.mxu0 0.0
  %1182 = vmatpush1.msra.mxu0 0.0
  %1183 = vmatprep.mubr.f32.mxu0 0.0
  %1184 = vmatmul.mubr.f32.gmra.mrb[0].mxu0 %v960
  %v1185 = vpop.f32.mrb[0].mxu0
  %v1186 = vadd.f32 0.0, %v1185
  %v1187 = vpop.f32.mrb[0].mxu0
  %v1188 = vadd.f32 0.0, %v1187
  %1189 = vmatprep.mubr.f32.mxu0 0.0
  %1190 = vmatmul.mubr.f32.gmra.mrb[0].mxu0 %v963
  %v1191 = vpop.f32.mrb[0].mxu0
  %v1192 = vadd.f32 0.0, %v1191
  %v1193 = vpop.f32.mrb[0].mxu0
  %v1194 = vadd.f32 0.0, %v1193
  %1195 = vdwg.mxu0
  %v1196 = vmax.f32 %v945, %v1032
  %v1197 = vmax.f32 %v946, %v1034
  %v1198 = vmax.f32 %v947, %v1109
  %v1199 = vmax.f32 %v948, %v1111
  %v1200 = vmax.f32 %v949, %v1186
  %v1201 = vmax.f32 %v950, %v1188
  %v1202 = vmax.f32 %v951, %v1038
  %v1203 = vmax.f32 %v952, %v1040
  %v1204 = vmax.f32 %v953, %v1115
  %v1205 = vmax.f32 %v954, %v1117
  %v1206 = vmax.f32 %v955, %v1192
  %v1207 = vmax.f32 %v956, %v1194
  %v1208 = vld [vmem:[%s2 + $0x30] sm:$0xff]
  %v1209 = vld [vmem:[%s2 + $0x38] sm:$0xff]
  %v1211 = vsel %vm468, %v1208, 0
  %v1214 = vsel %vm468, %v1209, 0
  %1216 = vmatprep.subr.mxu0 %v415
  %1217 = vmatpush1.msra.mxu0 %v414
  %1218 = vmatprep.subr.mxu0 %v421
  %1219 = vmatpush1.msra.mxu0 %v420
  %1220 = vmatprep.subr.mxu0 %v427
  %1221 = vmatpush1.msra.mxu0 %v426
  %1222 = vmatprep.subr.mxu0 %v433
  %1223 = vmatpush1.msra.mxu0 %v432
  %1224 = vmatprep.subr.mxu0 %v439
  %1225 = vmatpush1.msra.mxu0 %v438
  %1226 = vmatprep.subr.mxu0 %v445
  %1227 = vmatpush1.msra.mxu0 %v444
  %1228 = vmatprep.subr.mxu0 %v451
  %1229 = vmatpush1.msra.mxu0 %v450
  %1230 = vmatprep.subr.mxu0 %v457
  %1231 = vmatpush1.msra.mxu0 %v456
  %1232 = vmatprep.subr.mxu0 %v463
  %1233 = vmatpush1.msra.mxu0 %v462
  %1234 = vmatprep.subr.mxu0 0.0
  %1235 = vmatpush1.msra.mxu0 0.0
  %1236 = vmatprep.subr.mxu0 0.0
  %1237 = vmatpush1.msra.mxu0 0.0
  %1238 = vmatprep.subr.mxu0 0.0
  %1239 = vmatpush1.msra.mxu0 0.0
  %1240 = vmatprep.subr.mxu0 0.0
  %1241 = vmatpush1.msra.mxu0 0.0
  %1242 = vmatprep.subr.mxu0 0.0
  %1243 = vmatpush1.msra.mxu0 0.0
  %1244 = vmatprep.subr.mxu0 0.0
  %1245 = vmatpush1.msra.mxu0 0.0
  %1246 = vmatprep.subr.mxu0 0.0
  %1247 = vmatpush1.msra.mxu0 0.0
  %1248 = vmatprep.subr.mxu0 0.0
  %1249 = vmatpush1.msra.mxu0 0.0
  %1250 = vmatprep.subr.mxu0 0.0
  %1251 = vmatpush1.msra.mxu0 0.0
  %1252 = vmatprep.subr.mxu0 0.0
  %1253 = vmatpush1.msra.mxu0 0.0
  %1254 = vmatprep.subr.mxu0 0.0
  %1255 = vmatpush1.msra.mxu0 0.0
  %1256 = vmatprep.subr.mxu0 0.0
  %1257 = vmatpush1.msra.mxu0 0.0
  %1258 = vmatprep.subr.mxu0 0.0
  %1259 = vmatpush1.msra.mxu0 0.0
  %1260 = vmatprep.subr.mxu0 0.0
  %1261 = vmatpush1.msra.mxu0 0.0
  %1262 = vmatprep.subr.mxu0 0.0
  %1263 = vmatpush1.msra.mxu0 0.0
  %1264 = vmatprep.subr.mxu0 0.0
  %1265 = vmatpush1.msra.mxu0 0.0
  %1266 = vmatprep.subr.mxu0 0.0
  %1267 = vmatpush1.msra.mxu0 0.0
  %1268 = vmatprep.subr.mxu0 0.0
  %1269 = vmatpush1.msra.mxu0 0.0
  %1270 = vmatprep.subr.mxu0 0.0
  %1271 = vmatpush1.msra.mxu0 0.0
  %1272 = vmatprep.subr.mxu0 0.0
  %1273 = vmatpush1.msra.mxu0 0.0
  %1274 = vmatprep.subr.mxu0 0.0
  %1275 = vmatpush1.msra.mxu0 0.0
  %1276 = vmatprep.subr.mxu0 0.0
  %1277 = vmatpush1.msra.mxu0 0.0
  %1278 = vmatprep.subr.mxu0 0.0
  %1279 = vmatpush1.msra.mxu0 0.0
  %1280 = vmatprep.mubr.f32.mxu0 0.0
  %1281 = vmatmul.mubr.f32.gmra.mrb[0].mxu0 %v1211
  %v1282 = vpop.f32.mrb[0].mxu0
  %v1283 = vadd.f32 0.0, %v1282
  %v1284 = vpop.f32.mrb[0].mxu0
  %v1285 = vadd.f32 0.0, %v1284
  %1286 = vmatprep.mubr.f32.mxu0 0.0
  %1287 = vmatmul.mubr.f32.gmra.mrb[0].mxu0 %v1214
  %v1288 = vpop.f32.mrb[0].mxu0
  %v1289 = vadd.f32 0.0, %v1288
  %v1290 = vpop.f32.mrb[0].mxu0
  %v1291 = vadd.f32 0.0, %v1290
  %1292 = vdwg.mxu0
  %1293 = vmatprep.subr.mxu0 %v417
  %1294 = vmatpush1.msra.mxu0 %v416
  %1295 = vmatprep.subr.mxu0 %v423
  %1296 = vmatpush1.msra.mxu0 %v422
  %1297 = vmatprep.subr.mxu0 %v429
  %1298 = vmatpush1.msra.mxu0 %v428
  %1299 = vmatprep.subr.mxu0 %v435
  %1300 = vmatpush1.msra.mxu0 %v434
  %1301 = vmatprep.subr.mxu0 %v441
  %1302 = vmatpush1.msra.mxu0 %v440
  %1303 = vmatprep.subr.mxu0 %v447
  %1304 = vmatpush1.msra.mxu0 %v446
  %1305 = vmatprep.subr.mxu0 %v453
  %1306 = vmatpush1.msra.mxu0 %v452
  %1307 = vmatprep.subr.mxu0 %v459
  %1308 = vmatpush1.msra.mxu0 %v458
  %1309 = vmatprep.subr.mxu0 %v465
  %1310 = vmatpush1.msra.mxu0 %v464
  %1311 = vmatprep.subr.mxu0 0.0
  %1312 = vmatpush1.msra.mxu0 0.0
  %1313 = vmatprep.subr.mxu0 0.0
  %1314 = vmatpush1.msra.mxu0 0.0
  %1315 = vmatprep.subr.mxu0 0.0
  %1316 = vmatpush1.msra.mxu0 0.0
  %1317 = vmatprep.subr.mxu0 0.0
  %1318 = vmatpush1.msra.mxu0 0.0
  %1319 = vmatprep.subr.mxu0 0.0
  %1320 = vmatpush1.msra.mxu0 0.0
  %1321 = vmatprep.subr.mxu0 0.0
  %1322 = vmatpush1.msra.mxu0 0.0
  %1323 = vmatprep.subr.mxu0 0.0
  %1324 = vmatpush1.msra.mxu0 0.0
  %1325 = vmatprep.subr.mxu0 0.0
  %1326 = vmatpush1.msra.mxu0 0.0
  %1327 = vmatprep.subr.mxu0 0.0
  %1328 = vmatpush1.msra.mxu0 0.0
  %1329 = vmatprep.subr.mxu0 0.0
  %1330 = vmatpush1.msra.mxu0 0.0
  %1331 = vmatprep.subr.mxu0 0.0
  %1332 = vmatpush1.msra.mxu0 0.0
  %1333 = vmatprep.subr.mxu0 0.0
  %1334 = vmatpush1.msra.mxu0 0.0
  %1335 = vmatprep.subr.mxu0 0.0
  %1336 = vmatpush1.msra.mxu0 0.0
  %1337 = vmatprep.subr.mxu0 0.0
  %1338 = vmatpush1.msra.mxu0 0.0
  %1339 = vmatprep.subr.mxu0 0.0
  %1340 = vmatpush1.msra.mxu0 0.0
  %1341 = vmatprep.subr.mxu0 0.0
  %1342 = vmatpush1.msra.mxu0 0.0
  %1343 = vmatprep.subr.mxu0 0.0
  %1344 = vmatpush1.msra.mxu0 0.0
  %1345 = vmatprep.subr.mxu0 0.0
  %1346 = vmatpush1.msra.mxu0 0.0
  %1347 = vmatprep.subr.mxu0 0.0
  %1348 = vmatpush1.msra.mxu0 0.0
  %1349 = vmatprep.subr.mxu0 0.0
  %1350 = vmatpush1.msra.mxu0 0.0
  %1351 = vmatprep.subr.mxu0 0.0
  %1352 = vmatpush1.msra.mxu0 0.0
  %1353 = vmatprep.subr.mxu0 0.0
  %1354 = vmatpush1.msra.mxu0 0.0
  %1355 = vmatprep.subr.mxu0 0.0
  %1356 = vmatpush1.msra.mxu0 0.0
  %1357 = vmatprep.mubr.f32.mxu0 0.0
  %1358 = vmatmul.mubr.f32.gmra.mrb[0].mxu0 %v1211
  %v1359 = vpop.f32.mrb[0].mxu0
  %v1360 = vadd.f32 0.0, %v1359
  %v1361 = vpop.f32.mrb[0].mxu0
  %v1362 = vadd.f32 0.0, %v1361
  %1363 = vmatprep.mubr.f32.mxu0 0.0
  %1364 = vmatmul.mubr.f32.gmra.mrb[0].mxu0 %v1214
  %v1365 = vpop.f32.mrb[0].mxu0
  %v1366 = vadd.f32 0.0, %v1365
  %v1367 = vpop.f32.mrb[0].mxu0
  %v1368 = vadd.f32 0.0, %v1367
  %1369 = vdwg.mxu0
  %1370 = vmatprep.subr.mxu0 %v419
  %1371 = vmatpush1.msra.mxu0 %v418
  %1372 = vmatprep.subr.mxu0 %v425
  %1373 = vmatpush1.msra.mxu0 %v424
  %1374 = vmatprep.subr.mxu0 %v431
  %1375 = vmatpush1.msra.mxu0 %v430
  %1376 = vmatprep.subr.mxu0 %v437
  %1377 = vmatpush1.msra.mxu0 %v436
  %1378 = vmatprep.subr.mxu0 %v443
  %1379 = vmatpush1.msra.mxu0 %v442
  %1380 = vmatprep.subr.mxu0 %v449
  %1381 = vmatpush1.msra.mxu0 %v448
  %1382 = vmatprep.subr.mxu0 %v455
  %1383 = vmatpush1.msra.mxu0 %v454
  %1384 = vmatprep.subr.mxu0 %v461
  %1385 = vmatpush1.msra.mxu0 %v460
  %1386 = vmatprep.subr.mxu0 %v467
  %1387 = vmatpush1.msra.mxu0 %v466
  %1388 = vmatprep.subr.mxu0 0.0
  %1389 = vmatpush1.msra.mxu0 0.0
  %1390 = vmatprep.subr.mxu0 0.0
  %1391 = vmatpush1.msra.mxu0 0.0
  %1392 = vmatprep.subr.mxu0 0.0
  %1393 = vmatpush1.msra.mxu0 0.0
  %1394 = vmatprep.subr.mxu0 0.0
  %1395 = vmatpush1.msra.mxu0 0.0
  %1396 = vmatprep.subr.mxu0 0.0
  %1397 = vmatpush1.msra.mxu0 0.0
  %1398 = vmatprep.subr.mxu0 0.0
  %1399 = vmatpush1.msra.mxu0 0.0
  %1400 = vmatprep.subr.mxu0 0.0
  %1401 = vmatpush1.msra.mxu0 0.0
  %1402 = vmatprep.subr.mxu0 0.0
  %1403 = vmatpush1.msra.mxu0 0.0
  %1404 = vmatprep.subr.mxu0 0.0
  %1405 = vmatpush1.msra.mxu0 0.0
  %1406 = vmatprep.subr.mxu0 0.0
  %1407 = vmatpush1.msra.mxu0 0.0
  %1408 = vmatprep.subr.mxu0 0.0
  %1409 = vmatpush1.msra.mxu0 0.0
  %1410 = vmatprep.subr.mxu0 0.0
  %1411 = vmatpush1.msra.mxu0 0.0
  %1412 = vmatprep.subr.mxu0 0.0
  %1413 = vmatpush1.msra.mxu0 0.0
  %1414 = vmatprep.subr.mxu0 0.0
  %1415 = vmatpush1.msra.mxu0 0.0
  %1416 = vmatprep.subr.mxu0 0.0
  %1417 = vmatpush1.msra.mxu0 0.0
  %1418 = vmatprep.subr.mxu0 0.0
  %1419 = vmatpush1.msra.mxu0 0.0
  %1420 = vmatprep.subr.mxu0 0.0
  %1421 = vmatpush1.msra.mxu0 0.0
  %1422 = vmatprep.subr.mxu0 0.0
  %1423 = vmatpush1.msra.mxu0 0.0
  %1424 = vmatprep.subr.mxu0 0.0
  %1425 = vmatpush1.msra.mxu0 0.0
  %1426 = vmatprep.subr.mxu0 0.0
  %1427 = vmatpush1.msra.mxu0 0.0
  %1428 = vmatprep.subr.mxu0 0.0
  %1429 = vmatpush1.msra.mxu0 0.0
  %1430 = vmatprep.subr.mxu0 0.0
  %1431 = vmatpush1.msra.mxu0 0.0
  %1432 = vmatprep.subr.mxu0 0.0
  %1433 = vmatpush1.msra.mxu0 0.0
  %1434 = vmatprep.mubr.f32.mxu0 0.0
  %1435 = vmatmul.mubr.f32.gmra.mrb[0].mxu0 %v1211
  %v1436 = vpop.f32.mrb[0].mxu0
  %v1437 = vadd.f32 0.0, %v1436
  %v1438 = vpop.f32.mrb[0].mxu0
  %v1439 = vadd.f32 0.0, %v1438
  %1440 = vmatprep.mubr.f32.mxu0 0.0
  %1441 = vmatmul.mubr.f32.gmra.mrb[0].mxu0 %v1214
  %v1442 = vpop.f32.mrb[0].mxu0
  %v1443 = vadd.f32 0.0, %v1442
  %v1444 = vpop.f32.mrb[0].mxu0
  %v1445 = vadd.f32 0.0, %v1444
  %1446 = vdwg.mxu0
  %v1447 = vmax.f32 %v1196, %v1283
  %v1448 = vmax.f32 %v1197, %v1285
  %v1449 = vmax.f32 %v1198, %v1360
  %v1450 = vmax.f32 %v1199, %v1362
  %v1451 = vmax.f32 %v1200, %v1437
  %v1452 = vmax.f32 %v1201, %v1439
  %v1453 = vmax.f32 %v1202, %v1289
  %v1454 = vmax.f32 %v1203, %v1291
  %v1455 = vmax.f32 %v1204, %v1366
  %v1456 = vmax.f32 %v1205, %v1368
  %v1457 = vmax.f32 %v1206, %v1443
  %v1458 = vmax.f32 %v1207, %v1445
  %v1459 = vld [vmem:[%s3] sm:$0xff]
  %v1460 = vld [vmem:[%s3 + $0x8] sm:$0xff]
  %1462 = vset.pattern.permute.xlu0 0
  %1463 = vperm.xlu0 %1462, %v1459
  %v1464 = vpop.permute.xlu0 %1463
  %1467 = vset.pattern.permute.xlu0 0
  %1468 = vperm.xlu0 %1467, %v1460
  %v1469 = vpop.permute.xlu0 %1468
  %v1471 = vadd.f32 %v1447, %v1464
  %v1472 = vadd.f32 %v1448, %v1464
  %v1473 = vadd.f32 %v1449, %v1464
  %v1474 = vadd.f32 %v1450, %v1464
  %v1475 = vadd.f32 %v1451, %v1464
  %v1476 = vadd.f32 %v1452, %v1464
  %v1477 = vadd.f32 %v1453, %v1469
  %v1478 = vadd.f32 %v1454, %v1469
  %v1479 = vadd.f32 %v1455, %v1469
  %v1480 = vadd.f32 %v1456, %v1469
  %v1481 = vadd.f32 %v1457, %v1469
  %v1482 = vadd.f32 %v1458, %v1469
  %v1483 = vmax.f32 %v1471, 0.0
  %v1484 = vmax.f32 %v1472, 0.0
  %v1485 = vmax.f32 %v1473, 0.0
  %v1486 = vmax.f32 %v1474, 0.0
  %v1487 = vmax.f32 %v1475, 0.0
  %v1488 = vmax.f32 %v1476, 0.0
  %v1489 = vmax.f32 %v1477, 0.0
  %v1490 = vmax.f32 %v1478, 0.0
  %v1491 = vmax.f32 %v1479, 0.0
  %v1492 = vmax.f32 %v1480, 0.0
  %v1493 = vmax.f32 %v1481, 0.0
  %v1494 = vmax.f32 %v1482, 0.0
  %v1495 = vld [vmem:[%s1] sm:$0x3f]
  %v1497 = vlaneseq
  %v1498 = vshrl.u32 %v1497, 7
  %v1499 = vsub.s32 0, %v1498
  %v1500 = vrot.slane %v1495, %v1499
  %v1501 = vlaneseq
  %v1502 = vshrl.u32 %v1501, 7
  %v1503 = vsub.s32 1, %v1502
  %v1504 = vrot.slane %v1495, %v1503
  %v1505 = vlaneseq
  %v1506 = vshrl.u32 %v1505, 7
  %v1507 = vsub.s32 2, %v1506
  %v1508 = vrot.slane %v1495, %v1507
  %v1509 = vlaneseq
  %v1510 = vshrl.u32 %v1509, 7
  %v1511 = vsub.s32 3, %v1510
  %v1512 = vrot.slane %v1495, %v1511
  %v1513 = vlaneseq
  %v1514 = vshrl.u32 %v1513, 7
  %v1515 = vsub.s32 4, %v1514
  %v1516 = vrot.slane %v1495, %v1515
  %v1517 = vlaneseq
  %v1518 = vshrl.u32 %v1517, 7
  %v1519 = vsub.s32 5, %v1518
  %v1520 = vrot.slane %v1495, %v1519
  %v1527 = vmul.f32 %v1483, %v1500
  %v1528 = vmul.f32 %v1484, %v1504
  %v1529 = vmul.f32 %v1485, %v1508
  %v1530 = vmul.f32 %v1486, %v1512
  %v1531 = vmul.f32 %v1487, %v1516
  %v1532 = vmul.f32 %v1488, %v1520
  %v1533 = vmul.f32 %v1489, %v1500
  %v1534 = vmul.f32 %v1490, %v1504
  %v1535 = vmul.f32 %v1491, %v1508
  %v1536 = vmul.f32 %v1492, %v1512
  %v1537 = vmul.f32 %v1493, %v1516
  %v1538 = vmul.f32 %v1494, %v1520
  %v1539 = vpack.c.bf16 %v1533, %v1527
  %v1540 = vpack.c.bf16 %v1534, %v1528
  %v1541 = vpack.c.bf16 %v1535, %v1529
  %v1542 = vpack.c.bf16 %v1536, %v1530
  %v1543 = vpack.c.bf16 %v1537, %v1531
  %v1544 = vpack.c.bf16 %v1538, %v1532
  %1545 = vst [vmem:[#allocation3] sm:$0xff] %v1539
  %1546 = vst [vmem:[#allocation3 + $0x8] sm:$0xff] %v1540
  %1547 = vst [vmem:[#allocation3 + $0x10] sm:$0xff] %v1541
  %1548 = vst [vmem:[#allocation3 + $0x18] sm:$0xff] %v1542
  %1549 = vst [vmem:[#allocation3 + $0x20] sm:$0xff] %v1543
  %1550 = vst [vmem:[#allocation3 + $0x28] sm:$0xff] %v1544
  %1551 = vst [vmem:[#allocation3 + $0x30] sm:$0xff] 0
  %v1552 = vld [vmem:[%s4] sm:$0xf]
  %v1553 = vld [vmem:[%s4 + $0x4] sm:$0xf]
  %v1554 = vld [vmem:[%s4 + $0x8] sm:$0xf]
  %v1555 = vld [vmem:[%s4 + $0xc] sm:$0xf]
  %v1556 = vld [vmem:[#allocation3] sm:$0xff]
  %v1557 = vld [vmem:[#allocation3 + $0x8] sm:$0xff]
  %v1558 = vld [vmem:[#allocation3 + $0x10] sm:$0xff]
  %v1559 = vld [vmem:[#allocation3 + $0x18] sm:$0xff]
  %v1560 = vld [vmem:[#allocation3 + $0x20] sm:$0xff]
  %v1561 = vld [vmem:[#allocation3 + $0x28] sm:$0xff]
  %s1562 = scalar_lea.vmem %s4, 16
  %v1563 = vld [vmem:[%s1562] sm:$0xf]
  %v1564 = vld [vmem:[%s1562 + $0x4] sm:$0xf]
  %v1565 = vld [vmem:[%s1562 + $0x8] sm:$0xf]
  %v1566 = vld [vmem:[%s1562 + $0xc] sm:$0xf]
  %v1567 = vld [vmem:[#allocation3] sm:$0xff]
  %v1568 = vld [vmem:[#allocation3 + $0x8] sm:$0xff]
  %v1569 = vld [vmem:[#allocation3 + $0x10] sm:$0xff]
  %v1570 = vld [vmem:[#allocation3 + $0x18] sm:$0xff]
  %v1571 = vld [vmem:[#allocation3 + $0x20] sm:$0xff]
  %v1572 = vld [vmem:[#allocation3 + $0x28] sm:$0xff]
  %v1573 = vld [vmem:[#allocation3 + $0x30] sm:$0xff]
  %v1578 = vunpack.c.l.b16 %v1563
  %v1579 = vunpack.c.l.b16 %v1564
  %v1580 = vunpack.c.l.b16 %v1565
  %v1581 = vunpack.c.l.b16 %v1566
  %v1582 = vpack.c.b16 %v1579, %v1578
  %v1583 = vpack.c.b16 %v1581, %v1580
  %1591 = vrot.lane.b32.xlu0 %v1567, 127
  %v1592 = vpop.permute.xlu0 %1591
  %1593 = vrot.lane.b32.xlu0 %v1568, 127
  %v1594 = vpop.permute.xlu0 %1593
  %1595 = vrot.lane.b32.xlu0 %v1569, 127
  %v1596 = vpop.permute.xlu0 %1595
  %1597 = vrot.lane.b32.xlu0 %v1570, 127
  %v1598 = vpop.permute.xlu0 %1597
  %1599 = vrot.lane.b32.xlu0 %v1571, 127
  %v1600 = vpop.permute.xlu0 %1599
  %1601 = vrot.lane.b32.xlu0 %v1572, 127
  %v1602 = vpop.permute.xlu0 %1601
  %1603 = vrot.lane.b32.xlu0 %v1573, 127
  %v1604 = vpop.permute.xlu0 %1603
  %vm1605 = vcmask 1039360
  %v1606 = vsel %vm1605, %v1592, %v1594
  %v1607 = vsel %vm1605, %v1594, %v1596
  %v1608 = vsel %vm1605, %v1596, %v1598
  %v1609 = vsel %vm1605, %v1598, %v1600
  %v1610 = vsel %vm1605, %v1600, %v1602
  %v1611 = vsel %vm1605, %v1602, %v1604
  %vm1618 = vcmask 130048
  %v1620 = vsel %vm1618, %v1582, 0
  %v1623 = vsel %vm1618, %v1583, 0
  %1625 = vmatprep.subr.bf16.mxu0 %v1607
  %1626 = vmatpush1.bf16.msra.mxu0 %v1606
  %1627 = vmatprep.subr.bf16.mxu0 0
  %1628 = vmatpush1.bf16.msra.mxu0 0
  %1629 = vmatprep.subr.bf16.mxu0 0
  %1630 = vmatpush1.bf16.msra.mxu0 0
  %1631 = vmatprep.subr.bf16.mxu0 0
  %1632 = vmatpush1.bf16.msra.mxu0 0
  %1633 = vmatprep.subr.bf16.mxu0 0
  %1634 = vmatpush1.bf16.msra.mxu0 0
  %1635 = vmatprep.subr.bf16.mxu0 0
  %1636 = vmatpush1.bf16.msra.mxu0 0
  %1637 = vmatprep.subr.bf16.mxu0 0
  %1638 = vmatpush1.bf16.msra.mxu0 0
  %1639 = vmatprep.subr.bf16.mxu0 0
  %1640 = vmatpush1.bf16.msra.mxu0 0
  %1641 = vmatprep.subr.bf16.mxu0 0
  %1642 = vmatpush1.bf16.msra.mxu0 0
  %1643 = vmatprep.subr.bf16.mxu0 0
  %1644 = vmatpush1.bf16.msra.mxu0 0
  %1645 = vmatprep.subr.bf16.mxu0 0
  %1646 = vmatpush1.bf16.msra.mxu0 0
  %1647 = vmatprep.subr.bf16.mxu0 0
  %1648 = vmatpush1.bf16.msra.mxu0 0
  %1649 = vmatprep.subr.bf16.mxu0 0
  %1650 = vmatpush1.bf16.msra.mxu0 0
  %1651 = vmatprep.subr.bf16.mxu0 0
  %1652 = vmatpush1.bf16.msra.mxu0 0
  %1653 = vmatprep.subr.bf16.mxu0 0
  %1654 = vmatpush1.bf16.msra.mxu0 0
  %1655 = vmatprep.subr.bf16.mxu0 0
  %1656 = vmatpush1.bf16.msra.mxu0 0
  %1657 = vmatprep.mubr.bf16.mxu0 0
  %1658 = vmatmul.mubr.bf16.gmra.mrb[0].mxu0 %v1620
  %v1659 = vpop.f32.mrb[0].mxu0
  %v1660 = vadd.f32 0.0, %v1659
  %v1661 = vpop.f32.mrb[0].mxu0
  %v1662 = vadd.f32 0.0, %v1661
  %v1663 = vpop.f32.mrb[0].mxu0
  %v1664 = vadd.f32 0.0, %v1663
  %v1665 = vpop.f32.mrb[0].mxu0
  %v1666 = vadd.f32 0.0, %v1665
  %1667 = vmatprep.mubr.bf16.mxu0 0
  %1668 = vmatmul.mubr.bf16.gmra.mrb[0].mxu0 %v1623
  %v1669 = vpop.f32.mrb[0].mxu0
  %v1670 = vadd.f32 0.0, %v1669
  %v1671 = vpop.f32.mrb[0].mxu0
  %v1672 = vadd.f32 0.0, %v1671
  %v1673 = vpop.f32.mrb[0].mxu0
  %v1674 = vadd.f32 0.0, %v1673
  %v1675 = vpop.f32.mrb[0].mxu0
  %v1676 = vadd.f32 0.0, %v1675
  %1677 = vdwg.mxu0
  %1678 = vmatprep.subr.bf16.mxu0 %v1609
  %1679 = vmatpush1.bf16.msra.mxu0 %v1608
  %1680 = vmatprep.subr.bf16.mxu0 0
  %1681 = vmatpush1.bf16.msra.mxu0 0
  %1682 = vmatprep.subr.bf16.mxu0 0
  %1683 = vmatpush1.bf16.msra.mxu0 0
  %1684 = vmatprep.subr.bf16.mxu0 0
  %1685 = vmatpush1.bf16.msra.mxu0 0
  %1686 = vmatprep.subr.bf16.mxu0 0
  %1687 = vmatpush1.bf16.msra.mxu0 0
  %1688 = vmatprep.subr.bf16.mxu0 0
  %1689 = vmatpush1.bf16.msra.mxu0 0
  %1690 = vmatprep.subr.bf16.mxu0 0
  %1691 = vmatpush1.bf16.msra.mxu0 0
  %1692 = vmatprep.subr.bf16.mxu0 0
  %1693 = vmatpush1.bf16.msra.mxu0 0
  %1694 = vmatprep.subr.bf16.mxu0 0
  %1695 = vmatpush1.bf16.msra.mxu0 0
  %1696 = vmatprep.subr.bf16.mxu0 0
  %1697 = vmatpush1.bf16.msra.mxu0 0
  %1698 = vmatprep.subr.bf16.mxu0 0
  %1699 = vmatpush1.bf16.msra.mxu0 0
  %1700 = vmatprep.subr.bf16.mxu0 0
  %1701 = vmatpush1.bf16.msra.mxu0 0
  %1702 = vmatprep.subr.bf16.mxu0 0
  %1703 = vmatpush1.bf16.msra.mxu0 0
  %1704 = vmatprep.subr.bf16.mxu0 0
  %1705 = vmatpush1.bf16.msra.mxu0 0
  %1706 = vmatprep.subr.bf16.mxu0 0
  %1707 = vmatpush1.bf16.msra.mxu0 0
  %1708 = vmatprep.subr.bf16.mxu0 0
  %1709 = vmatpush1.bf16.msra.mxu0 0
  %1710 = vmatprep.mubr.bf16.mxu0 0
  %1711 = vmatmul.mubr.bf16.gmra.mrb[0].mxu0 %v1620
  %v1712 = vpop.f32.mrb[0].mxu0
  %v1713 = vadd.f32 0.0, %v1712
  %v1714 = vpop.f32.mrb[0].mxu0
  %v1715 = vadd.f32 0.0, %v1714
  %v1716 = vpop.f32.mrb[0].mxu0
  %v1717 = vadd.f32 0.0, %v1716
  %v1718 = vpop.f32.mrb[0].mxu0
  %v1719 = vadd.f32 0.0, %v1718
  %1720 = vmatprep.mubr.bf16.mxu0 0
  %1721 = vmatmul.mubr.bf16.gmra.mrb[0].mxu0 %v1623
  %v1722 = vpop.f32.mrb[0].mxu0
  %v1723 = vadd.f32 0.0, %v1722
  %v1724 = vpop.f32.mrb[0].mxu0
  %v1725 = vadd.f32 0.0, %v1724
  %v1726 = vpop.f32.mrb[0].mxu0
  %v1727 = vadd.f32 0.0, %v1726
  %v1728 = vpop.f32.mrb[0].mxu0
  %v1729 = vadd.f32 0.0, %v1728
  %1730 = vdwg.mxu0
  %1731 = vmatprep.subr.bf16.mxu0 %v1611
  %1732 = vmatpush1.bf16.msra.mxu0 %v1610
  %1733 = vmatprep.subr.bf16.mxu0 0
  %1734 = vmatpush1.bf16.msra.mxu0 0
  %1735 = vmatprep.subr.bf16.mxu0 0
  %1736 = vmatpush1.bf16.msra.mxu0 0
  %1737 = vmatprep.subr.bf16.mxu0 0
  %1738 = vmatpush1.bf16.msra.mxu0 0
  %1739 = vmatprep.subr.bf16.mxu0 0
  %1740 = vmatpush1.bf16.msra.mxu0 0
  %1741 = vmatprep.subr.bf16.mxu0 0
  %1742 = vmatpush1.bf16.msra.mxu0 0
  %1743 = vmatprep.subr.bf16.mxu0 0
  %1744 = vmatpush1.bf16.msra.mxu0 0
  %1745 = vmatprep.subr.bf16.mxu0 0
  %1746 = vmatpush1.bf16.msra.mxu0 0
  %1747 = vmatprep.subr.bf16.mxu0 0
  %1748 = vmatpush1.bf16.msra.mxu0 0
  %1749 = vmatprep.subr.bf16.mxu0 0
  %1750 = vmatpush1.bf16.msra.mxu0 0
  %1751 = vmatprep.subr.bf16.mxu0 0
  %1752 = vmatpush1.bf16.msra.mxu0 0
  %1753 = vmatprep.subr.bf16.mxu0 0
  %1754 = vmatpush1.bf16.msra.mxu0 0
  %1755 = vmatprep.subr.bf16.mxu0 0
  %1756 = vmatpush1.bf16.msra.mxu0 0
  %1757 = vmatprep.subr.bf16.mxu0 0
  %1758 = vmatpush1.bf16.msra.mxu0 0
  %1759 = vmatprep.subr.bf16.mxu0 0
  %1760 = vmatpush1.bf16.msra.mxu0 0
  %1761 = vmatprep.subr.bf16.mxu0 0
  %1762 = vmatpush1.bf16.msra.mxu0 0
  %1763 = vmatprep.mubr.bf16.mxu0 0
  %1764 = vmatmul.mubr.bf16.gmra.mrb[0].mxu0 %v1620
  %v1765 = vpop.f32.mrb[0].mxu0
  %v1766 = vadd.f32 0.0, %v1765
  %v1767 = vpop.f32.mrb[0].mxu0
  %v1768 = vadd.f32 0.0, %v1767
  %v1769 = vpop.f32.mrb[0].mxu0
  %v1770 = vadd.f32 0.0, %v1769
  %v1771 = vpop.f32.mrb[0].mxu0
  %v1772 = vadd.f32 0.0, %v1771
  %1773 = vmatprep.mubr.bf16.mxu0 0
  %1774 = vmatmul.mubr.bf16.gmra.mrb[0].mxu0 %v1623
  %v1775 = vpop.f32.mrb[0].mxu0
  %v1776 = vadd.f32 0.0, %v1775
  %v1777 = vpop.f32.mrb[0].mxu0
  %v1778 = vadd.f32 0.0, %v1777
  %v1779 = vpop.f32.mrb[0].mxu0
  %v1780 = vadd.f32 0.0, %v1779
  %v1781 = vpop.f32.mrb[0].mxu0
  %v1782 = vadd.f32 0.0, %v1781
  %1783 = vdwg.mxu0
  %v1788 = vunpack.c.l.b16 %v1552
  %v1789 = vunpack.c.l.b16 %v1553
  %v1790 = vunpack.c.l.b16 %v1554
  %v1791 = vunpack.c.l.b16 %v1555
  %v1792 = vpack.c.b16 %v1789, %v1788
  %v1793 = vpack.c.b16 %v1791, %v1790
  %v1795 = vsel %vm1618, %v1792, 0
  %v1798 = vsel %vm1618, %v1793, 0
  %1800 = vmatprep.subr.bf16.mxu0 %v1557
  %1801 = vmatpush1.bf16.msra.mxu0 %v1556
  %1802 = vmatprep.subr.bf16.mxu0 0
  %1803 = vmatpush1.bf16.msra.mxu0 0
  %1804 = vmatprep.subr.bf16.mxu0 0
  %1805 = vmatpush1.bf16.msra.mxu0 0
  %1806 = vmatprep.subr.bf16.mxu0 0
  %1807 = vmatpush1.bf16.msra.mxu0 0
  %1808 = vmatprep.subr.bf16.mxu0 0
  %1809 = vmatpush1.bf16.msra.mxu0 0
  %1810 = vmatprep.subr.bf16.mxu0 0
  %1811 = vmatpush1.bf16.msra.mxu0 0
  %1812 = vmatprep.subr.bf16.mxu0 0
  %1813 = vmatpush1.bf16.msra.mxu0 0
  %1814 = vmatprep.subr.bf16.mxu0 0
  %1815 = vmatpush1.bf16.msra.mxu0 0
  %1816 = vmatprep.subr.bf16.mxu0 0
  %1817 = vmatpush1.bf16.msra.mxu0 0
  %1818 = vmatprep.subr.bf16.mxu0 0
  %1819 = vmatpush1.bf16.msra.mxu0 0
  %1820 = vmatprep.subr.bf16.mxu0 0
  %1821 = vmatpush1.bf16.msra.mxu0 0
  %1822 = vmatprep.subr.bf16.mxu0 0
  %1823 = vmatpush1.bf16.msra.mxu0 0
  %1824 = vmatprep.subr.bf16.mxu0 0
  %1825 = vmatpush1.bf16.msra.mxu0 0
  %1826 = vmatprep.subr.bf16.mxu0 0
  %1827 = vmatpush1.bf16.msra.mxu0 0
  %1828 = vmatprep.subr.bf16.mxu0 0
  %1829 = vmatpush1.bf16.msra.mxu0 0
  %1830 = vmatprep.subr.bf16.mxu0 0
  %1831 = vmatpush1.bf16.msra.mxu0 0
  %1832 = vmatprep.mubr.bf16.mxu0 0
  %1833 = vmatmul.mubr.bf16.gmra.mrb[0].mxu0 %v1795
  %v1834 = vpop.f32.mrb[0].mxu0
  %v1835 = vadd.f32 %v1660, %v1834
  %v1836 = vpop.f32.mrb[0].mxu0
  %v1837 = vadd.f32 %v1662, %v1836
  %v1838 = vpop.f32.mrb[0].mxu0
  %v1839 = vadd.f32 %v1664, %v1838
  %v1840 = vpop.f32.mrb[0].mxu0
  %v1841 = vadd.f32 %v1666, %v1840
  %1842 = vmatprep.mubr.bf16.mxu0 0
  %1843 = vmatmul.mubr.bf16.gmra.mrb[0].mxu0 %v1798
  %v1844 = vpop.f32.mrb[0].mxu0
  %v1845 = vadd.f32 %v1670, %v1844
  %v1846 = vpop.f32.mrb[0].mxu0
  %v1847 = vadd.f32 %v1672, %v1846
  %v1848 = vpop.f32.mrb[0].mxu0
  %v1849 = vadd.f32 %v1674, %v1848
  %v1850 = vpop.f32.mrb[0].mxu0
  %v1851 = vadd.f32 %v1676, %v1850
  %1852 = vdwg.mxu0
  %1853 = vmatprep.subr.bf16.mxu0 %v1559
  %1854 = vmatpush1.bf16.msra.mxu0 %v1558
  %1855 = vmatprep.subr.bf16.mxu0 0
  %1856 = vmatpush1.bf16.msra.mxu0 0
  %1857 = vmatprep.subr.bf16.mxu0 0
  %1858 = vmatpush1.bf16.msra.mxu0 0
  %1859 = vmatprep.subr.bf16.mxu0 0
  %1860 = vmatpush1.bf16.msra.mxu0 0
  %1861 = vmatprep.subr.bf16.mxu0 0
  %1862 = vmatpush1.bf16.msra.mxu0 0
  %1863 = vmatprep.subr.bf16.mxu0 0
  %1864 = vmatpush1.bf16.msra.mxu0 0
  %1865 = vmatprep.subr.bf16.mxu0 0
  %1866 = vmatpush1.bf16.msra.mxu0 0
  %1867 = vmatprep.subr.bf16.mxu0 0
  %1868 = vmatpush1.bf16.msra.mxu0 0
  %1869 = vmatprep.subr.bf16.mxu0 0
  %1870 = vmatpush1.bf16.msra.mxu0 0
  %1871 = vmatprep.subr.bf16.mxu0 0
  %1872 = vmatpush1.bf16.msra.mxu0 0
  %1873 = vmatprep.subr.bf16.mxu0 0
  %1874 = vmatpush1.bf16.msra.mxu0 0
  %1875 = vmatprep.subr.bf16.mxu0 0
  %1876 = vmatpush1.bf16.msra.mxu0 0
  %1877 = vmatprep.subr.bf16.mxu0 0
  %1878 = vmatpush1.bf16.msra.mxu0 0
  %1879 = vmatprep.subr.bf16.mxu0 0
  %1880 = vmatpush1.bf16.msra.mxu0 0
  %1881 = vmatprep.subr.bf16.mxu0 0
  %1882 = vmatpush1.bf16.msra.mxu0 0
  %1883 = vmatprep.subr.bf16.mxu0 0
  %1884 = vmatpush1.bf16.msra.mxu0 0
  %1885 = vmatprep.mubr.bf16.mxu0 0
  %1886 = vmatmul.mubr.bf16.gmra.mrb[0].mxu0 %v1795
  %v1887 = vpop.f32.mrb[0].mxu0
  %v1888 = vadd.f32 %v1713, %v1887
  %v1889 = vpop.f32.mrb[0].mxu0
  %v1890 = vadd.f32 %v1715, %v1889
  %v1891 = vpop.f32.mrb[0].mxu0
  %v1892 = vadd.f32 %v1717, %v1891
  %v1893 = vpop.f32.mrb[0].mxu0
  %v1894 = vadd.f32 %v1719, %v1893
  %1895 = vmatprep.mubr.bf16.mxu0 0
  %1896 = vmatmul.mubr.bf16.gmra.mrb[0].mxu0 %v1798
  %v1897 = vpop.f32.mrb[0].mxu0
  %v1898 = vadd.f32 %v1723, %v1897
  %v1899 = vpop.f32.mrb[0].mxu0
  %v1900 = vadd.f32 %v1725, %v1899
  %v1901 = vpop.f32.mrb[0].mxu0
  %v1902 = vadd.f32 %v1727, %v1901
  %v1903 = vpop.f32.mrb[0].mxu0
  %v1904 = vadd.f32 %v1729, %v1903
  %1905 = vdwg.mxu0
  %1906 = vmatprep.subr.bf16.mxu0 %v1561
  %1907 = vmatpush1.bf16.msra.mxu0 %v1560
  %1908 = vmatprep.subr.bf16.mxu0 0
  %1909 = vmatpush1.bf16.msra.mxu0 0
  %1910 = vmatprep.subr.bf16.mxu0 0
  %1911 = vmatpush1.bf16.msra.mxu0 0
  %1912 = vmatprep.subr.bf16.mxu0 0
  %1913 = vmatpush1.bf16.msra.mxu0 0
  %1914 = vmatprep.subr.bf16.mxu0 0
  %1915 = vmatpush1.bf16.msra.mxu0 0
  %1916 = vmatprep.subr.bf16.mxu0 0
  %1917 = vmatpush1.bf16.msra.mxu0 0
  %1918 = vmatprep.subr.bf16.mxu0 0
  %1919 = vmatpush1.bf16.msra.mxu0 0
  %1920 = vmatprep.subr.bf16.mxu0 0
  %1921 = vmatpush1.bf16.msra.mxu0 0
  %1922 = vmatprep.subr.bf16.mxu0 0
  %1923 = vmatpush1.bf16.msra.mxu0 0
  %1924 = vmatprep.subr.bf16.mxu0 0
  %1925 = vmatpush1.bf16.msra.mxu0 0
  %1926 = vmatprep.subr.bf16.mxu0 0
  %1927 = vmatpush1.bf16.msra.mxu0 0
  %1928 = vmatprep.subr.bf16.mxu0 0
  %1929 = vmatpush1.bf16.msra.mxu0 0
  %1930 = vmatprep.subr.bf16.mxu0 0
  %1931 = vmatpush1.bf16.msra.mxu0 0
  %1932 = vmatprep.subr.bf16.mxu0 0
  %1933 = vmatpush1.bf16.msra.mxu0 0
  %1934 = vmatprep.subr.bf16.mxu0 0
  %1935 = vmatpush1.bf16.msra.mxu0 0
  %1936 = vmatprep.subr.bf16.mxu0 0
  %1937 = vmatpush1.bf16.msra.mxu0 0
  %1938 = vmatprep.mubr.bf16.mxu0 0
  %1939 = vmatmul.mubr.bf16.gmra.mrb[0].mxu0 %v1795
  %v1940 = vpop.f32.mrb[0].mxu0
  %v1941 = vadd.f32 %v1766, %v1940
  %v1942 = vpop.f32.mrb[0].mxu0
  %v1943 = vadd.f32 %v1768, %v1942
  %v1944 = vpop.f32.mrb[0].mxu0
  %v1945 = vadd.f32 %v1770, %v1944
  %v1946 = vpop.f32.mrb[0].mxu0
  %v1947 = vadd.f32 %v1772, %v1946
  %1948 = vmatprep.mubr.bf16.mxu0 0
  %1949 = vmatmul.mubr.bf16.gmra.mrb[0].mxu0 %v1798
  %v1950 = vpop.f32.mrb[0].mxu0
  %v1951 = vadd.f32 %v1776, %v1950
  %v1952 = vpop.f32.mrb[0].mxu0
  %v1953 = vadd.f32 %v1778, %v1952
  %v1954 = vpop.f32.mrb[0].mxu0
  %v1955 = vadd.f32 %v1780, %v1954
  %v1956 = vpop.f32.mrb[0].mxu0
  %v1957 = vadd.f32 %v1782, %v1956
  %1958 = vdwg.mxu0
  %s1959 = scalar_lea.vmem %s4, 32
  %v1960 = vld [vmem:[%s1959] sm:$0xf]
  %v1961 = vld [vmem:[%s1959 + $0x4] sm:$0xf]
  %v1962 = vld [vmem:[%s1959 + $0x8] sm:$0xf]
  %v1963 = vld [vmem:[%s1959 + $0xc] sm:$0xf]
  %v1968 = vunpack.c.l.b16 %v1960
  %v1969 = vunpack.c.l.b16 %v1961
  %v1970 = vunpack.c.l.b16 %v1962
  %v1971 = vunpack.c.l.b16 %v1963
  %v1972 = vpack.c.b16 %v1969, %v1968
  %v1973 = vpack.c.b16 %v1971, %v1970
  %1974 = vrot.lane.b32.xlu0 %v1567, 126
  %v1975 = vpop.permute.xlu0 %1974
  %1976 = vrot.lane.b32.xlu0 %v1568, 126
  %v1977 = vpop.permute.xlu0 %1976
  %1978 = vrot.lane.b32.xlu0 %v1569, 126
  %v1979 = vpop.permute.xlu0 %1978
  %1980 = vrot.lane.b32.xlu0 %v1570, 126
  %v1981 = vpop.permute.xlu0 %1980
  %1982 = vrot.lane.b32.xlu0 %v1571, 126
  %v1983 = vpop.permute.xlu0 %1982
  %1984 = vrot.lane.b32.xlu0 %v1572, 126
  %v1985 = vpop.permute.xlu0 %1984
  %1986 = vrot.lane.b32.xlu0 %v1573, 126
  %v1987 = vpop.permute.xlu0 %1986
  %vm1988 = vcmask 1031168
  %v1989 = vsel %vm1988, %v1975, %v1977
  %v1990 = vsel %vm1988, %v1977, %v1979
  %v1991 = vsel %vm1988, %v1979, %v1981
  %v1992 = vsel %vm1988, %v1981, %v1983
  %v1993 = vsel %vm1988, %v1983, %v1985
  %v1994 = vsel %vm1988, %v1985, %v1987
  %v2002 = vsel %vm1618, %v1972, 0
  %v2005 = vsel %vm1618, %v1973, 0
  %2007 = vmatprep.subr.bf16.mxu0 %v1990
  %2008 = vmatpush1.bf16.msra.mxu0 %v1989
  %2009 = vmatprep.subr.bf16.mxu0 0
  %2010 = vmatpush1.bf16.msra.mxu0 0
  %2011 = vmatprep.subr.bf16.mxu0 0
  %2012 = vmatpush1.bf16.msra.mxu0 0
  %2013 = vmatprep.subr.bf16.mxu0 0
  %2014 = vmatpush1.bf16.msra.mxu0 0
  %2015 = vmatprep.subr.bf16.mxu0 0
  %2016 = vmatpush1.bf16.msra.mxu0 0
  %2017 = vmatprep.subr.bf16.mxu0 0
  %2018 = vmatpush1.bf16.msra.mxu0 0
  %2019 = vmatprep.subr.bf16.mxu0 0
  %2020 = vmatpush1.bf16.msra.mxu0 0
  %2021 = vmatprep.subr.bf16.mxu0 0
  %2022 = vmatpush1.bf16.msra.mxu0 0
  %2023 = vmatprep.subr.bf16.mxu0 0
  %2024 = vmatpush1.bf16.msra.mxu0 0
  %2025 = vmatprep.subr.bf16.mxu0 0
  %2026 = vmatpush1.bf16.msra.mxu0 0
  %2027 = vmatprep.subr.bf16.mxu0 0
  %2028 = vmatpush1.bf16.msra.mxu0 0
  %2029 = vmatprep.subr.bf16.mxu0 0
  %2030 = vmatpush1.bf16.msra.mxu0 0
  %2031 = vmatprep.subr.bf16.mxu0 0
  %2032 = vmatpush1.bf16.msra.mxu0 0
  %2033 = vmatprep.subr.bf16.mxu0 0
  %2034 = vmatpush1.bf16.msra.mxu0 0
  %2035 = vmatprep.subr.bf16.mxu0 0
  %2036 = vmatpush1.bf16.msra.mxu0 0
  %2037 = vmatprep.subr.bf16.mxu0 0
  %2038 = vmatpush1.bf16.msra.mxu0 0
  %2039 = vmatprep.mubr.bf16.mxu0 0
  %2040 = vmatmul.mubr.bf16.gmra.mrb[0].mxu0 %v2002
  %v2041 = vpop.f32.mrb[0].mxu0
  %v2042 = vadd.f32 0.0, %v2041
  %v2043 = vpop.f32.mrb[0].mxu0
  %v2044 = vadd.f32 0.0, %v2043
  %v2045 = vpop.f32.mrb[0].mxu0
  %v2046 = vadd.f32 0.0, %v2045
  %v2047 = vpop.f32.mrb[0].mxu0
  %v2048 = vadd.f32 0.0, %v2047
  %2049 = vmatprep.mubr.bf16.mxu0 0
  %2050 = vmatmul.mubr.bf16.gmra.mrb[0].mxu0 %v2005
  %v2051 = vpop.f32.mrb[0].mxu0
  %v2052 = vadd.f32 0.0, %v2051
  %v2053 = vpop.f32.mrb[0].mxu0
  %v2054 = vadd.f32 0.0, %v2053
  %v2055 = vpop.f32.mrb[0].mxu0
  %v2056 = vadd.f32 0.0, %v2055
  %v2057 = vpop.f32.mrb[0].mxu0
  %v2058 = vadd.f32 0.0, %v2057
  %2059 = vdwg.mxu0
  %2060 = vmatprep.subr.bf16.mxu0 %v1992
  %2061 = vmatpush1.bf16.msra.mxu0 %v1991
  %2062 = vmatprep.subr.bf16.mxu0 0
  %2063 = vmatpush1.bf16.msra.mxu0 0
  %2064 = vmatprep.subr.bf16.mxu0 0
  %2065 = vmatpush1.bf16.msra.mxu0 0
  %2066 = vmatprep.subr.bf16.mxu0 0
  %2067 = vmatpush1.bf16.msra.mxu0 0
  %2068 = vmatprep.subr.bf16.mxu0 0
  %2069 = vmatpush1.bf16.msra.mxu0 0
  %2070 = vmatprep.subr.bf16.mxu0 0
  %2071 = vmatpush1.bf16.msra.mxu0 0
  %2072 = vmatprep.subr.bf16.mxu0 0
  %2073 = vmatpush1.bf16.msra.mxu0 0
  %2074 = vmatprep.subr.bf16.mxu0 0
  %2075 = vmatpush1.bf16.msra.mxu0 0
  %2076 = vmatprep.subr.bf16.mxu0 0
  %2077 = vmatpush1.bf16.msra.mxu0 0
  %2078 = vmatprep.subr.bf16.mxu0 0
  %2079 = vmatpush1.bf16.msra.mxu0 0
  %2080 = vmatprep.subr.bf16.mxu0 0
  %2081 = vmatpush1.bf16.msra.mxu0 0
  %2082 = vmatprep.subr.bf16.mxu0 0
  %2083 = vmatpush1.bf16.msra.mxu0 0
  %2084 = vmatprep.subr.bf16.mxu0 0
  %2085 = vmatpush1.bf16.msra.mxu0 0
  %2086 = vmatprep.subr.bf16.mxu0 0
  %2087 = vmatpush1.bf16.msra.mxu0 0
  %2088 = vmatprep.subr.bf16.mxu0 0
  %2089 = vmatpush1.bf16.msra.mxu0 0
  %2090 = vmatprep.subr.bf16.mxu0 0
  %2091 = vmatpush1.bf16.msra.mxu0 0
  %2092 = vmatprep.mubr.bf16.mxu0 0
  %2093 = vmatmul.mubr.bf16.gmra.mrb[0].mxu0 %v2002
  %v2094 = vpop.f32.mrb[0].mxu0
  %v2095 = vadd.f32 0.0, %v2094
  %v2096 = vpop.f32.mrb[0].mxu0
  %v2097 = vadd.f32 0.0, %v2096
  %v2098 = vpop.f32.mrb[0].mxu0
  %v2099 = vadd.f32 0.0, %v2098
  %v2100 = vpop.f32.mrb[0].mxu0
  %v2101 = vadd.f32 0.0, %v2100
  %2102 = vmatprep.mubr.bf16.mxu0 0
  %2103 = vmatmul.mubr.bf16.gmra.mrb[0].mxu0 %v2005
  %v2104 = vpop.f32.mrb[0].mxu0
  %v2105 = vadd.f32 0.0, %v2104
  %v2106 = vpop.f32.mrb[0].mxu0
  %v2107 = vadd.f32 0.0, %v2106
  %v2108 = vpop.f32.mrb[0].mxu0
  %v2109 = vadd.f32 0.0, %v2108
  %v2110 = vpop.f32.mrb[0].mxu0
  %v2111 = vadd.f32 0.0, %v2110
  %2112 = vdwg.mxu0
  %2113 = vmatprep.subr.bf16.mxu0 %v1994
  %2114 = vmatpush1.bf16.msra.mxu0 %v1993
  %2115 = vmatprep.subr.bf16.mxu0 0
  %2116 = vmatpush1.bf16.msra.mxu0 0
  %2117 = vmatprep.subr.bf16.mxu0 0
  %2118 = vmatpush1.bf16.msra.mxu0 0
  %2119 = vmatprep.subr.bf16.mxu0 0
  %2120 = vmatpush1.bf16.msra.mxu0 0
  %2121 = vmatprep.subr.bf16.mxu0 0
  %2122 = vmatpush1.bf16.msra.mxu0 0
  %2123 = vmatprep.subr.bf16.mxu0 0
  %2124 = vmatpush1.bf16.msra.mxu0 0
  %2125 = vmatprep.subr.bf16.mxu0 0
  %2126 = vmatpush1.bf16.msra.mxu0 0
  %2127 = vmatprep.subr.bf16.mxu0 0
  %2128 = vmatpush1.bf16.msra.mxu0 0
  %2129 = vmatprep.subr.bf16.mxu0 0
  %2130 = vmatpush1.bf16.msra.mxu0 0
  %2131 = vmatprep.subr.bf16.mxu0 0
  %2132 = vmatpush1.bf16.msra.mxu0 0
  %2133 = vmatprep.subr.bf16.mxu0 0
  %2134 = vmatpush1.bf16.msra.mxu0 0
  %2135 = vmatprep.subr.bf16.mxu0 0
  %2136 = vmatpush1.bf16.msra.mxu0 0
  %2137 = vmatprep.subr.bf16.mxu0 0
  %2138 = vmatpush1.bf16.msra.mxu0 0
  %2139 = vmatprep.subr.bf16.mxu0 0
  %2140 = vmatpush1.bf16.msra.mxu0 0
  %2141 = vmatprep.subr.bf16.mxu0 0
  %2142 = vmatpush1.bf16.msra.mxu0 0
  %2143 = vmatprep.subr.bf16.mxu0 0
  %2144 = vmatpush1.bf16.msra.mxu0 0
  %2145 = vmatprep.mubr.bf16.mxu0 0
  %2146 = vmatmul.mubr.bf16.gmra.mrb[0].mxu0 %v2002
  %v2147 = vpop.f32.mrb[0].mxu0
  %v2148 = vadd.f32 0.0, %v2147
  %v2149 = vpop.f32.mrb[0].mxu0
  %v2150 = vadd.f32 0.0, %v2149
  %v2151 = vpop.f32.mrb[0].mxu0
  %v2152 = vadd.f32 0.0, %v2151
  %v2153 = vpop.f32.mrb[0].mxu0
  %v2154 = vadd.f32 0.0, %v2153
  %2155 = vmatprep.mubr.bf16.mxu0 0
  %2156 = vmatmul.mubr.bf16.gmra.mrb[0].mxu0 %v2005
  %v2157 = vpop.f32.mrb[0].mxu0
  %v2158 = vadd.f32 0.0, %v2157
  %v2159 = vpop.f32.mrb[0].mxu0
  %v2160 = vadd.f32 0.0, %v2159
  %v2161 = vpop.f32.mrb[0].mxu0
  %v2162 = vadd.f32 0.0, %v2161
  %v2163 = vpop.f32.mrb[0].mxu0
  %v2164 = vadd.f32 0.0, %v2163
  %2165 = vdwg.mxu0
  %v2166 = vadd.f32 %v1835, %v2042
  %v2167 = vadd.f32 %v1837, %v2044
  %v2168 = vadd.f32 %v1888, %v2095
  %v2169 = vadd.f32 %v1890, %v2097
  %v2170 = vadd.f32 %v1941, %v2148
  %v2171 = vadd.f32 %v1943, %v2150
  %v2172 = vadd.f32 %v1839, %v2046
  %v2173 = vadd.f32 %v1841, %v2048
  %v2174 = vadd.f32 %v1892, %v2099
  %v2175 = vadd.f32 %v1894, %v2101
  %v2176 = vadd.f32 %v1945, %v2152
  %v2177 = vadd.f32 %v1947, %v2154
  %v2178 = vadd.f32 %v1845, %v2052
  %v2179 = vadd.f32 %v1847, %v2054
  %v2180 = vadd.f32 %v1898, %v2105
  %v2181 = vadd.f32 %v1900, %v2107
  %v2182 = vadd.f32 %v1951, %v2158
  %v2183 = vadd.f32 %v1953, %v2160
  %v2184 = vadd.f32 %v1849, %v2056
  %v2185 = vadd.f32 %v1851, %v2058
  %v2186 = vadd.f32 %v1902, %v2109
  %v2187 = vadd.f32 %v1904, %v2111
  %v2188 = vadd.f32 %v1955, %v2162
  %v2189 = vadd.f32 %v1957, %v2164
  %s2190 = scalar_lea.vmem %s4, 48
  %v2191 = vld [vmem:[%s2190] sm:$0xf]
  %v2192 = vld [vmem:[%s2190 + $0x4] sm:$0xf]
  %v2193 = vld [vmem:[%s2190 + $0x8] sm:$0xf]
  %v2194 = vld [vmem:[%s2190 + $0xc] sm:$0xf]
  %v2199 = vunpack.c.l.b16 %v2191
  %v2200 = vunpack.c.l.b16 %v2192
  %v2201 = vunpack.c.l.b16 %v2193
  %v2202 = vunpack.c.l.b16 %v2194
  %v2203 = vpack.c.b16 %v2200, %v2199
  %v2204 = vpack.c.b16 %v2202, %v2201
  %2205 = vrot.lane.b32.xlu0 %v1567, 125
  %v2206 = vpop.permute.xlu0 %2205
  %2207 = vrot.lane.b32.xlu0 %v1568, 125
  %v2208 = vpop.permute.xlu0 %2207
  %2209 = vrot.lane.b32.xlu0 %v1569, 125
  %v2210 = vpop.permute.xlu0 %2209
  %2211 = vrot.lane.b32.xlu0 %v1570, 125
  %v2212 = vpop.permute.xlu0 %2211
  %2213 = vrot.lane.b32.xlu0 %v1571, 125
  %v2214 = vpop.permute.xlu0 %2213
  %2215 = vrot.lane.b32.xlu0 %v1572, 125
  %v2216 = vpop.permute.xlu0 %2215
  %2217 = vrot.lane.b32.xlu0 %v1573, 125
  %v2218 = vpop.permute.xlu0 %2217
  %vm2219 = vcmask 1022976
  %v2220 = vsel %vm2219, %v2206, %v2208
  %v2221 = vsel %vm2219, %v2208, %v2210
  %v2222 = vsel %vm2219, %v2210, %v2212
  %v2223 = vsel %vm2219, %v2212, %v2214
  %v2224 = vsel %vm2219, %v2214, %v2216
  %v2225 = vsel %vm2219, %v2216, %v2218
  %v2233 = vsel %vm1618, %v2203, 0
  %v2236 = vsel %vm1618, %v2204, 0
  %2238 = vmatprep.subr.bf16.mxu0 %v2221
  %2239 = vmatpush1.bf16.msra.mxu0 %v2220
  %2240 = vmatprep.subr.bf16.mxu0 0
  %2241 = vmatpush1.bf16.msra.mxu0 0
  %2242 = vmatprep.subr.bf16.mxu0 0
  %2243 = vmatpush1.bf16.msra.mxu0 0
  %2244 = vmatprep.subr.bf16.mxu0 0
  %2245 = vmatpush1.bf16.msra.mxu0 0
  %2246 = vmatprep.subr.bf16.mxu0 0
  %2247 = vmatpush1.bf16.msra.mxu0 0
  %2248 = vmatprep.subr.bf16.mxu0 0
  %2249 = vmatpush1.bf16.msra.mxu0 0
  %2250 = vmatprep.subr.bf16.mxu0 0
  %2251 = vmatpush1.bf16.msra.mxu0 0
  %2252 = vmatprep.subr.bf16.mxu0 0
  %2253 = vmatpush1.bf16.msra.mxu0 0
  %2254 = vmatprep.subr.bf16.mxu0 0
  %2255 = vmatpush1.bf16.msra.mxu0 0
  %2256 = vmatprep.subr.bf16.mxu0 0
  %2257 = vmatpush1.bf16.msra.mxu0 0
  %2258 = vmatprep.subr.bf16.mxu0 0
  %2259 = vmatpush1.bf16.msra.mxu0 0
  %2260 = vmatprep.subr.bf16.mxu0 0
  %2261 = vmatpush1.bf16.msra.mxu0 0
  %2262 = vmatprep.subr.bf16.mxu0 0
  %2263 = vmatpush1.bf16.msra.mxu0 0
  %2264 = vmatprep.subr.bf16.mxu0 0
  %2265 = vmatpush1.bf16.msra.mxu0 0
  %2266 = vmatprep.subr.bf16.mxu0 0
  %2267 = vmatpush1.bf16.msra.mxu0 0
  %2268 = vmatprep.subr.bf16.mxu0 0
  %2269 = vmatpush1.bf16.msra.mxu0 0
  %2270 = vmatprep.mubr.bf16.mxu0 0
  %2271 = vmatmul.mubr.bf16.gmra.mrb[0].mxu0 %v2233
  %v2272 = vpop.f32.mrb[0].mxu0
  %v2273 = vadd.f32 0.0, %v2272
  %v2274 = vpop.f32.mrb[0].mxu0
  %v2275 = vadd.f32 0.0, %v2274
  %v2276 = vpop.f32.mrb[0].mxu0
  %v2277 = vadd.f32 0.0, %v2276
  %v2278 = vpop.f32.mrb[0].mxu0
  %v2279 = vadd.f32 0.0, %v2278
  %2280 = vmatprep.mubr.bf16.mxu0 0
  %2281 = vmatmul.mubr.bf16.gmra.mrb[0].mxu0 %v2236
  %v2282 = vpop.f32.mrb[0].mxu0
  %v2283 = vadd.f32 0.0, %v2282
  %v2284 = vpop.f32.mrb[0].mxu0
  %v2285 = vadd.f32 0.0, %v2284
  %v2286 = vpop.f32.mrb[0].mxu0
  %v2287 = vadd.f32 0.0, %v2286
  %v2288 = vpop.f32.mrb[0].mxu0
  %v2289 = vadd.f32 0.0, %v2288
  %2290 = vdwg.mxu0
  %2291 = vmatprep.subr.bf16.mxu0 %v2223
  %2292 = vmatpush1.bf16.msra.mxu0 %v2222
  %2293 = vmatprep.subr.bf16.mxu0 0
  %2294 = vmatpush1.bf16.msra.mxu0 0
  %2295 = vmatprep.subr.bf16.mxu0 0
  %2296 = vmatpush1.bf16.msra.mxu0 0
  %2297 = vmatprep.subr.bf16.mxu0 0
  %2298 = vmatpush1.bf16.msra.mxu0 0
  %2299 = vmatprep.subr.bf16.mxu0 0
  %2300 = vmatpush1.bf16.msra.mxu0 0
  %2301 = vmatprep.subr.bf16.mxu0 0
  %2302 = vmatpush1.bf16.msra.mxu0 0
  %2303 = vmatprep.subr.bf16.mxu0 0
  %2304 = vmatpush1.bf16.msra.mxu0 0
  %2305 = vmatprep.subr.bf16.mxu0 0
  %2306 = vmatpush1.bf16.msra.mxu0 0
  %2307 = vmatprep.subr.bf16.mxu0 0
  %2308 = vmatpush1.bf16.msra.mxu0 0
  %2309 = vmatprep.subr.bf16.mxu0 0
  %2310 = vmatpush1.bf16.msra.mxu0 0
  %2311 = vmatprep.subr.bf16.mxu0 0
  %2312 = vmatpush1.bf16.msra.mxu0 0
  %2313 = vmatprep.subr.bf16.mxu0 0
  %2314 = vmatpush1.bf16.msra.mxu0 0
  %2315 = vmatprep.subr.bf16.mxu0 0
  %2316 = vmatpush1.bf16.msra.mxu0 0
  %2317 = vmatprep.subr.bf16.mxu0 0
  %2318 = vmatpush1.bf16.msra.mxu0 0
  %2319 = vmatprep.subr.bf16.mxu0 0
  %2320 = vmatpush1.bf16.msra.mxu0 0
  %2321 = vmatprep.subr.bf16.mxu0 0
  %2322 = vmatpush1.bf16.msra.mxu0 0
  %2323 = vmatprep.mubr.bf16.mxu0 0
  %2324 = vmatmul.mubr.bf16.gmra.mrb[0].mxu0 %v2233
  %v2325 = vpop.f32.mrb[0].mxu0
  %v2326 = vadd.f32 0.0, %v2325
  %v2327 = vpop.f32.mrb[0].mxu0
  %v2328 = vadd.f32 0.0, %v2327
  %v2329 = vpop.f32.mrb[0].mxu0
  %v2330 = vadd.f32 0.0, %v2329
  %v2331 = vpop.f32.mrb[0].mxu0
  %v2332 = vadd.f32 0.0, %v2331
  %2333 = vmatprep.mubr.bf16.mxu0 0
  %2334 = vmatmul.mubr.bf16.gmra.mrb[0].mxu0 %v2236
  %v2335 = vpop.f32.mrb[0].mxu0
  %v2336 = vadd.f32 0.0, %v2335
  %v2337 = vpop.f32.mrb[0].mxu0
  %v2338 = vadd.f32 0.0, %v2337
  %v2339 = vpop.f32.mrb[0].mxu0
  %v2340 = vadd.f32 0.0, %v2339
  %v2341 = vpop.f32.mrb[0].mxu0
  %v2342 = vadd.f32 0.0, %v2341
  %2343 = vdwg.mxu0
  %2344 = vmatprep.subr.bf16.mxu0 %v2225
  %2345 = vmatpush1.bf16.msra.mxu0 %v2224
  %2346 = vmatprep.subr.bf16.mxu0 0
  %2347 = vmatpush1.bf16.msra.mxu0 0
  %2348 = vmatprep.subr.bf16.mxu0 0
  %2349 = vmatpush1.bf16.msra.mxu0 0
  %2350 = vmatprep.subr.bf16.mxu0 0
  %2351 = vmatpush1.bf16.msra.mxu0 0
  %2352 = vmatprep.subr.bf16.mxu0 0
  %2353 = vmatpush1.bf16.msra.mxu0 0
  %2354 = vmatprep.subr.bf16.mxu0 0
  %2355 = vmatpush1.bf16.msra.mxu0 0
  %2356 = vmatprep.subr.bf16.mxu0 0
  %2357 = vmatpush1.bf16.msra.mxu0 0
  %2358 = vmatprep.subr.bf16.mxu0 0
  %2359 = vmatpush1.bf16.msra.mxu0 0
  %2360 = vmatprep.subr.bf16.mxu0 0
  %2361 = vmatpush1.bf16.msra.mxu0 0
  %2362 = vmatprep.subr.bf16.mxu0 0
  %2363 = vmatpush1.bf16.msra.mxu0 0
  %2364 = vmatprep.subr.bf16.mxu0 0
  %2365 = vmatpush1.bf16.msra.mxu0 0
  %2366 = vmatprep.subr.bf16.mxu0 0
  %2367 = vmatpush1.bf16.msra.mxu0 0
  %2368 = vmatprep.subr.bf16.mxu0 0
  %2369 = vmatpush1.bf16.msra.mxu0 0
  %2370 = vmatprep.subr.bf16.mxu0 0
  %2371 = vmatpush1.bf16.msra.mxu0 0
  %2372 = vmatprep.subr.bf16.mxu0 0
  %2373 = vmatpush1.bf16.msra.mxu0 0
  %2374 = vmatprep.subr.bf16.mxu0 0
  %2375 = vmatpush1.bf16.msra.mxu0 0
  %2376 = vmatprep.mubr.bf16.mxu0 0
  %2377 = vmatmul.mubr.bf16.gmra.mrb[0].mxu0 %v2233
  %v2378 = vpop.f32.mrb[0].mxu0
  %v2379 = vadd.f32 0.0, %v2378
  %v2380 = vpop.f32.mrb[0].mxu0
  %v2381 = vadd.f32 0.0, %v2380
  %v2382 = vpop.f32.mrb[0].mxu0
  %v2383 = vadd.f32 0.0, %v2382
  %v2384 = vpop.f32.mrb[0].mxu0
  %v2385 = vadd.f32 0.0, %v2384
  %2386 = vmatprep.mubr.bf16.mxu0 0
  %2387 = vmatmul.mubr.bf16.gmra.mrb[0].mxu0 %v2236
  %v2388 = vpop.f32.mrb[0].mxu0
  %v2389 = vadd.f32 0.0, %v2388
  %v2390 = vpop.f32.mrb[0].mxu0
  %v2391 = vadd.f32 0.0, %v2390
  %v2392 = vpop.f32.mrb[0].mxu0
  %v2393 = vadd.f32 0.0, %v2392
  %v2394 = vpop.f32.mrb[0].mxu0
  %v2395 = vadd.f32 0.0, %v2394
  %2396 = vdwg.mxu0
  %v2397 = vadd.f32 %v2166, %v2273
  %v2398 = vadd.f32 %v2167, %v2275
  %v2399 = vadd.f32 %v2168, %v2326
  %v2400 = vadd.f32 %v2169, %v2328
  %v2401 = vadd.f32 %v2170, %v2379
  %v2402 = vadd.f32 %v2171, %v2381
  %v2403 = vadd.f32 %v2172, %v2277
  %v2404 = vadd.f32 %v2173, %v2279
  %v2405 = vadd.f32 %v2174, %v2330
  %v2406 = vadd.f32 %v2175, %v2332
  %v2407 = vadd.f32 %v2176, %v2383
  %v2408 = vadd.f32 %v2177, %v2385
  %v2409 = vadd.f32 %v2178, %v2283
  %v2410 = vadd.f32 %v2179, %v2285
  %v2411 = vadd.f32 %v2180, %v2336
  %v2412 = vadd.f32 %v2181, %v2338
  %v2413 = vadd.f32 %v2182, %v2389
  %v2414 = vadd.f32 %v2183, %v2391
  %v2415 = vadd.f32 %v2184, %v2287
  %v2416 = vadd.f32 %v2185, %v2289
  %v2417 = vadd.f32 %v2186, %v2340
  %v2418 = vadd.f32 %v2187, %v2342
  %v2419 = vadd.f32 %v2188, %v2393
  %v2420 = vadd.f32 %v2189, %v2395
  %s2421 = scalar_lea.vmem %s4, 64
  %v2422 = vld [vmem:[%s2421] sm:$0xf]
  %v2423 = vld [vmem:[%s2421 + $0x4] sm:$0xf]
  %v2424 = vld [vmem:[%s2421 + $0x8] sm:$0xf]
  %v2425 = vld [vmem:[%s2421 + $0xc] sm:$0xf]
  %v2430 = vunpack.c.l.b16 %v2422
  %v2431 = vunpack.c.l.b16 %v2423
  %v2432 = vunpack.c.l.b16 %v2424
  %v2433 = vunpack.c.l.b16 %v2425
  %v2434 = vpack.c.b16 %v2431, %v2430
  %v2435 = vpack.c.b16 %v2433, %v2432
  %2436 = vrot.lane.b32.xlu0 %v1567, 124
  %v2437 = vpop.permute.xlu0 %2436
  %2438 = vrot.lane.b32.xlu0 %v1568, 124
  %v2439 = vpop.permute.xlu0 %2438
  %2440 = vrot.lane.b32.xlu0 %v1569, 124
  %v2441 = vpop.permute.xlu0 %2440
  %2442 = vrot.lane.b32.xlu0 %v1570, 124
  %v2443 = vpop.permute.xlu0 %2442
  %2444 = vrot.lane.b32.xlu0 %v1571, 124
  %v2445 = vpop.permute.xlu0 %2444
  %2446 = vrot.lane.b32.xlu0 %v1572, 124
  %v2447 = vpop.permute.xlu0 %2446
  %2448 = vrot.lane.b32.xlu0 %v1573, 124
  %v2449 = vpop.permute.xlu0 %2448
  %vm2450 = vcmask 1014784
  %v2451 = vsel %vm2450, %v2437, %v2439
  %v2452 = vsel %vm2450, %v2439, %v2441
  %v2453 = vsel %vm2450, %v2441, %v2443
  %v2454 = vsel %vm2450, %v2443, %v2445
  %v2455 = vsel %vm2450, %v2445, %v2447
  %v2456 = vsel %vm2450, %v2447, %v2449
  %v2464 = vsel %vm1618, %v2434, 0
  %v2467 = vsel %vm1618, %v2435, 0
  %2469 = vmatprep.subr.bf16.mxu0 %v2452
  %2470 = vmatpush1.bf16.msra.mxu0 %v2451
  %2471 = vmatprep.subr.bf16.mxu0 0
  %2472 = vmatpush1.bf16.msra.mxu0 0
  %2473 = vmatprep.subr.bf16.mxu0 0
  %2474 = vmatpush1.bf16.msra.mxu0 0
  %2475 = vmatprep.subr.bf16.mxu0 0
  %2476 = vmatpush1.bf16.msra.mxu0 0
  %2477 = vmatprep.subr.bf16.mxu0 0
  %2478 = vmatpush1.bf16.msra.mxu0 0
  %2479 = vmatprep.subr.bf16.mxu0 0
  %2480 = vmatpush1.bf16.msra.mxu0 0
  %2481 = vmatprep.subr.bf16.mxu0 0
  %2482 = vmatpush1.bf16.msra.mxu0 0
  %2483 = vmatprep.subr.bf16.mxu0 0
  %2484 = vmatpush1.bf16.msra.mxu0 0
  %2485 = vmatprep.subr.bf16.mxu0 0
  %2486 = vmatpush1.bf16.msra.mxu0 0
  %2487 = vmatprep.subr.bf16.mxu0 0
  %2488 = vmatpush1.bf16.msra.mxu0 0
  %2489 = vmatprep.subr.bf16.mxu0 0
  %2490 = vmatpush1.bf16.msra.mxu0 0
  %2491 = vmatprep.subr.bf16.mxu0 0
  %2492 = vmatpush1.bf16.msra.mxu0 0
  %2493 = vmatprep.subr.bf16.mxu0 0
  %2494 = vmatpush1.bf16.msra.mxu0 0
  %2495 = vmatprep.subr.bf16.mxu0 0
  %2496 = vmatpush1.bf16.msra.mxu0 0
  %2497 = vmatprep.subr.bf16.mxu0 0
  %2498 = vmatpush1.bf16.msra.mxu0 0
  %2499 = vmatprep.subr.bf16.mxu0 0
  %2500 = vmatpush1.bf16.msra.mxu0 0
  %2501 = vmatprep.mubr.bf16.mxu0 0
  %2502 = vmatmul.mubr.bf16.gmra.mrb[0].mxu0 %v2464
  %v2503 = vpop.f32.mrb[0].mxu0
  %v2504 = vadd.f32 0.0, %v2503
  %v2505 = vpop.f32.mrb[0].mxu0
  %v2506 = vadd.f32 0.0, %v2505
  %v2507 = vpop.f32.mrb[0].mxu0
  %v2508 = vadd.f32 0.0, %v2507
  %v2509 = vpop.f32.mrb[0].mxu0
  %v2510 = vadd.f32 0.0, %v2509
  %2511 = vmatprep.mubr.bf16.mxu0 0
  %2512 = vmatmul.mubr.bf16.gmra.mrb[0].mxu0 %v2467
  %v2513 = vpop.f32.mrb[0].mxu0
  %v2514 = vadd.f32 0.0, %v2513
  %v2515 = vpop.f32.mrb[0].mxu0
  %v2516 = vadd.f32 0.0, %v2515
  %v2517 = vpop.f32.mrb[0].mxu0
  %v2518 = vadd.f32 0.0, %v2517
  %v2519 = vpop.f32.mrb[0].mxu0
  %v2520 = vadd.f32 0.0, %v2519
  %2521 = vdwg.mxu0
  %2522 = vmatprep.subr.bf16.mxu0 %v2454
  %2523 = vmatpush1.bf16.msra.mxu0 %v2453
  %2524 = vmatprep.subr.bf16.mxu0 0
  %2525 = vmatpush1.bf16.msra.mxu0 0
  %2526 = vmatprep.subr.bf16.mxu0 0
  %2527 = vmatpush1.bf16.msra.mxu0 0
  %2528 = vmatprep.subr.bf16.mxu0 0
  %2529 = vmatpush1.bf16.msra.mxu0 0
  %2530 = vmatprep.subr.bf16.mxu0 0
  %2531 = vmatpush1.bf16.msra.mxu0 0
  %2532 = vmatprep.subr.bf16.mxu0 0
  %2533 = vmatpush1.bf16.msra.mxu0 0
  %2534 = vmatprep.subr.bf16.mxu0 0
  %2535 = vmatpush1.bf16.msra.mxu0 0
  %2536 = vmatprep.subr.bf16.mxu0 0
  %2537 = vmatpush1.bf16.msra.mxu0 0
  %2538 = vmatprep.subr.bf16.mxu0 0
  %2539 = vmatpush1.bf16.msra.mxu0 0
  %2540 = vmatprep.subr.bf16.mxu0 0
  %2541 = vmatpush1.bf16.msra.mxu0 0
  %2542 = vmatprep.subr.bf16.mxu0 0
  %2543 = vmatpush1.bf16.msra.mxu0 0
  %2544 = vmatprep.subr.bf16.mxu0 0
  %2545 = vmatpush1.bf16.msra.mxu0 0
  %2546 = vmatprep.subr.bf16.mxu0 0
  %2547 = vmatpush1.bf16.msra.mxu0 0
  %2548 = vmatprep.subr.bf16.mxu0 0
  %2549 = vmatpush1.bf16.msra.mxu0 0
  %2550 = vmatprep.subr.bf16.mxu0 0
  %2551 = vmatpush1.bf16.msra.mxu0 0
  %2552 = vmatprep.subr.bf16.mxu0 0
  %2553 = vmatpush1.bf16.msra.mxu0 0
  %2554 = vmatprep.mubr.bf16.mxu0 0
  %2555 = vmatmul.mubr.bf16.gmra.mrb[0].mxu0 %v2464
  %v2556 = vpop.f32.mrb[0].mxu0
  %v2557 = vadd.f32 0.0, %v2556
  %v2558 = vpop.f32.mrb[0].mxu0
  %v2559 = vadd.f32 0.0, %v2558
  %v2560 = vpop.f32.mrb[0].mxu0
  %v2561 = vadd.f32 0.0, %v2560
  %v2562 = vpop.f32.mrb[0].mxu0
  %v2563 = vadd.f32 0.0, %v2562
  %2564 = vmatprep.mubr.bf16.mxu0 0
  %2565 = vmatmul.mubr.bf16.gmra.mrb[0].mxu0 %v2467
  %v2566 = vpop.f32.mrb[0].mxu0
  %v2567 = vadd.f32 0.0, %v2566
  %v2568 = vpop.f32.mrb[0].mxu0
  %v2569 = vadd.f32 0.0, %v2568
  %v2570 = vpop.f32.mrb[0].mxu0
  %v2571 = vadd.f32 0.0, %v2570
  %v2572 = vpop.f32.mrb[0].mxu0
  %v2573 = vadd.f32 0.0, %v2572
  %2574 = vdwg.mxu0
  %2575 = vmatprep.subr.bf16.mxu0 %v2456
  %2576 = vmatpush1.bf16.msra.mxu0 %v2455
  %2577 = vmatprep.subr.bf16.mxu0 0
  %2578 = vmatpush1.bf16.msra.mxu0 0
  %2579 = vmatprep.subr.bf16.mxu0 0
  %2580 = vmatpush1.bf16.msra.mxu0 0
  %2581 = vmatprep.subr.bf16.mxu0 0
  %2582 = vmatpush1.bf16.msra.mxu0 0
  %2583 = vmatprep.subr.bf16.mxu0 0
  %2584 = vmatpush1.bf16.msra.mxu0 0
  %2585 = vmatprep.subr.bf16.mxu0 0
  %2586 = vmatpush1.bf16.msra.mxu0 0
  %2587 = vmatprep.subr.bf16.mxu0 0
  %2588 = vmatpush1.bf16.msra.mxu0 0
  %2589 = vmatprep.subr.bf16.mxu0 0
  %2590 = vmatpush1.bf16.msra.mxu0 0
  %2591 = vmatprep.subr.bf16.mxu0 0
  %2592 = vmatpush1.bf16.msra.mxu0 0
  %2593 = vmatprep.subr.bf16.mxu0 0
  %2594 = vmatpush1.bf16.msra.mxu0 0
  %2595 = vmatprep.subr.bf16.mxu0 0
  %2596 = vmatpush1.bf16.msra.mxu0 0
  %2597 = vmatprep.subr.bf16.mxu0 0
  %2598 = vmatpush1.bf16.msra.mxu0 0
  %2599 = vmatprep.subr.bf16.mxu0 0
  %2600 = vmatpush1.bf16.msra.mxu0 0
  %2601 = vmatprep.subr.bf16.mxu0 0
  %2602 = vmatpush1.bf16.msra.mxu0 0
  %2603 = vmatprep.subr.bf16.mxu0 0
  %2604 = vmatpush1.bf16.msra.mxu0 0
  %2605 = vmatprep.subr.bf16.mxu0 0
  %2606 = vmatpush1.bf16.msra.mxu0 0
  %2607 = vmatprep.mubr.bf16.mxu0 0
  %2608 = vmatmul.mubr.bf16.gmra.mrb[0].mxu0 %v2464
  %v2609 = vpop.f32.mrb[0].mxu0
  %v2610 = vadd.f32 0.0, %v2609
  %v2611 = vpop.f32.mrb[0].mxu0
  %v2612 = vadd.f32 0.0, %v2611
  %v2613 = vpop.f32.mrb[0].mxu0
  %v2614 = vadd.f32 0.0, %v2613
  %v2615 = vpop.f32.mrb[0].mxu0
  %v2616 = vadd.f32 0.0, %v2615
  %2617 = vmatprep.mubr.bf16.mxu0 0
  %2618 = vmatmul.mubr.bf16.gmra.mrb[0].mxu0 %v2467
  %v2619 = vpop.f32.mrb[0].mxu0
  %v2620 = vadd.f32 0.0, %v2619
  %v2621 = vpop.f32.mrb[0].mxu0
  %v2622 = vadd.f32 0.0, %v2621
  %v2623 = vpop.f32.mrb[0].mxu0
  %v2624 = vadd.f32 0.0, %v2623
  %v2625 = vpop.f32.mrb[0].mxu0
  %v2626 = vadd.f32 0.0, %v2625
  %2627 = vdwg.mxu0
  %v2628 = vadd.f32 %v2397, %v2504
  %v2629 = vadd.f32 %v2398, %v2506
  %v2630 = vadd.f32 %v2399, %v2557
  %v2631 = vadd.f32 %v2400, %v2559
  %v2632 = vadd.f32 %v2401, %v2610
  %v2633 = vadd.f32 %v2402, %v2612
  %v2634 = vadd.f32 %v2403, %v2508
  %v2635 = vadd.f32 %v2404, %v2510
  %v2636 = vadd.f32 %v2405, %v2561
  %v2637 = vadd.f32 %v2406, %v2563
  %v2638 = vadd.f32 %v2407, %v2614
  %v2639 = vadd.f32 %v2408, %v2616
  %v2640 = vadd.f32 %v2409, %v2514
  %v2641 = vadd.f32 %v2410, %v2516
  %v2642 = vadd.f32 %v2411, %v2567
  %v2643 = vadd.f32 %v2412, %v2569
  %v2644 = vadd.f32 %v2413, %v2620
  %v2645 = vadd.f32 %v2414, %v2622
  %v2646 = vadd.f32 %v2415, %v2518
  %v2647 = vadd.f32 %v2416, %v2520
  %v2648 = vadd.f32 %v2417, %v2571
  %v2649 = vadd.f32 %v2418, %v2573
  %v2650 = vadd.f32 %v2419, %v2624
  %v2651 = vadd.f32 %v2420, %v2626
  %s2652 = scalar_lea.vmem %s4, 80
  %v2653 = vld [vmem:[%s2652] sm:$0xf]
  %v2654 = vld [vmem:[%s2652 + $0x4] sm:$0xf]
  %v2655 = vld [vmem:[%s2652 + $0x8] sm:$0xf]
  %v2656 = vld [vmem:[%s2652 + $0xc] sm:$0xf]
  %v2661 = vunpack.c.l.b16 %v2653
  %v2662 = vunpack.c.l.b16 %v2654
  %v2663 = vunpack.c.l.b16 %v2655
  %v2664 = vunpack.c.l.b16 %v2656
  %v2665 = vpack.c.b16 %v2662, %v2661
  %v2666 = vpack.c.b16 %v2664, %v2663
  %2667 = vrot.lane.b32.xlu0 %v1567, 110
  %v2668 = vpop.permute.xlu0 %2667
  %2669 = vrot.lane.b32.xlu0 %v1568, 110
  %v2670 = vpop.permute.xlu0 %2669
  %2671 = vrot.lane.b32.xlu0 %v1569, 110
  %v2672 = vpop.permute.xlu0 %2671
  %2673 = vrot.lane.b32.xlu0 %v1570, 110
  %v2674 = vpop.permute.xlu0 %2673
  %2675 = vrot.lane.b32.xlu0 %v1571, 110
  %v2676 = vpop.permute.xlu0 %2675
  %2677 = vrot.lane.b32.xlu0 %v1572, 110
  %v2678 = vpop.permute.xlu0 %2677
  %2679 = vrot.lane.b32.xlu0 %v1573, 110
  %v2680 = vpop.permute.xlu0 %2679
  %vm2681 = vcmask 900096
  %v2682 = vsel %vm2681, %v2668, %v2670
  %v2683 = vsel %vm2681, %v2670, %v2672
  %v2684 = vsel %vm2681, %v2672, %v2674
  %v2685 = vsel %vm2681, %v2674, %v2676
  %v2686 = vsel %vm2681, %v2676, %v2678
  %v2687 = vsel %vm2681, %v2678, %v2680
  %v2695 = vsel %vm1618, %v2665, 0
  %v2698 = vsel %vm1618, %v2666, 0
  %2700 = vmatprep.subr.bf16.mxu0 %v2683
  %2701 = vmatpush1.bf16.msra.mxu0 %v2682
  %2702 = vmatprep.subr.bf16.mxu0 0
  %2703 = vmatpush1.bf16.msra.mxu0 0
  %2704 = vmatprep.subr.bf16.mxu0 0
  %2705 = vmatpush1.bf16.msra.mxu0 0
  %2706 = vmatprep.subr.bf16.mxu0 0
  %2707 = vmatpush1.bf16.msra.mxu0 0
  %2708 = vmatprep.subr.bf16.mxu0 0
  %2709 = vmatpush1.bf16.msra.mxu0 0
  %2710 = vmatprep.subr.bf16.mxu0 0
  %2711 = vmatpush1.bf16.msra.mxu0 0
  %2712 = vmatprep.subr.bf16.mxu0 0
  %2713 = vmatpush1.bf16.msra.mxu0 0
  %2714 = vmatprep.subr.bf16.mxu0 0
  %2715 = vmatpush1.bf16.msra.mxu0 0
  %2716 = vmatprep.subr.bf16.mxu0 0
  %2717 = vmatpush1.bf16.msra.mxu0 0
  %2718 = vmatprep.subr.bf16.mxu0 0
  %2719 = vmatpush1.bf16.msra.mxu0 0
  %2720 = vmatprep.subr.bf16.mxu0 0
  %2721 = vmatpush1.bf16.msra.mxu0 0
  %2722 = vmatprep.subr.bf16.mxu0 0
  %2723 = vmatpush1.bf16.msra.mxu0 0
  %2724 = vmatprep.subr.bf16.mxu0 0
  %2725 = vmatpush1.bf16.msra.mxu0 0
  %2726 = vmatprep.subr.bf16.mxu0 0
  %2727 = vmatpush1.bf16.msra.mxu0 0
  %2728 = vmatprep.subr.bf16.mxu0 0
  %2729 = vmatpush1.bf16.msra.mxu0 0
  %2730 = vmatprep.subr.bf16.mxu0 0
  %2731 = vmatpush1.bf16.msra.mxu0 0
  %2732 = vmatprep.mubr.bf16.mxu0 0
  %2733 = vmatmul.mubr.bf16.gmra.mrb[0].mxu0 %v2695
  %v2734 = vpop.f32.mrb[0].mxu0
  %v2735 = vadd.f32 0.0, %v2734
  %v2736 = vpop.f32.mrb[0].mxu0
  %v2737 = vadd.f32 0.0, %v2736
  %v2738 = vpop.f32.mrb[0].mxu0
  %v2739 = vadd.f32 0.0, %v2738
  %v2740 = vpop.f32.mrb[0].mxu0
  %v2741 = vadd.f32 0.0, %v2740
  %2742 = vmatprep.mubr.bf16.mxu0 0
  %2743 = vmatmul.mubr.bf16.gmra.mrb[0].mxu0 %v2698
  %v2744 = vpop.f32.mrb[0].mxu0
  %v2745 = vadd.f32 0.0, %v2744
  %v2746 = vpop.f32.mrb[0].mxu0
  %v2747 = vadd.f32 0.0, %v2746
  %v2748 = vpop.f32.mrb[0].mxu0
  %v2749 = vadd.f32 0.0, %v2748
  %v2750 = vpop.f32.mrb[0].mxu0
  %v2751 = vadd.f32 0.0, %v2750
  %2752 = vdwg.mxu0
  %2753 = vmatprep.subr.bf16.mxu0 %v2685
  %2754 = vmatpush1.bf16.msra.mxu0 %v2684
  %2755 = vmatprep.subr.bf16.mxu0 0
  %2756 = vmatpush1.bf16.msra.mxu0 0
  %2757 = vmatprep.subr.bf16.mxu0 0
  %2758 = vmatpush1.bf16.msra.mxu0 0
  %2759 = vmatprep.subr.bf16.mxu0 0
  %2760 = vmatpush1.bf16.msra.mxu0 0
  %2761 = vmatprep.subr.bf16.mxu0 0
  %2762 = vmatpush1.bf16.msra.mxu0 0
  %2763 = vmatprep.subr.bf16.mxu0 0
  %2764 = vmatpush1.bf16.msra.mxu0 0
  %2765 = vmatprep.subr.bf16.mxu0 0
  %2766 = vmatpush1.bf16.msra.mxu0 0
  %2767 = vmatprep.subr.bf16.mxu0 0
  %2768 = vmatpush1.bf16.msra.mxu0 0
  %2769 = vmatprep.subr.bf16.mxu0 0
  %2770 = vmatpush1.bf16.msra.mxu0 0
  %2771 = vmatprep.subr.bf16.mxu0 0
  %2772 = vmatpush1.bf16.msra.mxu0 0
  %2773 = vmatprep.subr.bf16.mxu0 0
  %2774 = vmatpush1.bf16.msra.mxu0 0
  %2775 = vmatprep.subr.bf16.mxu0 0
  %2776 = vmatpush1.bf16.msra.mxu0 0
  %2777 = vmatprep.subr.bf16.mxu0 0
  %2778 = vmatpush1.bf16.msra.mxu0 0
  %2779 = vmatprep.subr.bf16.mxu0 0
  %2780 = vmatpush1.bf16.msra.mxu0 0
  %2781 = vmatprep.subr.bf16.mxu0 0
  %2782 = vmatpush1.bf16.msra.mxu0 0
  %2783 = vmatprep.subr.bf16.mxu0 0
  %2784 = vmatpush1.bf16.msra.mxu0 0
  %2785 = vmatprep.mubr.bf16.mxu0 0
  %2786 = vmatmul.mubr.bf16.gmra.mrb[0].mxu0 %v2695
  %v2787 = vpop.f32.mrb[0].mxu0
  %v2788 = vadd.f32 0.0, %v2787
  %v2789 = vpop.f32.mrb[0].mxu0
  %v2790 = vadd.f32 0.0, %v2789
  %v2791 = vpop.f32.mrb[0].mxu0
  %v2792 = vadd.f32 0.0, %v2791
  %v2793 = vpop.f32.mrb[0].mxu0
  %v2794 = vadd.f32 0.0, %v2793
  %2795 = vmatprep.mubr.bf16.mxu0 0
  %2796 = vmatmul.mubr.bf16.gmra.mrb[0].mxu0 %v2698
  %v2797 = vpop.f32.mrb[0].mxu0
  %v2798 = vadd.f32 0.0, %v2797
  %v2799 = vpop.f32.mrb[0].mxu0
  %v2800 = vadd.f32 0.0, %v2799
  %v2801 = vpop.f32.mrb[0].mxu0
  %v2802 = vadd.f32 0.0, %v2801
  %v2803 = vpop.f32.mrb[0].mxu0
  %v2804 = vadd.f32 0.0, %v2803
  %2805 = vdwg.mxu0
  %2806 = vmatprep.subr.bf16.mxu0 %v2687
  %2807 = vmatpush1.bf16.msra.mxu0 %v2686
  %2808 = vmatprep.subr.bf16.mxu0 0
  %2809 = vmatpush1.bf16.msra.mxu0 0
  %2810 = vmatprep.subr.bf16.mxu0 0
  %2811 = vmatpush1.bf16.msra.mxu0 0
  %2812 = vmatprep.subr.bf16.mxu0 0
  %2813 = vmatpush1.bf16.msra.mxu0 0
  %2814 = vmatprep.subr.bf16.mxu0 0
  %2815 = vmatpush1.bf16.msra.mxu0 0
  %2816 = vmatprep.subr.bf16.mxu0 0
  %2817 = vmatpush1.bf16.msra.mxu0 0
  %2818 = vmatprep.subr.bf16.mxu0 0
  %2819 = vmatpush1.bf16.msra.mxu0 0
  %2820 = vmatprep.subr.bf16.mxu0 0
  %2821 = vmatpush1.bf16.msra.mxu0 0
  %2822 = vmatprep.subr.bf16.mxu0 0
  %2823 = vmatpush1.bf16.msra.mxu0 0
  %2824 = vmatprep.subr.bf16.mxu0 0
  %2825 = vmatpush1.bf16.msra.mxu0 0
  %2826 = vmatprep.subr.bf16.mxu0 0
  %2827 = vmatpush1.bf16.msra.mxu0 0
  %2828 = vmatprep.subr.bf16.mxu0 0
  %2829 = vmatpush1.bf16.msra.mxu0 0
  %2830 = vmatprep.subr.bf16.mxu0 0
  %2831 = vmatpush1.bf16.msra.mxu0 0
  %2832 = vmatprep.subr.bf16.mxu0 0
  %2833 = vmatpush1.bf16.msra.mxu0 0
  %2834 = vmatprep.subr.bf16.mxu0 0
  %2835 = vmatpush1.bf16.msra.mxu0 0
  %2836 = vmatprep.subr.bf16.mxu0 0
  %2837 = vmatpush1.bf16.msra.mxu0 0
  %2838 = vmatprep.mubr.bf16.mxu0 0
  %2839 = vmatmul.mubr.bf16.gmra.mrb[0].mxu0 %v2695
  %v2840 = vpop.f32.mrb[0].mxu0
  %v2841 = vadd.f32 0.0, %v2840
  %v2842 = vpop.f32.mrb[0].mxu0
  %v2843 = vadd.f32 0.0, %v2842
  %v2844 = vpop.f32.mrb[0].mxu0
  %v2845 = vadd.f32 0.0, %v2844
  %v2846 = vpop.f32.mrb[0].mxu0
  %v2847 = vadd.f32 0.0, %v2846
  %2848 = vmatprep.mubr.bf16.mxu0 0
  %2849 = vmatmul.mubr.bf16.gmra.mrb[0].mxu0 %v2698
  %v2850 = vpop.f32.mrb[0].mxu0
  %v2851 = vadd.f32 0.0, %v2850
  %v2852 = vpop.f32.mrb[0].mxu0
  %v2853 = vadd.f32 0.0, %v2852
  %v2854 = vpop.f32.mrb[0].mxu0
  %v2855 = vadd.f32 0.0, %v2854
  %v2856 = vpop.f32.mrb[0].mxu0
  %v2857 = vadd.f32 0.0, %v2856
  %2858 = vdwg.mxu0
  %v2859 = vadd.f32 %v2628, %v2735
  %v2860 = vadd.f32 %v2629, %v2737
  %v2861 = vadd.f32 %v2630, %v2788
  %v2862 = vadd.f32 %v2631, %v2790
  %v2863 = vadd.f32 %v2632, %v2841
  %v2864 = vadd.f32 %v2633, %v2843
  %v2865 = vadd.f32 %v2634, %v2739
  %v2866 = vadd.f32 %v2635, %v2741
  %v2867 = vadd.f32 %v2636, %v2792
  %v2868 = vadd.f32 %v2637, %v2794
  %v2869 = vadd.f32 %v2638, %v2845
  %v2870 = vadd.f32 %v2639, %v2847
  %v2871 = vadd.f32 %v2640, %v2745
  %v2872 = vadd.f32 %v2641, %v2747
  %v2873 = vadd.f32 %v2642, %v2798
  %v2874 = vadd.f32 %v2643, %v2800
  %v2875 = vadd.f32 %v2644, %v2851
  %v2876 = vadd.f32 %v2645, %v2853
  %v2877 = vadd.f32 %v2646, %v2749
  %v2878 = vadd.f32 %v2647, %v2751
  %v2879 = vadd.f32 %v2648, %v2802
  %v2880 = vadd.f32 %v2649, %v2804
  %v2881 = vadd.f32 %v2650, %v2855
  %v2882 = vadd.f32 %v2651, %v2857
  %s2883 = scalar_lea.vmem %s4, 96
  %v2884 = vld [vmem:[%s2883] sm:$0xf]
  %v2885 = vld [vmem:[%s2883 + $0x4] sm:$0xf]
  %v2886 = vld [vmem:[%s2883 + $0x8] sm:$0xf]
  %v2887 = vld [vmem:[%s2883 + $0xc] sm:$0xf]
  %v2892 = vunpack.c.l.b16 %v2884
  %v2893 = vunpack.c.l.b16 %v2885
  %v2894 = vunpack.c.l.b16 %v2886
  %v2895 = vunpack.c.l.b16 %v2887
  %v2896 = vpack.c.b16 %v2893, %v2892
  %v2897 = vpack.c.b16 %v2895, %v2894
  %2898 = vrot.lane.b32.xlu0 %v1567, 109
  %v2899 = vpop.permute.xlu0 %2898
  %2900 = vrot.lane.b32.xlu0 %v1568, 109
  %v2901 = vpop.permute.xlu0 %2900
  %2902 = vrot.lane.b32.xlu0 %v1569, 109
  %v2903 = vpop.permute.xlu0 %2902
  %2904 = vrot.lane.b32.xlu0 %v1570, 109
  %v2905 = vpop.permute.xlu0 %2904
  %2906 = vrot.lane.b32.xlu0 %v1571, 109
  %v2907 = vpop.permute.xlu0 %2906
  %2908 = vrot.lane.b32.xlu0 %v1572, 109
  %v2909 = vpop.permute.xlu0 %2908
  %2910 = vrot.lane.b32.xlu0 %v1573, 109
  %v2911 = vpop.permute.xlu0 %2910
  %vm2912 = vcmask 891904
  %v2913 = vsel %vm2912, %v2899, %v2901
  %v2914 = vsel %vm2912, %v2901, %v2903
  %v2915 = vsel %vm2912, %v2903, %v2905
  %v2916 = vsel %vm2912, %v2905, %v2907
  %v2917 = vsel %vm2912, %v2907, %v2909
  %v2918 = vsel %vm2912, %v2909, %v2911
  %v2926 = vsel %vm1618, %v2896, 0
  %v2929 = vsel %vm1618, %v2897, 0
  %2931 = vmatprep.subr.bf16.mxu0 %v2914
  %2932 = vmatpush1.bf16.msra.mxu0 %v2913
  %2933 = vmatprep.subr.bf16.mxu0 0
  %2934 = vmatpush1.bf16.msra.mxu0 0
  %2935 = vmatprep.subr.bf16.mxu0 0
  %2936 = vmatpush1.bf16.msra.mxu0 0
  %2937 = vmatprep.subr.bf16.mxu0 0
  %2938 = vmatpush1.bf16.msra.mxu0 0
  %2939 = vmatprep.subr.bf16.mxu0 0
  %2940 = vmatpush1.bf16.msra.mxu0 0
  %2941 = vmatprep.subr.bf16.mxu0 0
  %2942 = vmatpush1.bf16.msra.mxu0 0
  %2943 = vmatprep.subr.bf16.mxu0 0
  %2944 = vmatpush1.bf16.msra.mxu0 0
  %2945 = vmatprep.subr.bf16.mxu0 0
  %2946 = vmatpush1.bf16.msra.mxu0 0
  %2947 = vmatprep.subr.bf16.mxu0 0
  %2948 = vmatpush1.bf16.msra.mxu0 0
  %2949 = vmatprep.subr.bf16.mxu0 0
  %2950 = vmatpush1.bf16.msra.mxu0 0
  %2951 = vmatprep.subr.bf16.mxu0 0
  %2952 = vmatpush1.bf16.msra.mxu0 0
  %2953 = vmatprep.subr.bf16.mxu0 0
  %2954 = vmatpush1.bf16.msra.mxu0 0
  %2955 = vmatprep.subr.bf16.mxu0 0
  %2956 = vmatpush1.bf16.msra.mxu0 0
  %2957 = vmatprep.subr.bf16.mxu0 0
  %2958 = vmatpush1.bf16.msra.mxu0 0
  %2959 = vmatprep.subr.bf16.mxu0 0
  %2960 = vmatpush1.bf16.msra.mxu0 0
  %2961 = vmatprep.subr.bf16.mxu0 0
  %2962 = vmatpush1.bf16.msra.mxu0 0
  %2963 = vmatprep.mubr.bf16.mxu0 0
  %2964 = vmatmul.mubr.bf16.gmra.mrb[0].mxu0 %v2926
  %v2965 = vpop.f32.mrb[0].mxu0
  %v2966 = vadd.f32 0.0, %v2965
  %v2967 = vpop.f32.mrb[0].mxu0
  %v2968 = vadd.f32 0.0, %v2967
  %v2969 = vpop.f32.mrb[0].mxu0
  %v2970 = vadd.f32 0.0, %v2969
  %v2971 = vpop.f32.mrb[0].mxu0
  %v2972 = vadd.f32 0.0, %v2971
  %2973 = vmatprep.mubr.bf16.mxu0 0
  %2974 = vmatmul.mubr.bf16.gmra.mrb[0].mxu0 %v2929
  %v2975 = vpop.f32.mrb[0].mxu0
  %v2976 = vadd.f32 0.0, %v2975
  %v2977 = vpop.f32.mrb[0].mxu0
  %v2978 = vadd.f32 0.0, %v2977
  %v2979 = vpop.f32.mrb[0].mxu0
  %v2980 = vadd.f32 0.0, %v2979
  %v2981 = vpop.f32.mrb[0].mxu0
  %v2982 = vadd.f32 0.0, %v2981
  %2983 = vdwg.mxu0
  %2984 = vmatprep.subr.bf16.mxu0 %v2916
  %2985 = vmatpush1.bf16.msra.mxu0 %v2915
  %2986 = vmatprep.subr.bf16.mxu0 0
  %2987 = vmatpush1.bf16.msra.mxu0 0
  %2988 = vmatprep.subr.bf16.mxu0 0
  %2989 = vmatpush1.bf16.msra.mxu0 0
  %2990 = vmatprep.subr.bf16.mxu0 0
  %2991 = vmatpush1.bf16.msra.mxu0 0
  %2992 = vmatprep.subr.bf16.mxu0 0
  %2993 = vmatpush1.bf16.msra.mxu0 0
  %2994 = vmatprep.subr.bf16.mxu0 0
  %2995 = vmatpush1.bf16.msra.mxu0 0
  %2996 = vmatprep.subr.bf16.mxu0 0
  %2997 = vmatpush1.bf16.msra.mxu0 0
  %2998 = vmatprep.subr.bf16.mxu0 0
  %2999 = vmatpush1.bf16.msra.mxu0 0
  %3000 = vmatprep.subr.bf16.mxu0 0
  %3001 = vmatpush1.bf16.msra.mxu0 0
  %3002 = vmatprep.subr.bf16.mxu0 0
  %3003 = vmatpush1.bf16.msra.mxu0 0
  %3004 = vmatprep.subr.bf16.mxu0 0
  %3005 = vmatpush1.bf16.msra.mxu0 0
  %3006 = vmatprep.subr.bf16.mxu0 0
  %3007 = vmatpush1.bf16.msra.mxu0 0
  %3008 = vmatprep.subr.bf16.mxu0 0
  %3009 = vmatpush1.bf16.msra.mxu0 0
  %3010 = vmatprep.subr.bf16.mxu0 0
  %3011 = vmatpush1.bf16.msra.mxu0 0
  %3012 = vmatprep.subr.bf16.mxu0 0
  %3013 = vmatpush1.bf16.msra.mxu0 0
  %3014 = vmatprep.subr.bf16.mxu0 0
  %3015 = vmatpush1.bf16.msra.mxu0 0
  %3016 = vmatprep.mubr.bf16.mxu0 0
  %3017 = vmatmul.mubr.bf16.gmra.mrb[0].mxu0 %v2926
  %v3018 = vpop.f32.mrb[0].mxu0
  %v3019 = vadd.f32 0.0, %v3018
  %v3020 = vpop.f32.mrb[0].mxu0
  %v3021 = vadd.f32 0.0, %v3020
  %v3022 = vpop.f32.mrb[0].mxu0
  %v3023 = vadd.f32 0.0, %v3022
  %v3024 = vpop.f32.mrb[0].mxu0
  %v3025 = vadd.f32 0.0, %v3024
  %3026 = vmatprep.mubr.bf16.mxu0 0
  %3027 = vmatmul.mubr.bf16.gmra.mrb[0].mxu0 %v2929
  %v3028 = vpop.f32.mrb[0].mxu0
  %v3029 = vadd.f32 0.0, %v3028
  %v3030 = vpop.f32.mrb[0].mxu0
  %v3031 = vadd.f32 0.0, %v3030
  %v3032 = vpop.f32.mrb[0].mxu0
  %v3033 = vadd.f32 0.0, %v3032
  %v3034 = vpop.f32.mrb[0].mxu0
  %v3035 = vadd.f32 0.0, %v3034
  %3036 = vdwg.mxu0
  %3037 = vmatprep.subr.bf16.mxu0 %v2918
  %3038 = vmatpush1.bf16.msra.mxu0 %v2917
  %3039 = vmatprep.subr.bf16.mxu0 0
  %3040 = vmatpush1.bf16.msra.mxu0 0
  %3041 = vmatprep.subr.bf16.mxu0 0
  %3042 = vmatpush1.bf16.msra.mxu0 0
  %3043 = vmatprep.subr.bf16.mxu0 0
  %3044 = vmatpush1.bf16.msra.mxu0 0
  %3045 = vmatprep.subr.bf16.mxu0 0
  %3046 = vmatpush1.bf16.msra.mxu0 0
  %3047 = vmatprep.subr.bf16.mxu0 0
  %3048 = vmatpush1.bf16.msra.mxu0 0
  %3049 = vmatprep.subr.bf16.mxu0 0
  %3050 = vmatpush1.bf16.msra.mxu0 0
  %3051 = vmatprep.subr.bf16.mxu0 0
  %3052 = vmatpush1.bf16.msra.mxu0 0
  %3053 = vmatprep.subr.bf16.mxu0 0
  %3054 = vmatpush1.bf16.msra.mxu0 0
  %3055 = vmatprep.subr.bf16.mxu0 0
  %3056 = vmatpush1.bf16.msra.mxu0 0
  %3057 = vmatprep.subr.bf16.mxu0 0
  %3058 = vmatpush1.bf16.msra.mxu0 0
  %3059 = vmatprep.subr.bf16.mxu0 0
  %3060 = vmatpush1.bf16.msra.mxu0 0
  %3061 = vmatprep.subr.bf16.mxu0 0
  %3062 = vmatpush1.bf16.msra.mxu0 0
  %3063 = vmatprep.subr.bf16.mxu0 0
  %3064 = vmatpush1.bf16.msra.mxu0 0
  %3065 = vmatprep.subr.bf16.mxu0 0
  %3066 = vmatpush1.bf16.msra.mxu0 0
  %3067 = vmatprep.subr.bf16.mxu0 0
  %3068 = vmatpush1.bf16.msra.mxu0 0
  %3069 = vmatprep.mubr.bf16.mxu0 0
  %3070 = vmatmul.mubr.bf16.gmra.mrb[0].mxu0 %v2926
  %v3071 = vpop.f32.mrb[0].mxu0
  %v3072 = vadd.f32 0.0, %v3071
  %v3073 = vpop.f32.mrb[0].mxu0
  %v3074 = vadd.f32 0.0, %v3073
  %v3075 = vpop.f32.mrb[0].mxu0
  %v3076 = vadd.f32 0.0, %v3075
  %v3077 = vpop.f32.mrb[0].mxu0
  %v3078 = vadd.f32 0.0, %v3077
  %3079 = vmatprep.mubr.bf16.mxu0 0
  %3080 = vmatmul.mubr.bf16.gmra.mrb[0].mxu0 %v2929
  %v3081 = vpop.f32.mrb[0].mxu0
  %v3082 = vadd.f32 0.0, %v3081
  %v3083 = vpop.f32.mrb[0].mxu0
  %v3084 = vadd.f32 0.0, %v3083
  %v3085 = vpop.f32.mrb[0].mxu0
  %v3086 = vadd.f32 0.0, %v3085
  %v3087 = vpop.f32.mrb[0].mxu0
  %v3088 = vadd.f32 0.0, %v3087
  %3089 = vdwg.mxu0
  %v3090 = vadd.f32 %v2859, %v2966
  %v3091 = vadd.f32 %v2860, %v2968
  %v3092 = vadd.f32 %v2861, %v3019
  %v3093 = vadd.f32 %v2862, %v3021
  %v3094 = vadd.f32 %v2863, %v3072
  %v3095 = vadd.f32 %v2864, %v3074
  %v3096 = vadd.f32 %v2865, %v2970
  %v3097 = vadd.f32 %v2866, %v2972
  %v3098 = vadd.f32 %v2867, %v3023
  %v3099 = vadd.f32 %v2868, %v3025
  %v3100 = vadd.f32 %v2869, %v3076
  %v3101 = vadd.f32 %v2870, %v3078
  %v3102 = vadd.f32 %v2871, %v2976
  %v3103 = vadd.f32 %v2872, %v2978
  %v3104 = vadd.f32 %v2873, %v3029
  %v3105 = vadd.f32 %v2874, %v3031
  %v3106 = vadd.f32 %v2875, %v3082
  %v3107 = vadd.f32 %v2876, %v3084
  %v3108 = vadd.f32 %v2877, %v2980
  %v3109 = vadd.f32 %v2878, %v2982
  %v3110 = vadd.f32 %v2879, %v3033
  %v3111 = vadd.f32 %v2880, %v3035
  %v3112 = vadd.f32 %v2881, %v3086
  %v3113 = vadd.f32 %v2882, %v3088
  %s3114 = scalar_lea.vmem %s4, 112
  %v3115 = vld [vmem:[%s3114] sm:$0xf]
  %v3116 = vld [vmem:[%s3114 + $0x4] sm:$0xf]
  %v3117 = vld [vmem:[%s3114 + $0x8] sm:$0xf]
  %v3118 = vld [vmem:[%s3114 + $0xc] sm:$0xf]
  %v3123 = vunpack.c.l.b16 %v3115
  %v3124 = vunpack.c.l.b16 %v3116
  %v3125 = vunpack.c.l.b16 %v3117
  %v3126 = vunpack.c.l.b16 %v3118
  %v3127 = vpack.c.b16 %v3124, %v3123
  %v3128 = vpack.c.b16 %v3126, %v3125
  %3129 = vrot.lane.b32.xlu0 %v1567, 108
  %v3130 = vpop.permute.xlu0 %3129
  %3131 = vrot.lane.b32.xlu0 %v1568, 108
  %v3132 = vpop.permute.xlu0 %3131
  %3133 = vrot.lane.b32.xlu0 %v1569, 108
  %v3134 = vpop.permute.xlu0 %3133
  %3135 = vrot.lane.b32.xlu0 %v1570, 108
  %v3136 = vpop.permute.xlu0 %3135
  %3137 = vrot.lane.b32.xlu0 %v1571, 108
  %v3138 = vpop.permute.xlu0 %3137
  %3139 = vrot.lane.b32.xlu0 %v1572, 108
  %v3140 = vpop.permute.xlu0 %3139
  %3141 = vrot.lane.b32.xlu0 %v1573, 108
  %v3142 = vpop.permute.xlu0 %3141
  %vm3143 = vcmask 883712
  %v3144 = vsel %vm3143, %v3130, %v3132
  %v3145 = vsel %vm3143, %v3132, %v3134
  %v3146 = vsel %vm3143, %v3134, %v3136
  %v3147 = vsel %vm3143, %v3136, %v3138
  %v3148 = vsel %vm3143, %v3138, %v3140
  %v3149 = vsel %vm3143, %v3140, %v3142
  %v3157 = vsel %vm1618, %v3127, 0
  %v3160 = vsel %vm1618, %v3128, 0
  %3162 = vmatprep.subr.bf16.mxu0 %v3145
  %3163 = vmatpush1.bf16.msra.mxu0 %v3144
  %3164 = vmatprep.subr.bf16.mxu0 0
  %3165 = vmatpush1.bf16.msra.mxu0 0
  %3166 = vmatprep.subr.bf16.mxu0 0
  %3167 = vmatpush1.bf16.msra.mxu0 0
  %3168 = vmatprep.subr.bf16.mxu0 0
  %3169 = vmatpush1.bf16.msra.mxu0 0
  %3170 = vmatprep.subr.bf16.mxu0 0
  %3171 = vmatpush1.bf16.msra.mxu0 0
  %3172 = vmatprep.subr.bf16.mxu0 0
  %3173 = vmatpush1.bf16.msra.mxu0 0
  %3174 = vmatprep.subr.bf16.mxu0 0
  %3175 = vmatpush1.bf16.msra.mxu0 0
  %3176 = vmatprep.subr.bf16.mxu0 0
  %3177 = vmatpush1.bf16.msra.mxu0 0
  %3178 = vmatprep.subr.bf16.mxu0 0
  %3179 = vmatpush1.bf16.msra.mxu0 0
  %3180 = vmatprep.subr.bf16.mxu0 0
  %3181 = vmatpush1.bf16.msra.mxu0 0
  %3182 = vmatprep.subr.bf16.mxu0 0
  %3183 = vmatpush1.bf16.msra.mxu0 0
  %3184 = vmatprep.subr.bf16.mxu0 0
  %3185 = vmatpush1.bf16.msra.mxu0 0
  %3186 = vmatprep.subr.bf16.mxu0 0
  %3187 = vmatpush1.bf16.msra.mxu0 0
  %3188 = vmatprep.subr.bf16.mxu0 0
  %3189 = vmatpush1.bf16.msra.mxu0 0
  %3190 = vmatprep.subr.bf16.mxu0 0
  %3191 = vmatpush1.bf16.msra.mxu0 0
  %3192 = vmatprep.subr.bf16.mxu0 0
  %3193 = vmatpush1.bf16.msra.mxu0 0
  %3194 = vmatprep.mubr.bf16.mxu0 0
  %3195 = vmatmul.mubr.bf16.gmra.mrb[0].mxu0 %v3157
  %v3196 = vpop.f32.mrb[0].mxu0
  %v3197 = vadd.f32 0.0, %v3196
  %v3198 = vpop.f32.mrb[0].mxu0
  %v3199 = vadd.f32 0.0, %v3198
  %v3200 = vpop.f32.mrb[0].mxu0
  %v3201 = vadd.f32 0.0, %v3200
  %v3202 = vpop.f32.mrb[0].mxu0
  %v3203 = vadd.f32 0.0, %v3202
  %3204 = vmatprep.mubr.bf16.mxu0 0
  %3205 = vmatmul.mubr.bf16.gmra.mrb[0].mxu0 %v3160
  %v3206 = vpop.f32.mrb[0].mxu0
  %v3207 = vadd.f32 0.0, %v3206
  %v3208 = vpop.f32.mrb[0].mxu0
  %v3209 = vadd.f32 0.0, %v3208
  %v3210 = vpop.f32.mrb[0].mxu0
  %v3211 = vadd.f32 0.0, %v3210
  %v3212 = vpop.f32.mrb[0].mxu0
  %v3213 = vadd.f32 0.0, %v3212
  %3214 = vdwg.mxu0
  %3215 = vmatprep.subr.bf16.mxu0 %v3147
  %3216 = vmatpush1.bf16.msra.mxu0 %v3146
  %3217 = vmatprep.subr.bf16.mxu0 0
  %3218 = vmatpush1.bf16.msra.mxu0 0
  %3219 = vmatprep.subr.bf16.mxu0 0
  %3220 = vmatpush1.bf16.msra.mxu0 0
  %3221 = vmatprep.subr.bf16.mxu0 0
  %3222 = vmatpush1.bf16.msra.mxu0 0
  %3223 = vmatprep.subr.bf16.mxu0 0
  %3224 = vmatpush1.bf16.msra.mxu0 0
  %3225 = vmatprep.subr.bf16.mxu0 0
  %3226 = vmatpush1.bf16.msra.mxu0 0
  %3227 = vmatprep.subr.bf16.mxu0 0
  %3228 = vmatpush1.bf16.msra.mxu0 0
  %3229 = vmatprep.subr.bf16.mxu0 0
  %3230 = vmatpush1.bf16.msra.mxu0 0
  %3231 = vmatprep.subr.bf16.mxu0 0
  %3232 = vmatpush1.bf16.msra.mxu0 0
  %3233 = vmatprep.subr.bf16.mxu0 0
  %3234 = vmatpush1.bf16.msra.mxu0 0
  %3235 = vmatprep.subr.bf16.mxu0 0
  %3236 = vmatpush1.bf16.msra.mxu0 0
  %3237 = vmatprep.subr.bf16.mxu0 0
  %3238 = vmatpush1.bf16.msra.mxu0 0
  %3239 = vmatprep.subr.bf16.mxu0 0
  %3240 = vmatpush1.bf16.msra.mxu0 0
  %3241 = vmatprep.subr.bf16.mxu0 0
  %3242 = vmatpush1.bf16.msra.mxu0 0
  %3243 = vmatprep.subr.bf16.mxu0 0
  %3244 = vmatpush1.bf16.msra.mxu0 0
  %3245 = vmatprep.subr.bf16.mxu0 0
  %3246 = vmatpush1.bf16.msra.mxu0 0
  %3247 = vmatprep.mubr.bf16.mxu0 0
  %3248 = vmatmul.mubr.bf16.gmra.mrb[0].mxu0 %v3157
  %v3249 = vpop.f32.mrb[0].mxu0
  %v3250 = vadd.f32 0.0, %v3249
  %v3251 = vpop.f32.mrb[0].mxu0
  %v3252 = vadd.f32 0.0, %v3251
  %v3253 = vpop.f32.mrb[0].mxu0
  %v3254 = vadd.f32 0.0, %v3253
  %v3255 = vpop.f32.mrb[0].mxu0
  %v3256 = vadd.f32 0.0, %v3255
  %3257 = vmatprep.mubr.bf16.mxu0 0
  %3258 = vmatmul.mubr.bf16.gmra.mrb[0].mxu0 %v3160
  %v3259 = vpop.f32.mrb[0].mxu0
  %v3260 = vadd.f32 0.0, %v3259
  %v3261 = vpop.f32.mrb[0].mxu0
  %v3262 = vadd.f32 0.0, %v3261
  %v3263 = vpop.f32.mrb[0].mxu0
  %v3264 = vadd.f32 0.0, %v3263
  %v3265 = vpop.f32.mrb[0].mxu0
  %v3266 = vadd.f32 0.0, %v3265
  %3267 = vdwg.mxu0
  %3268 = vmatprep.subr.bf16.mxu0 %v3149
  %3269 = vmatpush1.bf16.msra.mxu0 %v3148
  %3270 = vmatprep.subr.bf16.mxu0 0
  %3271 = vmatpush1.bf16.msra.mxu0 0
  %3272 = vmatprep.subr.bf16.mxu0 0
  %3273 = vmatpush1.bf16.msra.mxu0 0
  %3274 = vmatprep.subr.bf16.mxu0 0
  %3275 = vmatpush1.bf16.msra.mxu0 0
  %3276 = vmatprep.subr.bf16.mxu0 0
  %3277 = vmatpush1.bf16.msra.mxu0 0
  %3278 = vmatprep.subr.bf16.mxu0 0
  %3279 = vmatpush1.bf16.msra.mxu0 0
  %3280 = vmatprep.subr.bf16.mxu0 0
  %3281 = vmatpush1.bf16.msra.mxu0 0
  %3282 = vmatprep.subr.bf16.mxu0 0
  %3283 = vmatpush1.bf16.msra.mxu0 0
  %3284 = vmatprep.subr.bf16.mxu0 0
  %3285 = vmatpush1.bf16.msra.mxu0 0
  %3286 = vmatprep.subr.bf16.mxu0 0
  %3287 = vmatpush1.bf16.msra.mxu0 0
  %3288 = vmatprep.subr.bf16.mxu0 0
  %3289 = vmatpush1.bf16.msra.mxu0 0
  %3290 = vmatprep.subr.bf16.mxu0 0
  %3291 = vmatpush1.bf16.msra.mxu0 0
  %3292 = vmatprep.subr.bf16.mxu0 0
  %3293 = vmatpush1.bf16.msra.mxu0 0
  %3294 = vmatprep.subr.bf16.mxu0 0
  %3295 = vmatpush1.bf16.msra.mxu0 0
  %3296 = vmatprep.subr.bf16.mxu0 0
  %3297 = vmatpush1.bf16.msra.mxu0 0
  %3298 = vmatprep.subr.bf16.mxu0 0
  %3299 = vmatpush1.bf16.msra.mxu0 0
  %3300 = vmatprep.mubr.bf16.mxu0 0
  %3301 = vmatmul.mubr.bf16.gmra.mrb[0].mxu0 %v3157
  %v3302 = vpop.f32.mrb[0].mxu0
  %v3303 = vadd.f32 0.0, %v3302
  %v3304 = vpop.f32.mrb[0].mxu0
  %v3305 = vadd.f32 0.0, %v3304
  %v3306 = vpop.f32.mrb[0].mxu0
  %v3307 = vadd.f32 0.0, %v3306
  %v3308 = vpop.f32.mrb[0].mxu0
  %v3309 = vadd.f32 0.0, %v3308
  %3310 = vmatprep.mubr.bf16.mxu0 0
  %3311 = vmatmul.mubr.bf16.gmra.mrb[0].mxu0 %v3160
  %v3312 = vpop.f32.mrb[0].mxu0
  %v3313 = vadd.f32 0.0, %v3312
  %v3314 = vpop.f32.mrb[0].mxu0
  %v3315 = vadd.f32 0.0, %v3314
  %v3316 = vpop.f32.mrb[0].mxu0
  %v3317 = vadd.f32 0.0, %v3316
  %v3318 = vpop.f32.mrb[0].mxu0
  %v3319 = vadd.f32 0.0, %v3318
  %3320 = vdwg.mxu0
  %v3321 = vadd.f32 %v3090, %v3197
  %v3322 = vadd.f32 %v3091, %v3199
  %v3323 = vadd.f32 %v3092, %v3250
  %v3324 = vadd.f32 %v3093, %v3252
  %v3325 = vadd.f32 %v3094, %v3303
  %v3326 = vadd.f32 %v3095, %v3305
  %v3327 = vadd.f32 %v3096, %v3201
  %v3328 = vadd.f32 %v3097, %v3203
  %v3329 = vadd.f32 %v3098, %v3254
  %v3330 = vadd.f32 %v3099, %v3256
  %v3331 = vadd.f32 %v3100, %v3307
  %v3332 = vadd.f32 %v3101, %v3309
  %v3333 = vadd.f32 %v3102, %v3207
  %v3334 = vadd.f32 %v3103, %v3209
  %v3335 = vadd.f32 %v3104, %v3260
  %v3336 = vadd.f32 %v3105, %v3262
  %v3337 = vadd.f32 %v3106, %v3313
  %v3338 = vadd.f32 %v3107, %v3315
  %v3339 = vadd.f32 %v3108, %v3211
  %v3340 = vadd.f32 %v3109, %v3213
  %v3341 = vadd.f32 %v3110, %v3264
  %v3342 = vadd.f32 %v3111, %v3266
  %v3343 = vadd.f32 %v3112, %v3317
  %v3344 = vadd.f32 %v3113, %v3319
  %s3345 = scalar_lea.vmem %s4, 128
  %v3346 = vld [vmem:[%s3345] sm:$0xf]
  %v3347 = vld [vmem:[%s3345 + $0x4] sm:$0xf]
  %v3348 = vld [vmem:[%s3345 + $0x8] sm:$0xf]
  %v3349 = vld [vmem:[%s3345 + $0xc] sm:$0xf]
  %v3354 = vunpack.c.l.b16 %v3346
  %v3355 = vunpack.c.l.b16 %v3347
  %v3356 = vunpack.c.l.b16 %v3348
  %v3357 = vunpack.c.l.b16 %v3349
  %v3358 = vpack.c.b16 %v3355, %v3354
  %v3359 = vpack.c.b16 %v3357, %v3356
  %3360 = vrot.lane.b32.xlu0 %v1567, 107
  %v3361 = vpop.permute.xlu0 %3360
  %3362 = vrot.lane.b32.xlu0 %v1568, 107
  %v3363 = vpop.permute.xlu0 %3362
  %3364 = vrot.lane.b32.xlu0 %v1569, 107
  %v3365 = vpop.permute.xlu0 %3364
  %3366 = vrot.lane.b32.xlu0 %v1570, 107
  %v3367 = vpop.permute.xlu0 %3366
  %3368 = vrot.lane.b32.xlu0 %v1571, 107
  %v3369 = vpop.permute.xlu0 %3368
  %3370 = vrot.lane.b32.xlu0 %v1572, 107
  %v3371 = vpop.permute.xlu0 %3370
  %3372 = vrot.lane.b32.xlu0 %v1573, 107
  %v3373 = vpop.permute.xlu0 %3372
  %vm3374 = vcmask 875520
  %v3375 = vsel %vm3374, %v3361, %v3363
  %v3376 = vsel %vm3374, %v3363, %v3365
  %v3377 = vsel %vm3374, %v3365, %v3367
  %v3378 = vsel %vm3374, %v3367, %v3369
  %v3379 = vsel %vm3374, %v3369, %v3371
  %v3380 = vsel %vm3374, %v3371, %v3373
  %v3388 = vsel %vm1618, %v3358, 0
  %v3391 = vsel %vm1618, %v3359, 0
  %3393 = vmatprep.subr.bf16.mxu0 %v3376
  %3394 = vmatpush1.bf16.msra.mxu0 %v3375
  %3395 = vmatprep.subr.bf16.mxu0 0
  %3396 = vmatpush1.bf16.msra.mxu0 0
  %3397 = vmatprep.subr.bf16.mxu0 0
  %3398 = vmatpush1.bf16.msra.mxu0 0
  %3399 = vmatprep.subr.bf16.mxu0 0
  %3400 = vmatpush1.bf16.msra.mxu0 0
  %3401 = vmatprep.subr.bf16.mxu0 0
  %3402 = vmatpush1.bf16.msra.mxu0 0
  %3403 = vmatprep.subr.bf16.mxu0 0
  %3404 = vmatpush1.bf16.msra.mxu0 0
  %3405 = vmatprep.subr.bf16.mxu0 0
  %3406 = vmatpush1.bf16.msra.mxu0 0
  %3407 = vmatprep.subr.bf16.mxu0 0
  %3408 = vmatpush1.bf16.msra.mxu0 0
  %3409 = vmatprep.subr.bf16.mxu0 0
  %3410 = vmatpush1.bf16.msra.mxu0 0
  %3411 = vmatprep.subr.bf16.mxu0 0
  %3412 = vmatpush1.bf16.msra.mxu0 0
  %3413 = vmatprep.subr.bf16.mxu0 0
  %3414 = vmatpush1.bf16.msra.mxu0 0
  %3415 = vmatprep.subr.bf16.mxu0 0
  %3416 = vmatpush1.bf16.msra.mxu0 0
  %3417 = vmatprep.subr.bf16.mxu0 0
  %3418 = vmatpush1.bf16.msra.mxu0 0
  %3419 = vmatprep.subr.bf16.mxu0 0
  %3420 = vmatpush1.bf16.msra.mxu0 0
  %3421 = vmatprep.subr.bf16.mxu0 0
  %3422 = vmatpush1.bf16.msra.mxu0 0
  %3423 = vmatprep.subr.bf16.mxu0 0
  %3424 = vmatpush1.bf16.msra.mxu0 0
  %3425 = vmatprep.mubr.bf16.mxu0 0
  %3426 = vmatmul.mubr.bf16.gmra.mrb[0].mxu0 %v3388
  %v3427 = vpop.f32.mrb[0].mxu0
  %v3428 = vadd.f32 0.0, %v3427
  %v3429 = vpop.f32.mrb[0].mxu0
  %v3430 = vadd.f32 0.0, %v3429
  %v3431 = vpop.f32.mrb[0].mxu0
  %v3432 = vadd.f32 0.0, %v3431
  %v3433 = vpop.f32.mrb[0].mxu0
  %v3434 = vadd.f32 0.0, %v3433
  %3435 = vmatprep.mubr.bf16.mxu0 0
  %3436 = vmatmul.mubr.bf16.gmra.mrb[0].mxu0 %v3391
  %v3437 = vpop.f32.mrb[0].mxu0
  %v3438 = vadd.f32 0.0, %v3437
  %v3439 = vpop.f32.mrb[0].mxu0
  %v3440 = vadd.f32 0.0, %v3439
  %v3441 = vpop.f32.mrb[0].mxu0
  %v3442 = vadd.f32 0.0, %v3441
  %v3443 = vpop.f32.mrb[0].mxu0
  %v3444 = vadd.f32 0.0, %v3443
  %3445 = vdwg.mxu0
  %3446 = vmatprep.subr.bf16.mxu0 %v3378
  %3447 = vmatpush1.bf16.msra.mxu0 %v3377
  %3448 = vmatprep.subr.bf16.mxu0 0
  %3449 = vmatpush1.bf16.msra.mxu0 0
  %3450 = vmatprep.subr.bf16.mxu0 0
  %3451 = vmatpush1.bf16.msra.mxu0 0
  %3452 = vmatprep.subr.bf16.mxu0 0
  %3453 = vmatpush1.bf16.msra.mxu0 0
  %3454 = vmatprep.subr.bf16.mxu0 0
  %3455 = vmatpush1.bf16.msra.mxu0 0
  %3456 = vmatprep.subr.bf16.mxu0 0
  %3457 = vmatpush1.bf16.msra.mxu0 0
  %3458 = vmatprep.subr.bf16.mxu0 0
  %3459 = vmatpush1.bf16.msra.mxu0 0
  %3460 = vmatprep.subr.bf16.mxu0 0
  %3461 = vmatpush1.bf16.msra.mxu0 0
  %3462 = vmatprep.subr.bf16.mxu0 0
  %3463 = vmatpush1.bf16.msra.mxu0 0
  %3464 = vmatprep.subr.bf16.mxu0 0
  %3465 = vmatpush1.bf16.msra.mxu0 0
  %3466 = vmatprep.subr.bf16.mxu0 0
  %3467 = vmatpush1.bf16.msra.mxu0 0
  %3468 = vmatprep.subr.bf16.mxu0 0
  %3469 = vmatpush1.bf16.msra.mxu0 0
  %3470 = vmatprep.subr.bf16.mxu0 0
  %3471 = vmatpush1.bf16.msra.mxu0 0
  %3472 = vmatprep.subr.bf16.mxu0 0
  %3473 = vmatpush1.bf16.msra.mxu0 0
  %3474 = vmatprep.subr.bf16.mxu0 0
  %3475 = vmatpush1.bf16.msra.mxu0 0
  %3476 = vmatprep.subr.bf16.mxu0 0
  %3477 = vmatpush1.bf16.msra.mxu0 0
  %3478 = vmatprep.mubr.bf16.mxu0 0
  %3479 = vmatmul.mubr.bf16.gmra.mrb[0].mxu0 %v3388
  %v3480 = vpop.f32.mrb[0].mxu0
  %v3481 = vadd.f32 0.0, %v3480
  %v3482 = vpop.f32.mrb[0].mxu0
  %v3483 = vadd.f32 0.0, %v3482
  %v3484 = vpop.f32.mrb[0].mxu0
  %v3485 = vadd.f32 0.0, %v3484
  %v3486 = vpop.f32.mrb[0].mxu0
  %v3487 = vadd.f32 0.0, %v3486
  %3488 = vmatprep.mubr.bf16.mxu0 0
  %3489 = vmatmul.mubr.bf16.gmra.mrb[0].mxu0 %v3391
  %v3490 = vpop.f32.mrb[0].mxu0
  %v3491 = vadd.f32 0.0, %v3490
  %v3492 = vpop.f32.mrb[0].mxu0
  %v3493 = vadd.f32 0.0, %v3492
  %v3494 = vpop.f32.mrb[0].mxu0
  %v3495 = vadd.f32 0.0, %v3494
  %v3496 = vpop.f32.mrb[0].mxu0
  %v3497 = vadd.f32 0.0, %v3496
  %3498 = vdwg.mxu0
  %3499 = vmatprep.subr.bf16.mxu0 %v3380
  %3500 = vmatpush1.bf16.msra.mxu0 %v3379
  %3501 = vmatprep.subr.bf16.mxu0 0
  %3502 = vmatpush1.bf16.msra.mxu0 0
  %3503 = vmatprep.subr.bf16.mxu0 0
  %3504 = vmatpush1.bf16.msra.mxu0 0
  %3505 = vmatprep.subr.bf16.mxu0 0
  %3506 = vmatpush1.bf16.msra.mxu0 0
  %3507 = vmatprep.subr.bf16.mxu0 0
  %3508 = vmatpush1.bf16.msra.mxu0 0
  %3509 = vmatprep.subr.bf16.mxu0 0
  %3510 = vmatpush1.bf16.msra.mxu0 0
  %3511 = vmatprep.subr.bf16.mxu0 0
  %3512 = vmatpush1.bf16.msra.mxu0 0
  %3513 = vmatprep.subr.bf16.mxu0 0
  %3514 = vmatpush1.bf16.msra.mxu0 0
  %3515 = vmatprep.subr.bf16.mxu0 0
  %3516 = vmatpush1.bf16.msra.mxu0 0
  %3517 = vmatprep.subr.bf16.mxu0 0
  %3518 = vmatpush1.bf16.msra.mxu0 0
  %3519 = vmatprep.subr.bf16.mxu0 0
  %3520 = vmatpush1.bf16.msra.mxu0 0
  %3521 = vmatprep.subr.bf16.mxu0 0
  %3522 = vmatpush1.bf16.msra.mxu0 0
  %3523 = vmatprep.subr.bf16.mxu0 0
  %3524 = vmatpush1.bf16.msra.mxu0 0
  %3525 = vmatprep.subr.bf16.mxu0 0
  %3526 = vmatpush1.bf16.msra.mxu0 0
  %3527 = vmatprep.subr.bf16.mxu0 0
  %3528 = vmatpush1.bf16.msra.mxu0 0
  %3529 = vmatprep.subr.bf16.mxu0 0
  %3530 = vmatpush1.bf16.msra.mxu0 0
  %3531 = vmatprep.mubr.bf16.mxu0 0
  %3532 = vmatmul.mubr.bf16.gmra.mrb[0].mxu0 %v3388
  %v3533 = vpop.f32.mrb[0].mxu0
  %v3534 = vadd.f32 0.0, %v3533
  %v3535 = vpop.f32.mrb[0].mxu0
  %v3536 = vadd.f32 0.0, %v3535
  %v3537 = vpop.f32.mrb[0].mxu0
  %v3538 = vadd.f32 0.0, %v3537
  %v3539 = vpop.f32.mrb[0].mxu0
  %v3540 = vadd.f32 0.0, %v3539
  %3541 = vmatprep.mubr.bf16.mxu0 0
  %3542 = vmatmul.mubr.bf16.gmra.mrb[0].mxu0 %v3391
  %v3543 = vpop.f32.mrb[0].mxu0
  %v3544 = vadd.f32 0.0, %v3543
  %v3545 = vpop.f32.mrb[0].mxu0
  %v3546 = vadd.f32 0.0, %v3545
  %v3547 = vpop.f32.mrb[0].mxu0
  %v3548 = vadd.f32 0.0, %v3547
  %v3549 = vpop.f32.mrb[0].mxu0
  %v3550 = vadd.f32 0.0, %v3549
  %3551 = vdwg.mxu0
  %v3552 = vadd.f32 %v3321, %v3428
  %v3553 = vadd.f32 %v3322, %v3430
  %v3554 = vadd.f32 %v3323, %v3481
  %v3555 = vadd.f32 %v3324, %v3483
  %v3556 = vadd.f32 %v3325, %v3534
  %v3557 = vadd.f32 %v3326, %v3536
  %v3558 = vadd.f32 %v3327, %v3432
  %v3559 = vadd.f32 %v3328, %v3434
  %v3560 = vadd.f32 %v3329, %v3485
  %v3561 = vadd.f32 %v3330, %v3487
  %v3562 = vadd.f32 %v3331, %v3538
  %v3563 = vadd.f32 %v3332, %v3540
  %v3564 = vadd.f32 %v3333, %v3438
  %v3565 = vadd.f32 %v3334, %v3440
  %v3566 = vadd.f32 %v3335, %v3491
  %v3567 = vadd.f32 %v3336, %v3493
  %v3568 = vadd.f32 %v3337, %v3544
  %v3569 = vadd.f32 %v3338, %v3546
  %v3570 = vadd.f32 %v3339, %v3442
  %v3571 = vadd.f32 %v3340, %v3444
  %v3572 = vadd.f32 %v3341, %v3495
  %v3573 = vadd.f32 %v3342, %v3497
  %v3574 = vadd.f32 %v3343, %v3548
  %v3575 = vadd.f32 %v3344, %v3550
  %s3576 = scalar_lea.vmem %s4, 144
  %v3577 = vld [vmem:[%s3576] sm:$0xf]
  %v3578 = vld [vmem:[%s3576 + $0x4] sm:$0xf]
  %v3579 = vld [vmem:[%s3576 + $0x8] sm:$0xf]
  %v3580 = vld [vmem:[%s3576 + $0xc] sm:$0xf]
  %v3585 = vunpack.c.l.b16 %v3577
  %v3586 = vunpack.c.l.b16 %v3578
  %v3587 = vunpack.c.l.b16 %v3579
  %v3588 = vunpack.c.l.b16 %v3580
  %v3589 = vpack.c.b16 %v3586, %v3585
  %v3590 = vpack.c.b16 %v3588, %v3587
  %3591 = vrot.lane.b32.xlu0 %v1567, 106
  %v3592 = vpop.permute.xlu0 %3591
  %3593 = vrot.lane.b32.xlu0 %v1568, 106
  %v3594 = vpop.permute.xlu0 %3593
  %3595 = vrot.lane.b32.xlu0 %v1569, 106
  %v3596 = vpop.permute.xlu0 %3595
  %3597 = vrot.lane.b32.xlu0 %v1570, 106
  %v3598 = vpop.permute.xlu0 %3597
  %3599 = vrot.lane.b32.xlu0 %v1571, 106
  %v3600 = vpop.permute.xlu0 %3599
  %3601 = vrot.lane.b32.xlu0 %v1572, 106
  %v3602 = vpop.permute.xlu0 %3601
  %3603 = vrot.lane.b32.xlu0 %v1573, 106
  %v3604 = vpop.permute.xlu0 %3603
  %vm3605 = vcmask 867328
  %v3606 = vsel %vm3605, %v3592, %v3594
  %v3607 = vsel %vm3605, %v3594, %v3596
  %v3608 = vsel %vm3605, %v3596, %v3598
  %v3609 = vsel %vm3605, %v3598, %v3600
  %v3610 = vsel %vm3605, %v3600, %v3602
  %v3611 = vsel %vm3605, %v3602, %v3604
  %v3619 = vsel %vm1618, %v3589, 0
  %v3622 = vsel %vm1618, %v3590, 0
  %3624 = vmatprep.subr.bf16.mxu0 %v3607
  %3625 = vmatpush1.bf16.msra.mxu0 %v3606
  %3626 = vmatprep.subr.bf16.mxu0 0
  %3627 = vmatpush1.bf16.msra.mxu0 0
  %3628 = vmatprep.subr.bf16.mxu0 0
  %3629 = vmatpush1.bf16.msra.mxu0 0
  %3630 = vmatprep.subr.bf16.mxu0 0
  %3631 = vmatpush1.bf16.msra.mxu0 0
  %3632 = vmatprep.subr.bf16.mxu0 0
  %3633 = vmatpush1.bf16.msra.mxu0 0
  %3634 = vmatprep.subr.bf16.mxu0 0
  %3635 = vmatpush1.bf16.msra.mxu0 0
  %3636 = vmatprep.subr.bf16.mxu0 0
  %3637 = vmatpush1.bf16.msra.mxu0 0
  %3638 = vmatprep.subr.bf16.mxu0 0
  %3639 = vmatpush1.bf16.msra.mxu0 0
  %3640 = vmatprep.subr.bf16.mxu0 0
  %3641 = vmatpush1.bf16.msra.mxu0 0
  %3642 = vmatprep.subr.bf16.mxu0 0
  %3643 = vmatpush1.bf16.msra.mxu0 0
  %3644 = vmatprep.subr.bf16.mxu0 0
  %3645 = vmatpush1.bf16.msra.mxu0 0
  %3646 = vmatprep.subr.bf16.mxu0 0
  %3647 = vmatpush1.bf16.msra.mxu0 0
  %3648 = vmatprep.subr.bf16.mxu0 0
  %3649 = vmatpush1.bf16.msra.mxu0 0
  %3650 = vmatprep.subr.bf16.mxu0 0
  %3651 = vmatpush1.bf16.msra.mxu0 0
  %3652 = vmatprep.subr.bf16.mxu0 0
  %3653 = vmatpush1.bf16.msra.mxu0 0
  %3654 = vmatprep.subr.bf16.mxu0 0
  %3655 = vmatpush1.bf16.msra.mxu0 0
  %3656 = vmatprep.mubr.bf16.mxu0 0
  %3657 = vmatmul.mubr.bf16.gmra.mrb[0].mxu0 %v3619
  %v3658 = vpop.f32.mrb[0].mxu0
  %v3659 = vadd.f32 0.0, %v3658
  %v3660 = vpop.f32.mrb[0].mxu0
  %v3661 = vadd.f32 0.0, %v3660
  %v3662 = vpop.f32.mrb[0].mxu0
  %v3663 = vadd.f32 0.0, %v3662
  %v3664 = vpop.f32.mrb[0].mxu0
  %v3665 = vadd.f32 0.0, %v3664
  %3666 = vmatprep.mubr.bf16.mxu0 0
  %3667 = vmatmul.mubr.bf16.gmra.mrb[0].mxu0 %v3622
  %v3668 = vpop.f32.mrb[0].mxu0
  %v3669 = vadd.f32 0.0, %v3668
  %v3670 = vpop.f32.mrb[0].mxu0
  %v3671 = vadd.f32 0.0, %v3670
  %v3672 = vpop.f32.mrb[0].mxu0
  %v3673 = vadd.f32 0.0, %v3672
  %v3674 = vpop.f32.mrb[0].mxu0
  %v3675 = vadd.f32 0.0, %v3674
  %3676 = vdwg.mxu0
  %3677 = vmatprep.subr.bf16.mxu0 %v3609
  %3678 = vmatpush1.bf16.msra.mxu0 %v3608
  %3679 = vmatprep.subr.bf16.mxu0 0
  %3680 = vmatpush1.bf16.msra.mxu0 0
  %3681 = vmatprep.subr.bf16.mxu0 0
  %3682 = vmatpush1.bf16.msra.mxu0 0
  %3683 = vmatprep.subr.bf16.mxu0 0
  %3684 = vmatpush1.bf16.msra.mxu0 0
  %3685 = vmatprep.subr.bf16.mxu0 0
  %3686 = vmatpush1.bf16.msra.mxu0 0
  %3687 = vmatprep.subr.bf16.mxu0 0
  %3688 = vmatpush1.bf16.msra.mxu0 0
  %3689 = vmatprep.subr.bf16.mxu0 0
  %3690 = vmatpush1.bf16.msra.mxu0 0
  %3691 = vmatprep.subr.bf16.mxu0 0
  %3692 = vmatpush1.bf16.msra.mxu0 0
  %3693 = vmatprep.subr.bf16.mxu0 0
  %3694 = vmatpush1.bf16.msra.mxu0 0
  %3695 = vmatprep.subr.bf16.mxu0 0
  %3696 = vmatpush1.bf16.msra.mxu0 0
  %3697 = vmatprep.subr.bf16.mxu0 0
  %3698 = vmatpush1.bf16.msra.mxu0 0
  %3699 = vmatprep.subr.bf16.mxu0 0
  %3700 = vmatpush1.bf16.msra.mxu0 0
  %3701 = vmatprep.subr.bf16.mxu0 0
  %3702 = vmatpush1.bf16.msra.mxu0 0
  %3703 = vmatprep.subr.bf16.mxu0 0
  %3704 = vmatpush1.bf16.msra.mxu0 0
  %3705 = vmatprep.subr.bf16.mxu0 0
  %3706 = vmatpush1.bf16.msra.mxu0 0
  %3707 = vmatprep.subr.bf16.mxu0 0
  %3708 = vmatpush1.bf16.msra.mxu0 0
  %3709 = vmatprep.mubr.bf16.mxu0 0
  %3710 = vmatmul.mubr.bf16.gmra.mrb[0].mxu0 %v3619
  %v3711 = vpop.f32.mrb[0].mxu0
  %v3712 = vadd.f32 0.0, %v3711
  %v3713 = vpop.f32.mrb[0].mxu0
  %v3714 = vadd.f32 0.0, %v3713
  %v3715 = vpop.f32.mrb[0].mxu0
  %v3716 = vadd.f32 0.0, %v3715
  %v3717 = vpop.f32.mrb[0].mxu0
  %v3718 = vadd.f32 0.0, %v3717
  %3719 = vmatprep.mubr.bf16.mxu0 0
  %3720 = vmatmul.mubr.bf16.gmra.mrb[0].mxu0 %v3622
  %v3721 = vpop.f32.mrb[0].mxu0
  %v3722 = vadd.f32 0.0, %v3721
  %v3723 = vpop.f32.mrb[0].mxu0
  %v3724 = vadd.f32 0.0, %v3723
  %v3725 = vpop.f32.mrb[0].mxu0
  %v3726 = vadd.f32 0.0, %v3725
  %v3727 = vpop.f32.mrb[0].mxu0
  %v3728 = vadd.f32 0.0, %v3727
  %3729 = vdwg.mxu0
  %3730 = vmatprep.subr.bf16.mxu0 %v3611
  %3731 = vmatpush1.bf16.msra.mxu0 %v3610
  %3732 = vmatprep.subr.bf16.mxu0 0
  %3733 = vmatpush1.bf16.msra.mxu0 0
  %3734 = vmatprep.subr.bf16.mxu0 0
  %3735 = vmatpush1.bf16.msra.mxu0 0
  %3736 = vmatprep.subr.bf16.mxu0 0
  %3737 = vmatpush1.bf16.msra.mxu0 0
  %3738 = vmatprep.subr.bf16.mxu0 0
  %3739 = vmatpush1.bf16.msra.mxu0 0
  %3740 = vmatprep.subr.bf16.mxu0 0
  %3741 = vmatpush1.bf16.msra.mxu0 0
  %3742 = vmatprep.subr.bf16.mxu0 0
  %3743 = vmatpush1.bf16.msra.mxu0 0
  %3744 = vmatprep.subr.bf16.mxu0 0
  %3745 = vmatpush1.bf16.msra.mxu0 0
  %3746 = vmatprep.subr.bf16.mxu0 0
  %3747 = vmatpush1.bf16.msra.mxu0 0
  %3748 = vmatprep.subr.bf16.mxu0 0
  %3749 = vmatpush1.bf16.msra.mxu0 0
  %3750 = vmatprep.subr.bf16.mxu0 0
  %3751 = vmatpush1.bf16.msra.mxu0 0
  %3752 = vmatprep.subr.bf16.mxu0 0
  %3753 = vmatpush1.bf16.msra.mxu0 0
  %3754 = vmatprep.subr.bf16.mxu0 0
  %3755 = vmatpush1.bf16.msra.mxu0 0
  %3756 = vmatprep.subr.bf16.mxu0 0
  %3757 = vmatpush1.bf16.msra.mxu0 0
  %3758 = vmatprep.subr.bf16.mxu0 0
  %3759 = vmatpush1.bf16.msra.mxu0 0
  %3760 = vmatprep.subr.bf16.mxu0 0
  %3761 = vmatpush1.bf16.msra.mxu0 0
  %3762 = vmatprep.mubr.bf16.mxu0 0
  %3763 = vmatmul.mubr.bf16.gmra.mrb[0].mxu0 %v3619
  %v3764 = vpop.f32.mrb[0].mxu0
  %v3765 = vadd.f32 0.0, %v3764
  %v3766 = vpop.f32.mrb[0].mxu0
  %v3767 = vadd.f32 0.0, %v3766
  %v3768 = vpop.f32.mrb[0].mxu0
  %v3769 = vadd.f32 0.0, %v3768
  %v3770 = vpop.f32.mrb[0].mxu0
  %v3771 = vadd.f32 0.0, %v3770
  %3772 = vmatprep.mubr.bf16.mxu0 0
  %3773 = vmatmul.mubr.bf16.gmra.mrb[0].mxu0 %v3622
  %v3774 = vpop.f32.mrb[0].mxu0
  %v3775 = vadd.f32 0.0, %v3774
  %v3776 = vpop.f32.mrb[0].mxu0
  %v3777 = vadd.f32 0.0, %v3776
  %v3778 = vpop.f32.mrb[0].mxu0
  %v3779 = vadd.f32 0.0, %v3778
  %v3780 = vpop.f32.mrb[0].mxu0
  %v3781 = vadd.f32 0.0, %v3780
  %3782 = vdwg.mxu0
  %v3783 = vadd.f32 %v3552, %v3659
  %v3784 = vadd.f32 %v3553, %v3661
  %v3785 = vadd.f32 %v3554, %v3712
  %v3786 = vadd.f32 %v3555, %v3714
  %v3787 = vadd.f32 %v3556, %v3765
  %v3788 = vadd.f32 %v3557, %v3767
  %v3789 = vadd.f32 %v3558, %v3663
  %v3790 = vadd.f32 %v3559, %v3665
  %v3791 = vadd.f32 %v3560, %v3716
  %v3792 = vadd.f32 %v3561, %v3718
  %v3793 = vadd.f32 %v3562, %v3769
  %v3794 = vadd.f32 %v3563, %v3771
  %v3795 = vadd.f32 %v3564, %v3669
  %v3796 = vadd.f32 %v3565, %v3671
  %v3797 = vadd.f32 %v3566, %v3722
  %v3798 = vadd.f32 %v3567, %v3724
  %v3799 = vadd.f32 %v3568, %v3775
  %v3800 = vadd.f32 %v3569, %v3777
  %v3801 = vadd.f32 %v3570, %v3673
  %v3802 = vadd.f32 %v3571, %v3675
  %v3803 = vadd.f32 %v3572, %v3726
  %v3804 = vadd.f32 %v3573, %v3728
  %v3805 = vadd.f32 %v3574, %v3779
  %v3806 = vadd.f32 %v3575, %v3781
  %s3807 = scalar_lea.vmem %s4, 160
  %v3808 = vld [vmem:[%s3807] sm:$0xf]
  %v3809 = vld [vmem:[%s3807 + $0x4] sm:$0xf]
  %v3810 = vld [vmem:[%s3807 + $0x8] sm:$0xf]
  %v3811 = vld [vmem:[%s3807 + $0xc] sm:$0xf]
  %v3816 = vunpack.c.l.b16 %v3808
  %v3817 = vunpack.c.l.b16 %v3809
  %v3818 = vunpack.c.l.b16 %v3810
  %v3819 = vunpack.c.l.b16 %v3811
  %v3820 = vpack.c.b16 %v3817, %v3816
  %v3821 = vpack.c.b16 %v3819, %v3818
  %3822 = vrot.lane.b32.xlu0 %v1567, 92
  %v3823 = vpop.permute.xlu0 %3822
  %3824 = vrot.lane.b32.xlu0 %v1568, 92
  %v3825 = vpop.permute.xlu0 %3824
  %3826 = vrot.lane.b32.xlu0 %v1569, 92
  %v3827 = vpop.permute.xlu0 %3826
  %3828 = vrot.lane.b32.xlu0 %v1570, 92
  %v3829 = vpop.permute.xlu0 %3828
  %3830 = vrot.lane.b32.xlu0 %v1571, 92
  %v3831 = vpop.permute.xlu0 %3830
  %3832 = vrot.lane.b32.xlu0 %v1572, 92
  %v3833 = vpop.permute.xlu0 %3832
  %3834 = vrot.lane.b32.xlu0 %v1573, 92
  %v3835 = vpop.permute.xlu0 %3834
  %vm3836 = vcmask 752640
  %v3837 = vsel %vm3836, %v3823, %v3825
  %v3838 = vsel %vm3836, %v3825, %v3827
  %v3839 = vsel %vm3836, %v3827, %v3829
  %v3840 = vsel %vm3836, %v3829, %v3831
  %v3841 = vsel %vm3836, %v3831, %v3833
  %v3842 = vsel %vm3836, %v3833, %v3835
  %v3850 = vsel %vm1618, %v3820, 0
  %v3853 = vsel %vm1618, %v3821, 0
  %3855 = vmatprep.subr.bf16.mxu0 %v3838
  %3856 = vmatpush1.bf16.msra.mxu0 %v3837
  %3857 = vmatprep.subr.bf16.mxu0 0
  %3858 = vmatpush1.bf16.msra.mxu0 0
  %3859 = vmatprep.subr.bf16.mxu0 0
  %3860 = vmatpush1.bf16.msra.mxu0 0
  %3861 = vmatprep.subr.bf16.mxu0 0
  %3862 = vmatpush1.bf16.msra.mxu0 0
  %3863 = vmatprep.subr.bf16.mxu0 0
  %3864 = vmatpush1.bf16.msra.mxu0 0
  %3865 = vmatprep.subr.bf16.mxu0 0
  %3866 = vmatpush1.bf16.msra.mxu0 0
  %3867 = vmatprep.subr.bf16.mxu0 0
  %3868 = vmatpush1.bf16.msra.mxu0 0
  %3869 = vmatprep.subr.bf16.mxu0 0
  %3870 = vmatpush1.bf16.msra.mxu0 0
  %3871 = vmatprep.subr.bf16.mxu0 0
  %3872 = vmatpush1.bf16.msra.mxu0 0
  %3873 = vmatprep.subr.bf16.mxu0 0
  %3874 = vmatpush1.bf16.msra.mxu0 0
  %3875 = vmatprep.subr.bf16.mxu0 0
  %3876 = vmatpush1.bf16.msra.mxu0 0
  %3877 = vmatprep.subr.bf16.mxu0 0
  %3878 = vmatpush1.bf16.msra.mxu0 0
  %3879 = vmatprep.subr.bf16.mxu0 0
  %3880 = vmatpush1.bf16.msra.mxu0 0
  %3881 = vmatprep.subr.bf16.mxu0 0
  %3882 = vmatpush1.bf16.msra.mxu0 0
  %3883 = vmatprep.subr.bf16.mxu0 0
  %3884 = vmatpush1.bf16.msra.mxu0 0
  %3885 = vmatprep.subr.bf16.mxu0 0
  %3886 = vmatpush1.bf16.msra.mxu0 0
  %3887 = vmatprep.mubr.bf16.mxu0 0
  %3888 = vmatmul.mubr.bf16.gmra.mrb[0].mxu0 %v3850
  %v3889 = vpop.f32.mrb[0].mxu0
  %v3890 = vadd.f32 0.0, %v3889
  %v3891 = vpop.f32.mrb[0].mxu0
  %v3892 = vadd.f32 0.0, %v3891
  %v3893 = vpop.f32.mrb[0].mxu0
  %v3894 = vadd.f32 0.0, %v3893
  %v3895 = vpop.f32.mrb[0].mxu0
  %v3896 = vadd.f32 0.0, %v3895
  %3897 = vmatprep.mubr.bf16.mxu0 0
  %3898 = vmatmul.mubr.bf16.gmra.mrb[0].mxu0 %v3853
  %v3899 = vpop.f32.mrb[0].mxu0
  %v3900 = vadd.f32 0.0, %v3899
  %v3901 = vpop.f32.mrb[0].mxu0
  %v3902 = vadd.f32 0.0, %v3901
  %v3903 = vpop.f32.mrb[0].mxu0
  %v3904 = vadd.f32 0.0, %v3903
  %v3905 = vpop.f32.mrb[0].mxu0
  %v3906 = vadd.f32 0.0, %v3905
  %3907 = vdwg.mxu0
  %3908 = vmatprep.subr.bf16.mxu0 %v3840
  %3909 = vmatpush1.bf16.msra.mxu0 %v3839
  %3910 = vmatprep.subr.bf16.mxu0 0
  %3911 = vmatpush1.bf16.msra.mxu0 0
  %3912 = vmatprep.subr.bf16.mxu0 0
  %3913 = vmatpush1.bf16.msra.mxu0 0
  %3914 = vmatprep.subr.bf16.mxu0 0
  %3915 = vmatpush1.bf16.msra.mxu0 0
  %3916 = vmatprep.subr.bf16.mxu0 0
  %3917 = vmatpush1.bf16.msra.mxu0 0
  %3918 = vmatprep.subr.bf16.mxu0 0
  %3919 = vmatpush1.bf16.msra.mxu0 0
  %3920 = vmatprep.subr.bf16.mxu0 0
  %3921 = vmatpush1.bf16.msra.mxu0 0
  %3922 = vmatprep.subr.bf16.mxu0 0
  %3923 = vmatpush1.bf16.msra.mxu0 0
  %3924 = vmatprep.subr.bf16.mxu0 0
  %3925 = vmatpush1.bf16.msra.mxu0 0
  %3926 = vmatprep.subr.bf16.mxu0 0
  %3927 = vmatpush1.bf16.msra.mxu0 0
  %3928 = vmatprep.subr.bf16.mxu0 0
  %3929 = vmatpush1.bf16.msra.mxu0 0
  %3930 = vmatprep.subr.bf16.mxu0 0
  %3931 = vmatpush1.bf16.msra.mxu0 0
  %3932 = vmatprep.subr.bf16.mxu0 0
  %3933 = vmatpush1.bf16.msra.mxu0 0
  %3934 = vmatprep.subr.bf16.mxu0 0
  %3935 = vmatpush1.bf16.msra.mxu0 0
  %3936 = vmatprep.subr.bf16.mxu0 0
  %3937 = vmatpush1.bf16.msra.mxu0 0
  %3938 = vmatprep.subr.bf16.mxu0 0
  %3939 = vmatpush1.bf16.msra.mxu0 0
  %3940 = vmatprep.mubr.bf16.mxu0 0
  %3941 = vmatmul.mubr.bf16.gmra.mrb[0].mxu0 %v3850
  %v3942 = vpop.f32.mrb[0].mxu0
  %v3943 = vadd.f32 0.0, %v3942
  %v3944 = vpop.f32.mrb[0].mxu0
  %v3945 = vadd.f32 0.0, %v3944
  %v3946 = vpop.f32.mrb[0].mxu0
  %v3947 = vadd.f32 0.0, %v3946
  %v3948 = vpop.f32.mrb[0].mxu0
  %v3949 = vadd.f32 0.0, %v3948
  %3950 = vmatprep.mubr.bf16.mxu0 0
  %3951 = vmatmul.mubr.bf16.gmra.mrb[0].mxu0 %v3853
  %v3952 = vpop.f32.mrb[0].mxu0
  %v3953 = vadd.f32 0.0, %v3952
  %v3954 = vpop.f32.mrb[0].mxu0
  %v3955 = vadd.f32 0.0, %v3954
  %v3956 = vpop.f32.mrb[0].mxu0
  %v3957 = vadd.f32 0.0, %v3956
  %v3958 = vpop.f32.mrb[0].mxu0
  %v3959 = vadd.f32 0.0, %v3958
  %3960 = vdwg.mxu0
  %3961 = vmatprep.subr.bf16.mxu0 %v3842
  %3962 = vmatpush1.bf16.msra.mxu0 %v3841
  %3963 = vmatprep.subr.bf16.mxu0 0
  %3964 = vmatpush1.bf16.msra.mxu0 0
  %3965 = vmatprep.subr.bf16.mxu0 0
  %3966 = vmatpush1.bf16.msra.mxu0 0
  %3967 = vmatprep.subr.bf16.mxu0 0
  %3968 = vmatpush1.bf16.msra.mxu0 0
  %3969 = vmatprep.subr.bf16.mxu0 0
  %3970 = vmatpush1.bf16.msra.mxu0 0
  %3971 = vmatprep.subr.bf16.mxu0 0
  %3972 = vmatpush1.bf16.msra.mxu0 0
  %3973 = vmatprep.subr.bf16.mxu0 0
  %3974 = vmatpush1.bf16.msra.mxu0 0
  %3975 = vmatprep.subr.bf16.mxu0 0
  %3976 = vmatpush1.bf16.msra.mxu0 0
  %3977 = vmatprep.subr.bf16.mxu0 0
  %3978 = vmatpush1.bf16.msra.mxu0 0
  %3979 = vmatprep.subr.bf16.mxu0 0
  %3980 = vmatpush1.bf16.msra.mxu0 0
  %3981 = vmatprep.subr.bf16.mxu0 0
  %3982 = vmatpush1.bf16.msra.mxu0 0
  %3983 = vmatprep.subr.bf16.mxu0 0
  %3984 = vmatpush1.bf16.msra.mxu0 0
  %3985 = vmatprep.subr.bf16.mxu0 0
  %3986 = vmatpush1.bf16.msra.mxu0 0
  %3987 = vmatprep.subr.bf16.mxu0 0
  %3988 = vmatpush1.bf16.msra.mxu0 0
  %3989 = vmatprep.subr.bf16.mxu0 0
  %3990 = vmatpush1.bf16.msra.mxu0 0
  %3991 = vmatprep.subr.bf16.mxu0 0
  %3992 = vmatpush1.bf16.msra.mxu0 0
  %3993 = vmatprep.mubr.bf16.mxu0 0
  %3994 = vmatmul.mubr.bf16.gmra.mrb[0].mxu0 %v3850
  %v3995 = vpop.f32.mrb[0].mxu0
  %v3996 = vadd.f32 0.0, %v3995
  %v3997 = vpop.f32.mrb[0].mxu0
  %v3998 = vadd.f32 0.0, %v3997
  %v3999 = vpop.f32.mrb[0].mxu0
  %v4000 = vadd.f32 0.0, %v3999
  %v4001 = vpop.f32.mrb[0].mxu0
  %v4002 = vadd.f32 0.0, %v4001
  %4003 = vmatprep.mubr.bf16.mxu0 0
  %4004 = vmatmul.mubr.bf16.gmra.mrb[0].mxu0 %v3853
  %v4005 = vpop.f32.mrb[0].mxu0
  %v4006 = vadd.f32 0.0, %v4005
  %v4007 = vpop.f32.mrb[0].mxu0
  %v4008 = vadd.f32 0.0, %v4007
  %v4009 = vpop.f32.mrb[0].mxu0
  %v4010 = vadd.f32 0.0, %v4009
  %v4011 = vpop.f32.mrb[0].mxu0
  %v4012 = vadd.f32 0.0, %v4011
  %4013 = vdwg.mxu0
  %v4014 = vadd.f32 %v3783, %v3890
  %v4015 = vadd.f32 %v3784, %v3892
  %v4016 = vadd.f32 %v3785, %v3943
  %v4017 = vadd.f32 %v3786, %v3945
  %v4018 = vadd.f32 %v3787, %v3996
  %v4019 = vadd.f32 %v3788, %v3998
  %v4020 = vadd.f32 %v3789, %v3894
  %v4021 = vadd.f32 %v3790, %v3896
  %v4022 = vadd.f32 %v3791, %v3947
  %v4023 = vadd.f32 %v3792, %v3949
  %v4024 = vadd.f32 %v3793, %v4000
  %v4025 = vadd.f32 %v3794, %v4002
  %v4026 = vadd.f32 %v3795, %v3900
  %v4027 = vadd.f32 %v3796, %v3902
  %v4028 = vadd.f32 %v3797, %v3953
  %v4029 = vadd.f32 %v3798, %v3955
  %v4030 = vadd.f32 %v3799, %v4006
  %v4031 = vadd.f32 %v3800, %v4008
  %v4032 = vadd.f32 %v3801, %v3904
  %v4033 = vadd.f32 %v3802, %v3906
  %v4034 = vadd.f32 %v3803, %v3957
  %v4035 = vadd.f32 %v3804, %v3959
  %v4036 = vadd.f32 %v3805, %v4010
  %v4037 = vadd.f32 %v3806, %v4012
  %s4038 = scalar_lea.vmem %s4, 176
  %v4039 = vld [vmem:[%s4038] sm:$0xf]
  %v4040 = vld [vmem:[%s4038 + $0x4] sm:$0xf]
  %v4041 = vld [vmem:[%s4038 + $0x8] sm:$0xf]
  %v4042 = vld [vmem:[%s4038 + $0xc] sm:$0xf]
  %v4047 = vunpack.c.l.b16 %v4039
  %v4048 = vunpack.c.l.b16 %v4040
  %v4049 = vunpack.c.l.b16 %v4041
  %v4050 = vunpack.c.l.b16 %v4042
  %v4051 = vpack.c.b16 %v4048, %v4047
  %v4052 = vpack.c.b16 %v4050, %v4049
  %4053 = vrot.lane.b32.xlu0 %v1567, 91
  %v4054 = vpop.permute.xlu0 %4053
  %4055 = vrot.lane.b32.xlu0 %v1568, 91
  %v4056 = vpop.permute.xlu0 %4055
  %4057 = vrot.lane.b32.xlu0 %v1569, 91
  %v4058 = vpop.permute.xlu0 %4057
  %4059 = vrot.lane.b32.xlu0 %v1570, 91
  %v4060 = vpop.permute.xlu0 %4059
  %4061 = vrot.lane.b32.xlu0 %v1571, 91
  %v4062 = vpop.permute.xlu0 %4061
  %4063 = vrot.lane.b32.xlu0 %v1572, 91
  %v4064 = vpop.permute.xlu0 %4063
  %4065 = vrot.lane.b32.xlu0 %v1573, 91
  %v4066 = vpop.permute.xlu0 %4065
  %vm4067 = vcmask 744448
  %v4068 = vsel %vm4067, %v4054, %v4056
  %v4069 = vsel %vm4067, %v4056, %v4058
  %v4070 = vsel %vm4067, %v4058, %v4060
  %v4071 = vsel %vm4067, %v4060, %v4062
  %v4072 = vsel %vm4067, %v4062, %v4064
  %v4073 = vsel %vm4067, %v4064, %v4066
  %v4081 = vsel %vm1618, %v4051, 0
  %v4084 = vsel %vm1618, %v4052, 0
  %4086 = vmatprep.subr.bf16.mxu0 %v4069
  %4087 = vmatpush1.bf16.msra.mxu0 %v4068
  %4088 = vmatprep.subr.bf16.mxu0 0
  %4089 = vmatpush1.bf16.msra.mxu0 0
  %4090 = vmatprep.subr.bf16.mxu0 0
  %4091 = vmatpush1.bf16.msra.mxu0 0
  %4092 = vmatprep.subr.bf16.mxu0 0
  %4093 = vmatpush1.bf16.msra.mxu0 0
  %4094 = vmatprep.subr.bf16.mxu0 0
  %4095 = vmatpush1.bf16.msra.mxu0 0
  %4096 = vmatprep.subr.bf16.mxu0 0
  %4097 = vmatpush1.bf16.msra.mxu0 0
  %4098 = vmatprep.subr.bf16.mxu0 0
  %4099 = vmatpush1.bf16.msra.mxu0 0
  %4100 = vmatprep.subr.bf16.mxu0 0
  %4101 = vmatpush1.bf16.msra.mxu0 0
  %4102 = vmatprep.subr.bf16.mxu0 0
  %4103 = vmatpush1.bf16.msra.mxu0 0
  %4104 = vmatprep.subr.bf16.mxu0 0
  %4105 = vmatpush1.bf16.msra.mxu0 0
  %4106 = vmatprep.subr.bf16.mxu0 0
  %4107 = vmatpush1.bf16.msra.mxu0 0
  %4108 = vmatprep.subr.bf16.mxu0 0
  %4109 = vmatpush1.bf16.msra.mxu0 0
  %4110 = vmatprep.subr.bf16.mxu0 0
  %4111 = vmatpush1.bf16.msra.mxu0 0
  %4112 = vmatprep.subr.bf16.mxu0 0
  %4113 = vmatpush1.bf16.msra.mxu0 0
  %4114 = vmatprep.subr.bf16.mxu0 0
  %4115 = vmatpush1.bf16.msra.mxu0 0
  %4116 = vmatprep.subr.bf16.mxu0 0
  %4117 = vmatpush1.bf16.msra.mxu0 0
  %4118 = vmatprep.mubr.bf16.mxu0 0
  %4119 = vmatmul.mubr.bf16.gmra.mrb[0].mxu0 %v4081
  %v4120 = vpop.f32.mrb[0].mxu0
  %v4121 = vadd.f32 0.0, %v4120
  %v4122 = vpop.f32.mrb[0].mxu0
  %v4123 = vadd.f32 0.0, %v4122
  %v4124 = vpop.f32.mrb[0].mxu0
  %v4125 = vadd.f32 0.0, %v4124
  %v4126 = vpop.f32.mrb[0].mxu0
  %v4127 = vadd.f32 0.0, %v4126
  %4128 = vmatprep.mubr.bf16.mxu0 0
  %4129 = vmatmul.mubr.bf16.gmra.mrb[0].mxu0 %v4084
  %v4130 = vpop.f32.mrb[0].mxu0
  %v4131 = vadd.f32 0.0, %v4130
  %v4132 = vpop.f32.mrb[0].mxu0
  %v4133 = vadd.f32 0.0, %v4132
  %v4134 = vpop.f32.mrb[0].mxu0
  %v4135 = vadd.f32 0.0, %v4134
  %v4136 = vpop.f32.mrb[0].mxu0
  %v4137 = vadd.f32 0.0, %v4136
  %4138 = vdwg.mxu0
  %4139 = vmatprep.subr.bf16.mxu0 %v4071
  %4140 = vmatpush1.bf16.msra.mxu0 %v4070
  %4141 = vmatprep.subr.bf16.mxu0 0
  %4142 = vmatpush1.bf16.msra.mxu0 0
  %4143 = vmatprep.subr.bf16.mxu0 0
  %4144 = vmatpush1.bf16.msra.mxu0 0
  %4145 = vmatprep.subr.bf16.mxu0 0
  %4146 = vmatpush1.bf16.msra.mxu0 0
  %4147 = vmatprep.subr.bf16.mxu0 0
  %4148 = vmatpush1.bf16.msra.mxu0 0
  %4149 = vmatprep.subr.bf16.mxu0 0
  %4150 = vmatpush1.bf16.msra.mxu0 0
  %4151 = vmatprep.subr.bf16.mxu0 0
  %4152 = vmatpush1.bf16.msra.mxu0 0
  %4153 = vmatprep.subr.bf16.mxu0 0
  %4154 = vmatpush1.bf16.msra.mxu0 0
  %4155 = vmatprep.subr.bf16.mxu0 0
  %4156 = vmatpush1.bf16.msra.mxu0 0
  %4157 = vmatprep.subr.bf16.mxu0 0
  %4158 = vmatpush1.bf16.msra.mxu0 0
  %4159 = vmatprep.subr.bf16.mxu0 0
  %4160 = vmatpush1.bf16.msra.mxu0 0
  %4161 = vmatprep.subr.bf16.mxu0 0
  %4162 = vmatpush1.bf16.msra.mxu0 0
  %4163 = vmatprep.subr.bf16.mxu0 0
  %4164 = vmatpush1.bf16.msra.mxu0 0
  %4165 = vmatprep.subr.bf16.mxu0 0
  %4166 = vmatpush1.bf16.msra.mxu0 0
  %4167 = vmatprep.subr.bf16.mxu0 0
  %4168 = vmatpush1.bf16.msra.mxu0 0
  %4169 = vmatprep.subr.bf16.mxu0 0
  %4170 = vmatpush1.bf16.msra.mxu0 0
  %4171 = vmatprep.mubr.bf16.mxu0 0
  %4172 = vmatmul.mubr.bf16.gmra.mrb[0].mxu0 %v4081
  %v4173 = vpop.f32.mrb[0].mxu0
  %v4174 = vadd.f32 0.0, %v4173
  %v4175 = vpop.f32.mrb[0].mxu0
  %v4176 = vadd.f32 0.0, %v4175
  %v4177 = vpop.f32.mrb[0].mxu0
  %v4178 = vadd.f32 0.0, %v4177
  %v4179 = vpop.f32.mrb[0].mxu0
  %v4180 = vadd.f32 0.0, %v4179
  %4181 = vmatprep.mubr.bf16.mxu0 0
  %4182 = vmatmul.mubr.bf16.gmra.mrb[0].mxu0 %v4084
  %v4183 = vpop.f32.mrb[0].mxu0
  %v4184 = vadd.f32 0.0, %v4183
  %v4185 = vpop.f32.mrb[0].mxu0
  %v4186 = vadd.f32 0.0, %v4185
  %v4187 = vpop.f32.mrb[0].mxu0
  %v4188 = vadd.f32 0.0, %v4187
  %v4189 = vpop.f32.mrb[0].mxu0
  %v4190 = vadd.f32 0.0, %v4189
  %4191 = vdwg.mxu0
  %4192 = vmatprep.subr.bf16.mxu0 %v4073
  %4193 = vmatpush1.bf16.msra.mxu0 %v4072
  %4194 = vmatprep.subr.bf16.mxu0 0
  %4195 = vmatpush1.bf16.msra.mxu0 0
  %4196 = vmatprep.subr.bf16.mxu0 0
  %4197 = vmatpush1.bf16.msra.mxu0 0
  %4198 = vmatprep.subr.bf16.mxu0 0
  %4199 = vmatpush1.bf16.msra.mxu0 0
  %4200 = vmatprep.subr.bf16.mxu0 0
  %4201 = vmatpush1.bf16.msra.mxu0 0
  %4202 = vmatprep.subr.bf16.mxu0 0
  %4203 = vmatpush1.bf16.msra.mxu0 0
  %4204 = vmatprep.subr.bf16.mxu0 0
  %4205 = vmatpush1.bf16.msra.mxu0 0
  %4206 = vmatprep.subr.bf16.mxu0 0
  %4207 = vmatpush1.bf16.msra.mxu0 0
  %4208 = vmatprep.subr.bf16.mxu0 0
  %4209 = vmatpush1.bf16.msra.mxu0 0
  %4210 = vmatprep.subr.bf16.mxu0 0
  %4211 = vmatpush1.bf16.msra.mxu0 0
  %4212 = vmatprep.subr.bf16.mxu0 0
  %4213 = vmatpush1.bf16.msra.mxu0 0
  %4214 = vmatprep.subr.bf16.mxu0 0
  %4215 = vmatpush1.bf16.msra.mxu0 0
  %4216 = vmatprep.subr.bf16.mxu0 0
  %4217 = vmatpush1.bf16.msra.mxu0 0
  %4218 = vmatprep.subr.bf16.mxu0 0
  %4219 = vmatpush1.bf16.msra.mxu0 0
  %4220 = vmatprep.subr.bf16.mxu0 0
  %4221 = vmatpush1.bf16.msra.mxu0 0
  %4222 = vmatprep.subr.bf16.mxu0 0
  %4223 = vmatpush1.bf16.msra.mxu0 0
  %4224 = vmatprep.mubr.bf16.mxu0 0
  %4225 = vmatmul.mubr.bf16.gmra.mrb[0].mxu0 %v4081
  %v4226 = vpop.f32.mrb[0].mxu0
  %v4227 = vadd.f32 0.0, %v4226
  %v4228 = vpop.f32.mrb[0].mxu0
  %v4229 = vadd.f32 0.0, %v4228
  %v4230 = vpop.f32.mrb[0].mxu0
  %v4231 = vadd.f32 0.0, %v4230
  %v4232 = vpop.f32.mrb[0].mxu0
  %v4233 = vadd.f32 0.0, %v4232
  %4234 = vmatprep.mubr.bf16.mxu0 0
  %4235 = vmatmul.mubr.bf16.gmra.mrb[0].mxu0 %v4084
  %v4236 = vpop.f32.mrb[0].mxu0
  %v4237 = vadd.f32 0.0, %v4236
  %v4238 = vpop.f32.mrb[0].mxu0
  %v4239 = vadd.f32 0.0, %v4238
  %v4240 = vpop.f32.mrb[0].mxu0
  %v4241 = vadd.f32 0.0, %v4240
  %v4242 = vpop.f32.mrb[0].mxu0
  %v4243 = vadd.f32 0.0, %v4242
  %4244 = vdwg.mxu0
  %v4245 = vadd.f32 %v4014, %v4121
  %v4246 = vadd.f32 %v4015, %v4123
  %v4247 = vadd.f32 %v4016, %v4174
  %v4248 = vadd.f32 %v4017, %v4176
  %v4249 = vadd.f32 %v4018, %v4227
  %v4250 = vadd.f32 %v4019, %v4229
  %v4251 = vadd.f32 %v4020, %v4125
  %v4252 = vadd.f32 %v4021, %v4127
  %v4253 = vadd.f32 %v4022, %v4178
  %v4254 = vadd.f32 %v4023, %v4180
  %v4255 = vadd.f32 %v4024, %v4231
  %v4256 = vadd.f32 %v4025, %v4233
  %v4257 = vadd.f32 %v4026, %v4131
  %v4258 = vadd.f32 %v4027, %v4133
  %v4259 = vadd.f32 %v4028, %v4184
  %v4260 = vadd.f32 %v4029, %v4186
  %v4261 = vadd.f32 %v4030, %v4237
  %v4262 = vadd.f32 %v4031, %v4239
  %v4263 = vadd.f32 %v4032, %v4135
  %v4264 = vadd.f32 %v4033, %v4137
  %v4265 = vadd.f32 %v4034, %v4188
  %v4266 = vadd.f32 %v4035, %v4190
  %v4267 = vadd.f32 %v4036, %v4241
  %v4268 = vadd.f32 %v4037, %v4243
  %s4269 = scalar_lea.vmem %s4, 192
  %v4270 = vld [vmem:[%s4269] sm:$0xf]
  %v4271 = vld [vmem:[%s4269 + $0x4] sm:$0xf]
  %v4272 = vld [vmem:[%s4269 + $0x8] sm:$0xf]
  %v4273 = vld [vmem:[%s4269 + $0xc] sm:$0xf]
  %v4278 = vunpack.c.l.b16 %v4270
  %v4279 = vunpack.c.l.b16 %v4271
  %v4280 = vunpack.c.l.b16 %v4272
  %v4281 = vunpack.c.l.b16 %v4273
  %v4282 = vpack.c.b16 %v4279, %v4278
  %v4283 = vpack.c.b16 %v4281, %v4280
  %4284 = vrot.lane.b32.xlu0 %v1567, 90
  %v4285 = vpop.permute.xlu0 %4284
  %4286 = vrot.lane.b32.xlu0 %v1568, 90
  %v4287 = vpop.permute.xlu0 %4286
  %4288 = vrot.lane.b32.xlu0 %v1569, 90
  %v4289 = vpop.permute.xlu0 %4288
  %4290 = vrot.lane.b32.xlu0 %v1570, 90
  %v4291 = vpop.permute.xlu0 %4290
  %4292 = vrot.lane.b32.xlu0 %v1571, 90
  %v4293 = vpop.permute.xlu0 %4292
  %4294 = vrot.lane.b32.xlu0 %v1572, 90
  %v4295 = vpop.permute.xlu0 %4294
  %4296 = vrot.lane.b32.xlu0 %v1573, 90
  %v4297 = vpop.permute.xlu0 %4296
  %vm4298 = vcmask 736256
  %v4299 = vsel %vm4298, %v4285, %v4287
  %v4300 = vsel %vm4298, %v4287, %v4289
  %v4301 = vsel %vm4298, %v4289, %v4291
  %v4302 = vsel %vm4298, %v4291, %v4293
  %v4303 = vsel %vm4298, %v4293, %v4295
  %v4304 = vsel %vm4298, %v4295, %v4297
  %v4312 = vsel %vm1618, %v4282, 0
  %v4315 = vsel %vm1618, %v4283, 0
  %4317 = vmatprep.subr.bf16.mxu0 %v4300
  %4318 = vmatpush1.bf16.msra.mxu0 %v4299
  %4319 = vmatprep.subr.bf16.mxu0 0
  %4320 = vmatpush1.bf16.msra.mxu0 0
  %4321 = vmatprep.subr.bf16.mxu0 0
  %4322 = vmatpush1.bf16.msra.mxu0 0
  %4323 = vmatprep.subr.bf16.mxu0 0
  %4324 = vmatpush1.bf16.msra.mxu0 0
  %4325 = vmatprep.subr.bf16.mxu0 0
  %4326 = vmatpush1.bf16.msra.mxu0 0
  %4327 = vmatprep.subr.bf16.mxu0 0
  %4328 = vmatpush1.bf16.msra.mxu0 0
  %4329 = vmatprep.subr.bf16.mxu0 0
  %4330 = vmatpush1.bf16.msra.mxu0 0
  %4331 = vmatprep.subr.bf16.mxu0 0
  %4332 = vmatpush1.bf16.msra.mxu0 0
  %4333 = vmatprep.subr.bf16.mxu0 0
  %4334 = vmatpush1.bf16.msra.mxu0 0
  %4335 = vmatprep.subr.bf16.mxu0 0
  %4336 = vmatpush1.bf16.msra.mxu0 0
  %4337 = vmatprep.subr.bf16.mxu0 0
  %4338 = vmatpush1.bf16.msra.mxu0 0
  %4339 = vmatprep.subr.bf16.mxu0 0
  %4340 = vmatpush1.bf16.msra.mxu0 0
  %4341 = vmatprep.subr.bf16.mxu0 0
  %4342 = vmatpush1.bf16.msra.mxu0 0
  %4343 = vmatprep.subr.bf16.mxu0 0
  %4344 = vmatpush1.bf16.msra.mxu0 0
  %4345 = vmatprep.subr.bf16.mxu0 0
  %4346 = vmatpush1.bf16.msra.mxu0 0
  %4347 = vmatprep.subr.bf16.mxu0 0
  %4348 = vmatpush1.bf16.msra.mxu0 0
  %4349 = vmatprep.mubr.bf16.mxu0 0
  %4350 = vmatmul.mubr.bf16.gmra.mrb[0].mxu0 %v4312
  %v4351 = vpop.f32.mrb[0].mxu0
  %v4352 = vadd.f32 0.0, %v4351
  %v4353 = vpop.f32.mrb[0].mxu0
  %v4354 = vadd.f32 0.0, %v4353
  %v4355 = vpop.f32.mrb[0].mxu0
  %v4356 = vadd.f32 0.0, %v4355
  %v4357 = vpop.f32.mrb[0].mxu0
  %v4358 = vadd.f32 0.0, %v4357
  %4359 = vmatprep.mubr.bf16.mxu0 0
  %4360 = vmatmul.mubr.bf16.gmra.mrb[0].mxu0 %v4315
  %v4361 = vpop.f32.mrb[0].mxu0
  %v4362 = vadd.f32 0.0, %v4361
  %v4363 = vpop.f32.mrb[0].mxu0
  %v4364 = vadd.f32 0.0, %v4363
  %v4365 = vpop.f32.mrb[0].mxu0
  %v4366 = vadd.f32 0.0, %v4365
  %v4367 = vpop.f32.mrb[0].mxu0
  %v4368 = vadd.f32 0.0, %v4367
  %4369 = vdwg.mxu0
  %4370 = vmatprep.subr.bf16.mxu0 %v4302
  %4371 = vmatpush1.bf16.msra.mxu0 %v4301
  %4372 = vmatprep.subr.bf16.mxu0 0
  %4373 = vmatpush1.bf16.msra.mxu0 0
  %4374 = vmatprep.subr.bf16.mxu0 0
  %4375 = vmatpush1.bf16.msra.mxu0 0
  %4376 = vmatprep.subr.bf16.mxu0 0
  %4377 = vmatpush1.bf16.msra.mxu0 0
  %4378 = vmatprep.subr.bf16.mxu0 0
  %4379 = vmatpush1.bf16.msra.mxu0 0
  %4380 = vmatprep.subr.bf16.mxu0 0
  %4381 = vmatpush1.bf16.msra.mxu0 0
  %4382 = vmatprep.subr.bf16.mxu0 0
  %4383 = vmatpush1.bf16.msra.mxu0 0
  %4384 = vmatprep.subr.bf16.mxu0 0
  %4385 = vmatpush1.bf16.msra.mxu0 0
  %4386 = vmatprep.subr.bf16.mxu0 0
  %4387 = vmatpush1.bf16.msra.mxu0 0
  %4388 = vmatprep.subr.bf16.mxu0 0
  %4389 = vmatpush1.bf16.msra.mxu0 0
  %4390 = vmatprep.subr.bf16.mxu0 0
  %4391 = vmatpush1.bf16.msra.mxu0 0
  %4392 = vmatprep.subr.bf16.mxu0 0
  %4393 = vmatpush1.bf16.msra.mxu0 0
  %4394 = vmatprep.subr.bf16.mxu0 0
  %4395 = vmatpush1.bf16.msra.mxu0 0
  %4396 = vmatprep.subr.bf16.mxu0 0
  %4397 = vmatpush1.bf16.msra.mxu0 0
  %4398 = vmatprep.subr.bf16.mxu0 0
  %4399 = vmatpush1.bf16.msra.mxu0 0
  %4400 = vmatprep.subr.bf16.mxu0 0
  %4401 = vmatpush1.bf16.msra.mxu0 0
  %4402 = vmatprep.mubr.bf16.mxu0 0
  %4403 = vmatmul.mubr.bf16.gmra.mrb[0].mxu0 %v4312
  %v4404 = vpop.f32.mrb[0].mxu0
  %v4405 = vadd.f32 0.0, %v4404
  %v4406 = vpop.f32.mrb[0].mxu0
  %v4407 = vadd.f32 0.0, %v4406
  %v4408 = vpop.f32.mrb[0].mxu0
  %v4409 = vadd.f32 0.0, %v4408
  %v4410 = vpop.f32.mrb[0].mxu0
  %v4411 = vadd.f32 0.0, %v4410
  %4412 = vmatprep.mubr.bf16.mxu0 0
  %4413 = vmatmul.mubr.bf16.gmra.mrb[0].mxu0 %v4315
  %v4414 = vpop.f32.mrb[0].mxu0
  %v4415 = vadd.f32 0.0, %v4414
  %v4416 = vpop.f32.mrb[0].mxu0
  %v4417 = vadd.f32 0.0, %v4416
  %v4418 = vpop.f32.mrb[0].mxu0
  %v4419 = vadd.f32 0.0, %v4418
  %v4420 = vpop.f32.mrb[0].mxu0
  %v4421 = vadd.f32 0.0, %v4420
  %4422 = vdwg.mxu0
  %4423 = vmatprep.subr.bf16.mxu0 %v4304
  %4424 = vmatpush1.bf16.msra.mxu0 %v4303
  %4425 = vmatprep.subr.bf16.mxu0 0
  %4426 = vmatpush1.bf16.msra.mxu0 0
  %4427 = vmatprep.subr.bf16.mxu0 0
  %4428 = vmatpush1.bf16.msra.mxu0 0
  %4429 = vmatprep.subr.bf16.mxu0 0
  %4430 = vmatpush1.bf16.msra.mxu0 0
  %4431 = vmatprep.subr.bf16.mxu0 0
  %4432 = vmatpush1.bf16.msra.mxu0 0
  %4433 = vmatprep.subr.bf16.mxu0 0
  %4434 = vmatpush1.bf16.msra.mxu0 0
  %4435 = vmatprep.subr.bf16.mxu0 0
  %4436 = vmatpush1.bf16.msra.mxu0 0
  %4437 = vmatprep.subr.bf16.mxu0 0
  %4438 = vmatpush1.bf16.msra.mxu0 0
  %4439 = vmatprep.subr.bf16.mxu0 0
  %4440 = vmatpush1.bf16.msra.mxu0 0
  %4441 = vmatprep.subr.bf16.mxu0 0
  %4442 = vmatpush1.bf16.msra.mxu0 0
  %4443 = vmatprep.subr.bf16.mxu0 0
  %4444 = vmatpush1.bf16.msra.mxu0 0
  %4445 = vmatprep.subr.bf16.mxu0 0
  %4446 = vmatpush1.bf16.msra.mxu0 0
  %4447 = vmatprep.subr.bf16.mxu0 0
  %4448 = vmatpush1.bf16.msra.mxu0 0
  %4449 = vmatprep.subr.bf16.mxu0 0
  %4450 = vmatpush1.bf16.msra.mxu0 0
  %4451 = vmatprep.subr.bf16.mxu0 0
  %4452 = vmatpush1.bf16.msra.mxu0 0
  %4453 = vmatprep.subr.bf16.mxu0 0
  %4454 = vmatpush1.bf16.msra.mxu0 0
  %4455 = vmatprep.mubr.bf16.mxu0 0
  %4456 = vmatmul.mubr.bf16.gmra.mrb[0].mxu0 %v4312
  %v4457 = vpop.f32.mrb[0].mxu0
  %v4458 = vadd.f32 0.0, %v4457
  %v4459 = vpop.f32.mrb[0].mxu0
  %v4460 = vadd.f32 0.0, %v4459
  %v4461 = vpop.f32.mrb[0].mxu0
  %v4462 = vadd.f32 0.0, %v4461
  %v4463 = vpop.f32.mrb[0].mxu0
  %v4464 = vadd.f32 0.0, %v4463
  %4465 = vmatprep.mubr.bf16.mxu0 0
  %4466 = vmatmul.mubr.bf16.gmra.mrb[0].mxu0 %v4315
  %v4467 = vpop.f32.mrb[0].mxu0
  %v4468 = vadd.f32 0.0, %v4467
  %v4469 = vpop.f32.mrb[0].mxu0
  %v4470 = vadd.f32 0.0, %v4469
  %v4471 = vpop.f32.mrb[0].mxu0
  %v4472 = vadd.f32 0.0, %v4471
  %v4473 = vpop.f32.mrb[0].mxu0
  %v4474 = vadd.f32 0.0, %v4473
  %4475 = vdwg.mxu0
  %v4476 = vadd.f32 %v4245, %v4352
  %v4477 = vadd.f32 %v4246, %v4354
  %v4478 = vadd.f32 %v4247, %v4405
  %v4479 = vadd.f32 %v4248, %v4407
  %v4480 = vadd.f32 %v4249, %v4458
  %v4481 = vadd.f32 %v4250, %v4460
  %v4482 = vadd.f32 %v4251, %v4356
  %v4483 = vadd.f32 %v4252, %v4358
  %v4484 = vadd.f32 %v4253, %v4409
  %v4485 = vadd.f32 %v4254, %v4411
  %v4486 = vadd.f32 %v4255, %v4462
  %v4487 = vadd.f32 %v4256, %v4464
  %v4488 = vadd.f32 %v4257, %v4362
  %v4489 = vadd.f32 %v4258, %v4364
  %v4490 = vadd.f32 %v4259, %v4415
  %v4491 = vadd.f32 %v4260, %v4417
  %v4492 = vadd.f32 %v4261, %v4468
  %v4493 = vadd.f32 %v4262, %v4470
  %v4494 = vadd.f32 %v4263, %v4366
  %v4495 = vadd.f32 %v4264, %v4368
  %v4496 = vadd.f32 %v4265, %v4419
  %v4497 = vadd.f32 %v4266, %v4421
  %v4498 = vadd.f32 %v4267, %v4472
  %v4499 = vadd.f32 %v4268, %v4474
  %s4500 = scalar_lea.vmem %s4, 208
  %v4501 = vld [vmem:[%s4500] sm:$0xf]
  %v4502 = vld [vmem:[%s4500 + $0x4] sm:$0xf]
  %v4503 = vld [vmem:[%s4500 + $0x8] sm:$0xf]
  %v4504 = vld [vmem:[%s4500 + $0xc] sm:$0xf]
  %v4509 = vunpack.c.l.b16 %v4501
  %v4510 = vunpack.c.l.b16 %v4502
  %v4511 = vunpack.c.l.b16 %v4503
  %v4512 = vunpack.c.l.b16 %v4504
  %v4513 = vpack.c.b16 %v4510, %v4509
  %v4514 = vpack.c.b16 %v4512, %v4511
  %4515 = vrot.lane.b32.xlu0 %v1567, 89
  %v4516 = vpop.permute.xlu0 %4515
  %4517 = vrot.lane.b32.xlu0 %v1568, 89
  %v4518 = vpop.permute.xlu0 %4517
  %4519 = vrot.lane.b32.xlu0 %v1569, 89
  %v4520 = vpop.permute.xlu0 %4519
  %4521 = vrot.lane.b32.xlu0 %v1570, 89
  %v4522 = vpop.permute.xlu0 %4521
  %4523 = vrot.lane.b32.xlu0 %v1571, 89
  %v4524 = vpop.permute.xlu0 %4523
  %4525 = vrot.lane.b32.xlu0 %v1572, 89
  %v4526 = vpop.permute.xlu0 %4525
  %4527 = vrot.lane.b32.xlu0 %v1573, 89
  %v4528 = vpop.permute.xlu0 %4527
  %vm4529 = vcmask 728064
  %v4530 = vsel %vm4529, %v4516, %v4518
  %v4531 = vsel %vm4529, %v4518, %v4520
  %v4532 = vsel %vm4529, %v4520, %v4522
  %v4533 = vsel %vm4529, %v4522, %v4524
  %v4534 = vsel %vm4529, %v4524, %v4526
  %v4535 = vsel %vm4529, %v4526, %v4528
  %v4543 = vsel %vm1618, %v4513, 0
  %v4546 = vsel %vm1618, %v4514, 0
  %4548 = vmatprep.subr.bf16.mxu0 %v4531
  %4549 = vmatpush1.bf16.msra.mxu0 %v4530
  %4550 = vmatprep.subr.bf16.mxu0 0
  %4551 = vmatpush1.bf16.msra.mxu0 0
  %4552 = vmatprep.subr.bf16.mxu0 0
  %4553 = vmatpush1.bf16.msra.mxu0 0
  %4554 = vmatprep.subr.bf16.mxu0 0
  %4555 = vmatpush1.bf16.msra.mxu0 0
  %4556 = vmatprep.subr.bf16.mxu0 0
  %4557 = vmatpush1.bf16.msra.mxu0 0
  %4558 = vmatprep.subr.bf16.mxu0 0
  %4559 = vmatpush1.bf16.msra.mxu0 0
  %4560 = vmatprep.subr.bf16.mxu0 0
  %4561 = vmatpush1.bf16.msra.mxu0 0
  %4562 = vmatprep.subr.bf16.mxu0 0
  %4563 = vmatpush1.bf16.msra.mxu0 0
  %4564 = vmatprep.subr.bf16.mxu0 0
  %4565 = vmatpush1.bf16.msra.mxu0 0
  %4566 = vmatprep.subr.bf16.mxu0 0
  %4567 = vmatpush1.bf16.msra.mxu0 0
  %4568 = vmatprep.subr.bf16.mxu0 0
  %4569 = vmatpush1.bf16.msra.mxu0 0
  %4570 = vmatprep.subr.bf16.mxu0 0
  %4571 = vmatpush1.bf16.msra.mxu0 0
  %4572 = vmatprep.subr.bf16.mxu0 0
  %4573 = vmatpush1.bf16.msra.mxu0 0
  %4574 = vmatprep.subr.bf16.mxu0 0
  %4575 = vmatpush1.bf16.msra.mxu0 0
  %4576 = vmatprep.subr.bf16.mxu0 0
  %4577 = vmatpush1.bf16.msra.mxu0 0
  %4578 = vmatprep.subr.bf16.mxu0 0
  %4579 = vmatpush1.bf16.msra.mxu0 0
  %4580 = vmatprep.mubr.bf16.mxu0 0
  %4581 = vmatmul.mubr.bf16.gmra.mrb[0].mxu0 %v4543
  %v4582 = vpop.f32.mrb[0].mxu0
  %v4583 = vadd.f32 0.0, %v4582
  %v4584 = vpop.f32.mrb[0].mxu0
  %v4585 = vadd.f32 0.0, %v4584
  %v4586 = vpop.f32.mrb[0].mxu0
  %v4587 = vadd.f32 0.0, %v4586
  %v4588 = vpop.f32.mrb[0].mxu0
  %v4589 = vadd.f32 0.0, %v4588
  %4590 = vmatprep.mubr.bf16.mxu0 0
  %4591 = vmatmul.mubr.bf16.gmra.mrb[0].mxu0 %v4546
  %v4592 = vpop.f32.mrb[0].mxu0
  %v4593 = vadd.f32 0.0, %v4592
  %v4594 = vpop.f32.mrb[0].mxu0
  %v4595 = vadd.f32 0.0, %v4594
  %v4596 = vpop.f32.mrb[0].mxu0
  %v4597 = vadd.f32 0.0, %v4596
  %v4598 = vpop.f32.mrb[0].mxu0
  %v4599 = vadd.f32 0.0, %v4598
  %4600 = vdwg.mxu0
  %4601 = vmatprep.subr.bf16.mxu0 %v4533
  %4602 = vmatpush1.bf16.msra.mxu0 %v4532
  %4603 = vmatprep.subr.bf16.mxu0 0
  %4604 = vmatpush1.bf16.msra.mxu0 0
  %4605 = vmatprep.subr.bf16.mxu0 0
  %4606 = vmatpush1.bf16.msra.mxu0 0
  %4607 = vmatprep.subr.bf16.mxu0 0
  %4608 = vmatpush1.bf16.msra.mxu0 0
  %4609 = vmatprep.subr.bf16.mxu0 0
  %4610 = vmatpush1.bf16.msra.mxu0 0
  %4611 = vmatprep.subr.bf16.mxu0 0
  %4612 = vmatpush1.bf16.msra.mxu0 0
  %4613 = vmatprep.subr.bf16.mxu0 0
  %4614 = vmatpush1.bf16.msra.mxu0 0
  %4615 = vmatprep.subr.bf16.mxu0 0
  %4616 = vmatpush1.bf16.msra.mxu0 0
  %4617 = vmatprep.subr.bf16.mxu0 0
  %4618 = vmatpush1.bf16.msra.mxu0 0
  %4619 = vmatprep.subr.bf16.mxu0 0
  %4620 = vmatpush1.bf16.msra.mxu0 0
  %4621 = vmatprep.subr.bf16.mxu0 0
  %4622 = vmatpush1.bf16.msra.mxu0 0
  %4623 = vmatprep.subr.bf16.mxu0 0
  %4624 = vmatpush1.bf16.msra.mxu0 0
  %4625 = vmatprep.subr.bf16.mxu0 0
  %4626 = vmatpush1.bf16.msra.mxu0 0
  %4627 = vmatprep.subr.bf16.mxu0 0
  %4628 = vmatpush1.bf16.msra.mxu0 0
  %4629 = vmatprep.subr.bf16.mxu0 0
  %4630 = vmatpush1.bf16.msra.mxu0 0
  %4631 = vmatprep.subr.bf16.mxu0 0
  %4632 = vmatpush1.bf16.msra.mxu0 0
  %4633 = vmatprep.mubr.bf16.mxu0 0
  %4634 = vmatmul.mubr.bf16.gmra.mrb[0].mxu0 %v4543
  %v4635 = vpop.f32.mrb[0].mxu0
  %v4636 = vadd.f32 0.0, %v4635
  %v4637 = vpop.f32.mrb[0].mxu0
  %v4638 = vadd.f32 0.0, %v4637
  %v4639 = vpop.f32.mrb[0].mxu0
  %v4640 = vadd.f32 0.0, %v4639
  %v4641 = vpop.f32.mrb[0].mxu0
  %v4642 = vadd.f32 0.0, %v4641
  %4643 = vmatprep.mubr.bf16.mxu0 0
  %4644 = vmatmul.mubr.bf16.gmra.mrb[0].mxu0 %v4546
  %v4645 = vpop.f32.mrb[0].mxu0
  %v4646 = vadd.f32 0.0, %v4645
  %v4647 = vpop.f32.mrb[0].mxu0
  %v4648 = vadd.f32 0.0, %v4647
  %v4649 = vpop.f32.mrb[0].mxu0
  %v4650 = vadd.f32 0.0, %v4649
  %v4651 = vpop.f32.mrb[0].mxu0
  %v4652 = vadd.f32 0.0, %v4651
  %4653 = vdwg.mxu0
  %4654 = vmatprep.subr.bf16.mxu0 %v4535
  %4655 = vmatpush1.bf16.msra.mxu0 %v4534
  %4656 = vmatprep.subr.bf16.mxu0 0
  %4657 = vmatpush1.bf16.msra.mxu0 0
  %4658 = vmatprep.subr.bf16.mxu0 0
  %4659 = vmatpush1.bf16.msra.mxu0 0
  %4660 = vmatprep.subr.bf16.mxu0 0
  %4661 = vmatpush1.bf16.msra.mxu0 0
  %4662 = vmatprep.subr.bf16.mxu0 0
  %4663 = vmatpush1.bf16.msra.mxu0 0
  %4664 = vmatprep.subr.bf16.mxu0 0
  %4665 = vmatpush1.bf16.msra.mxu0 0
  %4666 = vmatprep.subr.bf16.mxu0 0
  %4667 = vmatpush1.bf16.msra.mxu0 0
  %4668 = vmatprep.subr.bf16.mxu0 0
  %4669 = vmatpush1.bf16.msra.mxu0 0
  %4670 = vmatprep.subr.bf16.mxu0 0
  %4671 = vmatpush1.bf16.msra.mxu0 0
  %4672 = vmatprep.subr.bf16.mxu0 0
  %4673 = vmatpush1.bf16.msra.mxu0 0
  %4674 = vmatprep.subr.bf16.mxu0 0
  %4675 = vmatpush1.bf16.msra.mxu0 0
  %4676 = vmatprep.subr.bf16.mxu0 0
  %4677 = vmatpush1.bf16.msra.mxu0 0
  %4678 = vmatprep.subr.bf16.mxu0 0
  %4679 = vmatpush1.bf16.msra.mxu0 0
  %4680 = vmatprep.subr.bf16.mxu0 0
  %4681 = vmatpush1.bf16.msra.mxu0 0
  %4682 = vmatprep.subr.bf16.mxu0 0
  %4683 = vmatpush1.bf16.msra.mxu0 0
  %4684 = vmatprep.subr.bf16.mxu0 0
  %4685 = vmatpush1.bf16.msra.mxu0 0
  %4686 = vmatprep.mubr.bf16.mxu0 0
  %4687 = vmatmul.mubr.bf16.gmra.mrb[0].mxu0 %v4543
  %v4688 = vpop.f32.mrb[0].mxu0
  %v4689 = vadd.f32 0.0, %v4688
  %v4690 = vpop.f32.mrb[0].mxu0
  %v4691 = vadd.f32 0.0, %v4690
  %v4692 = vpop.f32.mrb[0].mxu0
  %v4693 = vadd.f32 0.0, %v4692
  %v4694 = vpop.f32.mrb[0].mxu0
  %v4695 = vadd.f32 0.0, %v4694
  %4696 = vmatprep.mubr.bf16.mxu0 0
  %4697 = vmatmul.mubr.bf16.gmra.mrb[0].mxu0 %v4546
  %v4698 = vpop.f32.mrb[0].mxu0
  %v4699 = vadd.f32 0.0, %v4698
  %v4700 = vpop.f32.mrb[0].mxu0
  %v4701 = vadd.f32 0.0, %v4700
  %v4702 = vpop.f32.mrb[0].mxu0
  %v4703 = vadd.f32 0.0, %v4702
  %v4704 = vpop.f32.mrb[0].mxu0
  %v4705 = vadd.f32 0.0, %v4704
  %4706 = vdwg.mxu0
  %v4707 = vadd.f32 %v4476, %v4583
  %v4708 = vadd.f32 %v4477, %v4585
  %v4709 = vadd.f32 %v4478, %v4636
  %v4710 = vadd.f32 %v4479, %v4638
  %v4711 = vadd.f32 %v4480, %v4689
  %v4712 = vadd.f32 %v4481, %v4691
  %v4713 = vadd.f32 %v4482, %v4587
  %v4714 = vadd.f32 %v4483, %v4589
  %v4715 = vadd.f32 %v4484, %v4640
  %v4716 = vadd.f32 %v4485, %v4642
  %v4717 = vadd.f32 %v4486, %v4693
  %v4718 = vadd.f32 %v4487, %v4695
  %v4719 = vadd.f32 %v4488, %v4593
  %v4720 = vadd.f32 %v4489, %v4595
  %v4721 = vadd.f32 %v4490, %v4646
  %v4722 = vadd.f32 %v4491, %v4648
  %v4723 = vadd.f32 %v4492, %v4699
  %v4724 = vadd.f32 %v4493, %v4701
  %v4725 = vadd.f32 %v4494, %v4597
  %v4726 = vadd.f32 %v4495, %v4599
  %v4727 = vadd.f32 %v4496, %v4650
  %v4728 = vadd.f32 %v4497, %v4652
  %v4729 = vadd.f32 %v4498, %v4703
  %v4730 = vadd.f32 %v4499, %v4705
  %s4731 = scalar_lea.vmem %s4, 224
  %v4732 = vld [vmem:[%s4731] sm:$0xf]
  %v4733 = vld [vmem:[%s4731 + $0x4] sm:$0xf]
  %v4734 = vld [vmem:[%s4731 + $0x8] sm:$0xf]
  %v4735 = vld [vmem:[%s4731 + $0xc] sm:$0xf]
  %v4740 = vunpack.c.l.b16 %v4732
  %v4741 = vunpack.c.l.b16 %v4733
  %v4742 = vunpack.c.l.b16 %v4734
  %v4743 = vunpack.c.l.b16 %v4735
  %v4744 = vpack.c.b16 %v4741, %v4740
  %v4745 = vpack.c.b16 %v4743, %v4742
  %4746 = vrot.lane.b32.xlu0 %v1567, 88
  %v4747 = vpop.permute.xlu0 %4746
  %4748 = vrot.lane.b32.xlu0 %v1568, 88
  %v4749 = vpop.permute.xlu0 %4748
  %4750 = vrot.lane.b32.xlu0 %v1569, 88
  %v4751 = vpop.permute.xlu0 %4750
  %4752 = vrot.lane.b32.xlu0 %v1570, 88
  %v4753 = vpop.permute.xlu0 %4752
  %4754 = vrot.lane.b32.xlu0 %v1571, 88
  %v4755 = vpop.permute.xlu0 %4754
  %4756 = vrot.lane.b32.xlu0 %v1572, 88
  %v4757 = vpop.permute.xlu0 %4756
  %4758 = vrot.lane.b32.xlu0 %v1573, 88
  %v4759 = vpop.permute.xlu0 %4758
  %vm4760 = vcmask 719872
  %v4761 = vsel %vm4760, %v4747, %v4749
  %v4762 = vsel %vm4760, %v4749, %v4751
  %v4763 = vsel %vm4760, %v4751, %v4753
  %v4764 = vsel %vm4760, %v4753, %v4755
  %v4765 = vsel %vm4760, %v4755, %v4757
  %v4766 = vsel %vm4760, %v4757, %v4759
  %v4774 = vsel %vm1618, %v4744, 0
  %v4777 = vsel %vm1618, %v4745, 0
  %4779 = vmatprep.subr.bf16.mxu0 %v4762
  %4780 = vmatpush1.bf16.msra.mxu0 %v4761
  %4781 = vmatprep.subr.bf16.mxu0 0
  %4782 = vmatpush1.bf16.msra.mxu0 0
  %4783 = vmatprep.subr.bf16.mxu0 0
  %4784 = vmatpush1.bf16.msra.mxu0 0
  %4785 = vmatprep.subr.bf16.mxu0 0
  %4786 = vmatpush1.bf16.msra.mxu0 0
  %4787 = vmatprep.subr.bf16.mxu0 0
  %4788 = vmatpush1.bf16.msra.mxu0 0
  %4789 = vmatprep.subr.bf16.mxu0 0
  %4790 = vmatpush1.bf16.msra.mxu0 0
  %4791 = vmatprep.subr.bf16.mxu0 0
  %4792 = vmatpush1.bf16.msra.mxu0 0
  %4793 = vmatprep.subr.bf16.mxu0 0
  %4794 = vmatpush1.bf16.msra.mxu0 0
  %4795 = vmatprep.subr.bf16.mxu0 0
  %4796 = vmatpush1.bf16.msra.mxu0 0
  %4797 = vmatprep.subr.bf16.mxu0 0
  %4798 = vmatpush1.bf16.msra.mxu0 0
  %4799 = vmatprep.subr.bf16.mxu0 0
  %4800 = vmatpush1.bf16.msra.mxu0 0
  %4801 = vmatprep.subr.bf16.mxu0 0
  %4802 = vmatpush1.bf16.msra.mxu0 0
  %4803 = vmatprep.subr.bf16.mxu0 0
  %4804 = vmatpush1.bf16.msra.mxu0 0
  %4805 = vmatprep.subr.bf16.mxu0 0
  %4806 = vmatpush1.bf16.msra.mxu0 0
  %4807 = vmatprep.subr.bf16.mxu0 0
  %4808 = vmatpush1.bf16.msra.mxu0 0
  %4809 = vmatprep.subr.bf16.mxu0 0
  %4810 = vmatpush1.bf16.msra.mxu0 0
  %4811 = vmatprep.mubr.bf16.mxu0 0
  %4812 = vmatmul.mubr.bf16.gmra.mrb[0].mxu0 %v4774
  %v4813 = vpop.f32.mrb[0].mxu0
  %v4814 = vadd.f32 0.0, %v4813
  %v4815 = vpop.f32.mrb[0].mxu0
  %v4816 = vadd.f32 0.0, %v4815
  %v4817 = vpop.f32.mrb[0].mxu0
  %v4818 = vadd.f32 0.0, %v4817
  %v4819 = vpop.f32.mrb[0].mxu0
  %v4820 = vadd.f32 0.0, %v4819
  %4821 = vmatprep.mubr.bf16.mxu0 0
  %4822 = vmatmul.mubr.bf16.gmra.mrb[0].mxu0 %v4777
  %v4823 = vpop.f32.mrb[0].mxu0
  %v4824 = vadd.f32 0.0, %v4823
  %v4825 = vpop.f32.mrb[0].mxu0
  %v4826 = vadd.f32 0.0, %v4825
  %v4827 = vpop.f32.mrb[0].mxu0
  %v4828 = vadd.f32 0.0, %v4827
  %v4829 = vpop.f32.mrb[0].mxu0
  %v4830 = vadd.f32 0.0, %v4829
  %4831 = vdwg.mxu0
  %4832 = vmatprep.subr.bf16.mxu0 %v4764
  %4833 = vmatpush1.bf16.msra.mxu0 %v4763
  %4834 = vmatprep.subr.bf16.mxu0 0
  %4835 = vmatpush1.bf16.msra.mxu0 0
  %4836 = vmatprep.subr.bf16.mxu0 0
  %4837 = vmatpush1.bf16.msra.mxu0 0
  %4838 = vmatprep.subr.bf16.mxu0 0
  %4839 = vmatpush1.bf16.msra.mxu0 0
  %4840 = vmatprep.subr.bf16.mxu0 0
  %4841 = vmatpush1.bf16.msra.mxu0 0
  %4842 = vmatprep.subr.bf16.mxu0 0
  %4843 = vmatpush1.bf16.msra.mxu0 0
  %4844 = vmatprep.subr.bf16.mxu0 0
  %4845 = vmatpush1.bf16.msra.mxu0 0
  %4846 = vmatprep.subr.bf16.mxu0 0
  %4847 = vmatpush1.bf16.msra.mxu0 0
  %4848 = vmatprep.subr.bf16.mxu0 0
  %4849 = vmatpush1.bf16.msra.mxu0 0
  %4850 = vmatprep.subr.bf16.mxu0 0
  %4851 = vmatpush1.bf16.msra.mxu0 0
  %4852 = vmatprep.subr.bf16.mxu0 0
  %4853 = vmatpush1.bf16.msra.mxu0 0
  %4854 = vmatprep.subr.bf16.mxu0 0
  %4855 = vmatpush1.bf16.msra.mxu0 0
  %4856 = vmatprep.subr.bf16.mxu0 0
  %4857 = vmatpush1.bf16.msra.mxu0 0
  %4858 = vmatprep.subr.bf16.mxu0 0
  %4859 = vmatpush1.bf16.msra.mxu0 0
  %4860 = vmatprep.subr.bf16.mxu0 0
  %4861 = vmatpush1.bf16.msra.mxu0 0
  %4862 = vmatprep.subr.bf16.mxu0 0
  %4863 = vmatpush1.bf16.msra.mxu0 0
  %4864 = vmatprep.mubr.bf16.mxu0 0
  %4865 = vmatmul.mubr.bf16.gmra.mrb[0].mxu0 %v4774
  %v4866 = vpop.f32.mrb[0].mxu0
  %v4867 = vadd.f32 0.0, %v4866
  %v4868 = vpop.f32.mrb[0].mxu0
  %v4869 = vadd.f32 0.0, %v4868
  %v4870 = vpop.f32.mrb[0].mxu0
  %v4871 = vadd.f32 0.0, %v4870
  %v4872 = vpop.f32.mrb[0].mxu0
  %v4873 = vadd.f32 0.0, %v4872
  %4874 = vmatprep.mubr.bf16.mxu0 0
  %4875 = vmatmul.mubr.bf16.gmra.mrb[0].mxu0 %v4777
  %v4876 = vpop.f32.mrb[0].mxu0
  %v4877 = vadd.f32 0.0, %v4876
  %v4878 = vpop.f32.mrb[0].mxu0
  %v4879 = vadd.f32 0.0, %v4878
  %v4880 = vpop.f32.mrb[0].mxu0
  %v4881 = vadd.f32 0.0, %v4880
  %v4882 = vpop.f32.mrb[0].mxu0
  %v4883 = vadd.f32 0.0, %v4882
  %4884 = vdwg.mxu0
  %4885 = vmatprep.subr.bf16.mxu0 %v4766
  %4886 = vmatpush1.bf16.msra.mxu0 %v4765
  %4887 = vmatprep.subr.bf16.mxu0 0
  %4888 = vmatpush1.bf16.msra.mxu0 0
  %4889 = vmatprep.subr.bf16.mxu0 0
  %4890 = vmatpush1.bf16.msra.mxu0 0
  %4891 = vmatprep.subr.bf16.mxu0 0
  %4892 = vmatpush1.bf16.msra.mxu0 0
  %4893 = vmatprep.subr.bf16.mxu0 0
  %4894 = vmatpush1.bf16.msra.mxu0 0
  %4895 = vmatprep.subr.bf16.mxu0 0
  %4896 = vmatpush1.bf16.msra.mxu0 0
  %4897 = vmatprep.subr.bf16.mxu0 0
  %4898 = vmatpush1.bf16.msra.mxu0 0
  %4899 = vmatprep.subr.bf16.mxu0 0
  %4900 = vmatpush1.bf16.msra.mxu0 0
  %4901 = vmatprep.subr.bf16.mxu0 0
  %4902 = vmatpush1.bf16.msra.mxu0 0
  %4903 = vmatprep.subr.bf16.mxu0 0
  %4904 = vmatpush1.bf16.msra.mxu0 0
  %4905 = vmatprep.subr.bf16.mxu0 0
  %4906 = vmatpush1.bf16.msra.mxu0 0
  %4907 = vmatprep.subr.bf16.mxu0 0
  %4908 = vmatpush1.bf16.msra.mxu0 0
  %4909 = vmatprep.subr.bf16.mxu0 0
  %4910 = vmatpush1.bf16.msra.mxu0 0
  %4911 = vmatprep.subr.bf16.mxu0 0
  %4912 = vmatpush1.bf16.msra.mxu0 0
  %4913 = vmatprep.subr.bf16.mxu0 0
  %4914 = vmatpush1.bf16.msra.mxu0 0
  %4915 = vmatprep.subr.bf16.mxu0 0
  %4916 = vmatpush1.bf16.msra.mxu0 0
  %4917 = vmatprep.mubr.bf16.mxu0 0
  %4918 = vmatmul.mubr.bf16.gmra.mrb[0].mxu0 %v4774
  %v4919 = vpop.f32.mrb[0].mxu0
  %v4920 = vadd.f32 0.0, %v4919
  %v4921 = vpop.f32.mrb[0].mxu0
  %v4922 = vadd.f32 0.0, %v4921
  %v4923 = vpop.f32.mrb[0].mxu0
  %v4924 = vadd.f32 0.0, %v4923
  %v4925 = vpop.f32.mrb[0].mxu0
  %v4926 = vadd.f32 0.0, %v4925
  %4927 = vmatprep.mubr.bf16.mxu0 0
  %4928 = vmatmul.mubr.bf16.gmra.mrb[0].mxu0 %v4777
  %v4929 = vpop.f32.mrb[0].mxu0
  %v4930 = vadd.f32 0.0, %v4929
  %v4931 = vpop.f32.mrb[0].mxu0
  %v4932 = vadd.f32 0.0, %v4931
  %v4933 = vpop.f32.mrb[0].mxu0
  %v4934 = vadd.f32 0.0, %v4933
  %v4935 = vpop.f32.mrb[0].mxu0
  %v4936 = vadd.f32 0.0, %v4935
  %4937 = vdwg.mxu0
  %v4938 = vadd.f32 %v4707, %v4814
  %v4939 = vadd.f32 %v4708, %v4816
  %v4940 = vadd.f32 %v4709, %v4867
  %v4941 = vadd.f32 %v4710, %v4869
  %v4942 = vadd.f32 %v4711, %v4920
  %v4943 = vadd.f32 %v4712, %v4922
  %v4944 = vadd.f32 %v4713, %v4818
  %v4945 = vadd.f32 %v4714, %v4820
  %v4946 = vadd.f32 %v4715, %v4871
  %v4947 = vadd.f32 %v4716, %v4873
  %v4948 = vadd.f32 %v4717, %v4924
  %v4949 = vadd.f32 %v4718, %v4926
  %v4950 = vadd.f32 %v4719, %v4824
  %v4951 = vadd.f32 %v4720, %v4826
  %v4952 = vadd.f32 %v4721, %v4877
  %v4953 = vadd.f32 %v4722, %v4879
  %v4954 = vadd.f32 %v4723, %v4930
  %v4955 = vadd.f32 %v4724, %v4932
  %v4956 = vadd.f32 %v4725, %v4828
  %v4957 = vadd.f32 %v4726, %v4830
  %v4958 = vadd.f32 %v4727, %v4881
  %v4959 = vadd.f32 %v4728, %v4883
  %v4960 = vadd.f32 %v4729, %v4934
  %v4961 = vadd.f32 %v4730, %v4936
  %s4962 = scalar_lea.vmem %s4, 240
  %v4963 = vld [vmem:[%s4962] sm:$0xf]
  %v4964 = vld [vmem:[%s4962 + $0x4] sm:$0xf]
  %v4965 = vld [vmem:[%s4962 + $0x8] sm:$0xf]
  %v4966 = vld [vmem:[%s4962 + $0xc] sm:$0xf]
  %v4971 = vunpack.c.l.b16 %v4963
  %v4972 = vunpack.c.l.b16 %v4964
  %v4973 = vunpack.c.l.b16 %v4965
  %v4974 = vunpack.c.l.b16 %v4966
  %v4975 = vpack.c.b16 %v4972, %v4971
  %v4976 = vpack.c.b16 %v4974, %v4973
  %4977 = vrot.lane.b32.xlu0 %v1567, 74
  %v4978 = vpop.permute.xlu0 %4977
  %4979 = vrot.lane.b32.xlu0 %v1568, 74
  %v4980 = vpop.permute.xlu0 %4979
  %4981 = vrot.lane.b32.xlu0 %v1569, 74
  %v4982 = vpop.permute.xlu0 %4981
  %4983 = vrot.lane.b32.xlu0 %v1570, 74
  %v4984 = vpop.permute.xlu0 %4983
  %4985 = vrot.lane.b32.xlu0 %v1571, 74
  %v4986 = vpop.permute.xlu0 %4985
  %4987 = vrot.lane.b32.xlu0 %v1572, 74
  %v4988 = vpop.permute.xlu0 %4987
  %4989 = vrot.lane.b32.xlu0 %v1573, 74
  %v4990 = vpop.permute.xlu0 %4989
  %vm4991 = vcmask 605184
  %v4992 = vsel %vm4991, %v4978, %v4980
  %v4993 = vsel %vm4991, %v4980, %v4982
  %v4994 = vsel %vm4991, %v4982, %v4984
  %v4995 = vsel %vm4991, %v4984, %v4986
  %v4996 = vsel %vm4991, %v4986, %v4988
  %v4997 = vsel %vm4991, %v4988, %v4990
  %v5005 = vsel %vm1618, %v4975, 0
  %v5008 = vsel %vm1618, %v4976, 0
  %5010 = vmatprep.subr.bf16.mxu0 %v4993
  %5011 = vmatpush1.bf16.msra.mxu0 %v4992
  %5012 = vmatprep.subr.bf16.mxu0 0
  %5013 = vmatpush1.bf16.msra.mxu0 0
  %5014 = vmatprep.subr.bf16.mxu0 0
  %5015 = vmatpush1.bf16.msra.mxu0 0
  %5016 = vmatprep.subr.bf16.mxu0 0
  %5017 = vmatpush1.bf16.msra.mxu0 0
  %5018 = vmatprep.subr.bf16.mxu0 0
  %5019 = vmatpush1.bf16.msra.mxu0 0
  %5020 = vmatprep.subr.bf16.mxu0 0
  %5021 = vmatpush1.bf16.msra.mxu0 0
  %5022 = vmatprep.subr.bf16.mxu0 0
  %5023 = vmatpush1.bf16.msra.mxu0 0
  %5024 = vmatprep.subr.bf16.mxu0 0
  %5025 = vmatpush1.bf16.msra.mxu0 0
  %5026 = vmatprep.subr.bf16.mxu0 0
  %5027 = vmatpush1.bf16.msra.mxu0 0
  %5028 = vmatprep.subr.bf16.mxu0 0
  %5029 = vmatpush1.bf16.msra.mxu0 0
  %5030 = vmatprep.subr.bf16.mxu0 0
  %5031 = vmatpush1.bf16.msra.mxu0 0
  %5032 = vmatprep.subr.bf16.mxu0 0
  %5033 = vmatpush1.bf16.msra.mxu0 0
  %5034 = vmatprep.subr.bf16.mxu0 0
  %5035 = vmatpush1.bf16.msra.mxu0 0
  %5036 = vmatprep.subr.bf16.mxu0 0
  %5037 = vmatpush1.bf16.msra.mxu0 0
  %5038 = vmatprep.subr.bf16.mxu0 0
  %5039 = vmatpush1.bf16.msra.mxu0 0
  %5040 = vmatprep.subr.bf16.mxu0 0
  %5041 = vmatpush1.bf16.msra.mxu0 0
  %5042 = vmatprep.mubr.bf16.mxu0 0
  %5043 = vmatmul.mubr.bf16.gmra.mrb[0].mxu0 %v5005
  %v5044 = vpop.f32.mrb[0].mxu0
  %v5045 = vadd.f32 0.0, %v5044
  %v5046 = vpop.f32.mrb[0].mxu0
  %v5047 = vadd.f32 0.0, %v5046
  %v5048 = vpop.f32.mrb[0].mxu0
  %v5049 = vadd.f32 0.0, %v5048
  %v5050 = vpop.f32.mrb[0].mxu0
  %v5051 = vadd.f32 0.0, %v5050
  %5052 = vmatprep.mubr.bf16.mxu0 0
  %5053 = vmatmul.mubr.bf16.gmra.mrb[0].mxu0 %v5008
  %v5054 = vpop.f32.mrb[0].mxu0
  %v5055 = vadd.f32 0.0, %v5054
  %v5056 = vpop.f32.mrb[0].mxu0
  %v5057 = vadd.f32 0.0, %v5056
  %v5058 = vpop.f32.mrb[0].mxu0
  %v5059 = vadd.f32 0.0, %v5058
  %v5060 = vpop.f32.mrb[0].mxu0
  %v5061 = vadd.f32 0.0, %v5060
  %5062 = vdwg.mxu0
  %5063 = vmatprep.subr.bf16.mxu0 %v4995
  %5064 = vmatpush1.bf16.msra.mxu0 %v4994
  %5065 = vmatprep.subr.bf16.mxu0 0
  %5066 = vmatpush1.bf16.msra.mxu0 0
  %5067 = vmatprep.subr.bf16.mxu0 0
  %5068 = vmatpush1.bf16.msra.mxu0 0
  %5069 = vmatprep.subr.bf16.mxu0 0
  %5070 = vmatpush1.bf16.msra.mxu0 0
  %5071 = vmatprep.subr.bf16.mxu0 0
  %5072 = vmatpush1.bf16.msra.mxu0 0
  %5073 = vmatprep.subr.bf16.mxu0 0
  %5074 = vmatpush1.bf16.msra.mxu0 0
  %5075 = vmatprep.subr.bf16.mxu0 0
  %5076 = vmatpush1.bf16.msra.mxu0 0
  %5077 = vmatprep.subr.bf16.mxu0 0
  %5078 = vmatpush1.bf16.msra.mxu0 0
  %5079 = vmatprep.subr.bf16.mxu0 0
  %5080 = vmatpush1.bf16.msra.mxu0 0
  %5081 = vmatprep.subr.bf16.mxu0 0
  %5082 = vmatpush1.bf16.msra.mxu0 0
  %5083 = vmatprep.subr.bf16.mxu0 0
  %5084 = vmatpush1.bf16.msra.mxu0 0
  %5085 = vmatprep.subr.bf16.mxu0 0
  %5086 = vmatpush1.bf16.msra.mxu0 0
  %5087 = vmatprep.subr.bf16.mxu0 0
  %5088 = vmatpush1.bf16.msra.mxu0 0
  %5089 = vmatprep.subr.bf16.mxu0 0
  %5090 = vmatpush1.bf16.msra.mxu0 0
  %5091 = vmatprep.subr.bf16.mxu0 0
  %5092 = vmatpush1.bf16.msra.mxu0 0
  %5093 = vmatprep.subr.bf16.mxu0 0
  %5094 = vmatpush1.bf16.msra.mxu0 0
  %5095 = vmatprep.mubr.bf16.mxu0 0
  %5096 = vmatmul.mubr.bf16.gmra.mrb[0].mxu0 %v5005
  %v5097 = vpop.f32.mrb[0].mxu0
  %v5098 = vadd.f32 0.0, %v5097
  %v5099 = vpop.f32.mrb[0].mxu0
  %v5100 = vadd.f32 0.0, %v5099
  %v5101 = vpop.f32.mrb[0].mxu0
  %v5102 = vadd.f32 0.0, %v5101
  %v5103 = vpop.f32.mrb[0].mxu0
  %v5104 = vadd.f32 0.0, %v5103
  %5105 = vmatprep.mubr.bf16.mxu0 0
  %5106 = vmatmul.mubr.bf16.gmra.mrb[0].mxu0 %v5008
  %v5107 = vpop.f32.mrb[0].mxu0
  %v5108 = vadd.f32 0.0, %v5107
  %v5109 = vpop.f32.mrb[0].mxu0
  %v5110 = vadd.f32 0.0, %v5109
  %v5111 = vpop.f32.mrb[0].mxu0
  %v5112 = vadd.f32 0.0, %v5111
  %v5113 = vpop.f32.mrb[0].mxu0
  %v5114 = vadd.f32 0.0, %v5113
  %5115 = vdwg.mxu0
  %5116 = vmatprep.subr.bf16.mxu0 %v4997
  %5117 = vmatpush1.bf16.msra.mxu0 %v4996
  %5118 = vmatprep.subr.bf16.mxu0 0
  %5119 = vmatpush1.bf16.msra.mxu0 0
  %5120 = vmatprep.subr.bf16.mxu0 0
  %5121 = vmatpush1.bf16.msra.mxu0 0
  %5122 = vmatprep.subr.bf16.mxu0 0
  %5123 = vmatpush1.bf16.msra.mxu0 0
  %5124 = vmatprep.subr.bf16.mxu0 0
  %5125 = vmatpush1.bf16.msra.mxu0 0
  %5126 = vmatprep.subr.bf16.mxu0 0
  %5127 = vmatpush1.bf16.msra.mxu0 0
  %5128 = vmatprep.subr.bf16.mxu0 0
  %5129 = vmatpush1.bf16.msra.mxu0 0
  %5130 = vmatprep.subr.bf16.mxu0 0
  %5131 = vmatpush1.bf16.msra.mxu0 0
  %5132 = vmatprep.subr.bf16.mxu0 0
  %5133 = vmatpush1.bf16.msra.mxu0 0
  %5134 = vmatprep.subr.bf16.mxu0 0
  %5135 = vmatpush1.bf16.msra.mxu0 0
  %5136 = vmatprep.subr.bf16.mxu0 0
  %5137 = vmatpush1.bf16.msra.mxu0 0
  %5138 = vmatprep.subr.bf16.mxu0 0
  %5139 = vmatpush1.bf16.msra.mxu0 0
  %5140 = vmatprep.subr.bf16.mxu0 0
  %5141 = vmatpush1.bf16.msra.mxu0 0
  %5142 = vmatprep.subr.bf16.mxu0 0
  %5143 = vmatpush1.bf16.msra.mxu0 0
  %5144 = vmatprep.subr.bf16.mxu0 0
  %5145 = vmatpush1.bf16.msra.mxu0 0
  %5146 = vmatprep.subr.bf16.mxu0 0
  %5147 = vmatpush1.bf16.msra.mxu0 0
  %5148 = vmatprep.mubr.bf16.mxu0 0
  %5149 = vmatmul.mubr.bf16.gmra.mrb[0].mxu0 %v5005
  %v5150 = vpop.f32.mrb[0].mxu0
  %v5151 = vadd.f32 0.0, %v5150
  %v5152 = vpop.f32.mrb[0].mxu0
  %v5153 = vadd.f32 0.0, %v5152
  %v5154 = vpop.f32.mrb[0].mxu0
  %v5155 = vadd.f32 0.0, %v5154
  %v5156 = vpop.f32.mrb[0].mxu0
  %v5157 = vadd.f32 0.0, %v5156
  %5158 = vmatprep.mubr.bf16.mxu0 0
  %5159 = vmatmul.mubr.bf16.gmra.mrb[0].mxu0 %v5008
  %v5160 = vpop.f32.mrb[0].mxu0
  %v5161 = vadd.f32 0.0, %v5160
  %v5162 = vpop.f32.mrb[0].mxu0
  %v5163 = vadd.f32 0.0, %v5162
  %v5164 = vpop.f32.mrb[0].mxu0
  %v5165 = vadd.f32 0.0, %v5164
  %v5166 = vpop.f32.mrb[0].mxu0
  %v5167 = vadd.f32 0.0, %v5166
  %5168 = vdwg.mxu0
  %v5169 = vadd.f32 %v4938, %v5045
  %v5170 = vadd.f32 %v4939, %v5047
  %v5171 = vadd.f32 %v4940, %v5098
  %v5172 = vadd.f32 %v4941, %v5100
  %v5173 = vadd.f32 %v4942, %v5151
  %v5174 = vadd.f32 %v4943, %v5153
  %v5175 = vadd.f32 %v4944, %v5049
  %v5176 = vadd.f32 %v4945, %v5051
  %v5177 = vadd.f32 %v4946, %v5102
  %v5178 = vadd.f32 %v4947, %v5104
  %v5179 = vadd.f32 %v4948, %v5155
  %v5180 = vadd.f32 %v4949, %v5157
  %v5181 = vadd.f32 %v4950, %v5055
  %v5182 = vadd.f32 %v4951, %v5057
  %v5183 = vadd.f32 %v4952, %v5108
  %v5184 = vadd.f32 %v4953, %v5110
  %v5185 = vadd.f32 %v4954, %v5161
  %v5186 = vadd.f32 %v4955, %v5163
  %v5187 = vadd.f32 %v4956, %v5059
  %v5188 = vadd.f32 %v4957, %v5061
  %v5189 = vadd.f32 %v4958, %v5112
  %v5190 = vadd.f32 %v4959, %v5114
  %v5191 = vadd.f32 %v4960, %v5165
  %v5192 = vadd.f32 %v4961, %v5167
  %s5193 = scalar_lea.vmem %s4, 256
  %v5194 = vld [vmem:[%s5193] sm:$0xf]
  %v5195 = vld [vmem:[%s5193 + $0x4] sm:$0xf]
  %v5196 = vld [vmem:[%s5193 + $0x8] sm:$0xf]
  %v5197 = vld [vmem:[%s5193 + $0xc] sm:$0xf]
  %v5202 = vunpack.c.l.b16 %v5194
  %v5203 = vunpack.c.l.b16 %v5195
  %v5204 = vunpack.c.l.b16 %v5196
  %v5205 = vunpack.c.l.b16 %v5197
  %v5206 = vpack.c.b16 %v5203, %v5202
  %v5207 = vpack.c.b16 %v5205, %v5204
  %5208 = vrot.lane.b32.xlu0 %v1567, 73
  %v5209 = vpop.permute.xlu0 %5208
  %5210 = vrot.lane.b32.xlu0 %v1568, 73
  %v5211 = vpop.permute.xlu0 %5210
  %5212 = vrot.lane.b32.xlu0 %v1569, 73
  %v5213 = vpop.permute.xlu0 %5212
  %5214 = vrot.lane.b32.xlu0 %v1570, 73
  %v5215 = vpop.permute.xlu0 %5214
  %5216 = vrot.lane.b32.xlu0 %v1571, 73
  %v5217 = vpop.permute.xlu0 %5216
  %5218 = vrot.lane.b32.xlu0 %v1572, 73
  %v5219 = vpop.permute.xlu0 %5218
  %5220 = vrot.lane.b32.xlu0 %v1573, 73
  %v5221 = vpop.permute.xlu0 %5220
  %vm5222 = vcmask 596992
  %v5223 = vsel %vm5222, %v5209, %v5211
  %v5224 = vsel %vm5222, %v5211, %v5213
  %v5225 = vsel %vm5222, %v5213, %v5215
  %v5226 = vsel %vm5222, %v5215, %v5217
  %v5227 = vsel %vm5222, %v5217, %v5219
  %v5228 = vsel %vm5222, %v5219, %v5221
  %v5236 = vsel %vm1618, %v5206, 0
  %v5239 = vsel %vm1618, %v5207, 0
  %5241 = vmatprep.subr.bf16.mxu0 %v5224
  %5242 = vmatpush1.bf16.msra.mxu0 %v5223
  %5243 = vmatprep.subr.bf16.mxu0 0
  %5244 = vmatpush1.bf16.msra.mxu0 0
  %5245 = vmatprep.subr.bf16.mxu0 0
  %5246 = vmatpush1.bf16.msra.mxu0 0
  %5247 = vmatprep.subr.bf16.mxu0 0
  %5248 = vmatpush1.bf16.msra.mxu0 0
  %5249 = vmatprep.subr.bf16.mxu0 0
  %5250 = vmatpush1.bf16.msra.mxu0 0
  %5251 = vmatprep.subr.bf16.mxu0 0
  %5252 = vmatpush1.bf16.msra.mxu0 0
  %5253 = vmatprep.subr.bf16.mxu0 0
  %5254 = vmatpush1.bf16.msra.mxu0 0
  %5255 = vmatprep.subr.bf16.mxu0 0
  %5256 = vmatpush1.bf16.msra.mxu0 0
  %5257 = vmatprep.subr.bf16.mxu0 0
  %5258 = vmatpush1.bf16.msra.mxu0 0
  %5259 = vmatprep.subr.bf16.mxu0 0
  %5260 = vmatpush1.bf16.msra.mxu0 0
  %5261 = vmatprep.subr.bf16.mxu0 0
  %5262 = vmatpush1.bf16.msra.mxu0 0
  %5263 = vmatprep.subr.bf16.mxu0 0
  %5264 = vmatpush1.bf16.msra.mxu0 0
  %5265 = vmatprep.subr.bf16.mxu0 0
  %5266 = vmatpush1.bf16.msra.mxu0 0
  %5267 = vmatprep.subr.bf16.mxu0 0
  %5268 = vmatpush1.bf16.msra.mxu0 0
  %5269 = vmatprep.subr.bf16.mxu0 0
  %5270 = vmatpush1.bf16.msra.mxu0 0
  %5271 = vmatprep.subr.bf16.mxu0 0
  %5272 = vmatpush1.bf16.msra.mxu0 0
  %5273 = vmatprep.mubr.bf16.mxu0 0
  %5274 = vmatmul.mubr.bf16.gmra.mrb[0].mxu0 %v5236
  %v5275 = vpop.f32.mrb[0].mxu0
  %v5276 = vadd.f32 0.0, %v5275
  %v5277 = vpop.f32.mrb[0].mxu0
  %v5278 = vadd.f32 0.0, %v5277
  %v5279 = vpop.f32.mrb[0].mxu0
  %v5280 = vadd.f32 0.0, %v5279
  %v5281 = vpop.f32.mrb[0].mxu0
  %v5282 = vadd.f32 0.0, %v5281
  %5283 = vmatprep.mubr.bf16.mxu0 0
  %5284 = vmatmul.mubr.bf16.gmra.mrb[0].mxu0 %v5239
  %v5285 = vpop.f32.mrb[0].mxu0
  %v5286 = vadd.f32 0.0, %v5285
  %v5287 = vpop.f32.mrb[0].mxu0
  %v5288 = vadd.f32 0.0, %v5287
  %v5289 = vpop.f32.mrb[0].mxu0
  %v5290 = vadd.f32 0.0, %v5289
  %v5291 = vpop.f32.mrb[0].mxu0
  %v5292 = vadd.f32 0.0, %v5291
  %5293 = vdwg.mxu0
  %5294 = vmatprep.subr.bf16.mxu0 %v5226
  %5295 = vmatpush1.bf16.msra.mxu0 %v5225
  %5296 = vmatprep.subr.bf16.mxu0 0
  %5297 = vmatpush1.bf16.msra.mxu0 0
  %5298 = vmatprep.subr.bf16.mxu0 0
  %5299 = vmatpush1.bf16.msra.mxu0 0
  %5300 = vmatprep.subr.bf16.mxu0 0
  %5301 = vmatpush1.bf16.msra.mxu0 0
  %5302 = vmatprep.subr.bf16.mxu0 0
  %5303 = vmatpush1.bf16.msra.mxu0 0
  %5304 = vmatprep.subr.bf16.mxu0 0
  %5305 = vmatpush1.bf16.msra.mxu0 0
  %5306 = vmatprep.subr.bf16.mxu0 0
  %5307 = vmatpush1.bf16.msra.mxu0 0
  %5308 = vmatprep.subr.bf16.mxu0 0
  %5309 = vmatpush1.bf16.msra.mxu0 0
  %5310 = vmatprep.subr.bf16.mxu0 0
  %5311 = vmatpush1.bf16.msra.mxu0 0
  %5312 = vmatprep.subr.bf16.mxu0 0
  %5313 = vmatpush1.bf16.msra.mxu0 0
  %5314 = vmatprep.subr.bf16.mxu0 0
  %5315 = vmatpush1.bf16.msra.mxu0 0
  %5316 = vmatprep.subr.bf16.mxu0 0
  %5317 = vmatpush1.bf16.msra.mxu0 0
  %5318 = vmatprep.subr.bf16.mxu0 0
  %5319 = vmatpush1.bf16.msra.mxu0 0
  %5320 = vmatprep.subr.bf16.mxu0 0
  %5321 = vmatpush1.bf16.msra.mxu0 0
  %5322 = vmatprep.subr.bf16.mxu0 0
  %5323 = vmatpush1.bf16.msra.mxu0 0
  %5324 = vmatprep.subr.bf16.mxu0 0
  %5325 = vmatpush1.bf16.msra.mxu0 0
  %5326 = vmatprep.mubr.bf16.mxu0 0
  %5327 = vmatmul.mubr.bf16.gmra.mrb[0].mxu0 %v5236
  %v5328 = vpop.f32.mrb[0].mxu0
  %v5329 = vadd.f32 0.0, %v5328
  %v5330 = vpop.f32.mrb[0].mxu0
  %v5331 = vadd.f32 0.0, %v5330
  %v5332 = vpop.f32.mrb[0].mxu0
  %v5333 = vadd.f32 0.0, %v5332
  %v5334 = vpop.f32.mrb[0].mxu0
  %v5335 = vadd.f32 0.0, %v5334
  %5336 = vmatprep.mubr.bf16.mxu0 0
  %5337 = vmatmul.mubr.bf16.gmra.mrb[0].mxu0 %v5239
  %v5338 = vpop.f32.mrb[0].mxu0
  %v5339 = vadd.f32 0.0, %v5338
  %v5340 = vpop.f32.mrb[0].mxu0
  %v5341 = vadd.f32 0.0, %v5340
  %v5342 = vpop.f32.mrb[0].mxu0
  %v5343 = vadd.f32 0.0, %v5342
  %v5344 = vpop.f32.mrb[0].mxu0
  %v5345 = vadd.f32 0.0, %v5344
  %5346 = vdwg.mxu0
  %5347 = vmatprep.subr.bf16.mxu0 %v5228
  %5348 = vmatpush1.bf16.msra.mxu0 %v5227
  %5349 = vmatprep.subr.bf16.mxu0 0
  %5350 = vmatpush1.bf16.msra.mxu0 0
  %5351 = vmatprep.subr.bf16.mxu0 0
  %5352 = vmatpush1.bf16.msra.mxu0 0
  %5353 = vmatprep.subr.bf16.mxu0 0
  %5354 = vmatpush1.bf16.msra.mxu0 0
  %5355 = vmatprep.subr.bf16.mxu0 0
  %5356 = vmatpush1.bf16.msra.mxu0 0
  %5357 = vmatprep.subr.bf16.mxu0 0
  %5358 = vmatpush1.bf16.msra.mxu0 0
  %5359 = vmatprep.subr.bf16.mxu0 0
  %5360 = vmatpush1.bf16.msra.mxu0 0
  %5361 = vmatprep.subr.bf16.mxu0 0
  %5362 = vmatpush1.bf16.msra.mxu0 0
  %5363 = vmatprep.subr.bf16.mxu0 0
  %5364 = vmatpush1.bf16.msra.mxu0 0
  %5365 = vmatprep.subr.bf16.mxu0 0
  %5366 = vmatpush1.bf16.msra.mxu0 0
  %5367 = vmatprep.subr.bf16.mxu0 0
  %5368 = vmatpush1.bf16.msra.mxu0 0
  %5369 = vmatprep.subr.bf16.mxu0 0
  %5370 = vmatpush1.bf16.msra.mxu0 0
  %5371 = vmatprep.subr.bf16.mxu0 0
  %5372 = vmatpush1.bf16.msra.mxu0 0
  %5373 = vmatprep.subr.bf16.mxu0 0
  %5374 = vmatpush1.bf16.msra.mxu0 0
  %5375 = vmatprep.subr.bf16.mxu0 0
  %5376 = vmatpush1.bf16.msra.mxu0 0
  %5377 = vmatprep.subr.bf16.mxu0 0
  %5378 = vmatpush1.bf16.msra.mxu0 0
  %5379 = vmatprep.mubr.bf16.mxu0 0
  %5380 = vmatmul.mubr.bf16.gmra.mrb[0].mxu0 %v5236
  %v5381 = vpop.f32.mrb[0].mxu0
  %v5382 = vadd.f32 0.0, %v5381
  %v5383 = vpop.f32.mrb[0].mxu0
  %v5384 = vadd.f32 0.0, %v5383
  %v5385 = vpop.f32.mrb[0].mxu0
  %v5386 = vadd.f32 0.0, %v5385
  %v5387 = vpop.f32.mrb[0].mxu0
  %v5388 = vadd.f32 0.0, %v5387
  %5389 = vmatprep.mubr.bf16.mxu0 0
  %5390 = vmatmul.mubr.bf16.gmra.mrb[0].mxu0 %v5239
  %v5391 = vpop.f32.mrb[0].mxu0
  %v5392 = vadd.f32 0.0, %v5391
  %v5393 = vpop.f32.mrb[0].mxu0
  %v5394 = vadd.f32 0.0, %v5393
  %v5395 = vpop.f32.mrb[0].mxu0
  %v5396 = vadd.f32 0.0, %v5395
  %v5397 = vpop.f32.mrb[0].mxu0
  %v5398 = vadd.f32 0.0, %v5397
  %5399 = vdwg.mxu0
  %v5400 = vadd.f32 %v5169, %v5276
  %v5401 = vadd.f32 %v5170, %v5278
  %v5402 = vadd.f32 %v5171, %v5329
  %v5403 = vadd.f32 %v5172, %v5331
  %v5404 = vadd.f32 %v5173, %v5382
  %v5405 = vadd.f32 %v5174, %v5384
  %v5406 = vadd.f32 %v5175, %v5280
  %v5407 = vadd.f32 %v5176, %v5282
  %v5408 = vadd.f32 %v5177, %v5333
  %v5409 = vadd.f32 %v5178, %v5335
  %v5410 = vadd.f32 %v5179, %v5386
  %v5411 = vadd.f32 %v5180, %v5388
  %v5412 = vadd.f32 %v5181, %v5286
  %v5413 = vadd.f32 %v5182, %v5288
  %v5414 = vadd.f32 %v5183, %v5339
  %v5415 = vadd.f32 %v5184, %v5341
  %v5416 = vadd.f32 %v5185, %v5392
  %v5417 = vadd.f32 %v5186, %v5394
  %v5418 = vadd.f32 %v5187, %v5290
  %v5419 = vadd.f32 %v5188, %v5292
  %v5420 = vadd.f32 %v5189, %v5343
  %v5421 = vadd.f32 %v5190, %v5345
  %v5422 = vadd.f32 %v5191, %v5396
  %v5423 = vadd.f32 %v5192, %v5398
  %s5424 = scalar_lea.vmem %s4, 272
  %v5425 = vld [vmem:[%s5424] sm:$0xf]
  %v5426 = vld [vmem:[%s5424 + $0x4] sm:$0xf]
  %v5427 = vld [vmem:[%s5424 + $0x8] sm:$0xf]
  %v5428 = vld [vmem:[%s5424 + $0xc] sm:$0xf]
  %v5433 = vunpack.c.l.b16 %v5425
  %v5434 = vunpack.c.l.b16 %v5426
  %v5435 = vunpack.c.l.b16 %v5427
  %v5436 = vunpack.c.l.b16 %v5428
  %v5437 = vpack.c.b16 %v5434, %v5433
  %v5438 = vpack.c.b16 %v5436, %v5435
  %5439 = vrot.lane.b32.xlu0 %v1567, 72
  %v5440 = vpop.permute.xlu0 %5439
  %5441 = vrot.lane.b32.xlu0 %v1568, 72
  %v5442 = vpop.permute.xlu0 %5441
  %5443 = vrot.lane.b32.xlu0 %v1569, 72
  %v5444 = vpop.permute.xlu0 %5443
  %5445 = vrot.lane.b32.xlu0 %v1570, 72
  %v5446 = vpop.permute.xlu0 %5445
  %5447 = vrot.lane.b32.xlu0 %v1571, 72
  %v5448 = vpop.permute.xlu0 %5447
  %5449 = vrot.lane.b32.xlu0 %v1572, 72
  %v5450 = vpop.permute.xlu0 %5449
  %5451 = vrot.lane.b32.xlu0 %v1573, 72
  %v5452 = vpop.permute.xlu0 %5451
  %vm5453 = vcmask 588800
  %v5454 = vsel %vm5453, %v5440, %v5442
  %v5455 = vsel %vm5453, %v5442, %v5444
  %v5456 = vsel %vm5453, %v5444, %v5446
  %v5457 = vsel %vm5453, %v5446, %v5448
  %v5458 = vsel %vm5453, %v5448, %v5450
  %v5459 = vsel %vm5453, %v5450, %v5452
  %v5467 = vsel %vm1618, %v5437, 0
  %v5470 = vsel %vm1618, %v5438, 0
  %5472 = vmatprep.subr.bf16.mxu0 %v5455
  %5473 = vmatpush1.bf16.msra.mxu0 %v5454
  %5474 = vmatprep.subr.bf16.mxu0 0
  %5475 = vmatpush1.bf16.msra.mxu0 0
  %5476 = vmatprep.subr.bf16.mxu0 0
  %5477 = vmatpush1.bf16.msra.mxu0 0
  %5478 = vmatprep.subr.bf16.mxu0 0
  %5479 = vmatpush1.bf16.msra.mxu0 0
  %5480 = vmatprep.subr.bf16.mxu0 0
  %5481 = vmatpush1.bf16.msra.mxu0 0
  %5482 = vmatprep.subr.bf16.mxu0 0
  %5483 = vmatpush1.bf16.msra.mxu0 0
  %5484 = vmatprep.subr.bf16.mxu0 0
  %5485 = vmatpush1.bf16.msra.mxu0 0
  %5486 = vmatprep.subr.bf16.mxu0 0
  %5487 = vmatpush1.bf16.msra.mxu0 0
  %5488 = vmatprep.subr.bf16.mxu0 0
  %5489 = vmatpush1.bf16.msra.mxu0 0
  %5490 = vmatprep.subr.bf16.mxu0 0
  %5491 = vmatpush1.bf16.msra.mxu0 0
  %5492 = vmatprep.subr.bf16.mxu0 0
  %5493 = vmatpush1.bf16.msra.mxu0 0
  %5494 = vmatprep.subr.bf16.mxu0 0
  %5495 = vmatpush1.bf16.msra.mxu0 0
  %5496 = vmatprep.subr.bf16.mxu0 0
  %5497 = vmatpush1.bf16.msra.mxu0 0
  %5498 = vmatprep.subr.bf16.mxu0 0
  %5499 = vmatpush1.bf16.msra.mxu0 0
  %5500 = vmatprep.subr.bf16.mxu0 0
  %5501 = vmatpush1.bf16.msra.mxu0 0
  %5502 = vmatprep.subr.bf16.mxu0 0
  %5503 = vmatpush1.bf16.msra.mxu0 0
  %5504 = vmatprep.mubr.bf16.mxu0 0
  %5505 = vmatmul.mubr.bf16.gmra.mrb[0].mxu0 %v5467
  %v5506 = vpop.f32.mrb[0].mxu0
  %v5507 = vadd.f32 0.0, %v5506
  %v5508 = vpop.f32.mrb[0].mxu0
  %v5509 = vadd.f32 0.0, %v5508
  %v5510 = vpop.f32.mrb[0].mxu0
  %v5511 = vadd.f32 0.0, %v5510
  %v5512 = vpop.f32.mrb[0].mxu0
  %v5513 = vadd.f32 0.0, %v5512
  %5514 = vmatprep.mubr.bf16.mxu0 0
  %5515 = vmatmul.mubr.bf16.gmra.mrb[0].mxu0 %v5470
  %v5516 = vpop.f32.mrb[0].mxu0
  %v5517 = vadd.f32 0.0, %v5516
  %v5518 = vpop.f32.mrb[0].mxu0
  %v5519 = vadd.f32 0.0, %v5518
  %v5520 = vpop.f32.mrb[0].mxu0
  %v5521 = vadd.f32 0.0, %v5520
  %v5522 = vpop.f32.mrb[0].mxu0
  %v5523 = vadd.f32 0.0, %v5522
  %5524 = vdwg.mxu0
  %5525 = vmatprep.subr.bf16.mxu0 %v5457
  %5526 = vmatpush1.bf16.msra.mxu0 %v5456
  %5527 = vmatprep.subr.bf16.mxu0 0
  %5528 = vmatpush1.bf16.msra.mxu0 0
  %5529 = vmatprep.subr.bf16.mxu0 0
  %5530 = vmatpush1.bf16.msra.mxu0 0
  %5531 = vmatprep.subr.bf16.mxu0 0
  %5532 = vmatpush1.bf16.msra.mxu0 0
  %5533 = vmatprep.subr.bf16.mxu0 0
  %5534 = vmatpush1.bf16.msra.mxu0 0
  %5535 = vmatprep.subr.bf16.mxu0 0
  %5536 = vmatpush1.bf16.msra.mxu0 0
  %5537 = vmatprep.subr.bf16.mxu0 0
  %5538 = vmatpush1.bf16.msra.mxu0 0
  %5539 = vmatprep.subr.bf16.mxu0 0
  %5540 = vmatpush1.bf16.msra.mxu0 0
  %5541 = vmatprep.subr.bf16.mxu0 0
  %5542 = vmatpush1.bf16.msra.mxu0 0
  %5543 = vmatprep.subr.bf16.mxu0 0
  %5544 = vmatpush1.bf16.msra.mxu0 0
  %5545 = vmatprep.subr.bf16.mxu0 0
  %5546 = vmatpush1.bf16.msra.mxu0 0
  %5547 = vmatprep.subr.bf16.mxu0 0
  %5548 = vmatpush1.bf16.msra.mxu0 0
  %5549 = vmatprep.subr.bf16.mxu0 0
  %5550 = vmatpush1.bf16.msra.mxu0 0
  %5551 = vmatprep.subr.bf16.mxu0 0
  %5552 = vmatpush1.bf16.msra.mxu0 0
  %5553 = vmatprep.subr.bf16.mxu0 0
  %5554 = vmatpush1.bf16.msra.mxu0 0
  %5555 = vmatprep.subr.bf16.mxu0 0
  %5556 = vmatpush1.bf16.msra.mxu0 0
  %5557 = vmatprep.mubr.bf16.mxu0 0
  %5558 = vmatmul.mubr.bf16.gmra.mrb[0].mxu0 %v5467
  %v5559 = vpop.f32.mrb[0].mxu0
  %v5560 = vadd.f32 0.0, %v5559
  %v5561 = vpop.f32.mrb[0].mxu0
  %v5562 = vadd.f32 0.0, %v5561
  %v5563 = vpop.f32.mrb[0].mxu0
  %v5564 = vadd.f32 0.0, %v5563
  %v5565 = vpop.f32.mrb[0].mxu0
  %v5566 = vadd.f32 0.0, %v5565
  %5567 = vmatprep.mubr.bf16.mxu0 0
  %5568 = vmatmul.mubr.bf16.gmra.mrb[0].mxu0 %v5470
  %v5569 = vpop.f32.mrb[0].mxu0
  %v5570 = vadd.f32 0.0, %v5569
  %v5571 = vpop.f32.mrb[0].mxu0
  %v5572 = vadd.f32 0.0, %v5571
  %v5573 = vpop.f32.mrb[0].mxu0
  %v5574 = vadd.f32 0.0, %v5573
  %v5575 = vpop.f32.mrb[0].mxu0
  %v5576 = vadd.f32 0.0, %v5575
  %5577 = vdwg.mxu0
  %5578 = vmatprep.subr.bf16.mxu0 %v5459
  %5579 = vmatpush1.bf16.msra.mxu0 %v5458
  %5580 = vmatprep.subr.bf16.mxu0 0
  %5581 = vmatpush1.bf16.msra.mxu0 0
  %5582 = vmatprep.subr.bf16.mxu0 0
  %5583 = vmatpush1.bf16.msra.mxu0 0
  %5584 = vmatprep.subr.bf16.mxu0 0
  %5585 = vmatpush1.bf16.msra.mxu0 0
  %5586 = vmatprep.subr.bf16.mxu0 0
  %5587 = vmatpush1.bf16.msra.mxu0 0
  %5588 = vmatprep.subr.bf16.mxu0 0
  %5589 = vmatpush1.bf16.msra.mxu0 0
  %5590 = vmatprep.subr.bf16.mxu0 0
  %5591 = vmatpush1.bf16.msra.mxu0 0
  %5592 = vmatprep.subr.bf16.mxu0 0
  %5593 = vmatpush1.bf16.msra.mxu0 0
  %5594 = vmatprep.subr.bf16.mxu0 0
  %5595 = vmatpush1.bf16.msra.mxu0 0
  %5596 = vmatprep.subr.bf16.mxu0 0
  %5597 = vmatpush1.bf16.msra.mxu0 0
  %5598 = vmatprep.subr.bf16.mxu0 0
  %5599 = vmatpush1.bf16.msra.mxu0 0
  %5600 = vmatprep.subr.bf16.mxu0 0
  %5601 = vmatpush1.bf16.msra.mxu0 0
  %5602 = vmatprep.subr.bf16.mxu0 0
  %5603 = vmatpush1.bf16.msra.mxu0 0
  %5604 = vmatprep.subr.bf16.mxu0 0
  %5605 = vmatpush1.bf16.msra.mxu0 0
  %5606 = vmatprep.subr.bf16.mxu0 0
  %5607 = vmatpush1.bf16.msra.mxu0 0
  %5608 = vmatprep.subr.bf16.mxu0 0
  %5609 = vmatpush1.bf16.msra.mxu0 0
  %5610 = vmatprep.mubr.bf16.mxu0 0
  %5611 = vmatmul.mubr.bf16.gmra.mrb[0].mxu0 %v5467
  %v5612 = vpop.f32.mrb[0].mxu0
  %v5613 = vadd.f32 0.0, %v5612
  %v5614 = vpop.f32.mrb[0].mxu0
  %v5615 = vadd.f32 0.0, %v5614
  %v5616 = vpop.f32.mrb[0].mxu0
  %v5617 = vadd.f32 0.0, %v5616
  %v5618 = vpop.f32.mrb[0].mxu0
  %v5619 = vadd.f32 0.0, %v5618
  %5620 = vmatprep.mubr.bf16.mxu0 0
  %5621 = vmatmul.mubr.bf16.gmra.mrb[0].mxu0 %v5470
  %v5622 = vpop.f32.mrb[0].mxu0
  %v5623 = vadd.f32 0.0, %v5622
  %v5624 = vpop.f32.mrb[0].mxu0
  %v5625 = vadd.f32 0.0, %v5624
  %v5626 = vpop.f32.mrb[0].mxu0
  %v5627 = vadd.f32 0.0, %v5626
  %v5628 = vpop.f32.mrb[0].mxu0
  %v5629 = vadd.f32 0.0, %v5628
  %5630 = vdwg.mxu0
  %v5631 = vadd.f32 %v5400, %v5507
  %v5632 = vadd.f32 %v5401, %v5509
  %v5633 = vadd.f32 %v5402, %v5560
  %v5634 = vadd.f32 %v5403, %v5562
  %v5635 = vadd.f32 %v5404, %v5613
  %v5636 = vadd.f32 %v5405, %v5615
  %v5637 = vadd.f32 %v5406, %v5511
  %v5638 = vadd.f32 %v5407, %v5513
  %v5639 = vadd.f32 %v5408, %v5564
  %v5640 = vadd.f32 %v5409, %v5566
  %v5641 = vadd.f32 %v5410, %v5617
  %v5642 = vadd.f32 %v5411, %v5619
  %v5643 = vadd.f32 %v5412, %v5517
  %v5644 = vadd.f32 %v5413, %v5519
  %v5645 = vadd.f32 %v5414, %v5570
  %v5646 = vadd.f32 %v5415, %v5572
  %v5647 = vadd.f32 %v5416, %v5623
  %v5648 = vadd.f32 %v5417, %v5625
  %v5649 = vadd.f32 %v5418, %v5521
  %v5650 = vadd.f32 %v5419, %v5523
  %v5651 = vadd.f32 %v5420, %v5574
  %v5652 = vadd.f32 %v5421, %v5576
  %v5653 = vadd.f32 %v5422, %v5627
  %v5654 = vadd.f32 %v5423, %v5629
  %s5655 = scalar_lea.vmem %s4, 288
  %v5656 = vld [vmem:[%s5655] sm:$0xf]
  %v5657 = vld [vmem:[%s5655 + $0x4] sm:$0xf]
  %v5658 = vld [vmem:[%s5655 + $0x8] sm:$0xf]
  %v5659 = vld [vmem:[%s5655 + $0xc] sm:$0xf]
  %v5664 = vunpack.c.l.b16 %v5656
  %v5665 = vunpack.c.l.b16 %v5657
  %v5666 = vunpack.c.l.b16 %v5658
  %v5667 = vunpack.c.l.b16 %v5659
  %v5668 = vpack.c.b16 %v5665, %v5664
  %v5669 = vpack.c.b16 %v5667, %v5666
  %5670 = vrot.lane.b32.xlu0 %v1567, 71
  %v5671 = vpop.permute.xlu0 %5670
  %5672 = vrot.lane.b32.xlu0 %v1568, 71
  %v5673 = vpop.permute.xlu0 %5672
  %5674 = vrot.lane.b32.xlu0 %v1569, 71
  %v5675 = vpop.permute.xlu0 %5674
  %5676 = vrot.lane.b32.xlu0 %v1570, 71
  %v5677 = vpop.permute.xlu0 %5676
  %5678 = vrot.lane.b32.xlu0 %v1571, 71
  %v5679 = vpop.permute.xlu0 %5678
  %5680 = vrot.lane.b32.xlu0 %v1572, 71
  %v5681 = vpop.permute.xlu0 %5680
  %5682 = vrot.lane.b32.xlu0 %v1573, 71
  %v5683 = vpop.permute.xlu0 %5682
  %vm5684 = vcmask 580608
  %v5685 = vsel %vm5684, %v5671, %v5673
  %v5686 = vsel %vm5684, %v5673, %v5675
  %v5687 = vsel %vm5684, %v5675, %v5677
  %v5688 = vsel %vm5684, %v5677, %v5679
  %v5689 = vsel %vm5684, %v5679, %v5681
  %v5690 = vsel %vm5684, %v5681, %v5683
  %v5698 = vsel %vm1618, %v5668, 0
  %v5701 = vsel %vm1618, %v5669, 0
  %5703 = vmatprep.subr.bf16.mxu0 %v5686
  %5704 = vmatpush1.bf16.msra.mxu0 %v5685
  %5705 = vmatprep.subr.bf16.mxu0 0
  %5706 = vmatpush1.bf16.msra.mxu0 0
  %5707 = vmatprep.subr.bf16.mxu0 0
  %5708 = vmatpush1.bf16.msra.mxu0 0
  %5709 = vmatprep.subr.bf16.mxu0 0
  %5710 = vmatpush1.bf16.msra.mxu0 0
  %5711 = vmatprep.subr.bf16.mxu0 0
  %5712 = vmatpush1.bf16.msra.mxu0 0
  %5713 = vmatprep.subr.bf16.mxu0 0
  %5714 = vmatpush1.bf16.msra.mxu0 0
  %5715 = vmatprep.subr.bf16.mxu0 0
  %5716 = vmatpush1.bf16.msra.mxu0 0
  %5717 = vmatprep.subr.bf16.mxu0 0
  %5718 = vmatpush1.bf16.msra.mxu0 0
  %5719 = vmatprep.subr.bf16.mxu0 0
  %5720 = vmatpush1.bf16.msra.mxu0 0
  %5721 = vmatprep.subr.bf16.mxu0 0
  %5722 = vmatpush1.bf16.msra.mxu0 0
  %5723 = vmatprep.subr.bf16.mxu0 0
  %5724 = vmatpush1.bf16.msra.mxu0 0
  %5725 = vmatprep.subr.bf16.mxu0 0
  %5726 = vmatpush1.bf16.msra.mxu0 0
  %5727 = vmatprep.subr.bf16.mxu0 0
  %5728 = vmatpush1.bf16.msra.mxu0 0
  %5729 = vmatprep.subr.bf16.mxu0 0
  %5730 = vmatpush1.bf16.msra.mxu0 0
  %5731 = vmatprep.subr.bf16.mxu0 0
  %5732 = vmatpush1.bf16.msra.mxu0 0
  %5733 = vmatprep.subr.bf16.mxu0 0
  %5734 = vmatpush1.bf16.msra.mxu0 0
  %5735 = vmatprep.mubr.bf16.mxu0 0
  %5736 = vmatmul.mubr.bf16.gmra.mrb[0].mxu0 %v5698
  %v5737 = vpop.f32.mrb[0].mxu0
  %v5738 = vadd.f32 0.0, %v5737
  %v5739 = vpop.f32.mrb[0].mxu0
  %v5740 = vadd.f32 0.0, %v5739
  %v5741 = vpop.f32.mrb[0].mxu0
  %v5742 = vadd.f32 0.0, %v5741
  %v5743 = vpop.f32.mrb[0].mxu0
  %v5744 = vadd.f32 0.0, %v5743
  %5745 = vmatprep.mubr.bf16.mxu0 0
  %5746 = vmatmul.mubr.bf16.gmra.mrb[0].mxu0 %v5701
  %v5747 = vpop.f32.mrb[0].mxu0
  %v5748 = vadd.f32 0.0, %v5747
  %v5749 = vpop.f32.mrb[0].mxu0
  %v5750 = vadd.f32 0.0, %v5749
  %v5751 = vpop.f32.mrb[0].mxu0
  %v5752 = vadd.f32 0.0, %v5751
  %v5753 = vpop.f32.mrb[0].mxu0
  %v5754 = vadd.f32 0.0, %v5753
  %5755 = vdwg.mxu0
  %5756 = vmatprep.subr.bf16.mxu0 %v5688
  %5757 = vmatpush1.bf16.msra.mxu0 %v5687
  %5758 = vmatprep.subr.bf16.mxu0 0
  %5759 = vmatpush1.bf16.msra.mxu0 0
  %5760 = vmatprep.subr.bf16.mxu0 0
  %5761 = vmatpush1.bf16.msra.mxu0 0
  %5762 = vmatprep.subr.bf16.mxu0 0
  %5763 = vmatpush1.bf16.msra.mxu0 0
  %5764 = vmatprep.subr.bf16.mxu0 0
  %5765 = vmatpush1.bf16.msra.mxu0 0
  %5766 = vmatprep.subr.bf16.mxu0 0
  %5767 = vmatpush1.bf16.msra.mxu0 0
  %5768 = vmatprep.subr.bf16.mxu0 0
  %5769 = vmatpush1.bf16.msra.mxu0 0
  %5770 = vmatprep.subr.bf16.mxu0 0
  %5771 = vmatpush1.bf16.msra.mxu0 0
  %5772 = vmatprep.subr.bf16.mxu0 0
  %5773 = vmatpush1.bf16.msra.mxu0 0
  %5774 = vmatprep.subr.bf16.mxu0 0
  %5775 = vmatpush1.bf16.msra.mxu0 0
  %5776 = vmatprep.subr.bf16.mxu0 0
  %5777 = vmatpush1.bf16.msra.mxu0 0
  %5778 = vmatprep.subr.bf16.mxu0 0
  %5779 = vmatpush1.bf16.msra.mxu0 0
  %5780 = vmatprep.subr.bf16.mxu0 0
  %5781 = vmatpush1.bf16.msra.mxu0 0
  %5782 = vmatprep.subr.bf16.mxu0 0
  %5783 = vmatpush1.bf16.msra.mxu0 0
  %5784 = vmatprep.subr.bf16.mxu0 0
  %5785 = vmatpush1.bf16.msra.mxu0 0
  %5786 = vmatprep.subr.bf16.mxu0 0
  %5787 = vmatpush1.bf16.msra.mxu0 0
  %5788 = vmatprep.mubr.bf16.mxu0 0
  %5789 = vmatmul.mubr.bf16.gmra.mrb[0].mxu0 %v5698
  %v5790 = vpop.f32.mrb[0].mxu0
  %v5791 = vadd.f32 0.0, %v5790
  %v5792 = vpop.f32.mrb[0].mxu0
  %v5793 = vadd.f32 0.0, %v5792
  %v5794 = vpop.f32.mrb[0].mxu0
  %v5795 = vadd.f32 0.0, %v5794
  %v5796 = vpop.f32.mrb[0].mxu0
  %v5797 = vadd.f32 0.0, %v5796
  %5798 = vmatprep.mubr.bf16.mxu0 0
  %5799 = vmatmul.mubr.bf16.gmra.mrb[0].mxu0 %v5701
  %v5800 = vpop.f32.mrb[0].mxu0
  %v5801 = vadd.f32 0.0, %v5800
  %v5802 = vpop.f32.mrb[0].mxu0
  %v5803 = vadd.f32 0.0, %v5802
  %v5804 = vpop.f32.mrb[0].mxu0
  %v5805 = vadd.f32 0.0, %v5804
  %v5806 = vpop.f32.mrb[0].mxu0
  %v5807 = vadd.f32 0.0, %v5806
  %5808 = vdwg.mxu0
  %5809 = vmatprep.subr.bf16.mxu0 %v5690
  %5810 = vmatpush1.bf16.msra.mxu0 %v5689
  %5811 = vmatprep.subr.bf16.mxu0 0
  %5812 = vmatpush1.bf16.msra.mxu0 0
  %5813 = vmatprep.subr.bf16.mxu0 0
  %5814 = vmatpush1.bf16.msra.mxu0 0
  %5815 = vmatprep.subr.bf16.mxu0 0
  %5816 = vmatpush1.bf16.msra.mxu0 0
  %5817 = vmatprep.subr.bf16.mxu0 0
  %5818 = vmatpush1.bf16.msra.mxu0 0
  %5819 = vmatprep.subr.bf16.mxu0 0
  %5820 = vmatpush1.bf16.msra.mxu0 0
  %5821 = vmatprep.subr.bf16.mxu0 0
  %5822 = vmatpush1.bf16.msra.mxu0 0
  %5823 = vmatprep.subr.bf16.mxu0 0
  %5824 = vmatpush1.bf16.msra.mxu0 0
  %5825 = vmatprep.subr.bf16.mxu0 0
  %5826 = vmatpush1.bf16.msra.mxu0 0
  %5827 = vmatprep.subr.bf16.mxu0 0
  %5828 = vmatpush1.bf16.msra.mxu0 0
  %5829 = vmatprep.subr.bf16.mxu0 0
  %5830 = vmatpush1.bf16.msra.mxu0 0
  %5831 = vmatprep.subr.bf16.mxu0 0
  %5832 = vmatpush1.bf16.msra.mxu0 0
  %5833 = vmatprep.subr.bf16.mxu0 0
  %5834 = vmatpush1.bf16.msra.mxu0 0
  %5835 = vmatprep.subr.bf16.mxu0 0
  %5836 = vmatpush1.bf16.msra.mxu0 0
  %5837 = vmatprep.subr.bf16.mxu0 0
  %5838 = vmatpush1.bf16.msra.mxu0 0
  %5839 = vmatprep.subr.bf16.mxu0 0
  %5840 = vmatpush1.bf16.msra.mxu0 0
  %5841 = vmatprep.mubr.bf16.mxu0 0
  %5842 = vmatmul.mubr.bf16.gmra.mrb[0].mxu0 %v5698
  %v5843 = vpop.f32.mrb[0].mxu0
  %v5844 = vadd.f32 0.0, %v5843
  %v5845 = vpop.f32.mrb[0].mxu0
  %v5846 = vadd.f32 0.0, %v5845
  %v5847 = vpop.f32.mrb[0].mxu0
  %v5848 = vadd.f32 0.0, %v5847
  %v5849 = vpop.f32.mrb[0].mxu0
  %v5850 = vadd.f32 0.0, %v5849
  %5851 = vmatprep.mubr.bf16.mxu0 0
  %5852 = vmatmul.mubr.bf16.gmra.mrb[0].mxu0 %v5701
  %v5853 = vpop.f32.mrb[0].mxu0
  %v5854 = vadd.f32 0.0, %v5853
  %v5855 = vpop.f32.mrb[0].mxu0
  %v5856 = vadd.f32 0.0, %v5855
  %v5857 = vpop.f32.mrb[0].mxu0
  %v5858 = vadd.f32 0.0, %v5857
  %v5859 = vpop.f32.mrb[0].mxu0
  %v5860 = vadd.f32 0.0, %v5859
  %5861 = vdwg.mxu0
  %v5862 = vadd.f32 %v5631, %v5738
  %v5863 = vadd.f32 %v5632, %v5740
  %v5864 = vadd.f32 %v5633, %v5791
  %v5865 = vadd.f32 %v5634, %v5793
  %v5866 = vadd.f32 %v5635, %v5844
  %v5867 = vadd.f32 %v5636, %v5846
  %v5868 = vadd.f32 %v5637, %v5742
  %v5869 = vadd.f32 %v5638, %v5744
  %v5870 = vadd.f32 %v5639, %v5795
  %v5871 = vadd.f32 %v5640, %v5797
  %v5872 = vadd.f32 %v5641, %v5848
  %v5873 = vadd.f32 %v5642, %v5850
  %v5874 = vadd.f32 %v5643, %v5748
  %v5875 = vadd.f32 %v5644, %v5750
  %v5876 = vadd.f32 %v5645, %v5801
  %v5877 = vadd.f32 %v5646, %v5803
  %v5878 = vadd.f32 %v5647, %v5854
  %v5879 = vadd.f32 %v5648, %v5856
  %v5880 = vadd.f32 %v5649, %v5752
  %v5881 = vadd.f32 %v5650, %v5754
  %v5882 = vadd.f32 %v5651, %v5805
  %v5883 = vadd.f32 %v5652, %v5807
  %v5884 = vadd.f32 %v5653, %v5858
  %v5885 = vadd.f32 %v5654, %v5860
  %s5886 = scalar_lea.vmem %s4, 304
  %v5887 = vld [vmem:[%s5886] sm:$0xf]
  %v5888 = vld [vmem:[%s5886 + $0x4] sm:$0xf]
  %v5889 = vld [vmem:[%s5886 + $0x8] sm:$0xf]
  %v5890 = vld [vmem:[%s5886 + $0xc] sm:$0xf]
  %v5895 = vunpack.c.l.b16 %v5887
  %v5896 = vunpack.c.l.b16 %v5888
  %v5897 = vunpack.c.l.b16 %v5889
  %v5898 = vunpack.c.l.b16 %v5890
  %v5899 = vpack.c.b16 %v5896, %v5895
  %v5900 = vpack.c.b16 %v5898, %v5897
  %5901 = vrot.lane.b32.xlu0 %v1567, 70
  %v5902 = vpop.permute.xlu0 %5901
  %5903 = vrot.lane.b32.xlu0 %v1568, 70
  %v5904 = vpop.permute.xlu0 %5903
  %5905 = vrot.lane.b32.xlu0 %v1569, 70
  %v5906 = vpop.permute.xlu0 %5905
  %5907 = vrot.lane.b32.xlu0 %v1570, 70
  %v5908 = vpop.permute.xlu0 %5907
  %5909 = vrot.lane.b32.xlu0 %v1571, 70
  %v5910 = vpop.permute.xlu0 %5909
  %5911 = vrot.lane.b32.xlu0 %v1572, 70
  %v5912 = vpop.permute.xlu0 %5911
  %5913 = vrot.lane.b32.xlu0 %v1573, 70
  %v5914 = vpop.permute.xlu0 %5913
  %vm5915 = vcmask 572416
  %v5916 = vsel %vm5915, %v5902, %v5904
  %v5917 = vsel %vm5915, %v5904, %v5906
  %v5918 = vsel %vm5915, %v5906, %v5908
  %v5919 = vsel %vm5915, %v5908, %v5910
  %v5920 = vsel %vm5915, %v5910, %v5912
  %v5921 = vsel %vm5915, %v5912, %v5914
  %v5929 = vsel %vm1618, %v5899, 0
  %v5932 = vsel %vm1618, %v5900, 0
  %5934 = vmatprep.subr.bf16.mxu0 %v5917
  %5935 = vmatpush1.bf16.msra.mxu0 %v5916
  %5936 = vmatprep.subr.bf16.mxu0 0
  %5937 = vmatpush1.bf16.msra.mxu0 0
  %5938 = vmatprep.subr.bf16.mxu0 0
  %5939 = vmatpush1.bf16.msra.mxu0 0
  %5940 = vmatprep.subr.bf16.mxu0 0
  %5941 = vmatpush1.bf16.msra.mxu0 0
  %5942 = vmatprep.subr.bf16.mxu0 0
  %5943 = vmatpush1.bf16.msra.mxu0 0
  %5944 = vmatprep.subr.bf16.mxu0 0
  %5945 = vmatpush1.bf16.msra.mxu0 0
  %5946 = vmatprep.subr.bf16.mxu0 0
  %5947 = vmatpush1.bf16.msra.mxu0 0
  %5948 = vmatprep.subr.bf16.mxu0 0
  %5949 = vmatpush1.bf16.msra.mxu0 0
  %5950 = vmatprep.subr.bf16.mxu0 0
  %5951 = vmatpush1.bf16.msra.mxu0 0
  %5952 = vmatprep.subr.bf16.mxu0 0
  %5953 = vmatpush1.bf16.msra.mxu0 0
  %5954 = vmatprep.subr.bf16.mxu0 0
  %5955 = vmatpush1.bf16.msra.mxu0 0
  %5956 = vmatprep.subr.bf16.mxu0 0
  %5957 = vmatpush1.bf16.msra.mxu0 0
  %5958 = vmatprep.subr.bf16.mxu0 0
  %5959 = vmatpush1.bf16.msra.mxu0 0
  %5960 = vmatprep.subr.bf16.mxu0 0
  %5961 = vmatpush1.bf16.msra.mxu0 0
  %5962 = vmatprep.subr.bf16.mxu0 0
  %5963 = vmatpush1.bf16.msra.mxu0 0
  %5964 = vmatprep.subr.bf16.mxu0 0
  %5965 = vmatpush1.bf16.msra.mxu0 0
  %5966 = vmatprep.mubr.bf16.mxu0 0
  %5967 = vmatmul.mubr.bf16.gmra.mrb[0].mxu0 %v5929
  %v5968 = vpop.f32.mrb[0].mxu0
  %v5969 = vadd.f32 0.0, %v5968
  %v5970 = vpop.f32.mrb[0].mxu0
  %v5971 = vadd.f32 0.0, %v5970
  %v5972 = vpop.f32.mrb[0].mxu0
  %v5973 = vadd.f32 0.0, %v5972
  %v5974 = vpop.f32.mrb[0].mxu0
  %v5975 = vadd.f32 0.0, %v5974
  %5976 = vmatprep.mubr.bf16.mxu0 0
  %5977 = vmatmul.mubr.bf16.gmra.mrb[0].mxu0 %v5932
  %v5978 = vpop.f32.mrb[0].mxu0
  %v5979 = vadd.f32 0.0, %v5978
  %v5980 = vpop.f32.mrb[0].mxu0
  %v5981 = vadd.f32 0.0, %v5980
  %v5982 = vpop.f32.mrb[0].mxu0
  %v5983 = vadd.f32 0.0, %v5982
  %v5984 = vpop.f32.mrb[0].mxu0
  %v5985 = vadd.f32 0.0, %v5984
  %5986 = vdwg.mxu0
  %5987 = vmatprep.subr.bf16.mxu0 %v5919
  %5988 = vmatpush1.bf16.msra.mxu0 %v5918
  %5989 = vmatprep.subr.bf16.mxu0 0
  %5990 = vmatpush1.bf16.msra.mxu0 0
  %5991 = vmatprep.subr.bf16.mxu0 0
  %5992 = vmatpush1.bf16.msra.mxu0 0
  %5993 = vmatprep.subr.bf16.mxu0 0
  %5994 = vmatpush1.bf16.msra.mxu0 0
  %5995 = vmatprep.subr.bf16.mxu0 0
  %5996 = vmatpush1.bf16.msra.mxu0 0
  %5997 = vmatprep.subr.bf16.mxu0 0
  %5998 = vmatpush1.bf16.msra.mxu0 0
  %5999 = vmatprep.subr.bf16.mxu0 0
  %6000 = vmatpush1.bf16.msra.mxu0 0
  %6001 = vmatprep.subr.bf16.mxu0 0
  %6002 = vmatpush1.bf16.msra.mxu0 0
  %6003 = vmatprep.subr.bf16.mxu0 0
  %6004 = vmatpush1.bf16.msra.mxu0 0
  %6005 = vmatprep.subr.bf16.mxu0 0
  %6006 = vmatpush1.bf16.msra.mxu0 0
  %6007 = vmatprep.subr.bf16.mxu0 0
  %6008 = vmatpush1.bf16.msra.mxu0 0
  %6009 = vmatprep.subr.bf16.mxu0 0
  %6010 = vmatpush1.bf16.msra.mxu0 0
  %6011 = vmatprep.subr.bf16.mxu0 0
  %6012 = vmatpush1.bf16.msra.mxu0 0
  %6013 = vmatprep.subr.bf16.mxu0 0
  %6014 = vmatpush1.bf16.msra.mxu0 0
  %6015 = vmatprep.subr.bf16.mxu0 0
  %6016 = vmatpush1.bf16.msra.mxu0 0
  %6017 = vmatprep.subr.bf16.mxu0 0
  %6018 = vmatpush1.bf16.msra.mxu0 0
  %6019 = vmatprep.mubr.bf16.mxu0 0
  %6020 = vmatmul.mubr.bf16.gmra.mrb[0].mxu0 %v5929
  %v6021 = vpop.f32.mrb[0].mxu0
  %v6022 = vadd.f32 0.0, %v6021
  %v6023 = vpop.f32.mrb[0].mxu0
  %v6024 = vadd.f32 0.0, %v6023
  %v6025 = vpop.f32.mrb[0].mxu0
  %v6026 = vadd.f32 0.0, %v6025
  %v6027 = vpop.f32.mrb[0].mxu0
  %v6028 = vadd.f32 0.0, %v6027
  %6029 = vmatprep.mubr.bf16.mxu0 0
  %6030 = vmatmul.mubr.bf16.gmra.mrb[0].mxu0 %v5932
  %v6031 = vpop.f32.mrb[0].mxu0
  %v6032 = vadd.f32 0.0, %v6031
  %v6033 = vpop.f32.mrb[0].mxu0
  %v6034 = vadd.f32 0.0, %v6033
  %v6035 = vpop.f32.mrb[0].mxu0
  %v6036 = vadd.f32 0.0, %v6035
  %v6037 = vpop.f32.mrb[0].mxu0
  %v6038 = vadd.f32 0.0, %v6037
  %6039 = vdwg.mxu0
  %6040 = vmatprep.subr.bf16.mxu0 %v5921
  %6041 = vmatpush1.bf16.msra.mxu0 %v5920
  %6042 = vmatprep.subr.bf16.mxu0 0
  %6043 = vmatpush1.bf16.msra.mxu0 0
  %6044 = vmatprep.subr.bf16.mxu0 0
  %6045 = vmatpush1.bf16.msra.mxu0 0
  %6046 = vmatprep.subr.bf16.mxu0 0
  %6047 = vmatpush1.bf16.msra.mxu0 0
  %6048 = vmatprep.subr.bf16.mxu0 0
  %6049 = vmatpush1.bf16.msra.mxu0 0
  %6050 = vmatprep.subr.bf16.mxu0 0
  %6051 = vmatpush1.bf16.msra.mxu0 0
  %6052 = vmatprep.subr.bf16.mxu0 0
  %6053 = vmatpush1.bf16.msra.mxu0 0
  %6054 = vmatprep.subr.bf16.mxu0 0
  %6055 = vmatpush1.bf16.msra.mxu0 0
  %6056 = vmatprep.subr.bf16.mxu0 0
  %6057 = vmatpush1.bf16.msra.mxu0 0
  %6058 = vmatprep.subr.bf16.mxu0 0
  %6059 = vmatpush1.bf16.msra.mxu0 0
  %6060 = vmatprep.subr.bf16.mxu0 0
  %6061 = vmatpush1.bf16.msra.mxu0 0
  %6062 = vmatprep.subr.bf16.mxu0 0
  %6063 = vmatpush1.bf16.msra.mxu0 0
  %6064 = vmatprep.subr.bf16.mxu0 0
  %6065 = vmatpush1.bf16.msra.mxu0 0
  %6066 = vmatprep.subr.bf16.mxu0 0
  %6067 = vmatpush1.bf16.msra.mxu0 0
  %6068 = vmatprep.subr.bf16.mxu0 0
  %6069 = vmatpush1.bf16.msra.mxu0 0
  %6070 = vmatprep.subr.bf16.mxu0 0
  %6071 = vmatpush1.bf16.msra.mxu0 0
  %6072 = vmatprep.mubr.bf16.mxu0 0
  %6073 = vmatmul.mubr.bf16.gmra.mrb[0].mxu0 %v5929
  %v6074 = vpop.f32.mrb[0].mxu0
  %v6075 = vadd.f32 0.0, %v6074
  %v6076 = vpop.f32.mrb[0].mxu0
  %v6077 = vadd.f32 0.0, %v6076
  %v6078 = vpop.f32.mrb[0].mxu0
  %v6079 = vadd.f32 0.0, %v6078
  %v6080 = vpop.f32.mrb[0].mxu0
  %v6081 = vadd.f32 0.0, %v6080
  %6082 = vmatprep.mubr.bf16.mxu0 0
  %6083 = vmatmul.mubr.bf16.gmra.mrb[0].mxu0 %v5932
  %v6084 = vpop.f32.mrb[0].mxu0
  %v6085 = vadd.f32 0.0, %v6084
  %v6086 = vpop.f32.mrb[0].mxu0
  %v6087 = vadd.f32 0.0, %v6086
  %v6088 = vpop.f32.mrb[0].mxu0
  %v6089 = vadd.f32 0.0, %v6088
  %v6090 = vpop.f32.mrb[0].mxu0
  %v6091 = vadd.f32 0.0, %v6090
  %6092 = vdwg.mxu0
  %v6093 = vadd.f32 %v5862, %v5969
  %v6094 = vadd.f32 %v5863, %v5971
  %v6095 = vadd.f32 %v5864, %v6022
  %v6096 = vadd.f32 %v5865, %v6024
  %v6097 = vadd.f32 %v5866, %v6075
  %v6098 = vadd.f32 %v5867, %v6077
  %v6099 = vadd.f32 %v5868, %v5973
  %v6100 = vadd.f32 %v5869, %v5975
  %v6101 = vadd.f32 %v5870, %v6026
  %v6102 = vadd.f32 %v5871, %v6028
  %v6103 = vadd.f32 %v5872, %v6079
  %v6104 = vadd.f32 %v5873, %v6081
  %v6105 = vadd.f32 %v5874, %v5979
  %v6106 = vadd.f32 %v5875, %v5981
  %v6107 = vadd.f32 %v5876, %v6032
  %v6108 = vadd.f32 %v5877, %v6034
  %v6109 = vadd.f32 %v5878, %v6085
  %v6110 = vadd.f32 %v5879, %v6087
  %v6111 = vadd.f32 %v5880, %v5983
  %v6112 = vadd.f32 %v5881, %v5985
  %v6113 = vadd.f32 %v5882, %v6036
  %v6114 = vadd.f32 %v5883, %v6038
  %v6115 = vadd.f32 %v5884, %v6089
  %v6116 = vadd.f32 %v5885, %v6091
  %s6117 = scalar_lea.vmem %s4, 320
  %v6118 = vld [vmem:[%s6117] sm:$0xf]
  %v6119 = vld [vmem:[%s6117 + $0x4] sm:$0xf]
  %v6120 = vld [vmem:[%s6117 + $0x8] sm:$0xf]
  %v6121 = vld [vmem:[%s6117 + $0xc] sm:$0xf]
  %v6126 = vunpack.c.l.b16 %v6118
  %v6127 = vunpack.c.l.b16 %v6119
  %v6128 = vunpack.c.l.b16 %v6120
  %v6129 = vunpack.c.l.b16 %v6121
  %v6130 = vpack.c.b16 %v6127, %v6126
  %v6131 = vpack.c.b16 %v6129, %v6128
  %6132 = vrot.lane.b32.xlu0 %v1567, 56
  %v6133 = vpop.permute.xlu0 %6132
  %6134 = vrot.lane.b32.xlu0 %v1568, 56
  %v6135 = vpop.permute.xlu0 %6134
  %6136 = vrot.lane.b32.xlu0 %v1569, 56
  %v6137 = vpop.permute.xlu0 %6136
  %6138 = vrot.lane.b32.xlu0 %v1570, 56
  %v6139 = vpop.permute.xlu0 %6138
  %6140 = vrot.lane.b32.xlu0 %v1571, 56
  %v6141 = vpop.permute.xlu0 %6140
  %6142 = vrot.lane.b32.xlu0 %v1572, 56
  %v6143 = vpop.permute.xlu0 %6142
  %6144 = vrot.lane.b32.xlu0 %v1573, 56
  %v6145 = vpop.permute.xlu0 %6144
  %vm6146 = vcmask 457728
  %v6147 = vsel %vm6146, %v6133, %v6135
  %v6148 = vsel %vm6146, %v6135, %v6137
  %v6149 = vsel %vm6146, %v6137, %v6139
  %v6150 = vsel %vm6146, %v6139, %v6141
  %v6151 = vsel %vm6146, %v6141, %v6143
  %v6152 = vsel %vm6146, %v6143, %v6145
  %v6160 = vsel %vm1618, %v6130, 0
  %v6163 = vsel %vm1618, %v6131, 0
  %6165 = vmatprep.subr.bf16.mxu0 %v6148
  %6166 = vmatpush1.bf16.msra.mxu0 %v6147
  %6167 = vmatprep.subr.bf16.mxu0 0
  %6168 = vmatpush1.bf16.msra.mxu0 0
  %6169 = vmatprep.subr.bf16.mxu0 0
  %6170 = vmatpush1.bf16.msra.mxu0 0
  %6171 = vmatprep.subr.bf16.mxu0 0
  %6172 = vmatpush1.bf16.msra.mxu0 0
  %6173 = vmatprep.subr.bf16.mxu0 0
  %6174 = vmatpush1.bf16.msra.mxu0 0
  %6175 = vmatprep.subr.bf16.mxu0 0
  %6176 = vmatpush1.bf16.msra.mxu0 0
  %6177 = vmatprep.subr.bf16.mxu0 0
  %6178 = vmatpush1.bf16.msra.mxu0 0
  %6179 = vmatprep.subr.bf16.mxu0 0
  %6180 = vmatpush1.bf16.msra.mxu0 0
  %6181 = vmatprep.subr.bf16.mxu0 0
  %6182 = vmatpush1.bf16.msra.mxu0 0
  %6183 = vmatprep.subr.bf16.mxu0 0
  %6184 = vmatpush1.bf16.msra.mxu0 0
  %6185 = vmatprep.subr.bf16.mxu0 0
  %6186 = vmatpush1.bf16.msra.mxu0 0
  %6187 = vmatprep.subr.bf16.mxu0 0
  %6188 = vmatpush1.bf16.msra.mxu0 0
  %6189 = vmatprep.subr.bf16.mxu0 0
  %6190 = vmatpush1.bf16.msra.mxu0 0
  %6191 = vmatprep.subr.bf16.mxu0 0
  %6192 = vmatpush1.bf16.msra.mxu0 0
  %6193 = vmatprep.subr.bf16.mxu0 0
  %6194 = vmatpush1.bf16.msra.mxu0 0
  %6195 = vmatprep.subr.bf16.mxu0 0
  %6196 = vmatpush1.bf16.msra.mxu0 0
  %6197 = vmatprep.mubr.bf16.mxu0 0
  %6198 = vmatmul.mubr.bf16.gmra.mrb[0].mxu0 %v6160
  %v6199 = vpop.f32.mrb[0].mxu0
  %v6200 = vadd.f32 0.0, %v6199
  %v6201 = vpop.f32.mrb[0].mxu0
  %v6202 = vadd.f32 0.0, %v6201
  %v6203 = vpop.f32.mrb[0].mxu0
  %v6204 = vadd.f32 0.0, %v6203
  %v6205 = vpop.f32.mrb[0].mxu0
  %v6206 = vadd.f32 0.0, %v6205
  %6207 = vmatprep.mubr.bf16.mxu0 0
  %6208 = vmatmul.mubr.bf16.gmra.mrb[0].mxu0 %v6163
  %v6209 = vpop.f32.mrb[0].mxu0
  %v6210 = vadd.f32 0.0, %v6209
  %v6211 = vpop.f32.mrb[0].mxu0
  %v6212 = vadd.f32 0.0, %v6211
  %v6213 = vpop.f32.mrb[0].mxu0
  %v6214 = vadd.f32 0.0, %v6213
  %v6215 = vpop.f32.mrb[0].mxu0
  %v6216 = vadd.f32 0.0, %v6215
  %6217 = vdwg.mxu0
  %6218 = vmatprep.subr.bf16.mxu0 %v6150
  %6219 = vmatpush1.bf16.msra.mxu0 %v6149
  %6220 = vmatprep.subr.bf16.mxu0 0
  %6221 = vmatpush1.bf16.msra.mxu0 0
  %6222 = vmatprep.subr.bf16.mxu0 0
  %6223 = vmatpush1.bf16.msra.mxu0 0
  %6224 = vmatprep.subr.bf16.mxu0 0
  %6225 = vmatpush1.bf16.msra.mxu0 0
  %6226 = vmatprep.subr.bf16.mxu0 0
  %6227 = vmatpush1.bf16.msra.mxu0 0
  %6228 = vmatprep.subr.bf16.mxu0 0
  %6229 = vmatpush1.bf16.msra.mxu0 0
  %6230 = vmatprep.subr.bf16.mxu0 0
  %6231 = vmatpush1.bf16.msra.mxu0 0
  %6232 = vmatprep.subr.bf16.mxu0 0
  %6233 = vmatpush1.bf16.msra.mxu0 0
  %6234 = vmatprep.subr.bf16.mxu0 0
  %6235 = vmatpush1.bf16.msra.mxu0 0
  %6236 = vmatprep.subr.bf16.mxu0 0
  %6237 = vmatpush1.bf16.msra.mxu0 0
  %6238 = vmatprep.subr.bf16.mxu0 0
  %6239 = vmatpush1.bf16.msra.mxu0 0
  %6240 = vmatprep.subr.bf16.mxu0 0
  %6241 = vmatpush1.bf16.msra.mxu0 0
  %6242 = vmatprep.subr.bf16.mxu0 0
  %6243 = vmatpush1.bf16.msra.mxu0 0
  %6244 = vmatprep.subr.bf16.mxu0 0
  %6245 = vmatpush1.bf16.msra.mxu0 0
  %6246 = vmatprep.subr.bf16.mxu0 0
  %6247 = vmatpush1.bf16.msra.mxu0 0
  %6248 = vmatprep.subr.bf16.mxu0 0
  %6249 = vmatpush1.bf16.msra.mxu0 0
  %6250 = vmatprep.mubr.bf16.mxu0 0
  %6251 = vmatmul.mubr.bf16.gmra.mrb[0].mxu0 %v6160
  %v6252 = vpop.f32.mrb[0].mxu0
  %v6253 = vadd.f32 0.0, %v6252
  %v6254 = vpop.f32.mrb[0].mxu0
  %v6255 = vadd.f32 0.0, %v6254
  %v6256 = vpop.f32.mrb[0].mxu0
  %v6257 = vadd.f32 0.0, %v6256
  %v6258 = vpop.f32.mrb[0].mxu0
  %v6259 = vadd.f32 0.0, %v6258
  %6260 = vmatprep.mubr.bf16.mxu0 0
  %6261 = vmatmul.mubr.bf16.gmra.mrb[0].mxu0 %v6163
  %v6262 = vpop.f32.mrb[0].mxu0
  %v6263 = vadd.f32 0.0, %v6262
  %v6264 = vpop.f32.mrb[0].mxu0
  %v6265 = vadd.f32 0.0, %v6264
  %v6266 = vpop.f32.mrb[0].mxu0
  %v6267 = vadd.f32 0.0, %v6266
  %v6268 = vpop.f32.mrb[0].mxu0
  %v6269 = vadd.f32 0.0, %v6268
  %6270 = vdwg.mxu0
  %6271 = vmatprep.subr.bf16.mxu0 %v6152
  %6272 = vmatpush1.bf16.msra.mxu0 %v6151
  %6273 = vmatprep.subr.bf16.mxu0 0
  %6274 = vmatpush1.bf16.msra.mxu0 0
  %6275 = vmatprep.subr.bf16.mxu0 0
  %6276 = vmatpush1.bf16.msra.mxu0 0
  %6277 = vmatprep.subr.bf16.mxu0 0
  %6278 = vmatpush1.bf16.msra.mxu0 0
  %6279 = vmatprep.subr.bf16.mxu0 0
  %6280 = vmatpush1.bf16.msra.mxu0 0
  %6281 = vmatprep.subr.bf16.mxu0 0
  %6282 = vmatpush1.bf16.msra.mxu0 0
  %6283 = vmatprep.subr.bf16.mxu0 0
  %6284 = vmatpush1.bf16.msra.mxu0 0
  %6285 = vmatprep.subr.bf16.mxu0 0
  %6286 = vmatpush1.bf16.msra.mxu0 0
  %6287 = vmatprep.subr.bf16.mxu0 0
  %6288 = vmatpush1.bf16.msra.mxu0 0
  %6289 = vmatprep.subr.bf16.mxu0 0
  %6290 = vmatpush1.bf16.msra.mxu0 0
  %6291 = vmatprep.subr.bf16.mxu0 0
  %6292 = vmatpush1.bf16.msra.mxu0 0
  %6293 = vmatprep.subr.bf16.mxu0 0
  %6294 = vmatpush1.bf16.msra.mxu0 0
  %6295 = vmatprep.subr.bf16.mxu0 0
  %6296 = vmatpush1.bf16.msra.mxu0 0
  %6297 = vmatprep.subr.bf16.mxu0 0
  %6298 = vmatpush1.bf16.msra.mxu0 0
  %6299 = vmatprep.subr.bf16.mxu0 0
  %6300 = vmatpush1.bf16.msra.mxu0 0
  %6301 = vmatprep.subr.bf16.mxu0 0
  %6302 = vmatpush1.bf16.msra.mxu0 0
  %6303 = vmatprep.mubr.bf16.mxu0 0
  %6304 = vmatmul.mubr.bf16.gmra.mrb[0].mxu0 %v6160
  %v6305 = vpop.f32.mrb[0].mxu0
  %v6306 = vadd.f32 0.0, %v6305
  %v6307 = vpop.f32.mrb[0].mxu0
  %v6308 = vadd.f32 0.0, %v6307
  %v6309 = vpop.f32.mrb[0].mxu0
  %v6310 = vadd.f32 0.0, %v6309
  %v6311 = vpop.f32.mrb[0].mxu0
  %v6312 = vadd.f32 0.0, %v6311
  %6313 = vmatprep.mubr.bf16.mxu0 0
  %6314 = vmatmul.mubr.bf16.gmra.mrb[0].mxu0 %v6163
  %v6315 = vpop.f32.mrb[0].mxu0
  %v6316 = vadd.f32 0.0, %v6315
  %v6317 = vpop.f32.mrb[0].mxu0
  %v6318 = vadd.f32 0.0, %v6317
  %v6319 = vpop.f32.mrb[0].mxu0
  %v6320 = vadd.f32 0.0, %v6319
  %v6321 = vpop.f32.mrb[0].mxu0
  %v6322 = vadd.f32 0.0, %v6321
  %6323 = vdwg.mxu0
  %v6324 = vadd.f32 %v6093, %v6200
  %v6325 = vadd.f32 %v6094, %v6202
  %v6326 = vadd.f32 %v6095, %v6253
  %v6327 = vadd.f32 %v6096, %v6255
  %v6328 = vadd.f32 %v6097, %v6306
  %v6329 = vadd.f32 %v6098, %v6308
  %v6330 = vadd.f32 %v6099, %v6204
  %v6331 = vadd.f32 %v6100, %v6206
  %v6332 = vadd.f32 %v6101, %v6257
  %v6333 = vadd.f32 %v6102, %v6259
  %v6334 = vadd.f32 %v6103, %v6310
  %v6335 = vadd.f32 %v6104, %v6312
  %v6336 = vadd.f32 %v6105, %v6210
  %v6337 = vadd.f32 %v6106, %v6212
  %v6338 = vadd.f32 %v6107, %v6263
  %v6339 = vadd.f32 %v6108, %v6265
  %v6340 = vadd.f32 %v6109, %v6316
  %v6341 = vadd.f32 %v6110, %v6318
  %v6342 = vadd.f32 %v6111, %v6214
  %v6343 = vadd.f32 %v6112, %v6216
  %v6344 = vadd.f32 %v6113, %v6267
  %v6345 = vadd.f32 %v6114, %v6269
  %v6346 = vadd.f32 %v6115, %v6320
  %v6347 = vadd.f32 %v6116, %v6322
  %s6348 = scalar_lea.vmem %s4, 336
  %v6349 = vld [vmem:[%s6348] sm:$0xf]
  %v6350 = vld [vmem:[%s6348 + $0x4] sm:$0xf]
  %v6351 = vld [vmem:[%s6348 + $0x8] sm:$0xf]
  %v6352 = vld [vmem:[%s6348 + $0xc] sm:$0xf]
  %v6357 = vunpack.c.l.b16 %v6349
  %v6358 = vunpack.c.l.b16 %v6350
  %v6359 = vunpack.c.l.b16 %v6351
  %v6360 = vunpack.c.l.b16 %v6352
  %v6361 = vpack.c.b16 %v6358, %v6357
  %v6362 = vpack.c.b16 %v6360, %v6359
  %6363 = vrot.lane.b32.xlu0 %v1567, 55
  %v6364 = vpop.permute.xlu0 %6363
  %6365 = vrot.lane.b32.xlu0 %v1568, 55
  %v6366 = vpop.permute.xlu0 %6365
  %6367 = vrot.lane.b32.xlu0 %v1569, 55
  %v6368 = vpop.permute.xlu0 %6367
  %6369 = vrot.lane.b32.xlu0 %v1570, 55
  %v6370 = vpop.permute.xlu0 %6369
  %6371 = vrot.lane.b32.xlu0 %v1571, 55
  %v6372 = vpop.permute.xlu0 %6371
  %6373 = vrot.lane.b32.xlu0 %v1572, 55
  %v6374 = vpop.permute.xlu0 %6373
  %6375 = vrot.lane.b32.xlu0 %v1573, 55
  %v6376 = vpop.permute.xlu0 %6375
  %vm6377 = vcmask 449536
  %v6378 = vsel %vm6377, %v6364, %v6366
  %v6379 = vsel %vm6377, %v6366, %v6368
  %v6380 = vsel %vm6377, %v6368, %v6370
  %v6381 = vsel %vm6377, %v6370, %v6372
  %v6382 = vsel %vm6377, %v6372, %v6374
  %v6383 = vsel %vm6377, %v6374, %v6376
  %v6391 = vsel %vm1618, %v6361, 0
  %v6394 = vsel %vm1618, %v6362, 0
  %6396 = vmatprep.subr.bf16.mxu0 %v6379
  %6397 = vmatpush1.bf16.msra.mxu0 %v6378
  %6398 = vmatprep.subr.bf16.mxu0 0
  %6399 = vmatpush1.bf16.msra.mxu0 0
  %6400 = vmatprep.subr.bf16.mxu0 0
  %6401 = vmatpush1.bf16.msra.mxu0 0
  %6402 = vmatprep.subr.bf16.mxu0 0
  %6403 = vmatpush1.bf16.msra.mxu0 0
  %6404 = vmatprep.subr.bf16.mxu0 0
  %6405 = vmatpush1.bf16.msra.mxu0 0
  %6406 = vmatprep.subr.bf16.mxu0 0
  %6407 = vmatpush1.bf16.msra.mxu0 0
  %6408 = vmatprep.subr.bf16.mxu0 0
  %6409 = vmatpush1.bf16.msra.mxu0 0
  %6410 = vmatprep.subr.bf16.mxu0 0
  %6411 = vmatpush1.bf16.msra.mxu0 0
  %6412 = vmatprep.subr.bf16.mxu0 0
  %6413 = vmatpush1.bf16.msra.mxu0 0
  %6414 = vmatprep.subr.bf16.mxu0 0
  %6415 = vmatpush1.bf16.msra.mxu0 0
  %6416 = vmatprep.subr.bf16.mxu0 0
  %6417 = vmatpush1.bf16.msra.mxu0 0
  %6418 = vmatprep.subr.bf16.mxu0 0
  %6419 = vmatpush1.bf16.msra.mxu0 0
  %6420 = vmatprep.subr.bf16.mxu0 0
  %6421 = vmatpush1.bf16.msra.mxu0 0
  %6422 = vmatprep.subr.bf16.mxu0 0
  %6423 = vmatpush1.bf16.msra.mxu0 0
  %6424 = vmatprep.subr.bf16.mxu0 0
  %6425 = vmatpush1.bf16.msra.mxu0 0
  %6426 = vmatprep.subr.bf16.mxu0 0
  %6427 = vmatpush1.bf16.msra.mxu0 0
  %6428 = vmatprep.mubr.bf16.mxu0 0
  %6429 = vmatmul.mubr.bf16.gmra.mrb[0].mxu0 %v6391
  %v6430 = vpop.f32.mrb[0].mxu0
  %v6431 = vadd.f32 0.0, %v6430
  %v6432 = vpop.f32.mrb[0].mxu0
  %v6433 = vadd.f32 0.0, %v6432
  %v6434 = vpop.f32.mrb[0].mxu0
  %v6435 = vadd.f32 0.0, %v6434
  %v6436 = vpop.f32.mrb[0].mxu0
  %v6437 = vadd.f32 0.0, %v6436
  %6438 = vmatprep.mubr.bf16.mxu0 0
  %6439 = vmatmul.mubr.bf16.gmra.mrb[0].mxu0 %v6394
  %v6440 = vpop.f32.mrb[0].mxu0
  %v6441 = vadd.f32 0.0, %v6440
  %v6442 = vpop.f32.mrb[0].mxu0
  %v6443 = vadd.f32 0.0, %v6442
  %v6444 = vpop.f32.mrb[0].mxu0
  %v6445 = vadd.f32 0.0, %v6444
  %v6446 = vpop.f32.mrb[0].mxu0
  %v6447 = vadd.f32 0.0, %v6446
  %6448 = vdwg.mxu0
  %6449 = vmatprep.subr.bf16.mxu0 %v6381
  %6450 = vmatpush1.bf16.msra.mxu0 %v6380
  %6451 = vmatprep.subr.bf16.mxu0 0
  %6452 = vmatpush1.bf16.msra.mxu0 0
  %6453 = vmatprep.subr.bf16.mxu0 0
  %6454 = vmatpush1.bf16.msra.mxu0 0
  %6455 = vmatprep.subr.bf16.mxu0 0
  %6456 = vmatpush1.bf16.msra.mxu0 0
  %6457 = vmatprep.subr.bf16.mxu0 0
  %6458 = vmatpush1.bf16.msra.mxu0 0
  %6459 = vmatprep.subr.bf16.mxu0 0
  %6460 = vmatpush1.bf16.msra.mxu0 0
  %6461 = vmatprep.subr.bf16.mxu0 0
  %6462 = vmatpush1.bf16.msra.mxu0 0
  %6463 = vmatprep.subr.bf16.mxu0 0
  %6464 = vmatpush1.bf16.msra.mxu0 0
  %6465 = vmatprep.subr.bf16.mxu0 0
  %6466 = vmatpush1.bf16.msra.mxu0 0
  %6467 = vmatprep.subr.bf16.mxu0 0
  %6468 = vmatpush1.bf16.msra.mxu0 0
  %6469 = vmatprep.subr.bf16.mxu0 0
  %6470 = vmatpush1.bf16.msra.mxu0 0
  %6471 = vmatprep.subr.bf16.mxu0 0
  %6472 = vmatpush1.bf16.msra.mxu0 0
  %6473 = vmatprep.subr.bf16.mxu0 0
  %6474 = vmatpush1.bf16.msra.mxu0 0
  %6475 = vmatprep.subr.bf16.mxu0 0
  %6476 = vmatpush1.bf16.msra.mxu0 0
  %6477 = vmatprep.subr.bf16.mxu0 0
  %6478 = vmatpush1.bf16.msra.mxu0 0
  %6479 = vmatprep.subr.bf16.mxu0 0
  %6480 = vmatpush1.bf16.msra.mxu0 0
  %6481 = vmatprep.mubr.bf16.mxu0 0
  %6482 = vmatmul.mubr.bf16.gmra.mrb[0].mxu0 %v6391
  %v6483 = vpop.f32.mrb[0].mxu0
  %v6484 = vadd.f32 0.0, %v6483
  %v6485 = vpop.f32.mrb[0].mxu0
  %v6486 = vadd.f32 0.0, %v6485
  %v6487 = vpop.f32.mrb[0].mxu0
  %v6488 = vadd.f32 0.0, %v6487
  %v6489 = vpop.f32.mrb[0].mxu0
  %v6490 = vadd.f32 0.0, %v6489
  %6491 = vmatprep.mubr.bf16.mxu0 0
  %6492 = vmatmul.mubr.bf16.gmra.mrb[0].mxu0 %v6394
  %v6493 = vpop.f32.mrb[0].mxu0
  %v6494 = vadd.f32 0.0, %v6493
  %v6495 = vpop.f32.mrb[0].mxu0
  %v6496 = vadd.f32 0.0, %v6495
  %v6497 = vpop.f32.mrb[0].mxu0
  %v6498 = vadd.f32 0.0, %v6497
  %v6499 = vpop.f32.mrb[0].mxu0
  %v6500 = vadd.f32 0.0, %v6499
  %6501 = vdwg.mxu0
  %6502 = vmatprep.subr.bf16.mxu0 %v6383
  %6503 = vmatpush1.bf16.msra.mxu0 %v6382
  %6504 = vmatprep.subr.bf16.mxu0 0
  %6505 = vmatpush1.bf16.msra.mxu0 0
  %6506 = vmatprep.subr.bf16.mxu0 0
  %6507 = vmatpush1.bf16.msra.mxu0 0
  %6508 = vmatprep.subr.bf16.mxu0 0
  %6509 = vmatpush1.bf16.msra.mxu0 0
  %6510 = vmatprep.subr.bf16.mxu0 0
  %6511 = vmatpush1.bf16.msra.mxu0 0
  %6512 = vmatprep.subr.bf16.mxu0 0
  %6513 = vmatpush1.bf16.msra.mxu0 0
  %6514 = vmatprep.subr.bf16.mxu0 0
  %6515 = vmatpush1.bf16.msra.mxu0 0
  %6516 = vmatprep.subr.bf16.mxu0 0
  %6517 = vmatpush1.bf16.msra.mxu0 0
  %6518 = vmatprep.subr.bf16.mxu0 0
  %6519 = vmatpush1.bf16.msra.mxu0 0
  %6520 = vmatprep.subr.bf16.mxu0 0
  %6521 = vmatpush1.bf16.msra.mxu0 0
  %6522 = vmatprep.subr.bf16.mxu0 0
  %6523 = vmatpush1.bf16.msra.mxu0 0
  %6524 = vmatprep.subr.bf16.mxu0 0
  %6525 = vmatpush1.bf16.msra.mxu0 0
  %6526 = vmatprep.subr.bf16.mxu0 0
  %6527 = vmatpush1.bf16.msra.mxu0 0
  %6528 = vmatprep.subr.bf16.mxu0 0
  %6529 = vmatpush1.bf16.msra.mxu0 0
  %6530 = vmatprep.subr.bf16.mxu0 0
  %6531 = vmatpush1.bf16.msra.mxu0 0
  %6532 = vmatprep.subr.bf16.mxu0 0
  %6533 = vmatpush1.bf16.msra.mxu0 0
  %6534 = vmatprep.mubr.bf16.mxu0 0
  %6535 = vmatmul.mubr.bf16.gmra.mrb[0].mxu0 %v6391
  %v6536 = vpop.f32.mrb[0].mxu0
  %v6537 = vadd.f32 0.0, %v6536
  %v6538 = vpop.f32.mrb[0].mxu0
  %v6539 = vadd.f32 0.0, %v6538
  %v6540 = vpop.f32.mrb[0].mxu0
  %v6541 = vadd.f32 0.0, %v6540
  %v6542 = vpop.f32.mrb[0].mxu0
  %v6543 = vadd.f32 0.0, %v6542
  %6544 = vmatprep.mubr.bf16.mxu0 0
  %6545 = vmatmul.mubr.bf16.gmra.mrb[0].mxu0 %v6394
  %v6546 = vpop.f32.mrb[0].mxu0
  %v6547 = vadd.f32 0.0, %v6546
  %v6548 = vpop.f32.mrb[0].mxu0
  %v6549 = vadd.f32 0.0, %v6548
  %v6550 = vpop.f32.mrb[0].mxu0
  %v6551 = vadd.f32 0.0, %v6550
  %v6552 = vpop.f32.mrb[0].mxu0
  %v6553 = vadd.f32 0.0, %v6552
  %6554 = vdwg.mxu0
  %v6555 = vadd.f32 %v6324, %v6431
  %v6556 = vadd.f32 %v6325, %v6433
  %v6557 = vadd.f32 %v6326, %v6484
  %v6558 = vadd.f32 %v6327, %v6486
  %v6559 = vadd.f32 %v6328, %v6537
  %v6560 = vadd.f32 %v6329, %v6539
  %v6561 = vadd.f32 %v6330, %v6435
  %v6562 = vadd.f32 %v6331, %v6437
  %v6563 = vadd.f32 %v6332, %v6488
  %v6564 = vadd.f32 %v6333, %v6490
  %v6565 = vadd.f32 %v6334, %v6541
  %v6566 = vadd.f32 %v6335, %v6543
  %v6567 = vadd.f32 %v6336, %v6441
  %v6568 = vadd.f32 %v6337, %v6443
  %v6569 = vadd.f32 %v6338, %v6494
  %v6570 = vadd.f32 %v6339, %v6496
  %v6571 = vadd.f32 %v6340, %v6547
  %v6572 = vadd.f32 %v6341, %v6549
  %v6573 = vadd.f32 %v6342, %v6445
  %v6574 = vadd.f32 %v6343, %v6447
  %v6575 = vadd.f32 %v6344, %v6498
  %v6576 = vadd.f32 %v6345, %v6500
  %v6577 = vadd.f32 %v6346, %v6551
  %v6578 = vadd.f32 %v6347, %v6553
  %s6579 = scalar_lea.vmem %s4, 352
  %v6580 = vld [vmem:[%s6579] sm:$0xf]
  %v6581 = vld [vmem:[%s6579 + $0x4] sm:$0xf]
  %v6582 = vld [vmem:[%s6579 + $0x8] sm:$0xf]
  %v6583 = vld [vmem:[%s6579 + $0xc] sm:$0xf]
  %v6588 = vunpack.c.l.b16 %v6580
  %v6589 = vunpack.c.l.b16 %v6581
  %v6590 = vunpack.c.l.b16 %v6582
  %v6591 = vunpack.c.l.b16 %v6583
  %v6592 = vpack.c.b16 %v6589, %v6588
  %v6593 = vpack.c.b16 %v6591, %v6590
  %6594 = vrot.lane.b32.xlu0 %v1567, 54
  %v6595 = vpop.permute.xlu0 %6594
  %6596 = vrot.lane.b32.xlu0 %v1568, 54
  %v6597 = vpop.permute.xlu0 %6596
  %6598 = vrot.lane.b32.xlu0 %v1569, 54
  %v6599 = vpop.permute.xlu0 %6598
  %6600 = vrot.lane.b32.xlu0 %v1570, 54
  %v6601 = vpop.permute.xlu0 %6600
  %6602 = vrot.lane.b32.xlu0 %v1571, 54
  %v6603 = vpop.permute.xlu0 %6602
  %6604 = vrot.lane.b32.xlu0 %v1572, 54
  %v6605 = vpop.permute.xlu0 %6604
  %6606 = vrot.lane.b32.xlu0 %v1573, 54
  %v6607 = vpop.permute.xlu0 %6606
  %vm6608 = vcmask 441344
  %v6609 = vsel %vm6608, %v6595, %v6597
  %v6610 = vsel %vm6608, %v6597, %v6599
  %v6611 = vsel %vm6608, %v6599, %v6601
  %v6612 = vsel %vm6608, %v6601, %v6603
  %v6613 = vsel %vm6608, %v6603, %v6605
  %v6614 = vsel %vm6608, %v6605, %v6607
  %v6622 = vsel %vm1618, %v6592, 0
  %v6625 = vsel %vm1618, %v6593, 0
  %6627 = vmatprep.subr.bf16.mxu0 %v6610
  %6628 = vmatpush1.bf16.msra.mxu0 %v6609
  %6629 = vmatprep.subr.bf16.mxu0 0
  %6630 = vmatpush1.bf16.msra.mxu0 0
  %6631 = vmatprep.subr.bf16.mxu0 0
  %6632 = vmatpush1.bf16.msra.mxu0 0
  %6633 = vmatprep.subr.bf16.mxu0 0
  %6634 = vmatpush1.bf16.msra.mxu0 0
  %6635 = vmatprep.subr.bf16.mxu0 0
  %6636 = vmatpush1.bf16.msra.mxu0 0
  %6637 = vmatprep.subr.bf16.mxu0 0
  %6638 = vmatpush1.bf16.msra.mxu0 0
  %6639 = vmatprep.subr.bf16.mxu0 0
  %6640 = vmatpush1.bf16.msra.mxu0 0
  %6641 = vmatprep.subr.bf16.mxu0 0
  %6642 = vmatpush1.bf16.msra.mxu0 0
  %6643 = vmatprep.subr.bf16.mxu0 0
  %6644 = vmatpush1.bf16.msra.mxu0 0
  %6645 = vmatprep.subr.bf16.mxu0 0
  %6646 = vmatpush1.bf16.msra.mxu0 0
  %6647 = vmatprep.subr.bf16.mxu0 0
  %6648 = vmatpush1.bf16.msra.mxu0 0
  %6649 = vmatprep.subr.bf16.mxu0 0
  %6650 = vmatpush1.bf16.msra.mxu0 0
  %6651 = vmatprep.subr.bf16.mxu0 0
  %6652 = vmatpush1.bf16.msra.mxu0 0
  %6653 = vmatprep.subr.bf16.mxu0 0
  %6654 = vmatpush1.bf16.msra.mxu0 0
  %6655 = vmatprep.subr.bf16.mxu0 0
  %6656 = vmatpush1.bf16.msra.mxu0 0
  %6657 = vmatprep.subr.bf16.mxu0 0
  %6658 = vmatpush1.bf16.msra.mxu0 0
  %6659 = vmatprep.mubr.bf16.mxu0 0
  %6660 = vmatmul.mubr.bf16.gmra.mrb[0].mxu0 %v6622
  %v6661 = vpop.f32.mrb[0].mxu0
  %v6662 = vadd.f32 0.0, %v6661
  %v6663 = vpop.f32.mrb[0].mxu0
  %v6664 = vadd.f32 0.0, %v6663
  %v6665 = vpop.f32.mrb[0].mxu0
  %v6666 = vadd.f32 0.0, %v6665
  %v6667 = vpop.f32.mrb[0].mxu0
  %v6668 = vadd.f32 0.0, %v6667
  %6669 = vmatprep.mubr.bf16.mxu0 0
  %6670 = vmatmul.mubr.bf16.gmra.mrb[0].mxu0 %v6625
  %v6671 = vpop.f32.mrb[0].mxu0
  %v6672 = vadd.f32 0.0, %v6671
  %v6673 = vpop.f32.mrb[0].mxu0
  %v6674 = vadd.f32 0.0, %v6673
  %v6675 = vpop.f32.mrb[0].mxu0
  %v6676 = vadd.f32 0.0, %v6675
  %v6677 = vpop.f32.mrb[0].mxu0
  %v6678 = vadd.f32 0.0, %v6677
  %6679 = vdwg.mxu0
  %6680 = vmatprep.subr.bf16.mxu0 %v6612
  %6681 = vmatpush1.bf16.msra.mxu0 %v6611
  %6682 = vmatprep.subr.bf16.mxu0 0
  %6683 = vmatpush1.bf16.msra.mxu0 0
  %6684 = vmatprep.subr.bf16.mxu0 0
  %6685 = vmatpush1.bf16.msra.mxu0 0
  %6686 = vmatprep.subr.bf16.mxu0 0
  %6687 = vmatpush1.bf16.msra.mxu0 0
  %6688 = vmatprep.subr.bf16.mxu0 0
  %6689 = vmatpush1.bf16.msra.mxu0 0
  %6690 = vmatprep.subr.bf16.mxu0 0
  %6691 = vmatpush1.bf16.msra.mxu0 0
  %6692 = vmatprep.subr.bf16.mxu0 0
  %6693 = vmatpush1.bf16.msra.mxu0 0
  %6694 = vmatprep.subr.bf16.mxu0 0
  %6695 = vmatpush1.bf16.msra.mxu0 0
  %6696 = vmatprep.subr.bf16.mxu0 0
  %6697 = vmatpush1.bf16.msra.mxu0 0
  %6698 = vmatprep.subr.bf16.mxu0 0
  %6699 = vmatpush1.bf16.msra.mxu0 0
  %6700 = vmatprep.subr.bf16.mxu0 0
  %6701 = vmatpush1.bf16.msra.mxu0 0
  %6702 = vmatprep.subr.bf16.mxu0 0
  %6703 = vmatpush1.bf16.msra.mxu0 0
  %6704 = vmatprep.subr.bf16.mxu0 0
  %6705 = vmatpush1.bf16.msra.mxu0 0
  %6706 = vmatprep.subr.bf16.mxu0 0
  %6707 = vmatpush1.bf16.msra.mxu0 0
  %6708 = vmatprep.subr.bf16.mxu0 0
  %6709 = vmatpush1.bf16.msra.mxu0 0
  %6710 = vmatprep.subr.bf16.mxu0 0
  %6711 = vmatpush1.bf16.msra.mxu0 0
  %6712 = vmatprep.mubr.bf16.mxu0 0
  %6713 = vmatmul.mubr.bf16.gmra.mrb[0].mxu0 %v6622
  %v6714 = vpop.f32.mrb[0].mxu0
  %v6715 = vadd.f32 0.0, %v6714
  %v6716 = vpop.f32.mrb[0].mxu0
  %v6717 = vadd.f32 0.0, %v6716
  %v6718 = vpop.f32.mrb[0].mxu0
  %v6719 = vadd.f32 0.0, %v6718
  %v6720 = vpop.f32.mrb[0].mxu0
  %v6721 = vadd.f32 0.0, %v6720
  %6722 = vmatprep.mubr.bf16.mxu0 0
  %6723 = vmatmul.mubr.bf16.gmra.mrb[0].mxu0 %v6625
  %v6724 = vpop.f32.mrb[0].mxu0
  %v6725 = vadd.f32 0.0, %v6724
  %v6726 = vpop.f32.mrb[0].mxu0
  %v6727 = vadd.f32 0.0, %v6726
  %v6728 = vpop.f32.mrb[0].mxu0
  %v6729 = vadd.f32 0.0, %v6728
  %v6730 = vpop.f32.mrb[0].mxu0
  %v6731 = vadd.f32 0.0, %v6730
  %6732 = vdwg.mxu0
  %6733 = vmatprep.subr.bf16.mxu0 %v6614
  %6734 = vmatpush1.bf16.msra.mxu0 %v6613
  %6735 = vmatprep.subr.bf16.mxu0 0
  %6736 = vmatpush1.bf16.msra.mxu0 0
  %6737 = vmatprep.subr.bf16.mxu0 0
  %6738 = vmatpush1.bf16.msra.mxu0 0
  %6739 = vmatprep.subr.bf16.mxu0 0
  %6740 = vmatpush1.bf16.msra.mxu0 0
  %6741 = vmatprep.subr.bf16.mxu0 0
  %6742 = vmatpush1.bf16.msra.mxu0 0
  %6743 = vmatprep.subr.bf16.mxu0 0
  %6744 = vmatpush1.bf16.msra.mxu0 0
  %6745 = vmatprep.subr.bf16.mxu0 0
  %6746 = vmatpush1.bf16.msra.mxu0 0
  %6747 = vmatprep.subr.bf16.mxu0 0
  %6748 = vmatpush1.bf16.msra.mxu0 0
  %6749 = vmatprep.subr.bf16.mxu0 0
  %6750 = vmatpush1.bf16.msra.mxu0 0
  %6751 = vmatprep.subr.bf16.mxu0 0
  %6752 = vmatpush1.bf16.msra.mxu0 0
  %6753 = vmatprep.subr.bf16.mxu0 0
  %6754 = vmatpush1.bf16.msra.mxu0 0
  %6755 = vmatprep.subr.bf16.mxu0 0
  %6756 = vmatpush1.bf16.msra.mxu0 0
  %6757 = vmatprep.subr.bf16.mxu0 0
  %6758 = vmatpush1.bf16.msra.mxu0 0
  %6759 = vmatprep.subr.bf16.mxu0 0
  %6760 = vmatpush1.bf16.msra.mxu0 0
  %6761 = vmatprep.subr.bf16.mxu0 0
  %6762 = vmatpush1.bf16.msra.mxu0 0
  %6763 = vmatprep.subr.bf16.mxu0 0
  %6764 = vmatpush1.bf16.msra.mxu0 0
  %6765 = vmatprep.mubr.bf16.mxu0 0
  %6766 = vmatmul.mubr.bf16.gmra.mrb[0].mxu0 %v6622
  %v6767 = vpop.f32.mrb[0].mxu0
  %v6768 = vadd.f32 0.0, %v6767
  %v6769 = vpop.f32.mrb[0].mxu0
  %v6770 = vadd.f32 0.0, %v6769
  %v6771 = vpop.f32.mrb[0].mxu0
  %v6772 = vadd.f32 0.0, %v6771
  %v6773 = vpop.f32.mrb[0].mxu0
  %v6774 = vadd.f32 0.0, %v6773
  %6775 = vmatprep.mubr.bf16.mxu0 0
  %6776 = vmatmul.mubr.bf16.gmra.mrb[0].mxu0 %v6625
  %v6777 = vpop.f32.mrb[0].mxu0
  %v6778 = vadd.f32 0.0, %v6777
  %v6779 = vpop.f32.mrb[0].mxu0
  %v6780 = vadd.f32 0.0, %v6779
  %v6781 = vpop.f32.mrb[0].mxu0
  %v6782 = vadd.f32 0.0, %v6781
  %v6783 = vpop.f32.mrb[0].mxu0
  %v6784 = vadd.f32 0.0, %v6783
  %6785 = vdwg.mxu0
  %v6786 = vadd.f32 %v6555, %v6662
  %v6787 = vadd.f32 %v6556, %v6664
  %v6788 = vadd.f32 %v6557, %v6715
  %v6789 = vadd.f32 %v6558, %v6717
  %v6790 = vadd.f32 %v6559, %v6768
  %v6791 = vadd.f32 %v6560, %v6770
  %v6792 = vadd.f32 %v6561, %v6666
  %v6793 = vadd.f32 %v6562, %v6668
  %v6794 = vadd.f32 %v6563, %v6719
  %v6795 = vadd.f32 %v6564, %v6721
  %v6796 = vadd.f32 %v6565, %v6772
  %v6797 = vadd.f32 %v6566, %v6774
  %v6798 = vadd.f32 %v6567, %v6672
  %v6799 = vadd.f32 %v6568, %v6674
  %v6800 = vadd.f32 %v6569, %v6725
  %v6801 = vadd.f32 %v6570, %v6727
  %v6802 = vadd.f32 %v6571, %v6778
  %v6803 = vadd.f32 %v6572, %v6780
  %v6804 = vadd.f32 %v6573, %v6676
  %v6805 = vadd.f32 %v6574, %v6678
  %v6806 = vadd.f32 %v6575, %v6729
  %v6807 = vadd.f32 %v6576, %v6731
  %v6808 = vadd.f32 %v6577, %v6782
  %v6809 = vadd.f32 %v6578, %v6784
  %s6810 = scalar_lea.vmem %s4, 368
  %v6811 = vld [vmem:[%s6810] sm:$0xf]
  %v6812 = vld [vmem:[%s6810 + $0x4] sm:$0xf]
  %v6813 = vld [vmem:[%s6810 + $0x8] sm:$0xf]
  %v6814 = vld [vmem:[%s6810 + $0xc] sm:$0xf]
  %v6819 = vunpack.c.l.b16 %v6811
  %v6820 = vunpack.c.l.b16 %v6812
  %v6821 = vunpack.c.l.b16 %v6813
  %v6822 = vunpack.c.l.b16 %v6814
  %v6823 = vpack.c.b16 %v6820, %v6819
  %v6824 = vpack.c.b16 %v6822, %v6821
  %6825 = vrot.lane.b32.xlu0 %v1567, 53
  %v6826 = vpop.permute.xlu0 %6825
  %6827 = vrot.lane.b32.xlu0 %v1568, 53
  %v6828 = vpop.permute.xlu0 %6827
  %6829 = vrot.lane.b32.xlu0 %v1569, 53
  %v6830 = vpop.permute.xlu0 %6829
  %6831 = vrot.lane.b32.xlu0 %v1570, 53
  %v6832 = vpop.permute.xlu0 %6831
  %6833 = vrot.lane.b32.xlu0 %v1571, 53
  %v6834 = vpop.permute.xlu0 %6833
  %6835 = vrot.lane.b32.xlu0 %v1572, 53
  %v6836 = vpop.permute.xlu0 %6835
  %6837 = vrot.lane.b32.xlu0 %v1573, 53
  %v6838 = vpop.permute.xlu0 %6837
  %vm6839 = vcmask 433152
  %v6840 = vsel %vm6839, %v6826, %v6828
  %v6841 = vsel %vm6839, %v6828, %v6830
  %v6842 = vsel %vm6839, %v6830, %v6832
  %v6843 = vsel %vm6839, %v6832, %v6834
  %v6844 = vsel %vm6839, %v6834, %v6836
  %v6845 = vsel %vm6839, %v6836, %v6838
  %v6853 = vsel %vm1618, %v6823, 0
  %v6856 = vsel %vm1618, %v6824, 0
  %6858 = vmatprep.subr.bf16.mxu0 %v6841
  %6859 = vmatpush1.bf16.msra.mxu0 %v6840
  %6860 = vmatprep.subr.bf16.mxu0 0
  %6861 = vmatpush1.bf16.msra.mxu0 0
  %6862 = vmatprep.subr.bf16.mxu0 0
  %6863 = vmatpush1.bf16.msra.mxu0 0
  %6864 = vmatprep.subr.bf16.mxu0 0
  %6865 = vmatpush1.bf16.msra.mxu0 0
  %6866 = vmatprep.subr.bf16.mxu0 0
  %6867 = vmatpush1.bf16.msra.mxu0 0
  %6868 = vmatprep.subr.bf16.mxu0 0
  %6869 = vmatpush1.bf16.msra.mxu0 0
  %6870 = vmatprep.subr.bf16.mxu0 0
  %6871 = vmatpush1.bf16.msra.mxu0 0
  %6872 = vmatprep.subr.bf16.mxu0 0
  %6873 = vmatpush1.bf16.msra.mxu0 0
  %6874 = vmatprep.subr.bf16.mxu0 0
  %6875 = vmatpush1.bf16.msra.mxu0 0
  %6876 = vmatprep.subr.bf16.mxu0 0
  %6877 = vmatpush1.bf16.msra.mxu0 0
  %6878 = vmatprep.subr.bf16.mxu0 0
  %6879 = vmatpush1.bf16.msra.mxu0 0
  %6880 = vmatprep.subr.bf16.mxu0 0
  %6881 = vmatpush1.bf16.msra.mxu0 0
  %6882 = vmatprep.subr.bf16.mxu0 0
  %6883 = vmatpush1.bf16.msra.mxu0 0
  %6884 = vmatprep.subr.bf16.mxu0 0
  %6885 = vmatpush1.bf16.msra.mxu0 0
  %6886 = vmatprep.subr.bf16.mxu0 0
  %6887 = vmatpush1.bf16.msra.mxu0 0
  %6888 = vmatprep.subr.bf16.mxu0 0
  %6889 = vmatpush1.bf16.msra.mxu0 0
  %6890 = vmatprep.mubr.bf16.mxu0 0
  %6891 = vmatmul.mubr.bf16.gmra.mrb[0].mxu0 %v6853
  %v6892 = vpop.f32.mrb[0].mxu0
  %v6893 = vadd.f32 0.0, %v6892
  %v6894 = vpop.f32.mrb[0].mxu0
  %v6895 = vadd.f32 0.0, %v6894
  %v6896 = vpop.f32.mrb[0].mxu0
  %v6897 = vadd.f32 0.0, %v6896
  %v6898 = vpop.f32.mrb[0].mxu0
  %v6899 = vadd.f32 0.0, %v6898
  %6900 = vmatprep.mubr.bf16.mxu0 0
  %6901 = vmatmul.mubr.bf16.gmra.mrb[0].mxu0 %v6856
  %v6902 = vpop.f32.mrb[0].mxu0
  %v6903 = vadd.f32 0.0, %v6902
  %v6904 = vpop.f32.mrb[0].mxu0
  %v6905 = vadd.f32 0.0, %v6904
  %v6906 = vpop.f32.mrb[0].mxu0
  %v6907 = vadd.f32 0.0, %v6906
  %v6908 = vpop.f32.mrb[0].mxu0
  %v6909 = vadd.f32 0.0, %v6908
  %6910 = vdwg.mxu0
  %6911 = vmatprep.subr.bf16.mxu0 %v6843
  %6912 = vmatpush1.bf16.msra.mxu0 %v6842
  %6913 = vmatprep.subr.bf16.mxu0 0
  %6914 = vmatpush1.bf16.msra.mxu0 0
  %6915 = vmatprep.subr.bf16.mxu0 0
  %6916 = vmatpush1.bf16.msra.mxu0 0
  %6917 = vmatprep.subr.bf16.mxu0 0
  %6918 = vmatpush1.bf16.msra.mxu0 0
  %6919 = vmatprep.subr.bf16.mxu0 0
  %6920 = vmatpush1.bf16.msra.mxu0 0
  %6921 = vmatprep.subr.bf16.mxu0 0
  %6922 = vmatpush1.bf16.msra.mxu0 0
  %6923 = vmatprep.subr.bf16.mxu0 0
  %6924 = vmatpush1.bf16.msra.mxu0 0
  %6925 = vmatprep.subr.bf16.mxu0 0
  %6926 = vmatpush1.bf16.msra.mxu0 0
  %6927 = vmatprep.subr.bf16.mxu0 0
  %6928 = vmatpush1.bf16.msra.mxu0 0
  %6929 = vmatprep.subr.bf16.mxu0 0
  %6930 = vmatpush1.bf16.msra.mxu0 0
  %6931 = vmatprep.subr.bf16.mxu0 0
  %6932 = vmatpush1.bf16.msra.mxu0 0
  %6933 = vmatprep.subr.bf16.mxu0 0
  %6934 = vmatpush1.bf16.msra.mxu0 0
  %6935 = vmatprep.subr.bf16.mxu0 0
  %6936 = vmatpush1.bf16.msra.mxu0 0
  %6937 = vmatprep.subr.bf16.mxu0 0
  %6938 = vmatpush1.bf16.msra.mxu0 0
  %6939 = vmatprep.subr.bf16.mxu0 0
  %6940 = vmatpush1.bf16.msra.mxu0 0
  %6941 = vmatprep.subr.bf16.mxu0 0
  %6942 = vmatpush1.bf16.msra.mxu0 0
  %6943 = vmatprep.mubr.bf16.mxu0 0
  %6944 = vmatmul.mubr.bf16.gmra.mrb[0].mxu0 %v6853
  %v6945 = vpop.f32.mrb[0].mxu0
  %v6946 = vadd.f32 0.0, %v6945
  %v6947 = vpop.f32.mrb[0].mxu0
  %v6948 = vadd.f32 0.0, %v6947
  %v6949 = vpop.f32.mrb[0].mxu0
  %v6950 = vadd.f32 0.0, %v6949
  %v6951 = vpop.f32.mrb[0].mxu0
  %v6952 = vadd.f32 0.0, %v6951
  %6953 = vmatprep.mubr.bf16.mxu0 0
  %6954 = vmatmul.mubr.bf16.gmra.mrb[0].mxu0 %v6856
  %v6955 = vpop.f32.mrb[0].mxu0
  %v6956 = vadd.f32 0.0, %v6955
  %v6957 = vpop.f32.mrb[0].mxu0
  %v6958 = vadd.f32 0.0, %v6957
  %v6959 = vpop.f32.mrb[0].mxu0
  %v6960 = vadd.f32 0.0, %v6959
  %v6961 = vpop.f32.mrb[0].mxu0
  %v6962 = vadd.f32 0.0, %v6961
  %6963 = vdwg.mxu0
  %6964 = vmatprep.subr.bf16.mxu0 %v6845
  %6965 = vmatpush1.bf16.msra.mxu0 %v6844
  %6966 = vmatprep.subr.bf16.mxu0 0
  %6967 = vmatpush1.bf16.msra.mxu0 0
  %6968 = vmatprep.subr.bf16.mxu0 0
  %6969 = vmatpush1.bf16.msra.mxu0 0
  %6970 = vmatprep.subr.bf16.mxu0 0
  %6971 = vmatpush1.bf16.msra.mxu0 0
  %6972 = vmatprep.subr.bf16.mxu0 0
  %6973 = vmatpush1.bf16.msra.mxu0 0
  %6974 = vmatprep.subr.bf16.mxu0 0
  %6975 = vmatpush1.bf16.msra.mxu0 0
  %6976 = vmatprep.subr.bf16.mxu0 0
  %6977 = vmatpush1.bf16.msra.mxu0 0
  %6978 = vmatprep.subr.bf16.mxu0 0
  %6979 = vmatpush1.bf16.msra.mxu0 0
  %6980 = vmatprep.subr.bf16.mxu0 0
  %6981 = vmatpush1.bf16.msra.mxu0 0
  %6982 = vmatprep.subr.bf16.mxu0 0
  %6983 = vmatpush1.bf16.msra.mxu0 0
  %6984 = vmatprep.subr.bf16.mxu0 0
  %6985 = vmatpush1.bf16.msra.mxu0 0
  %6986 = vmatprep.subr.bf16.mxu0 0
  %6987 = vmatpush1.bf16.msra.mxu0 0
  %6988 = vmatprep.subr.bf16.mxu0 0
  %6989 = vmatpush1.bf16.msra.mxu0 0
  %6990 = vmatprep.subr.bf16.mxu0 0
  %6991 = vmatpush1.bf16.msra.mxu0 0
  %6992 = vmatprep.subr.bf16.mxu0 0
  %6993 = vmatpush1.bf16.msra.mxu0 0
  %6994 = vmatprep.subr.bf16.mxu0 0
  %6995 = vmatpush1.bf16.msra.mxu0 0
  %6996 = vmatprep.mubr.bf16.mxu0 0
  %6997 = vmatmul.mubr.bf16.gmra.mrb[0].mxu0 %v6853
  %v6998 = vpop.f32.mrb[0].mxu0
  %v6999 = vadd.f32 0.0, %v6998
  %v7000 = vpop.f32.mrb[0].mxu0
  %v7001 = vadd.f32 0.0, %v7000
  %v7002 = vpop.f32.mrb[0].mxu0
  %v7003 = vadd.f32 0.0, %v7002
  %v7004 = vpop.f32.mrb[0].mxu0
  %v7005 = vadd.f32 0.0, %v7004
  %7006 = vmatprep.mubr.bf16.mxu0 0
  %7007 = vmatmul.mubr.bf16.gmra.mrb[0].mxu0 %v6856
  %v7008 = vpop.f32.mrb[0].mxu0
  %v7009 = vadd.f32 0.0, %v7008
  %v7010 = vpop.f32.mrb[0].mxu0
  %v7011 = vadd.f32 0.0, %v7010
  %v7012 = vpop.f32.mrb[0].mxu0
  %v7013 = vadd.f32 0.0, %v7012
  %v7014 = vpop.f32.mrb[0].mxu0
  %v7015 = vadd.f32 0.0, %v7014
  %7016 = vdwg.mxu0
  %v7017 = vadd.f32 %v6786, %v6893
  %v7018 = vadd.f32 %v6787, %v6895
  %v7019 = vadd.f32 %v6788, %v6946
  %v7020 = vadd.f32 %v6789, %v6948
  %v7021 = vadd.f32 %v6790, %v6999
  %v7022 = vadd.f32 %v6791, %v7001
  %v7023 = vadd.f32 %v6792, %v6897
  %v7024 = vadd.f32 %v6793, %v6899
  %v7025 = vadd.f32 %v6794, %v6950
  %v7026 = vadd.f32 %v6795, %v6952
  %v7027 = vadd.f32 %v6796, %v7003
  %v7028 = vadd.f32 %v6797, %v7005
  %v7029 = vadd.f32 %v6798, %v6903
  %v7030 = vadd.f32 %v6799, %v6905
  %v7031 = vadd.f32 %v6800, %v6956
  %v7032 = vadd.f32 %v6801, %v6958
  %v7033 = vadd.f32 %v6802, %v7009
  %v7034 = vadd.f32 %v6803, %v7011
  %v7035 = vadd.f32 %v6804, %v6907
  %v7036 = vadd.f32 %v6805, %v6909
  %v7037 = vadd.f32 %v6806, %v6960
  %v7038 = vadd.f32 %v6807, %v6962
  %v7039 = vadd.f32 %v6808, %v7013
  %v7040 = vadd.f32 %v6809, %v7015
  %s7041 = scalar_lea.vmem %s4, 384
  %v7042 = vld [vmem:[%s7041] sm:$0xf]
  %v7043 = vld [vmem:[%s7041 + $0x4] sm:$0xf]
  %v7044 = vld [vmem:[%s7041 + $0x8] sm:$0xf]
  %v7045 = vld [vmem:[%s7041 + $0xc] sm:$0xf]
  %v7050 = vunpack.c.l.b16 %v7042
  %v7051 = vunpack.c.l.b16 %v7043
  %v7052 = vunpack.c.l.b16 %v7044
  %v7053 = vunpack.c.l.b16 %v7045
  %v7054 = vpack.c.b16 %v7051, %v7050
  %v7055 = vpack.c.b16 %v7053, %v7052
  %7056 = vrot.lane.b32.xlu0 %v1567, 52
  %v7057 = vpop.permute.xlu0 %7056
  %7058 = vrot.lane.b32.xlu0 %v1568, 52
  %v7059 = vpop.permute.xlu0 %7058
  %7060 = vrot.lane.b32.xlu0 %v1569, 52
  %v7061 = vpop.permute.xlu0 %7060
  %7062 = vrot.lane.b32.xlu0 %v1570, 52
  %v7063 = vpop.permute.xlu0 %7062
  %7064 = vrot.lane.b32.xlu0 %v1571, 52
  %v7065 = vpop.permute.xlu0 %7064
  %7066 = vrot.lane.b32.xlu0 %v1572, 52
  %v7067 = vpop.permute.xlu0 %7066
  %7068 = vrot.lane.b32.xlu0 %v1573, 52
  %v7069 = vpop.permute.xlu0 %7068
  %vm7070 = vcmask 424960
  %v7071 = vsel %vm7070, %v7057, %v7059
  %v7072 = vsel %vm7070, %v7059, %v7061
  %v7073 = vsel %vm7070, %v7061, %v7063
  %v7074 = vsel %vm7070, %v7063, %v7065
  %v7075 = vsel %vm7070, %v7065, %v7067
  %v7076 = vsel %vm7070, %v7067, %v7069
  %v7084 = vsel %vm1618, %v7054, 0
  %v7087 = vsel %vm1618, %v7055, 0
  %7089 = vmatprep.subr.bf16.mxu0 %v7072
  %7090 = vmatpush1.bf16.msra.mxu0 %v7071
  %7091 = vmatprep.subr.bf16.mxu0 0
  %7092 = vmatpush1.bf16.msra.mxu0 0
  %7093 = vmatprep.subr.bf16.mxu0 0
  %7094 = vmatpush1.bf16.msra.mxu0 0
  %7095 = vmatprep.subr.bf16.mxu0 0
  %7096 = vmatpush1.bf16.msra.mxu0 0
  %7097 = vmatprep.subr.bf16.mxu0 0
  %7098 = vmatpush1.bf16.msra.mxu0 0
  %7099 = vmatprep.subr.bf16.mxu0 0
  %7100 = vmatpush1.bf16.msra.mxu0 0
  %7101 = vmatprep.subr.bf16.mxu0 0
  %7102 = vmatpush1.bf16.msra.mxu0 0
  %7103 = vmatprep.subr.bf16.mxu0 0
  %7104 = vmatpush1.bf16.msra.mxu0 0
  %7105 = vmatprep.subr.bf16.mxu0 0
  %7106 = vmatpush1.bf16.msra.mxu0 0
  %7107 = vmatprep.subr.bf16.mxu0 0
  %7108 = vmatpush1.bf16.msra.mxu0 0
  %7109 = vmatprep.subr.bf16.mxu0 0
  %7110 = vmatpush1.bf16.msra.mxu0 0
  %7111 = vmatprep.subr.bf16.mxu0 0
  %7112 = vmatpush1.bf16.msra.mxu0 0
  %7113 = vmatprep.subr.bf16.mxu0 0
  %7114 = vmatpush1.bf16.msra.mxu0 0
  %7115 = vmatprep.subr.bf16.mxu0 0
  %7116 = vmatpush1.bf16.msra.mxu0 0
  %7117 = vmatprep.subr.bf16.mxu0 0
  %7118 = vmatpush1.bf16.msra.mxu0 0
  %7119 = vmatprep.subr.bf16.mxu0 0
  %7120 = vmatpush1.bf16.msra.mxu0 0
  %7121 = vmatprep.mubr.bf16.mxu0 0
  %7122 = vmatmul.mubr.bf16.gmra.mrb[0].mxu0 %v7084
  %v7123 = vpop.f32.mrb[0].mxu0
  %v7124 = vadd.f32 0.0, %v7123
  %v7125 = vpop.f32.mrb[0].mxu0
  %v7126 = vadd.f32 0.0, %v7125
  %v7127 = vpop.f32.mrb[0].mxu0
  %v7128 = vadd.f32 0.0, %v7127
  %v7129 = vpop.f32.mrb[0].mxu0
  %v7130 = vadd.f32 0.0, %v7129
  %7131 = vmatprep.mubr.bf16.mxu0 0
  %7132 = vmatmul.mubr.bf16.gmra.mrb[0].mxu0 %v7087
  %v7133 = vpop.f32.mrb[0].mxu0
  %v7134 = vadd.f32 0.0, %v7133
  %v7135 = vpop.f32.mrb[0].mxu0
  %v7136 = vadd.f32 0.0, %v7135
  %v7137 = vpop.f32.mrb[0].mxu0
  %v7138 = vadd.f32 0.0, %v7137
  %v7139 = vpop.f32.mrb[0].mxu0
  %v7140 = vadd.f32 0.0, %v7139
  %7141 = vdwg.mxu0
  %7142 = vmatprep.subr.bf16.mxu0 %v7074
  %7143 = vmatpush1.bf16.msra.mxu0 %v7073
  %7144 = vmatprep.subr.bf16.mxu0 0
  %7145 = vmatpush1.bf16.msra.mxu0 0
  %7146 = vmatprep.subr.bf16.mxu0 0
  %7147 = vmatpush1.bf16.msra.mxu0 0
  %7148 = vmatprep.subr.bf16.mxu0 0
  %7149 = vmatpush1.bf16.msra.mxu0 0
  %7150 = vmatprep.subr.bf16.mxu0 0
  %7151 = vmatpush1.bf16.msra.mxu0 0
  %7152 = vmatprep.subr.bf16.mxu0 0
  %7153 = vmatpush1.bf16.msra.mxu0 0
  %7154 = vmatprep.subr.bf16.mxu0 0
  %7155 = vmatpush1.bf16.msra.mxu0 0
  %7156 = vmatprep.subr.bf16.mxu0 0
  %7157 = vmatpush1.bf16.msra.mxu0 0
  %7158 = vmatprep.subr.bf16.mxu0 0
  %7159 = vmatpush1.bf16.msra.mxu0 0
  %7160 = vmatprep.subr.bf16.mxu0 0
  %7161 = vmatpush1.bf16.msra.mxu0 0
  %7162 = vmatprep.subr.bf16.mxu0 0
  %7163 = vmatpush1.bf16.msra.mxu0 0
  %7164 = vmatprep.subr.bf16.mxu0 0
  %7165 = vmatpush1.bf16.msra.mxu0 0
  %7166 = vmatprep.subr.bf16.mxu0 0
  %7167 = vmatpush1.bf16.msra.mxu0 0
  %7168 = vmatprep.subr.bf16.mxu0 0
  %7169 = vmatpush1.bf16.msra.mxu0 0
  %7170 = vmatprep.subr.bf16.mxu0 0
  %7171 = vmatpush1.bf16.msra.mxu0 0
  %7172 = vmatprep.subr.bf16.mxu0 0
  %7173 = vmatpush1.bf16.msra.mxu0 0
  %7174 = vmatprep.mubr.bf16.mxu0 0
  %7175 = vmatmul.mubr.bf16.gmra.mrb[0].mxu0 %v7084
  %v7176 = vpop.f32.mrb[0].mxu0
  %v7177 = vadd.f32 0.0, %v7176
  %v7178 = vpop.f32.mrb[0].mxu0
  %v7179 = vadd.f32 0.0, %v7178
  %v7180 = vpop.f32.mrb[0].mxu0
  %v7181 = vadd.f32 0.0, %v7180
  %v7182 = vpop.f32.mrb[0].mxu0
  %v7183 = vadd.f32 0.0, %v7182
  %7184 = vmatprep.mubr.bf16.mxu0 0
  %7185 = vmatmul.mubr.bf16.gmra.mrb[0].mxu0 %v7087
  %v7186 = vpop.f32.mrb[0].mxu0
  %v7187 = vadd.f32 0.0, %v7186
  %v7188 = vpop.f32.mrb[0].mxu0
  %v7189 = vadd.f32 0.0, %v7188
  %v7190 = vpop.f32.mrb[0].mxu0
  %v7191 = vadd.f32 0.0, %v7190
  %v7192 = vpop.f32.mrb[0].mxu0
  %v7193 = vadd.f32 0.0, %v7192
  %7194 = vdwg.mxu0
  %7195 = vmatprep.subr.bf16.mxu0 %v7076
  %7196 = vmatpush1.bf16.msra.mxu0 %v7075
  %7197 = vmatprep.subr.bf16.mxu0 0
  %7198 = vmatpush1.bf16.msra.mxu0 0
  %7199 = vmatprep.subr.bf16.mxu0 0
  %7200 = vmatpush1.bf16.msra.mxu0 0
  %7201 = vmatprep.subr.bf16.mxu0 0
  %7202 = vmatpush1.bf16.msra.mxu0 0
  %7203 = vmatprep.subr.bf16.mxu0 0
  %7204 = vmatpush1.bf16.msra.mxu0 0
  %7205 = vmatprep.subr.bf16.mxu0 0
  %7206 = vmatpush1.bf16.msra.mxu0 0
  %7207 = vmatprep.subr.bf16.mxu0 0
  %7208 = vmatpush1.bf16.msra.mxu0 0
  %7209 = vmatprep.subr.bf16.mxu0 0
  %7210 = vmatpush1.bf16.msra.mxu0 0
  %7211 = vmatprep.subr.bf16.mxu0 0
  %7212 = vmatpush1.bf16.msra.mxu0 0
  %7213 = vmatprep.subr.bf16.mxu0 0
  %7214 = vmatpush1.bf16.msra.mxu0 0
  %7215 = vmatprep.subr.bf16.mxu0 0
  %7216 = vmatpush1.bf16.msra.mxu0 0
  %7217 = vmatprep.subr.bf16.mxu0 0
  %7218 = vmatpush1.bf16.msra.mxu0 0
  %7219 = vmatprep.subr.bf16.mxu0 0
  %7220 = vmatpush1.bf16.msra.mxu0 0
  %7221 = vmatprep.subr.bf16.mxu0 0
  %7222 = vmatpush1.bf16.msra.mxu0 0
  %7223 = vmatprep.subr.bf16.mxu0 0
  %7224 = vmatpush1.bf16.msra.mxu0 0
  %7225 = vmatprep.subr.bf16.mxu0 0
  %7226 = vmatpush1.bf16.msra.mxu0 0
  %7227 = vmatprep.mubr.bf16.mxu0 0
  %7228 = vmatmul.mubr.bf16.gmra.mrb[0].mxu0 %v7084
  %v7229 = vpop.f32.mrb[0].mxu0
  %v7230 = vadd.f32 0.0, %v7229
  %v7231 = vpop.f32.mrb[0].mxu0
  %v7232 = vadd.f32 0.0, %v7231
  %v7233 = vpop.f32.mrb[0].mxu0
  %v7234 = vadd.f32 0.0, %v7233
  %v7235 = vpop.f32.mrb[0].mxu0
  %v7236 = vadd.f32 0.0, %v7235
  %7237 = vmatprep.mubr.bf16.mxu0 0
  %7238 = vmatmul.mubr.bf16.gmra.mrb[0].mxu0 %v7087
  %v7239 = vpop.f32.mrb[0].mxu0
  %v7240 = vadd.f32 0.0, %v7239
  %v7241 = vpop.f32.mrb[0].mxu0
  %v7242 = vadd.f32 0.0, %v7241
  %v7243 = vpop.f32.mrb[0].mxu0
  %v7244 = vadd.f32 0.0, %v7243
  %v7245 = vpop.f32.mrb[0].mxu0
  %v7246 = vadd.f32 0.0, %v7245
  %7247 = vdwg.mxu0
  %v7248 = vadd.f32 %v7017, %v7124
  %v7249 = vadd.f32 %v7018, %v7126
  %v7250 = vadd.f32 %v7019, %v7177
  %v7251 = vadd.f32 %v7020, %v7179
  %v7252 = vadd.f32 %v7021, %v7230
  %v7253 = vadd.f32 %v7022, %v7232
  %v7254 = vadd.f32 %v7023, %v7128
  %v7255 = vadd.f32 %v7024, %v7130
  %v7256 = vadd.f32 %v7025, %v7181
  %v7257 = vadd.f32 %v7026, %v7183
  %v7258 = vadd.f32 %v7027, %v7234
  %v7259 = vadd.f32 %v7028, %v7236
  %v7260 = vadd.f32 %v7029, %v7134
  %v7261 = vadd.f32 %v7030, %v7136
  %v7262 = vadd.f32 %v7031, %v7187
  %v7263 = vadd.f32 %v7032, %v7189
  %v7264 = vadd.f32 %v7033, %v7240
  %v7265 = vadd.f32 %v7034, %v7242
  %v7266 = vadd.f32 %v7035, %v7138
  %v7267 = vadd.f32 %v7036, %v7140
  %v7268 = vadd.f32 %v7037, %v7191
  %v7269 = vadd.f32 %v7038, %v7193
  %v7270 = vadd.f32 %v7039, %v7244
  %v7271 = vadd.f32 %v7040, %v7246
  %7296 = vrot.lane.b32.xlu0 %v7248, 127
  %v7297 = vpop.permute.xlu0 %7296
  %7298 = vrot.lane.b32.xlu0 %v7249, 127
  %v7299 = vpop.permute.xlu0 %7298
  %7300 = vrot.lane.b32.xlu0 %v7250, 127
  %v7301 = vpop.permute.xlu0 %7300
  %7302 = vrot.lane.b32.xlu0 %v7251, 127
  %v7303 = vpop.permute.xlu0 %7302
  %7304 = vrot.lane.b32.xlu0 %v7252, 127
  %v7305 = vpop.permute.xlu0 %7304
  %7306 = vrot.lane.b32.xlu0 %v7253, 127
  %v7307 = vpop.permute.xlu0 %7306
  %7308 = vrot.lane.b32.xlu0 %v7254, 127
  %v7309 = vpop.permute.xlu0 %7308
  %7310 = vrot.lane.b32.xlu0 %v7255, 127
  %v7311 = vpop.permute.xlu0 %7310
  %7312 = vrot.lane.b32.xlu0 %v7256, 127
  %v7313 = vpop.permute.xlu0 %7312
  %7314 = vrot.lane.b32.xlu0 %v7257, 127
  %v7315 = vpop.permute.xlu0 %7314
  %7316 = vrot.lane.b32.xlu0 %v7258, 127
  %v7317 = vpop.permute.xlu0 %7316
  %7318 = vrot.lane.b32.xlu0 %v7259, 127
  %v7319 = vpop.permute.xlu0 %7318
  %7320 = vrot.lane.b32.xlu0 %v7260, 127
  %v7321 = vpop.permute.xlu0 %7320
  %7322 = vrot.lane.b32.xlu0 %v7261, 127
  %v7323 = vpop.permute.xlu0 %7322
  %7324 = vrot.lane.b32.xlu0 %v7262, 127
  %v7325 = vpop.permute.xlu0 %7324
  %7326 = vrot.lane.b32.xlu0 %v7263, 127
  %v7327 = vpop.permute.xlu0 %7326
  %7328 = vrot.lane.b32.xlu0 %v7264, 127
  %v7329 = vpop.permute.xlu0 %7328
  %7330 = vrot.lane.b32.xlu0 %v7265, 127
  %v7331 = vpop.permute.xlu0 %7330
  %7332 = vrot.lane.b32.xlu0 %v7266, 127
  %v7333 = vpop.permute.xlu0 %7332
  %7334 = vrot.lane.b32.xlu0 %v7267, 127
  %v7335 = vpop.permute.xlu0 %7334
  %7336 = vrot.lane.b32.xlu0 %v7268, 127
  %v7337 = vpop.permute.xlu0 %7336
  %7338 = vrot.lane.b32.xlu0 %v7269, 127
  %v7339 = vpop.permute.xlu0 %7338
  %7340 = vrot.lane.b32.xlu0 %v7270, 127
  %v7341 = vpop.permute.xlu0 %7340
  %7342 = vrot.lane.b32.xlu0 %v7271, 127
  %v7343 = vpop.permute.xlu0 %7342
  %v7344 = vsel %vm64, %v7297, %v7299
  %v7345 = vsel %vm64, %v7299, %v7301
  %v7346 = vsel %vm64, %v7301, %v7303
  %v7347 = vsel %vm64, %v7303, %v7305
  %v7348 = vsel %vm64, %v7305, %v7307
  %v7349 = vsel %vm64, %v7309, %v7311
  %v7350 = vsel %vm64, %v7311, %v7313
  %v7351 = vsel %vm64, %v7313, %v7315
  %v7352 = vsel %vm64, %v7315, %v7317
  %v7353 = vsel %vm64, %v7317, %v7319
  %v7354 = vsel %vm64, %v7321, %v7323
  %v7355 = vsel %vm64, %v7323, %v7325
  %v7356 = vsel %vm64, %v7325, %v7327
  %v7357 = vsel %vm64, %v7327, %v7329
  %v7358 = vsel %vm64, %v7329, %v7331
  %v7359 = vsel %vm64, %v7333, %v7335
  %v7360 = vsel %vm64, %v7335, %v7337
  %v7361 = vsel %vm64, %v7337, %v7339
  %v7362 = vsel %vm64, %v7339, %v7341
  %v7363 = vsel %vm64, %v7341, %v7343
  %v7384 = vmax.f32 %v7248, %v7344
  %v7385 = vmax.f32 %v7249, %v7345
  %v7386 = vmax.f32 %v7250, %v7346
  %v7387 = vmax.f32 %v7251, %v7347
  %v7388 = vmax.f32 %v7252, %v7348
  %v7389 = vmax.f32 %v7254, %v7349
  %v7390 = vmax.f32 %v7255, %v7350
  %v7391 = vmax.f32 %v7256, %v7351
  %v7392 = vmax.f32 %v7257, %v7352
  %v7393 = vmax.f32 %v7258, %v7353
  %v7394 = vmax.f32 %v7260, %v7354
  %v7395 = vmax.f32 %v7261, %v7355
  %v7396 = vmax.f32 %v7262, %v7356
  %v7397 = vmax.f32 %v7263, %v7357
  %v7398 = vmax.f32 %v7264, %v7358
  %v7399 = vmax.f32 %v7266, %v7359
  %v7400 = vmax.f32 %v7267, %v7360
  %v7401 = vmax.f32 %v7268, %v7361
  %v7402 = vmax.f32 %v7269, %v7362
  %v7403 = vmax.f32 %v7270, %v7363
  %v7408 = vmax.f32 %v7253, %v7307
  %v7409 = vmax.f32 %v7259, %v7319
  %v7410 = vmax.f32 %v7265, %v7331
  %v7411 = vmax.f32 %v7271, %v7343
  %7436 = vrot.lane.b32.xlu0 %v7384, 110
  %v7437 = vpop.permute.xlu0 %7436
  %7438 = vrot.lane.b32.xlu0 %v7385, 110
  %v7439 = vpop.permute.xlu0 %7438
  %7440 = vrot.lane.b32.xlu0 %v7386, 110
  %v7441 = vpop.permute.xlu0 %7440
  %7442 = vrot.lane.b32.xlu0 %v7387, 110
  %v7443 = vpop.permute.xlu0 %7442
  %7444 = vrot.lane.b32.xlu0 %v7388, 110
  %v7445 = vpop.permute.xlu0 %7444
  %7446 = vrot.lane.b32.xlu0 %v7408, 110
  %v7447 = vpop.permute.xlu0 %7446
  %7448 = vrot.lane.b32.xlu0 %v7389, 110
  %v7449 = vpop.permute.xlu0 %7448
  %7450 = vrot.lane.b32.xlu0 %v7390, 110
  %v7451 = vpop.permute.xlu0 %7450
  %7452 = vrot.lane.b32.xlu0 %v7391, 110
  %v7453 = vpop.permute.xlu0 %7452
  %7454 = vrot.lane.b32.xlu0 %v7392, 110
  %v7455 = vpop.permute.xlu0 %7454
  %7456 = vrot.lane.b32.xlu0 %v7393, 110
  %v7457 = vpop.permute.xlu0 %7456
  %7458 = vrot.lane.b32.xlu0 %v7409, 110
  %v7459 = vpop.permute.xlu0 %7458
  %7460 = vrot.lane.b32.xlu0 %v7394, 110
  %v7461 = vpop.permute.xlu0 %7460
  %7462 = vrot.lane.b32.xlu0 %v7395, 110
  %v7463 = vpop.permute.xlu0 %7462
  %7464 = vrot.lane.b32.xlu0 %v7396, 110
  %v7465 = vpop.permute.xlu0 %7464
  %7466 = vrot.lane.b32.xlu0 %v7397, 110
  %v7467 = vpop.permute.xlu0 %7466
  %7468 = vrot.lane.b32.xlu0 %v7398, 110
  %v7469 = vpop.permute.xlu0 %7468
  %7470 = vrot.lane.b32.xlu0 %v7410, 110
  %v7471 = vpop.permute.xlu0 %7470
  %7472 = vrot.lane.b32.xlu0 %v7399, 110
  %v7473 = vpop.permute.xlu0 %7472
  %7474 = vrot.lane.b32.xlu0 %v7400, 110
  %v7475 = vpop.permute.xlu0 %7474
  %7476 = vrot.lane.b32.xlu0 %v7401, 110
  %v7477 = vpop.permute.xlu0 %7476
  %7478 = vrot.lane.b32.xlu0 %v7402, 110
  %v7479 = vpop.permute.xlu0 %7478
  %7480 = vrot.lane.b32.xlu0 %v7403, 110
  %v7481 = vpop.permute.xlu0 %7480
  %7482 = vrot.lane.b32.xlu0 %v7411, 110
  %v7483 = vpop.permute.xlu0 %7482
  %v7484 = vsel %vm158, %v7437, %v7439
  %v7485 = vsel %vm158, %v7439, %v7441
  %v7486 = vsel %vm158, %v7441, %v7443
  %v7487 = vsel %vm158, %v7443, %v7445
  %v7488 = vsel %vm158, %v7445, %v7447
  %v7489 = vsel %vm158, %v7449, %v7451
  %v7490 = vsel %vm158, %v7451, %v7453
  %v7491 = vsel %vm158, %v7453, %v7455
  %v7492 = vsel %vm158, %v7455, %v7457
  %v7493 = vsel %vm158, %v7457, %v7459
  %v7494 = vsel %vm158, %v7461, %v7463
  %v7495 = vsel %vm158, %v7463, %v7465
  %v7496 = vsel %vm158, %v7465, %v7467
  %v7497 = vsel %vm158, %v7467, %v7469
  %v7498 = vsel %vm158, %v7469, %v7471
  %v7499 = vsel %vm158, %v7473, %v7475
  %v7500 = vsel %vm158, %v7475, %v7477
  %v7501 = vsel %vm158, %v7477, %v7479
  %v7502 = vsel %vm158, %v7479, %v7481
  %v7503 = vsel %vm158, %v7481, %v7483
  %v7524 = vmax.f32 %v7384, %v7484
  %v7525 = vmax.f32 %v7385, %v7485
  %v7526 = vmax.f32 %v7386, %v7486
  %v7527 = vmax.f32 %v7387, %v7487
  %v7528 = vmax.f32 %v7388, %v7488
  %v7529 = vmax.f32 %v7389, %v7489
  %v7530 = vmax.f32 %v7390, %v7490
  %v7531 = vmax.f32 %v7391, %v7491
  %v7532 = vmax.f32 %v7392, %v7492
  %v7533 = vmax.f32 %v7393, %v7493
  %v7534 = vmax.f32 %v7394, %v7494
  %v7535 = vmax.f32 %v7395, %v7495
  %v7536 = vmax.f32 %v7396, %v7496
  %v7537 = vmax.f32 %v7397, %v7497
  %v7538 = vmax.f32 %v7398, %v7498
  %v7539 = vmax.f32 %v7399, %v7499
  %v7540 = vmax.f32 %v7400, %v7500
  %v7541 = vmax.f32 %v7401, %v7501
  %v7542 = vmax.f32 %v7402, %v7502
  %v7543 = vmax.f32 %v7403, %v7503
  %v7544 = vld [vmem:[%s5] sm:$0xff]
  %v7545 = vld [vmem:[%s5 + $0x8] sm:$0xff]
  %v7546 = vld [vmem:[%s5 + $0x10] sm:$0xff]
  %v7547 = vld [vmem:[%s5 + $0x18] sm:$0xff]
  %7549 = vset.pattern.permute.xlu0 0
  %7550 = vperm.xlu0 %7549, %v7544
  %v7551 = vpop.permute.xlu0 %7550
  %7554 = vset.pattern.permute.xlu0 0
  %7555 = vperm.xlu0 %7554, %v7545
  %v7556 = vpop.permute.xlu0 %7555
  %7559 = vset.pattern.permute.xlu0 0
  %7560 = vperm.xlu0 %7559, %v7546
  %v7561 = vpop.permute.xlu0 %7560
  %7564 = vset.pattern.permute.xlu0 0
  %7565 = vperm.xlu0 %7564, %v7547
  %v7566 = vpop.permute.xlu0 %7565
  %v7568 = vadd.f32 %v7524, %v7551
  %v7569 = vadd.f32 %v7525, %v7551
  %v7570 = vadd.f32 %v7526, %v7551
  %v7571 = vadd.f32 %v7527, %v7551
  %v7572 = vadd.f32 %v7528, %v7551
  %v7573 = vadd.f32 %v7529, %v7556
  %v7574 = vadd.f32 %v7530, %v7556
  %v7575 = vadd.f32 %v7531, %v7556
  %v7576 = vadd.f32 %v7532, %v7556
  %v7577 = vadd.f32 %v7533, %v7556
  %v7578 = vadd.f32 %v7534, %v7561
  %v7579 = vadd.f32 %v7535, %v7561
  %v7580 = vadd.f32 %v7536, %v7561
  %v7581 = vadd.f32 %v7537, %v7561
  %v7582 = vadd.f32 %v7538, %v7561
  %v7583 = vadd.f32 %v7539, %v7566
  %v7584 = vadd.f32 %v7540, %v7566
  %v7585 = vadd.f32 %v7541, %v7566
  %v7586 = vadd.f32 %v7542, %v7566
  %v7587 = vadd.f32 %v7543, %v7566
  %v7588 = vmax.f32 %v7568, 0.0
  %v7589 = vmax.f32 %v7569, 0.0
  %v7590 = vmax.f32 %v7570, 0.0
  %v7591 = vmax.f32 %v7571, 0.0
  %v7592 = vmax.f32 %v7572, 0.0
  %v7593 = vmax.f32 %v7573, 0.0
  %v7594 = vmax.f32 %v7574, 0.0
  %v7595 = vmax.f32 %v7575, 0.0
  %v7596 = vmax.f32 %v7576, 0.0
  %v7597 = vmax.f32 %v7577, 0.0
  %v7598 = vmax.f32 %v7578, 0.0
  %v7599 = vmax.f32 %v7579, 0.0
  %v7600 = vmax.f32 %v7580, 0.0
  %v7601 = vmax.f32 %v7581, 0.0
  %v7602 = vmax.f32 %v7582, 0.0
  %v7603 = vmax.f32 %v7583, 0.0
  %v7604 = vmax.f32 %v7584, 0.0
  %v7605 = vmax.f32 %v7585, 0.0
  %v7606 = vmax.f32 %v7586, 0.0
  %v7607 = vmax.f32 %v7587, 0.0
  %7608 = vst [vmem:[%s6] sm:$0xff] %v7588
  %7609 = vst [vmem:[%s6 + $0x8] sm:$0xff] %v7589
  %7610 = vst [vmem:[%s6 + $0x10] sm:$0xff] %v7590
  %7611 = vst [vmem:[%s6 + $0x18] sm:$0xff] %v7591
  %7612 = vst [vmem:[%s6 + $0x20] sm:$0xff] %v7592
  %7613 = vst [vmem:[%s6 + $0x28] sm:$0xff] %v7593
  %7614 = vst [vmem:[%s6 + $0x30] sm:$0xff] %v7594
  %7615 = vst [vmem:[%s6 + $0x38] sm:$0xff] %v7595
  %7616 = vst [vmem:[%s6 + $0x40] sm:$0xff] %v7596
  %7617 = vst [vmem:[%s6 + $0x48] sm:$0xff] %v7597
  %7618 = vst [vmem:[%s6 + $0x50] sm:$0xff] %v7598
  %7619 = vst [vmem:[%s6 + $0x58] sm:$0xff] %v7599
  %7620 = vst [vmem:[%s6 + $0x60] sm:$0xff] %v7600
  %7621 = vst [vmem:[%s6 + $0x68] sm:$0xff] %v7601
  %7622 = vst [vmem:[%s6 + $0x70] sm:$0xff] %v7602
  %7623 = vst [vmem:[%s6 + $0x78] sm:$0xff] %v7603
  %7624 = vst [vmem:[%s6 + $0x80] sm:$0xff] %v7604
  %7625 = vst [vmem:[%s6 + $0x88] sm:$0xff] %v7605
  %7626 = vst [vmem:[%s6 + $0x90] sm:$0xff] %v7606
  %7627 = vst [vmem:[%s6 + $0x98] sm:$0xff] %v7607
  // Predicated region
  $region26: #{cnn_forward.1} parent=0 // pred_check
    _
  $region27: #{cnn_forward.1} parent=0 // pred_check_branch
    %7629 = sbr.rel (0) target = $region29
  $region28: #{cnn_forward.1} parent=0 // pred_region
    _
  $region29: #{cnn_forward.1} parent=0 // pred_fallthru
    _
  // Predicated region
  $region30: #{cnn_forward.1} parent=0 // pred_check
    _
  $region31: #{cnn_forward.1} parent=0 // pred_check_branch
    %7631 = sbr.rel (0) target = $region33
  $region32: #{cnn_forward.1} parent=0 // pred_region
    _
  $region33: #{cnn_forward.1} parent=0 // pred_fallthru
    _

</llo_original>
